<compile_context>
chip_gen: v7x
topology: tpu7x:2x2x1
jax: 0.10.0
libtpu: 0.0.40
codegen_flags: <defaults>
</compile_context>

<pallas_src>
import math

import jax
import jax.numpy as jnp
from jax.experimental import pallas as pl
from jax.experimental.pallas import tpu as pltpu


CP = 128      # channel padding (full lane width) for lane-dense, aligned im2col
LPAD = 16     # left spatial pad in the W (sublane) dim -> bf16-tile-aligned stores


# ----------------------------------------------------------------------------
# Fused kernel: 4 x (conv3x3 -> maxpool2x2 -> LeakyReLU -> folded BN)
#               -> Linear(F, 1) -> Sigmoid          (one image per grid step)
# ----------------------------------------------------------------------------
def _disc_fused_kernel(x_ref,
                       w1, b1, g1, t1,
                       w2, b2, g2, t2,
                       w3, b3, g3, t3,
                       w4, b4, g4, t4,
                       lw_ref, lb_ref,
                       o_ref,
                       s1, s2, s3, s4):
    stages = ((w1, b1, g1, t1, s1),
              (w2, b2, g2, t2, s2),
              (w3, b3, g3, t3, s3),
              (w4, b4, g4, t4, s4))

    act = x_ref[0].astype(jnp.bfloat16)                     # (H, W, Cin) bf16
    y = None
    for (w_ref, b_ref, g_ref, t_ref, s_ref) in stages:
        H, W, cin = act.shape
        cout = w_ref.shape[1]

        # --- zero-padded, channel-padded staging buffer (VMEM scratch) ---
        s_ref[...] = jnp.zeros_like(s_ref)
        s_ref[1:H + 1, LPAD:LPAD + W, 0:cin] = act

        # --- im2col: 9 shifted (H, W, 128) windows -> (H*W, 9*128) patches ---
        slabs = [s_ref[dy:dy + H, LPAD - 1 + dx:LPAD - 1 + dx + W, :]
                 for dy in range(3) for dx in range(3)]
        patches = jnp.concatenate(slabs, axis=-1).reshape(H * W, 9 * CP)

        # --- single MXU matmul per block, f32 accumulation ---
        acc = jnp.dot(patches, w_ref[...], preferred_element_type=jnp.float32)

        # --- 2x2 max pool, stride 2 ---
        r = jnp.max(acc.reshape(H // 2, 2, W, cout), axis=1)
        p = jnp.max(r.reshape(H // 2, W // 2, 2, cout), axis=2)

        # --- bias after pool (exact for per-channel const), LeakyReLU, folded BN ---
        z = p + b_ref[...]
        z = jnp.where(z > 0, z, 0.2 * z)
        y = z * g_ref[...] + t_ref[...]                     # (H//2, W//2, cout) f32
        act = y.astype(jnp.bfloat16)

    # --- adversarial head: Linear(F, 1) + Sigmoid as VPU multiply + reduce ---
    Hf, Wf, Cf = y.shape
    prod = (y * lw_ref[...]).reshape(Hf * Wf, Cf)           # lw pre-permuted to HWC
    v = jnp.sum(prod, axis=1, keepdims=True)                # (Hf*Wf, 1) lane reduce
    v = jnp.sum(v, axis=0, keepdims=True)                   # (1, 1)
    v = v + lb_ref[...]
    o_ref[0] = jax.nn.sigmoid(v).astype(o_ref.dtype)


# ----------------------------------------------------------------------------
# Wrapper: pack / pad parameters once, launch one fused pallas_call
# ----------------------------------------------------------------------------
def discriminator_forward(img_nchw, blocks, lin_w, lin_b):
    """img_nchw: (N, 3, H, W) f32 -> (N, 1) f32 (eval-mode Discriminator forward)."""
    N, C, H, W = img_nchw.shape
    assert H % 16 == 0 and W % 16 == 0, "spatial dims must survive 4 maxpool halvings"

    x = jnp.transpose(img_nchw, (0, 2, 3, 1)).astype(jnp.bfloat16)   # NHWC bf16

    packed, in_specs, stage_hw = [], [], []
    cin, h, w = C, H, W
    for (cw, cb, csc, csh) in blocks:
        cout = cw.shape[-1]
        assert cin <= CP
        # channel-pad Cin -> 128 and reshape to the im2col (9*128, Cout) matrix
        wp = jnp.zeros((3, 3, CP, cout), jnp.float32).at[:, :, :cin, :].set(cw)
        packed += [wp.reshape(9 * CP, cout).astype(jnp.bfloat16),
                   cb.reshape(1, cout).astype(jnp.float32),
                   csc.reshape(1, cout).astype(jnp.float32),
                   csh.reshape(1, cout).astype(jnp.float32)]
        in_specs += [pl.BlockSpec((9 * CP, cout), lambda n: (0, 0)),
                     pl.BlockSpec((1, cout), lambda n: (0, 0)),
                     pl.BlockSpec((1, cout), lambda n: (0, 0)),
                     pl.BlockSpec((1, cout), lambda n: (0, 0))]
        stage_hw.append((h, w))
        cin, h, w = cout, h // 2, w // 2

    Cf, Hf, Wf = cin, h, w
    assert lin_w.shape[0] == Cf * Hf * Wf
    # pre-permute Linear weight from PyTorch's NCHW-flatten order to an NHWC slab
    lw = jnp.asarray(lin_w, jnp.float32).reshape(Cf, Hf, Wf).transpose(1, 2, 0)
    lb = jnp.asarray(lin_b, jnp.float32).reshape(1, 1)

    in_specs = ([pl.BlockSpec((1, H, W, C), lambda n: (n, 0, 0, 0))]
                + in_specs
                + [pl.BlockSpec((Hf, Wf, Cf), lambda n: (0, 0, 0)),
                   pl.BlockSpec((1, 1), lambda n: (0, 0))])

    scratch = [pltpu.VMEM((sh + 2, sw + LPAD + 1, CP), jnp.bfloat16)
               for (sh, sw) in stage_hw]

    out = pl.pallas_call(
        _disc_fused_kernel,
        out_shape=jax.ShapeDtypeStruct((N, 1, 1), jnp.float32),
        grid_spec=pltpu.PrefetchScalarGridSpec(
            num_scalar_prefetch=0,
            grid=(N,),
            in_specs=in_specs,
            out_specs=pl.BlockSpec((1, 1, 1), lambda n: (n, 0, 0)),
            scratch_shapes=scratch),
        compiler_params=pltpu.CompilerParams(
            dimension_semantics=("parallel",)),   # v7x: two TCs split the batch
    )(x, *packed, lw, lb)
    return out.reshape(N, 1)


# ----------------------------------------------------------------------------
# Plain-JAX reference (same bf16-weight / f32-accumulate dtype path)
# ----------------------------------------------------------------------------
def discriminator_reference(img_nchw, blocks, lin_w, lin_b):
    h = jnp.transpose(img_nchw, (0, 2, 3, 1)).astype(jnp.bfloat16)
    for i, (cw, cb, csc, csh) in enumerate(blocks):
        c = jax.lax.conv_general_dilated(
            h, cw.astype(jnp.bfloat16), window_strides=(1, 1), padding='SAME',
            dimension_numbers=('NHWC', 'HWIO', 'NHWC'),
            preferred_element_type=jnp.float32)
        c = c + cb
        c = jax.lax.reduce_window(c, -jnp.inf, jax.lax.max,
                                  (1, 2, 2, 1), (1, 2, 2, 1), 'VALID')
        c = jnp.where(c > 0, c, 0.2 * c)
        c = c * csc + csh
        h = c.astype(jnp.bfloat16) if i < len(blocks) - 1 else c
    N = h.shape[0]
    flat = jnp.transpose(h, (0, 3, 1, 2)).reshape(N, -1).astype(jnp.float32)
    return jax.nn.sigmoid(flat @ jnp.asarray(lin_w, jnp.float32)
                          + jnp.asarray(lin_b, jnp.float32))


def init_params(key, H, W):
    """Deterministic synthetic parameters matching Discriminator.__init__ shapes."""
    chans = [3, 16, 32, 64, 128]
    blocks = []
    for i in range(4):
        cin, cout = chans[i], chans[i + 1]
        key, k1, k2, k3, k4, k5, k6 = jax.random.split(key, 7)
        wstd = 1.0 / math.sqrt(cin * 9)
        w = jax.random.uniform(k1, (3, 3, cin, cout), jnp.float32, -wstd, wstd)
        b = jax.random.uniform(k2, (cout,), jnp.float32, -wstd, wstd)
        if i == 0:  # bn=False block
            scale = jnp.ones((cout,), jnp.float32)
            shift = jnp.zeros((cout,), jnp.float32)
        else:       # BatchNorm2d(cout, eps=0.8), eval-mode, folded
            eps = 0.8
            gamma = 1.0 + 0.1 * jax.random.normal(k3, (cout,), jnp.float32)
            beta = 0.1 * jax.random.normal(k4, (cout,), jnp.float32)
            rmean = 0.1 * jax.random.normal(k5, (cout,), jnp.float32)
            rvar = 1.0 + 0.1 * jax.random.uniform(k6, (cout,), jnp.float32)
            scale = gamma / jnp.sqrt(rvar + eps)
            shift = beta - rmean * scale
        blocks.append((w, b, scale, shift))
    feat = H * W // 2
    key, kw, kb = jax.random.split(key, 3)
    lstd = 1.0 / math.sqrt(feat)
    lin_w = jax.random.uniform(kw, (feat, 1), jnp.float32, -lstd, lstd)
    lin_b = jax.random.uniform(kb, (1,), jnp.float32, -lstd, lstd)
    return blocks, lin_w, lin_b


if __name__ == "__main__":
    N, C, H, W = 2, 3, 16, 16                 # inImageSize = (3, 16, 16)
    key = jax.random.PRNGKey(0)
    kx, kp = jax.random.split(key)
    img = jax.random.normal(kx, (N, C, H, W), jnp.float32)
    blocks, lin_w, lin_b = init_params(kp, H, W)

    out = jax.block_until_ready(discriminator_forward(img, blocks, lin_w, lin_b))
    assert out.shape == (N, 1), out.shape

    ref = discriminator_reference(img, blocks, lin_w, lin_b)
    if not jnp.allclose(out, ref, atol=2e-3, rtol=2e-3):
        raise AssertionError(f"mismatch: pallas={out} ref={ref}")

    print("KERNEL_OK")
</pallas_src>

<mosaic_0001>
module attributes {stable_mosaic.version = 11 : i64} {
  func.func @_disc_fused_kernel(%arg0: i32, %arg1: memref<1x16x16x3xbf16, #tpu.memory_space<vmem>>, %arg2: memref<1152x16xbf16, #tpu.memory_space<vmem>>, %arg3: memref<1x16xf32, #tpu.memory_space<vmem>>, %arg4: memref<1x16xf32, #tpu.memory_space<vmem>>, %arg5: memref<1x16xf32, #tpu.memory_space<vmem>>, %arg6: memref<1152x32xbf16, #tpu.memory_space<vmem>>, %arg7: memref<1x32xf32, #tpu.memory_space<vmem>>, %arg8: memref<1x32xf32, #tpu.memory_space<vmem>>, %arg9: memref<1x32xf32, #tpu.memory_space<vmem>>, %arg10: memref<1152x64xbf16, #tpu.memory_space<vmem>>, %arg11: memref<1x64xf32, #tpu.memory_space<vmem>>, %arg12: memref<1x64xf32, #tpu.memory_space<vmem>>, %arg13: memref<1x64xf32, #tpu.memory_space<vmem>>, %arg14: memref<1152x128xbf16, #tpu.memory_space<vmem>>, %arg15: memref<1x128xf32, #tpu.memory_space<vmem>>, %arg16: memref<1x128xf32, #tpu.memory_space<vmem>>, %arg17: memref<1x128xf32, #tpu.memory_space<vmem>>, %arg18: memref<1x1x128xf32, #tpu.memory_space<vmem>>, %arg19: memref<1x1xf32, #tpu.memory_space<vmem>>, %arg20: memref<1x1x1xf32, #tpu.memory_space<vmem>>, %arg21: memref<18x33x128xbf16, #tpu.memory_space<vmem>>, %arg22: memref<10x25x128xbf16, #tpu.memory_space<vmem>>, %arg23: memref<6x21x128xbf16, #tpu.memory_space<vmem>>, %arg24: memref<4x19x128xbf16, #tpu.memory_space<vmem>>) attributes {dimension_semantics = [#tpu.dimension_semantics<parallel>], iteration_bounds = array<i64: 2>, scalar_prefetch = 0 : i64, scratch_operands = 4 : i64, tpu.core_type = #tpu.core_type<tc>, window_params = [{transform_indices = @transform_0, window_bounds = array<i64: 1, 16, 16, 3>}, {pipeline_mode = #tpu.pipeline_mode<synchronous>, transform_indices = @transform_1, window_bounds = array<i64: 1152, 16>}, {pipeline_mode = #tpu.pipeline_mode<synchronous>, transform_indices = @transform_2, window_bounds = array<i64: 1, 16>}, {pipeline_mode = #tpu.pipeline_mode<synchronous>, transform_indices = @transform_3, window_bounds = array<i64: 1, 16>}, {pipeline_mode = #tpu.pipeline_mode<synchronous>, transform_indices = @transform_4, window_bounds = array<i64: 1, 16>}, {pipeline_mode = #tpu.pipeline_mode<synchronous>, transform_indices = @transform_5, window_bounds = array<i64: 1152, 32>}, {pipeline_mode = #tpu.pipeline_mode<synchronous>, transform_indices = @transform_6, window_bounds = array<i64: 1, 32>}, {pipeline_mode = #tpu.pipeline_mode<synchronous>, transform_indices = @transform_7, window_bounds = array<i64: 1, 32>}, {pipeline_mode = #tpu.pipeline_mode<synchronous>, transform_indices = @transform_8, window_bounds = array<i64: 1, 32>}, {pipeline_mode = #tpu.pipeline_mode<synchronous>, transform_indices = @transform_9, window_bounds = array<i64: 1152, 64>}, {pipeline_mode = #tpu.pipeline_mode<synchronous>, transform_indices = @transform_10, window_bounds = array<i64: 1, 64>}, {pipeline_mode = #tpu.pipeline_mode<synchronous>, transform_indices = @transform_11, window_bounds = array<i64: 1, 64>}, {pipeline_mode = #tpu.pipeline_mode<synchronous>, transform_indices = @transform_12, window_bounds = array<i64: 1, 64>}, {pipeline_mode = #tpu.pipeline_mode<synchronous>, transform_indices = @transform_13, window_bounds = array<i64: 1152, 128>}, {pipeline_mode = #tpu.pipeline_mode<synchronous>, transform_indices = @transform_14, window_bounds = array<i64: 1, 128>}, {pipeline_mode = #tpu.pipeline_mode<synchronous>, transform_indices = @transform_15, window_bounds = array<i64: 1, 128>}, {pipeline_mode = #tpu.pipeline_mode<synchronous>, transform_indices = @transform_16, window_bounds = array<i64: 1, 128>}, {pipeline_mode = #tpu.pipeline_mode<synchronous>, transform_indices = @transform_17, window_bounds = array<i64: 1, 1, 128>}, {pipeline_mode = #tpu.pipeline_mode<synchronous>, transform_indices = @transform_18, window_bounds = array<i64: 1, 1>}, {transform_indices = @transform_19, window_bounds = array<i64: 1, 1, 1>}]} {
    %c0 = arith.constant 0 : index
    %c0_0 = arith.constant 0 : index
    %c0_1 = arith.constant 0 : index
    %c0_2 = arith.constant 0 : index
    %0 = vector.load %arg1[%c0, %c0_0, %c0_1, %c0_2] : memref<1x16x16x3xbf16, #tpu.memory_space<vmem>>, vector<1x16x16x3xbf16>
    %1 = vector.shape_cast %0 : vector<1x16x16x3xbf16> to vector<16x16x3xbf16>
    %cst = arith.constant 0.000000e+00 : bf16
    %2 = vector.broadcast %cst : bf16 to vector<18x33x128xbf16>
    %c0_3 = arith.constant 0 : index
    %c0_4 = arith.constant 0 : index
    %c0_5 = arith.constant 0 : index
    %3 = vector.load %arg21[%c0_3, %c0_4, %c0_5] : memref<18x33x128xbf16, #tpu.memory_space<vmem>>, vector<18x33x128xbf16>
    tpu.vector_store %arg21[%c0_3, %c0_4, %c0_5], %2 {strides = array<i32>} : memref<18x33x128xbf16, #tpu.memory_space<vmem>>, vector<18x33x128xbf16>,
    %c1 = arith.constant 1 : index
    %c16 = arith.constant 16 : index
    %c0_6 = arith.constant 0 : index
    %4 = vector.load %arg21[%c1, %c16, %c0_6] : memref<18x33x128xbf16, #tpu.memory_space<vmem>>, vector<16x16x3xbf16>
    tpu.vector_store %arg21[%c1, %c16, %c0_6], %1 {strides = array<i32>} : memref<18x33x128xbf16, #tpu.memory_space<vmem>>, vector<16x16x3xbf16>,
    %c0_7 = arith.constant 0 : index
    %c15 = arith.constant 15 : index
    %c0_8 = arith.constant 0 : index
    %5 = vector.load %arg21[%c0_7, %c15, %c0_8] : memref<18x33x128xbf16, #tpu.memory_space<vmem>>, vector<16x16x128xbf16>
    %c0_9 = arith.constant 0 : index
    %c16_10 = arith.constant 16 : index
    %c0_11 = arith.constant 0 : index
    %6 = vector.load %arg21[%c0_9, %c16_10, %c0_11] : memref<18x33x128xbf16, #tpu.memory_space<vmem>>, vector<16x16x128xbf16>
    %c0_12 = arith.constant 0 : index
    %c17 = arith.constant 17 : index
    %c0_13 = arith.constant 0 : index
    %7 = vector.load %arg21[%c0_12, %c17, %c0_13] : memref<18x33x128xbf16, #tpu.memory_space<vmem>>, vector<16x16x128xbf16>
    %c1_14 = arith.constant 1 : index
    %c15_15 = arith.constant 15 : index
    %c0_16 = arith.constant 0 : index
    %8 = vector.load %arg21[%c1_14, %c15_15, %c0_16] : memref<18x33x128xbf16, #tpu.memory_space<vmem>>, vector<16x16x128xbf16>
    %c1_17 = arith.constant 1 : index
    %c16_18 = arith.constant 16 : index
    %c0_19 = arith.constant 0 : index
    %9 = vector.load %arg21[%c1_17, %c16_18, %c0_19] : memref<18x33x128xbf16, #tpu.memory_space<vmem>>, vector<16x16x128xbf16>
    %c1_20 = arith.constant 1 : index
    %c17_21 = arith.constant 17 : index
    %c0_22 = arith.constant 0 : index
    %10 = vector.load %arg21[%c1_20, %c17_21, %c0_22] : memref<18x33x128xbf16, #tpu.memory_space<vmem>>, vector<16x16x128xbf16>
    %c2 = arith.constant 2 : index
    %c15_23 = arith.constant 15 : index
    %c0_24 = arith.constant 0 : index
    %11 = vector.load %arg21[%c2, %c15_23, %c0_24] : memref<18x33x128xbf16, #tpu.memory_space<vmem>>, vector<16x16x128xbf16>
    %c2_25 = arith.constant 2 : index
    %c16_26 = arith.constant 16 : index
    %c0_27 = arith.constant 0 : index
    %12 = vector.load %arg21[%c2_25, %c16_26, %c0_27] : memref<18x33x128xbf16, #tpu.memory_space<vmem>>, vector<16x16x128xbf16>
    %c2_28 = arith.constant 2 : index
    %c17_29 = arith.constant 17 : index
    %c0_30 = arith.constant 0 : index
    %13 = vector.load %arg21[%c2_28, %c17_29, %c0_30] : memref<18x33x128xbf16, #tpu.memory_space<vmem>>, vector<16x16x128xbf16>
    %14 = tpu.concatenate %5, %6, %7, %8, %9, %10, %11, %12, %13 in 2 : vector<16x16x128xbf16>, vector<16x16x128xbf16>, vector<16x16x128xbf16>, vector<16x16x128xbf16>, vector<16x16x128xbf16>, vector<16x16x128xbf16>, vector<16x16x128xbf16>, vector<16x16x128xbf16>, vector<16x16x128xbf16> -> vector<16x16x1152xbf16>
    %15 = vector.shape_cast %14 : vector<16x16x1152xbf16> to vector<256x1152xbf16>
    %c0_31 = arith.constant 0 : index
    %c0_32 = arith.constant 0 : index
    %16 = vector.load %arg2[%c0_31, %c0_32] : memref<1152x16xbf16, #tpu.memory_space<vmem>>, vector<1152x16xbf16>
    %cst_33 = arith.constant dense<0.000000e+00> : vector<256x16xf32>
    %17 = tpu.matmul %15, %16, %cst_33 {dimension_numbers = #tpu.dot_dimension_numbers<[1], [0], [0], [1], [0, 0, 1, 1], [], []>} : vector<256x1152xbf16>, vector<1152x16xbf16>, vector<256x16xf32> -> vector<256x16xf32>
    %18 = vector.shape_cast %17 : vector<256x16xf32> to vector<8x2x16x16xf32>
    %cst_34 = arith.constant dense<0xFF800000> : vector<8x16x16xf32>
    %19 = vector.multi_reduction <maximumf>, %18, %cst_34 [1] : vector<8x2x16x16xf32> to vector<8x16x16xf32>
    %20 = vector.shape_cast %19 : vector<8x16x16xf32> to vector<8x8x2x16xf32>
    %cst_35 = arith.constant dense<0xFF800000> : vector<8x8x16xf32>
    %21 = vector.multi_reduction <maximumf>, %20, %cst_35 [2] : vector<8x8x2x16xf32> to vector<8x8x16xf32>
    %c0_36 = arith.constant 0 : index
    %c0_37 = arith.constant 0 : index
    %22 = vector.load %arg3[%c0_36, %c0_37] : memref<1x16xf32, #tpu.memory_space<vmem>>, vector<1x16xf32>
    %23 = vector.shape_cast %22 : vector<1x16xf32> to vector<1x1x16xf32>
    %24 = vector.broadcast %23 : vector<1x1x16xf32> to vector<8x8x16xf32>
    %25 = arith.addf %21, %24 : vector<8x8x16xf32>
    %cst_38 = arith.constant 0.000000e+00 : f32
    %26 = vector.broadcast %cst_38 : f32 to vector<8x8x16xf32>
    %27 = arith.cmpf ogt, %25, %26 : vector<8x8x16xf32>
    %cst_39 = arith.constant 2.000000e-01 : f32
    %28 = vector.broadcast %cst_39 : f32 to vector<8x8x16xf32>
    %29 = arith.mulf %28, %25 : vector<8x8x16xf32>
    %30 = arith.select %27, %25, %29 : vector<8x8x16xi1>, vector<8x8x16xf32>
    %c0_40 = arith.constant 0 : index
    %c0_41 = arith.constant 0 : index
    %31 = vector.load %arg4[%c0_40, %c0_41] : memref<1x16xf32, #tpu.memory_space<vmem>>, vector<1x16xf32>
    %32 = vector.shape_cast %31 : vector<1x16xf32> to vector<1x1x16xf32>
    %33 = vector.broadcast %32 : vector<1x1x16xf32> to vector<8x8x16xf32>
    %34 = arith.mulf %30, %33 : vector<8x8x16xf32>
    %c0_42 = arith.constant 0 : index
    %c0_43 = arith.constant 0 : index
    %35 = vector.load %arg5[%c0_42, %c0_43] : memref<1x16xf32, #tpu.memory_space<vmem>>, vector<1x16xf32>
    %36 = vector.shape_cast %35 : vector<1x16xf32> to vector<1x1x16xf32>
    %37 = vector.broadcast %36 : vector<1x1x16xf32> to vector<8x8x16xf32>
    %38 = arith.addf %34, %37 : vector<8x8x16xf32>
    %39 = arith.truncf %38 : vector<8x8x16xf32> to vector<8x8x16xbf16>
    %cst_44 = arith.constant 0.000000e+00 : bf16
    %40 = vector.broadcast %cst_44 : bf16 to vector<10x25x128xbf16>
    %c0_45 = arith.constant 0 : index
    %c0_46 = arith.constant 0 : index
    %c0_47 = arith.constant 0 : index
    %41 = vector.load %arg22[%c0_45, %c0_46, %c0_47] : memref<10x25x128xbf16, #tpu.memory_space<vmem>>, vector<10x25x128xbf16>
    tpu.vector_store %arg22[%c0_45, %c0_46, %c0_47], %40 {strides = array<i32>} : memref<10x25x128xbf16, #tpu.memory_space<vmem>>, vector<10x25x128xbf16>,
    %c1_48 = arith.constant 1 : index
    %c16_49 = arith.constant 16 : index
    %c0_50 = arith.constant 0 : index
    %42 = vector.load %arg22[%c1_48, %c16_49, %c0_50] : memref<10x25x128xbf16, #tpu.memory_space<vmem>>, vector<8x8x16xbf16>
    tpu.vector_store %arg22[%c1_48, %c16_49, %c0_50], %39 {strides = array<i32>} : memref<10x25x128xbf16, #tpu.memory_space<vmem>>, vector<8x8x16xbf16>,
    %c0_51 = arith.constant 0 : index
    %c15_52 = arith.constant 15 : index
    %c0_53 = arith.constant 0 : index
    %43 = vector.load %arg22[%c0_51, %c15_52, %c0_53] : memref<10x25x128xbf16, #tpu.memory_space<vmem>>, vector<8x8x128xbf16>
    %c0_54 = arith.constant 0 : index
    %c16_55 = arith.constant 16 : index
    %c0_56 = arith.constant 0 : index
    %44 = vector.load %arg22[%c0_54, %c16_55, %c0_56] : memref<10x25x128xbf16, #tpu.memory_space<vmem>>, vector<8x8x128xbf16>
    %c0_57 = arith.constant 0 : index
    %c17_58 = arith.constant 17 : index
    %c0_59 = arith.constant 0 : index
    %45 = vector.load %arg22[%c0_57, %c17_58, %c0_59] : memref<10x25x128xbf16, #tpu.memory_space<vmem>>, vector<8x8x128xbf16>
    %c1_60 = arith.constant 1 : index
    %c15_61 = arith.constant 15 : index
    %c0_62 = arith.constant 0 : index
    %46 = vector.load %arg22[%c1_60, %c15_61, %c0_62] : memref<10x25x128xbf16, #tpu.memory_space<vmem>>, vector<8x8x128xbf16>
    %c1_63 = arith.constant 1 : index
    %c16_64 = arith.constant 16 : index
    %c0_65 = arith.constant 0 : index
    %47 = vector.load %arg22[%c1_63, %c16_64, %c0_65] : memref<10x25x128xbf16, #tpu.memory_space<vmem>>, vector<8x8x128xbf16>
    %c1_66 = arith.constant 1 : index
    %c17_67 = arith.constant 17 : index
    %c0_68 = arith.constant 0 : index
    %48 = vector.load %arg22[%c1_66, %c17_67, %c0_68] : memref<10x25x128xbf16, #tpu.memory_space<vmem>>, vector<8x8x128xbf16>
    %c2_69 = arith.constant 2 : index
    %c15_70 = arith.constant 15 : index
    %c0_71 = arith.constant 0 : index
    %49 = vector.load %arg22[%c2_69, %c15_70, %c0_71] : memref<10x25x128xbf16, #tpu.memory_space<vmem>>, vector<8x8x128xbf16>
    %c2_72 = arith.constant 2 : index
    %c16_73 = arith.constant 16 : index
    %c0_74 = arith.constant 0 : index
    %50 = vector.load %arg22[%c2_72, %c16_73, %c0_74] : memref<10x25x128xbf16, #tpu.memory_space<vmem>>, vector<8x8x128xbf16>
    %c2_75 = arith.constant 2 : index
    %c17_76 = arith.constant 17 : index
    %c0_77 = arith.constant 0 : index
    %51 = vector.load %arg22[%c2_75, %c17_76, %c0_77] : memref<10x25x128xbf16, #tpu.memory_space<vmem>>, vector<8x8x128xbf16>
    %52 = tpu.concatenate %43, %44, %45, %46, %47, %48, %49, %50, %51 in 2 : vector<8x8x128xbf16>, vector<8x8x128xbf16>, vector<8x8x128xbf16>, vector<8x8x128xbf16>, vector<8x8x128xbf16>, vector<8x8x128xbf16>, vector<8x8x128xbf16>, vector<8x8x128xbf16>, vector<8x8x128xbf16> -> vector<8x8x1152xbf16>
    %53 = vector.shape_cast %52 : vector<8x8x1152xbf16> to vector<64x1152xbf16>
    %c0_78 = arith.constant 0 : index
    %c0_79 = arith.constant 0 : index
    %54 = vector.load %arg6[%c0_78, %c0_79] : memref<1152x32xbf16, #tpu.memory_space<vmem>>, vector<1152x32xbf16>
    %cst_80 = arith.constant dense<0.000000e+00> : vector<64x32xf32>
    %55 = tpu.matmul %53, %54, %cst_80 {dimension_numbers = #tpu.dot_dimension_numbers<[1], [0], [0], [1], [0, 0, 1, 1], [], []>} : vector<64x1152xbf16>, vector<1152x32xbf16>, vector<64x32xf32> -> vector<64x32xf32>
    %56 = vector.shape_cast %55 : vector<64x32xf32> to vector<4x2x8x32xf32>
    %cst_81 = arith.constant dense<0xFF800000> : vector<4x8x32xf32>
    %57 = vector.multi_reduction <maximumf>, %56, %cst_81 [1] : vector<4x2x8x32xf32> to vector<4x8x32xf32>
    %58 = vector.shape_cast %57 : vector<4x8x32xf32> to vector<4x4x2x32xf32>
    %cst_82 = arith.constant dense<0xFF800000> : vector<4x4x32xf32>
    %59 = vector.multi_reduction <maximumf>, %58, %cst_82 [2] : vector<4x4x2x32xf32> to vector<4x4x32xf32>
    %c0_83 = arith.constant 0 : index
    %c0_84 = arith.constant 0 : index
    %60 = vector.load %arg7[%c0_83, %c0_84] : memref<1x32xf32, #tpu.memory_space<vmem>>, vector<1x32xf32>
    %61 = vector.shape_cast %60 : vector<1x32xf32> to vector<1x1x32xf32>
    %62 = vector.broadcast %61 : vector<1x1x32xf32> to vector<4x4x32xf32>
    %63 = arith.addf %59, %62 : vector<4x4x32xf32>
    %cst_85 = arith.constant 0.000000e+00 : f32
    %64 = vector.broadcast %cst_85 : f32 to vector<4x4x32xf32>
    %65 = arith.cmpf ogt, %63, %64 : vector<4x4x32xf32>
    %cst_86 = arith.constant 2.000000e-01 : f32
    %66 = vector.broadcast %cst_86 : f32 to vector<4x4x32xf32>
    %67 = arith.mulf %66, %63 : vector<4x4x32xf32>
    %68 = arith.select %65, %63, %67 : vector<4x4x32xi1>, vector<4x4x32xf32>
    %c0_87 = arith.constant 0 : index
    %c0_88 = arith.constant 0 : index
    %69 = vector.load %arg8[%c0_87, %c0_88] : memref<1x32xf32, #tpu.memory_space<vmem>>, vector<1x32xf32>
    %70 = vector.shape_cast %69 : vector<1x32xf32> to vector<1x1x32xf32>
    %71 = vector.broadcast %70 : vector<1x1x32xf32> to vector<4x4x32xf32>
    %72 = arith.mulf %68, %71 : vector<4x4x32xf32>
    %c0_89 = arith.constant 0 : index
    %c0_90 = arith.constant 0 : index
    %73 = vector.load %arg9[%c0_89, %c0_90] : memref<1x32xf32, #tpu.memory_space<vmem>>, vector<1x32xf32>
    %74 = vector.shape_cast %73 : vector<1x32xf32> to vector<1x1x32xf32>
    %75 = vector.broadcast %74 : vector<1x1x32xf32> to vector<4x4x32xf32>
    %76 = arith.addf %72, %75 : vector<4x4x32xf32>
    %77 = arith.truncf %76 : vector<4x4x32xf32> to vector<4x4x32xbf16>
    %cst_91 = arith.constant 0.000000e+00 : bf16
    %78 = vector.broadcast %cst_91 : bf16 to vector<6x21x128xbf16>
    %c0_92 = arith.constant 0 : index
    %c0_93 = arith.constant 0 : index
    %c0_94 = arith.constant 0 : index
    %79 = vector.load %arg23[%c0_92, %c0_93, %c0_94] : memref<6x21x128xbf16, #tpu.memory_space<vmem>>, vector<6x21x128xbf16>
    tpu.vector_store %arg23[%c0_92, %c0_93, %c0_94], %78 {strides = array<i32>} : memref<6x21x128xbf16, #tpu.memory_space<vmem>>, vector<6x21x128xbf16>,
    %c1_95 = arith.constant 1 : index
    %c16_96 = arith.constant 16 : index
    %c0_97 = arith.constant 0 : index
    %80 = vector.load %arg23[%c1_95, %c16_96, %c0_97] : memref<6x21x128xbf16, #tpu.memory_space<vmem>>, vector<4x4x32xbf16>
    tpu.vector_store %arg23[%c1_95, %c16_96, %c0_97], %77 {strides = array<i32>} : memref<6x21x128xbf16, #tpu.memory_space<vmem>>, vector<4x4x32xbf16>,
    %c0_98 = arith.constant 0 : index
    %c15_99 = arith.constant 15 : index
    %c0_100 = arith.constant 0 : index
    %81 = vector.load %arg23[%c0_98, %c15_99, %c0_100] : memref<6x21x128xbf16, #tpu.memory_space<vmem>>, vector<4x4x128xbf16>
    %c0_101 = arith.constant 0 : index
    %c16_102 = arith.constant 16 : index
    %c0_103 = arith.constant 0 : index
    %82 = vector.load %arg23[%c0_101, %c16_102, %c0_103] : memref<6x21x128xbf16, #tpu.memory_space<vmem>>, vector<4x4x128xbf16>
    %c0_104 = arith.constant 0 : index
    %c17_105 = arith.constant 17 : index
    %c0_106 = arith.constant 0 : index
    %83 = vector.load %arg23[%c0_104, %c17_105, %c0_106] : memref<6x21x128xbf16, #tpu.memory_space<vmem>>, vector<4x4x128xbf16>
    %c1_107 = arith.constant 1 : index
    %c15_108 = arith.constant 15 : index
    %c0_109 = arith.constant 0 : index
    %84 = vector.load %arg23[%c1_107, %c15_108, %c0_109] : memref<6x21x128xbf16, #tpu.memory_space<vmem>>, vector<4x4x128xbf16>
    %c1_110 = arith.constant 1 : index
    %c16_111 = arith.constant 16 : index
    %c0_112 = arith.constant 0 : index
    %85 = vector.load %arg23[%c1_110, %c16_111, %c0_112] : memref<6x21x128xbf16, #tpu.memory_space<vmem>>, vector<4x4x128xbf16>
    %c1_113 = arith.constant 1 : index
    %c17_114 = arith.constant 17 : index
    %c0_115 = arith.constant 0 : index
    %86 = vector.load %arg23[%c1_113, %c17_114, %c0_115] : memref<6x21x128xbf16, #tpu.memory_space<vmem>>, vector<4x4x128xbf16>
    %c2_116 = arith.constant 2 : index
    %c15_117 = arith.constant 15 : index
    %c0_118 = arith.constant 0 : index
    %87 = vector.load %arg23[%c2_116, %c15_117, %c0_118] : memref<6x21x128xbf16, #tpu.memory_space<vmem>>, vector<4x4x128xbf16>
    %c2_119 = arith.constant 2 : index
    %c16_120 = arith.constant 16 : index
    %c0_121 = arith.constant 0 : index
    %88 = vector.load %arg23[%c2_119, %c16_120, %c0_121] : memref<6x21x128xbf16, #tpu.memory_space<vmem>>, vector<4x4x128xbf16>
    %c2_122 = arith.constant 2 : index
    %c17_123 = arith.constant 17 : index
    %c0_124 = arith.constant 0 : index
    %89 = vector.load %arg23[%c2_122, %c17_123, %c0_124] : memref<6x21x128xbf16, #tpu.memory_space<vmem>>, vector<4x4x128xbf16>
    %90 = tpu.concatenate %81, %82, %83, %84, %85, %86, %87, %88, %89 in 2 : vector<4x4x128xbf16>, vector<4x4x128xbf16>, vector<4x4x128xbf16>, vector<4x4x128xbf16>, vector<4x4x128xbf16>, vector<4x4x128xbf16>, vector<4x4x128xbf16>, vector<4x4x128xbf16>, vector<4x4x128xbf16> -> vector<4x4x1152xbf16>
    %91 = vector.shape_cast %90 : vector<4x4x1152xbf16> to vector<16x1152xbf16>
    %c0_125 = arith.constant 0 : index
    %c0_126 = arith.constant 0 : index
    %92 = vector.load %arg10[%c0_125, %c0_126] : memref<1152x64xbf16, #tpu.memory_space<vmem>>, vector<1152x64xbf16>
    %cst_127 = arith.constant dense<0.000000e+00> : vector<16x64xf32>
    %93 = tpu.matmul %91, %92, %cst_127 {dimension_numbers = #tpu.dot_dimension_numbers<[1], [0], [0], [1], [0, 0, 1, 1], [], []>} : vector<16x1152xbf16>, vector<1152x64xbf16>, vector<16x64xf32> -> vector<16x64xf32>
    %94 = vector.shape_cast %93 : vector<16x64xf32> to vector<2x2x4x64xf32>
    %cst_128 = arith.constant dense<0xFF800000> : vector<2x4x64xf32>
    %95 = vector.multi_reduction <maximumf>, %94, %cst_128 [1] : vector<2x2x4x64xf32> to vector<2x4x64xf32>
    %96 = vector.shape_cast %95 : vector<2x4x64xf32> to vector<2x2x2x64xf32>
    %cst_129 = arith.constant dense<0xFF800000> : vector<2x2x64xf32>
    %97 = vector.multi_reduction <maximumf>, %96, %cst_129 [2] : vector<2x2x2x64xf32> to vector<2x2x64xf32>
    %c0_130 = arith.constant 0 : index
    %c0_131 = arith.constant 0 : index
    %98 = vector.load %arg11[%c0_130, %c0_131] : memref<1x64xf32, #tpu.memory_space<vmem>>, vector<1x64xf32>
    %99 = vector.shape_cast %98 : vector<1x64xf32> to vector<1x1x64xf32>
    %100 = vector.broadcast %99 : vector<1x1x64xf32> to vector<2x2x64xf32>
    %101 = arith.addf %97, %100 : vector<2x2x64xf32>
    %cst_132 = arith.constant 0.000000e+00 : f32
    %102 = vector.broadcast %cst_132 : f32 to vector<2x2x64xf32>
    %103 = arith.cmpf ogt, %101, %102 : vector<2x2x64xf32>
    %cst_133 = arith.constant 2.000000e-01 : f32
    %104 = vector.broadcast %cst_133 : f32 to vector<2x2x64xf32>
    %105 = arith.mulf %104, %101 : vector<2x2x64xf32>
    %106 = arith.select %103, %101, %105 : vector<2x2x64xi1>, vector<2x2x64xf32>
    %c0_134 = arith.constant 0 : index
    %c0_135 = arith.constant 0 : index
    %107 = vector.load %arg12[%c0_134, %c0_135] : memref<1x64xf32, #tpu.memory_space<vmem>>, vector<1x64xf32>
    %108 = vector.shape_cast %107 : vector<1x64xf32> to vector<1x1x64xf32>
    %109 = vector.broadcast %108 : vector<1x1x64xf32> to vector<2x2x64xf32>
    %110 = arith.mulf %106, %109 : vector<2x2x64xf32>
    %c0_136 = arith.constant 0 : index
    %c0_137 = arith.constant 0 : index
    %111 = vector.load %arg13[%c0_136, %c0_137] : memref<1x64xf32, #tpu.memory_space<vmem>>, vector<1x64xf32>
    %112 = vector.shape_cast %111 : vector<1x64xf32> to vector<1x1x64xf32>
    %113 = vector.broadcast %112 : vector<1x1x64xf32> to vector<2x2x64xf32>
    %114 = arith.addf %110, %113 : vector<2x2x64xf32>
    %115 = arith.truncf %114 : vector<2x2x64xf32> to vector<2x2x64xbf16>
    %cst_138 = arith.constant 0.000000e+00 : bf16
    %116 = vector.broadcast %cst_138 : bf16 to vector<4x19x128xbf16>
    %c0_139 = arith.constant 0 : index
    %c0_140 = arith.constant 0 : index
    %c0_141 = arith.constant 0 : index
    %117 = vector.load %arg24[%c0_139, %c0_140, %c0_141] : memref<4x19x128xbf16, #tpu.memory_space<vmem>>, vector<4x19x128xbf16>
    tpu.vector_store %arg24[%c0_139, %c0_140, %c0_141], %116 {strides = array<i32>} : memref<4x19x128xbf16, #tpu.memory_space<vmem>>, vector<4x19x128xbf16>,
    %c1_142 = arith.constant 1 : index
    %c16_143 = arith.constant 16 : index
    %c0_144 = arith.constant 0 : index
    %118 = vector.load %arg24[%c1_142, %c16_143, %c0_144] : memref<4x19x128xbf16, #tpu.memory_space<vmem>>, vector<2x2x64xbf16>
    tpu.vector_store %arg24[%c1_142, %c16_143, %c0_144], %115 {strides = array<i32>} : memref<4x19x128xbf16, #tpu.memory_space<vmem>>, vector<2x2x64xbf16>,
    %c0_145 = arith.constant 0 : index
    %c15_146 = arith.constant 15 : index
    %c0_147 = arith.constant 0 : index
    %119 = vector.load %arg24[%c0_145, %c15_146, %c0_147] : memref<4x19x128xbf16, #tpu.memory_space<vmem>>, vector<2x2x128xbf16>
    %c0_148 = arith.constant 0 : index
    %c16_149 = arith.constant 16 : index
    %c0_150 = arith.constant 0 : index
    %120 = vector.load %arg24[%c0_148, %c16_149, %c0_150] : memref<4x19x128xbf16, #tpu.memory_space<vmem>>, vector<2x2x128xbf16>
    %c0_151 = arith.constant 0 : index
    %c17_152 = arith.constant 17 : index
    %c0_153 = arith.constant 0 : index
    %121 = vector.load %arg24[%c0_151, %c17_152, %c0_153] : memref<4x19x128xbf16, #tpu.memory_space<vmem>>, vector<2x2x128xbf16>
    %c1_154 = arith.constant 1 : index
    %c15_155 = arith.constant 15 : index
    %c0_156 = arith.constant 0 : index
    %122 = vector.load %arg24[%c1_154, %c15_155, %c0_156] : memref<4x19x128xbf16, #tpu.memory_space<vmem>>, vector<2x2x128xbf16>
    %c1_157 = arith.constant 1 : index
    %c16_158 = arith.constant 16 : index
    %c0_159 = arith.constant 0 : index
    %123 = vector.load %arg24[%c1_157, %c16_158, %c0_159] : memref<4x19x128xbf16, #tpu.memory_space<vmem>>, vector<2x2x128xbf16>
    %c1_160 = arith.constant 1 : index
    %c17_161 = arith.constant 17 : index
    %c0_162 = arith.constant 0 : index
    %124 = vector.load %arg24[%c1_160, %c17_161, %c0_162] : memref<4x19x128xbf16, #tpu.memory_space<vmem>>, vector<2x2x128xbf16>
    %c2_163 = arith.constant 2 : index
    %c15_164 = arith.constant 15 : index
    %c0_165 = arith.constant 0 : index
    %125 = vector.load %arg24[%c2_163, %c15_164, %c0_165] : memref<4x19x128xbf16, #tpu.memory_space<vmem>>, vector<2x2x128xbf16>
    %c2_166 = arith.constant 2 : index
    %c16_167 = arith.constant 16 : index
    %c0_168 = arith.constant 0 : index
    %126 = vector.load %arg24[%c2_166, %c16_167, %c0_168] : memref<4x19x128xbf16, #tpu.memory_space<vmem>>, vector<2x2x128xbf16>
    %c2_169 = arith.constant 2 : index
    %c17_170 = arith.constant 17 : index
    %c0_171 = arith.constant 0 : index
    %127 = vector.load %arg24[%c2_169, %c17_170, %c0_171] : memref<4x19x128xbf16, #tpu.memory_space<vmem>>, vector<2x2x128xbf16>
    %128 = tpu.concatenate %119, %120, %121, %122, %123, %124, %125, %126, %127 in 2 : vector<2x2x128xbf16>, vector<2x2x128xbf16>, vector<2x2x128xbf16>, vector<2x2x128xbf16>, vector<2x2x128xbf16>, vector<2x2x128xbf16>, vector<2x2x128xbf16>, vector<2x2x128xbf16>, vector<2x2x128xbf16> -> vector<2x2x1152xbf16>
    %129 = vector.shape_cast %128 : vector<2x2x1152xbf16> to vector<4x1152xbf16>
    %c0_172 = arith.constant 0 : index
    %c0_173 = arith.constant 0 : index
    %130 = vector.load %arg14[%c0_172, %c0_173] : memref<1152x128xbf16, #tpu.memory_space<vmem>>, vector<1152x128xbf16>
    %cst_174 = arith.constant dense<0.000000e+00> : vector<4x128xf32>
    %131 = tpu.matmul %129, %130, %cst_174 {dimension_numbers = #tpu.dot_dimension_numbers<[1], [0], [0], [1], [0, 0, 1, 1], [], []>} : vector<4x1152xbf16>, vector<1152x128xbf16>, vector<4x128xf32> -> vector<4x128xf32>
    %132 = vector.shape_cast %131 : vector<4x128xf32> to vector<1x2x2x128xf32>
    %cst_175 = arith.constant dense<0xFF800000> : vector<1x2x128xf32>
    %133 = vector.multi_reduction <maximumf>, %132, %cst_175 [1] : vector<1x2x2x128xf32> to vector<1x2x128xf32>
    %134 = vector.shape_cast %133 : vector<1x2x128xf32> to vector<1x1x2x128xf32>
    %cst_176 = arith.constant dense<0xFF800000> : vector<1x1x128xf32>
    %135 = vector.multi_reduction <maximumf>, %134, %cst_176 [2] : vector<1x1x2x128xf32> to vector<1x1x128xf32>
    %c0_177 = arith.constant 0 : index
    %c0_178 = arith.constant 0 : index
    %136 = vector.load %arg15[%c0_177, %c0_178] : memref<1x128xf32, #tpu.memory_space<vmem>>, vector<1x128xf32>
    %137 = vector.shape_cast %136 : vector<1x128xf32> to vector<1x1x128xf32>
    %138 = arith.addf %135, %137 : vector<1x1x128xf32>
    %cst_179 = arith.constant 0.000000e+00 : f32
    %139 = vector.broadcast %cst_179 : f32 to vector<1x1x128xf32>
    %140 = arith.cmpf ogt, %138, %139 : vector<1x1x128xf32>
    %cst_180 = arith.constant 2.000000e-01 : f32
    %141 = vector.broadcast %cst_180 : f32 to vector<1x1x128xf32>
    %142 = arith.mulf %141, %138 : vector<1x1x128xf32>
    %143 = arith.select %140, %138, %142 : vector<1x1x128xi1>, vector<1x1x128xf32>
    %c0_181 = arith.constant 0 : index
    %c0_182 = arith.constant 0 : index
    %144 = vector.load %arg16[%c0_181, %c0_182] : memref<1x128xf32, #tpu.memory_space<vmem>>, vector<1x128xf32>
    %145 = vector.shape_cast %144 : vector<1x128xf32> to vector<1x1x128xf32>
    %146 = arith.mulf %143, %145 : vector<1x1x128xf32>
    %c0_183 = arith.constant 0 : index
    %c0_184 = arith.constant 0 : index
    %147 = vector.load %arg17[%c0_183, %c0_184] : memref<1x128xf32, #tpu.memory_space<vmem>>, vector<1x128xf32>
    %148 = vector.shape_cast %147 : vector<1x128xf32> to vector<1x1x128xf32>
    %149 = arith.addf %146, %148 : vector<1x1x128xf32>
    %c0_185 = arith.constant 0 : index
    %c0_186 = arith.constant 0 : index
    %c0_187 = arith.constant 0 : index
    %150 = vector.load %arg18[%c0_185, %c0_186, %c0_187] : memref<1x1x128xf32, #tpu.memory_space<vmem>>, vector<1x1x128xf32>
    %151 = arith.mulf %149, %150 : vector<1x1x128xf32>
    %152 = vector.shape_cast %151 : vector<1x1x128xf32> to vector<1x128xf32>
    %cst_188 = arith.constant dense<0.000000e+00> : vector<1xf32>
    %153 = vector.multi_reduction <add>, %152, %cst_188 [1] : vector<1x128xf32> to vector<1xf32>
    %154 = vector.shape_cast %153 : vector<1xf32> to vector<1x1xf32>
    %cst_189 = arith.constant dense<0.000000e+00> : vector<1xf32>
    %155 = vector.multi_reduction <add>, %154, %cst_189 [0] : vector<1x1xf32> to vector<1xf32>
    %156 = vector.shape_cast %155 : vector<1xf32> to vector<1x1xf32>
    %c0_190 = arith.constant 0 : index
    %c0_191 = arith.constant 0 : index
    %157 = vector.load %arg19[%c0_190, %c0_191] : memref<1x1xf32, #tpu.memory_space<vmem>>, vector<1x1xf32>
    %158 = arith.addf %156, %157 : vector<1x1xf32>
    %159 = arith.negf %158 : vector<1x1xf32>
    %160 = math.exp %159 : vector<1x1xf32>
    %cst_192 = arith.constant 1.000000e+00 : f32
    %161 = vector.broadcast %cst_192 : f32 to vector<1x1xf32>
    %162 = arith.addf %161, %160 : vector<1x1xf32>
    %163 = arith.divf %161, %162 : vector<1x1xf32>
    %c0_193 = arith.constant 0 : index
    %c0_194 = arith.constant 0 : index
    %c0_195 = arith.constant 0 : index
    %164 = vector.load %arg20[%c0_193, %c0_194, %c0_195] : memref<1x1x1xf32, #tpu.memory_space<vmem>>, vector<1x1x1xf32>
    %165 = vector.shape_cast %164 : vector<1x1x1xf32> to vector<1x1xf32>
    %166 = vector.shape_cast %163 : vector<1x1xf32> to vector<1x1x1xf32>
    tpu.vector_store %arg20[%c0_193, %c0_194, %c0_195], %166 {strides = array<i32>} : memref<1x1x1xf32, #tpu.memory_space<vmem>>, vector<1x1x1xf32>,
    return
  }
  func.func @transform_0(%arg0: i32) -> (i32, i32, i32, i32) {
    %c0_i32 = arith.constant 0 : i32
    %c0_i32_0 = arith.constant 0 : i32
    %c0_i32_1 = arith.constant 0 : i32
    %c0_i32_2 = arith.constant 0 : i32
    return %arg0, %c0_i32, %c0_i32_0, %c0_i32_1 : i32, i32, i32, i32
  }
  func.func @transform_1(%arg0: i32) -> (i32, i32) {
    %c0_i32 = arith.constant 0 : i32
    %c0_i32_0 = arith.constant 0 : i32
    %c0_i32_1 = arith.constant 0 : i32
    return %c0_i32, %c0_i32_0 : i32, i32
  }
  func.func @transform_2(%arg0: i32) -> (i32, i32) {
    %c0_i32 = arith.constant 0 : i32
    %c0_i32_0 = arith.constant 0 : i32
    %c0_i32_1 = arith.constant 0 : i32
    return %c0_i32, %c0_i32_0 : i32, i32
  }
  func.func @transform_3(%arg0: i32) -> (i32, i32) {
    %c0_i32 = arith.constant 0 : i32
    %c0_i32_0 = arith.constant 0 : i32
    %c0_i32_1 = arith.constant 0 : i32
    return %c0_i32, %c0_i32_0 : i32, i32
  }
  func.func @transform_4(%arg0: i32) -> (i32, i32) {
    %c0_i32 = arith.constant 0 : i32
    %c0_i32_0 = arith.constant 0 : i32
    %c0_i32_1 = arith.constant 0 : i32
    return %c0_i32, %c0_i32_0 : i32, i32
  }
  func.func @transform_5(%arg0: i32) -> (i32, i32) {
    %c0_i32 = arith.constant 0 : i32
    %c0_i32_0 = arith.constant 0 : i32
    %c0_i32_1 = arith.constant 0 : i32
    return %c0_i32, %c0_i32_0 : i32, i32
  }
  func.func @transform_6(%arg0: i32) -> (i32, i32) {
    %c0_i32 = arith.constant 0 : i32
    %c0_i32_0 = arith.constant 0 : i32
    %c0_i32_1 = arith.constant 0 : i32
    return %c0_i32, %c0_i32_0 : i32, i32
  }
  func.func @transform_7(%arg0: i32) -> (i32, i32) {
    %c0_i32 = arith.constant 0 : i32
    %c0_i32_0 = arith.constant 0 : i32
    %c0_i32_1 = arith.constant 0 : i32
    return %c0_i32, %c0_i32_0 : i32, i32
  }
  func.func @transform_8(%arg0: i32) -> (i32, i32) {
    %c0_i32 = arith.constant 0 : i32
    %c0_i32_0 = arith.constant 0 : i32
    %c0_i32_1 = arith.constant 0 : i32
    return %c0_i32, %c0_i32_0 : i32, i32
  }
  func.func @transform_9(%arg0: i32) -> (i32, i32) {
    %c0_i32 = arith.constant 0 : i32
    %c0_i32_0 = arith.constant 0 : i32
    %c0_i32_1 = arith.constant 0 : i32
    return %c0_i32, %c0_i32_0 : i32, i32
  }
  func.func @transform_10(%arg0: i32) -> (i32, i32) {
    %c0_i32 = arith.constant 0 : i32
    %c0_i32_0 = arith.constant 0 : i32
    %c0_i32_1 = arith.constant 0 : i32
    return %c0_i32, %c0_i32_0 : i32, i32
  }
  func.func @transform_11(%arg0: i32) -> (i32, i32) {
    %c0_i32 = arith.constant 0 : i32
    %c0_i32_0 = arith.constant 0 : i32
    %c0_i32_1 = arith.constant 0 : i32
    return %c0_i32, %c0_i32_0 : i32, i32
  }
  func.func @transform_12(%arg0: i32) -> (i32, i32) {
    %c0_i32 = arith.constant 0 : i32
    %c0_i32_0 = arith.constant 0 : i32
    %c0_i32_1 = arith.constant 0 : i32
    return %c0_i32, %c0_i32_0 : i32, i32
  }
  func.func @transform_13(%arg0: i32) -> (i32, i32) {
    %c0_i32 = arith.constant 0 : i32
    %c0_i32_0 = arith.constant 0 : i32
    %c0_i32_1 = arith.constant 0 : i32
    return %c0_i32, %c0_i32_0 : i32, i32
  }
  func.func @transform_14(%arg0: i32) -> (i32, i32) {
    %c0_i32 = arith.constant 0 : i32
    %c0_i32_0 = arith.constant 0 : i32
    %c0_i32_1 = arith.constant 0 : i32
    return %c0_i32, %c0_i32_0 : i32, i32
  }
  func.func @transform_15(%arg0: i32) -> (i32, i32) {
    %c0_i32 = arith.constant 0 : i32
    %c0_i32_0 = arith.constant 0 : i32
    %c0_i32_1 = arith.constant 0 : i32
    return %c0_i32, %c0_i32_0 : i32, i32
  }
  func.func @transform_16(%arg0: i32) -> (i32, i32) {
    %c0_i32 = arith.constant 0 : i32
    %c0_i32_0 = arith.constant 0 : i32
    %c0_i32_1 = arith.constant 0 : i32
    return %c0_i32, %c0_i32_0 : i32, i32
  }
  func.func @transform_17(%arg0: i32) -> (i32, i32, i32) {
    %c0_i32 = arith.constant 0 : i32
    %c0_i32_0 = arith.constant 0 : i32
    %c0_i32_1 = arith.constant 0 : i32
    %c0_i32_2 = arith.constant 0 : i32
    return %c0_i32, %c0_i32_0, %c0_i32_1 : i32, i32, i32
  }
  func.func @transform_18(%arg0: i32) -> (i32, i32) {
    %c0_i32 = arith.constant 0 : i32
    %c0_i32_0 = arith.constant 0 : i32
    %c0_i32_1 = arith.constant 0 : i32
    return %c0_i32, %c0_i32_0 : i32, i32
  }
  func.func @transform_19(%arg0: i32) -> (i32, i32, i32) {
    %c0_i32 = arith.constant 0 : i32
    %c0_i32_0 = arith.constant 0 : i32
    %c0_i32_1 = arith.constant 0 : i32
    return %arg0, %c0_i32, %c0_i32_0 : i32, i32, i32
  }
}

</mosaic_0001>

<llo_original>
// kernel: tpu_custom_call.1
$region0: #{tpu_custom_call.1}
  #allocation0 [shape = 'u32[]', space=smem, size = 0x4, offset = 0x4, fixed_abs, tag = 'smem constant byte address 0x4 - core index']
  #allocation1 [shape = 'u32[144,128]{1,0:T(1,128)}', space=vmem, size = 0x12000, scoped, tag = 'internal scratch']
  #allocation2 [shape = 'bf16[18,33,128]{2,1,0:T(8,128)(2,1)}', space=vmem, size = 0x2d000, scoped, tag = 'scratch operand']
  #allocation3 [shape = 'bf16[10,25,128]{2,1,0:T(8,128)(2,1)}', space=vmem, size = 0x14000, scoped, tag = 'scratch operand']
  #allocation4 [shape = 'bf16[6,21,128]{2,1,0:T(8,128)(2,1)}', space=vmem, size = 0x9000, scoped, tag = 'scratch operand']
  #allocation5 [shape = 'bf16[4,19,128]{2,1,0:T(8,128)(2,1)}', space=vmem, size = 0x6000, scoped, tag = 'scratch operand']
  #allocation6 [shape = 'f32[1,1]{1,0:T(1,128)S(1)}', space=vmem, size = 0x200, scoped, tag = 'scoped memory for tpu_custom_call.1']
  %s0 = inlined_call_operand.vmem [shape: bf16[2,16,16,3], index: 0, kind: input, shape index: {}]
  %s1 = inlined_call_operand.vmem [shape: bf16[1152,16], index: 1, kind: input, shape index: {}]
  %s2 = inlined_call_operand.vmem [shape: f32[1,16], index: 2, kind: input, shape index: {}]
  %s3 = inlined_call_operand.vmem [shape: f32[1,16], index: 3, kind: input, shape index: {}]
  %s4 = inlined_call_operand.vmem [shape: f32[1,16], index: 4, kind: input, shape index: {}]
  %s5 = inlined_call_operand.vmem [shape: bf16[1152,32], index: 5, kind: input, shape index: {}]
  %s6 = inlined_call_operand.vmem [shape: f32[1,32], index: 6, kind: input, shape index: {}]
  %s7 = inlined_call_operand.vmem [shape: f32[1,32], index: 7, kind: input, shape index: {}]
  %s8 = inlined_call_operand.vmem [shape: f32[1,32], index: 8, kind: input, shape index: {}]
  %s9 = inlined_call_operand.vmem [shape: bf16[1152,64], index: 9, kind: input, shape index: {}]
  %s10 = inlined_call_operand.vmem [shape: f32[1,64], index: 10, kind: input, shape index: {}]
  %s11 = inlined_call_operand.vmem [shape: f32[1,64], index: 11, kind: input, shape index: {}]
  %s12 = inlined_call_operand.vmem [shape: f32[1,64], index: 12, kind: input, shape index: {}]
  %s13 = inlined_call_operand.vmem [shape: bf16[1152,128], index: 13, kind: input, shape index: {}]
  %s14 = inlined_call_operand.vmem [shape: f32[1,128], index: 14, kind: input, shape index: {}]
  %s15 = inlined_call_operand.vmem [shape: f32[1,128], index: 15, kind: input, shape index: {}]
  %s16 = inlined_call_operand.vmem [shape: f32[1,128], index: 16, kind: input, shape index: {}]
  %s17 = inlined_call_operand.vmem [shape: f32[1,1,128], index: 17, kind: input, shape index: {}]
  %s18 = inlined_call_operand.<no memory space> [shape: f32[1,1], index: 18, kind: input, shape index: {}]
  %s19 = inlined_call_operand.vmem [shape: f32[2,1,1], index: 19, kind: output, shape index: {}]
  %s20 = sld [smem:[#allocation0]]
  $region109: #{tpu_custom_call.1} parent=0
    _
  %s22 = ssub.s32 1, %s20
  %s23 = scalar_select 0, %s22, %s20
  %v24 = vstv %s18
  %25 = vst [vmem:[#allocation6] sm:$0x1] %v24
  loop: start=0, step=1, limit=4
  $region2: #{tpu_custom_call.1} parent=0 // loop_pre_header
    _
  $region3: #{tpu_custom_call.1} parent=0 // loop_header
    %s27 = sphi 0, %s31
    %p28 = scmp.ge.s32.totalorder %s27, 4
    %s37 = sphi 0, %s39
    %s40 = sphi 0, %s37
    %s41 = sphi 0, %s40
    %s57 = sphi 0, %s41
    %s61 = sphi 0, %s61
    %s63 = sphi 0, %s61
    %s64 = sphi 0, %s63
    %s78 = sphi 0, %s64
    %s82 = sphi 0, %s82
    %s84 = sphi 0, %s82
    %s85 = sphi 0, %s84
    %s99 = sphi 0, %s85
    %s103 = sphi 0, %s103
    %s105 = sphi 0, %s103
    %s106 = sphi 0, %s105
    %s120 = sphi 0, %s106
    %s124 = sphi 0, %s124
    %s126 = sphi 0, %s124
    %s127 = sphi 0, %s126
    %s141 = sphi 0, %s127
    %s145 = sphi 0, %s145
    %s147 = sphi 0, %s145
    %s148 = sphi 0, %s147
    %s162 = sphi 0, %s148
    %s166 = sphi 0, %s166
    %s168 = sphi 0, %s166
    %s169 = sphi 0, %s168
    %s183 = sphi 0, %s169
    %s187 = sphi 0, %s187
    %s189 = sphi 0, %s187
    %s190 = sphi 0, %s189
    %s204 = sphi 0, %s190
    %s208 = sphi 0, %s208
    %s210 = sphi 0, %s208
    %s211 = sphi 0, %s210
    %s225 = sphi 0, %s211
    %s229 = sphi 0, %s229
    %s231 = sphi 0, %s229
    %s232 = sphi 0, %s231
    %s246 = sphi 0, %s232
    %s250 = sphi 0, %s250
    %s252 = sphi 0, %s250
    %s253 = sphi 0, %s252
    %s267 = sphi 0, %s253
    %s271 = sphi 0, %s271
    %s273 = sphi 0, %s271
    %s274 = sphi 0, %s273
    %s288 = sphi 0, %s274
    %s292 = sphi 0, %s292
    %s294 = sphi 0, %s292
    %s295 = sphi 0, %s294
    %s309 = sphi 0, %s295
    %s313 = sphi 0, %s313
    %s315 = sphi 0, %s313
    %s316 = sphi 0, %s315
    %s330 = sphi 0, %s316
    %s334 = sphi 0, %s334
    %s336 = sphi 0, %s334
    %s337 = sphi 0, %s336
    %s351 = sphi 0, %s337
    %s355 = sphi 0, %s355
    %s357 = sphi 0, %s355
    %s358 = sphi 0, %s357
    %s372 = sphi 0, %s358
    %s376 = sphi 0, %s376
    %s378 = sphi 0, %s376
    %s379 = sphi 0, %s378
    %s393 = sphi 0, %s379
    %s397 = sphi 0, %s397
    %s399 = sphi 0, %s397
    %s400 = sphi 0, %s399
    %s414 = sphi 0, %s400
    %s418 = sphi 0, %s418
    %s420 = sphi 0, %s418
    %s421 = sphi 0, %s420
    %s435 = sphi 0, %s421
    %s441 = sphi 0, %s443
    %s444 = sphi 0, %s441
    %s445 = sphi 0, %s444
    %s461 = sphi 0, %s445
  $region4: #{tpu_custom_call.1} parent=0 // loop_header_branch
    %30 = sbr.rel (%p28) target = $region8
  $region5: #{tpu_custom_call.1} parent=0 // loop_body
    %s32 = ssub.s32 %s27, 1
    %s33 = ssub.s32 %s27, 2
    %s34 = sadd.s32 %s27, 1
    %s35 = ssub.s32 %s27, %s34
    %p36 = scmp.eq.s32.totalorder %s35, 0
    %s38 = sadd.s32 %s37, 1
    %s39 = scalar_select %p36, %s37, %s38
    %p42 = pneg %p36
    %p43 = scmp.eq.s32.totalorder %s27, 1
    %p44 = por %p42, %p43
    %p45 = scmp.ne.s32.totalorder %s37, %s40
    %p46 = scmp.eq.s32.totalorder %s27, 0
    %p47 = por %p45, %p46
    %p48 = scmp.ne.s32.totalorder %s37, %s40
    %p49 = scmp.eq.s32.totalorder %s32, 1
    %p50 = por %p48, %p49
    %p51 = scmp.ne.s32.totalorder %s40, %s41
    %p52 = scmp.eq.s32.totalorder %s32, 0
    %p53 = por %p51, %p52
    %p54 = scmp.ne.s32.totalorder %s40, %s41
    %p55 = scmp.eq.s32.totalorder %s33, 1
    %p56 = por %p54, %p55
    %p58 = scmp.ne.s32.totalorder %s41, %s57
    %p59 = scmp.eq.s32.totalorder %s33, 0
    %p60 = por %p58, %p59
    %s62 = sadd.s32 %s61, 1
    %p65 = scmp.eq.s32.totalorder %s27, 1
    %p66 = scmp.ne.s32.totalorder %s61, %s63
    %p67 = scmp.eq.s32.totalorder %s27, 0
    %p68 = por %p66, %p67
    %p69 = scmp.ne.s32.totalorder %s61, %s63
    %p70 = scmp.eq.s32.totalorder %s32, 1
    %p71 = por %p69, %p70
    %p72 = scmp.ne.s32.totalorder %s63, %s64
    %p73 = scmp.eq.s32.totalorder %s32, 0
    %p74 = por %p72, %p73
    %p75 = scmp.ne.s32.totalorder %s63, %s64
    %p76 = scmp.eq.s32.totalorder %s33, 1
    %p77 = por %p75, %p76
    %p79 = scmp.ne.s32.totalorder %s64, %s78
    %p80 = scmp.eq.s32.totalorder %s33, 0
    %p81 = por %p79, %p80
    %s83 = sadd.s32 %s82, 1
    %p86 = scmp.eq.s32.totalorder %s27, 1
    %p87 = scmp.ne.s32.totalorder %s82, %s84
    %p88 = scmp.eq.s32.totalorder %s27, 0
    %p89 = por %p87, %p88
    %p90 = scmp.ne.s32.totalorder %s82, %s84
    %p91 = scmp.eq.s32.totalorder %s32, 1
    %p92 = por %p90, %p91
    %p93 = scmp.ne.s32.totalorder %s84, %s85
    %p94 = scmp.eq.s32.totalorder %s32, 0
    %p95 = por %p93, %p94
    %p96 = scmp.ne.s32.totalorder %s84, %s85
    %p97 = scmp.eq.s32.totalorder %s33, 1
    %p98 = por %p96, %p97
    %p100 = scmp.ne.s32.totalorder %s85, %s99
    %p101 = scmp.eq.s32.totalorder %s33, 0
    %p102 = por %p100, %p101
    %s104 = sadd.s32 %s103, 1
    %p107 = scmp.eq.s32.totalorder %s27, 1
    %p108 = scmp.ne.s32.totalorder %s103, %s105
    %p109 = scmp.eq.s32.totalorder %s27, 0
    %p110 = por %p108, %p109
    %p111 = scmp.ne.s32.totalorder %s103, %s105
    %p112 = scmp.eq.s32.totalorder %s32, 1
    %p113 = por %p111, %p112
    %p114 = scmp.ne.s32.totalorder %s105, %s106
    %p115 = scmp.eq.s32.totalorder %s32, 0
    %p116 = por %p114, %p115
    %p117 = scmp.ne.s32.totalorder %s105, %s106
    %p118 = scmp.eq.s32.totalorder %s33, 1
    %p119 = por %p117, %p118
    %p121 = scmp.ne.s32.totalorder %s106, %s120
    %p122 = scmp.eq.s32.totalorder %s33, 0
    %p123 = por %p121, %p122
    %s125 = sadd.s32 %s124, 1
    %p128 = scmp.eq.s32.totalorder %s27, 1
    %p129 = scmp.ne.s32.totalorder %s124, %s126
    %p130 = scmp.eq.s32.totalorder %s27, 0
    %p131 = por %p129, %p130
    %p132 = scmp.ne.s32.totalorder %s124, %s126
    %p133 = scmp.eq.s32.totalorder %s32, 1
    %p134 = por %p132, %p133
    %p135 = scmp.ne.s32.totalorder %s126, %s127
    %p136 = scmp.eq.s32.totalorder %s32, 0
    %p137 = por %p135, %p136
    %p138 = scmp.ne.s32.totalorder %s126, %s127
    %p139 = scmp.eq.s32.totalorder %s33, 1
    %p140 = por %p138, %p139
    %p142 = scmp.ne.s32.totalorder %s127, %s141
    %p143 = scmp.eq.s32.totalorder %s33, 0
    %p144 = por %p142, %p143
    %s146 = sadd.s32 %s145, 1
    %p149 = scmp.eq.s32.totalorder %s27, 1
    %p150 = scmp.ne.s32.totalorder %s145, %s147
    %p151 = scmp.eq.s32.totalorder %s27, 0
    %p152 = por %p150, %p151
    %p153 = scmp.ne.s32.totalorder %s145, %s147
    %p154 = scmp.eq.s32.totalorder %s32, 1
    %p155 = por %p153, %p154
    %p156 = scmp.ne.s32.totalorder %s147, %s148
    %p157 = scmp.eq.s32.totalorder %s32, 0
    %p158 = por %p156, %p157
    %p159 = scmp.ne.s32.totalorder %s147, %s148
    %p160 = scmp.eq.s32.totalorder %s33, 1
    %p161 = por %p159, %p160
    %p163 = scmp.ne.s32.totalorder %s148, %s162
    %p164 = scmp.eq.s32.totalorder %s33, 0
    %p165 = por %p163, %p164
    %s167 = sadd.s32 %s166, 1
    %p170 = scmp.eq.s32.totalorder %s27, 1
    %p171 = scmp.ne.s32.totalorder %s166, %s168
    %p172 = scmp.eq.s32.totalorder %s27, 0
    %p173 = por %p171, %p172
    %p174 = scmp.ne.s32.totalorder %s166, %s168
    %p175 = scmp.eq.s32.totalorder %s32, 1
    %p176 = por %p174, %p175
    %p177 = scmp.ne.s32.totalorder %s168, %s169
    %p178 = scmp.eq.s32.totalorder %s32, 0
    %p179 = por %p177, %p178
    %p180 = scmp.ne.s32.totalorder %s168, %s169
    %p181 = scmp.eq.s32.totalorder %s33, 1
    %p182 = por %p180, %p181
    %p184 = scmp.ne.s32.totalorder %s169, %s183
    %p185 = scmp.eq.s32.totalorder %s33, 0
    %p186 = por %p184, %p185
    %s188 = sadd.s32 %s187, 1
    %p191 = scmp.eq.s32.totalorder %s27, 1
    %p192 = scmp.ne.s32.totalorder %s187, %s189
    %p193 = scmp.eq.s32.totalorder %s27, 0
    %p194 = por %p192, %p193
    %p195 = scmp.ne.s32.totalorder %s187, %s189
    %p196 = scmp.eq.s32.totalorder %s32, 1
    %p197 = por %p195, %p196
    %p198 = scmp.ne.s32.totalorder %s189, %s190
    %p199 = scmp.eq.s32.totalorder %s32, 0
    %p200 = por %p198, %p199
    %p201 = scmp.ne.s32.totalorder %s189, %s190
    %p202 = scmp.eq.s32.totalorder %s33, 1
    %p203 = por %p201, %p202
    %p205 = scmp.ne.s32.totalorder %s190, %s204
    %p206 = scmp.eq.s32.totalorder %s33, 0
    %p207 = por %p205, %p206
    %s209 = sadd.s32 %s208, 1
    %p212 = scmp.eq.s32.totalorder %s27, 1
    %p213 = scmp.ne.s32.totalorder %s208, %s210
    %p214 = scmp.eq.s32.totalorder %s27, 0
    %p215 = por %p213, %p214
    %p216 = scmp.ne.s32.totalorder %s208, %s210
    %p217 = scmp.eq.s32.totalorder %s32, 1
    %p218 = por %p216, %p217
    %p219 = scmp.ne.s32.totalorder %s210, %s211
    %p220 = scmp.eq.s32.totalorder %s32, 0
    %p221 = por %p219, %p220
    %p222 = scmp.ne.s32.totalorder %s210, %s211
    %p223 = scmp.eq.s32.totalorder %s33, 1
    %p224 = por %p222, %p223
    %p226 = scmp.ne.s32.totalorder %s211, %s225
    %p227 = scmp.eq.s32.totalorder %s33, 0
    %p228 = por %p226, %p227
    %s230 = sadd.s32 %s229, 1
    %p233 = scmp.eq.s32.totalorder %s27, 1
    %p234 = scmp.ne.s32.totalorder %s229, %s231
    %p235 = scmp.eq.s32.totalorder %s27, 0
    %p236 = por %p234, %p235
    %p237 = scmp.ne.s32.totalorder %s229, %s231
    %p238 = scmp.eq.s32.totalorder %s32, 1
    %p239 = por %p237, %p238
    %p240 = scmp.ne.s32.totalorder %s231, %s232
    %p241 = scmp.eq.s32.totalorder %s32, 0
    %p242 = por %p240, %p241
    %p243 = scmp.ne.s32.totalorder %s231, %s232
    %p244 = scmp.eq.s32.totalorder %s33, 1
    %p245 = por %p243, %p244
    %p247 = scmp.ne.s32.totalorder %s232, %s246
    %p248 = scmp.eq.s32.totalorder %s33, 0
    %p249 = por %p247, %p248
    %s251 = sadd.s32 %s250, 1
    %p254 = scmp.eq.s32.totalorder %s27, 1
    %p255 = scmp.ne.s32.totalorder %s250, %s252
    %p256 = scmp.eq.s32.totalorder %s27, 0
    %p257 = por %p255, %p256
    %p258 = scmp.ne.s32.totalorder %s250, %s252
    %p259 = scmp.eq.s32.totalorder %s32, 1
    %p260 = por %p258, %p259
    %p261 = scmp.ne.s32.totalorder %s252, %s253
    %p262 = scmp.eq.s32.totalorder %s32, 0
    %p263 = por %p261, %p262
    %p264 = scmp.ne.s32.totalorder %s252, %s253
    %p265 = scmp.eq.s32.totalorder %s33, 1
    %p266 = por %p264, %p265
    %p268 = scmp.ne.s32.totalorder %s253, %s267
    %p269 = scmp.eq.s32.totalorder %s33, 0
    %p270 = por %p268, %p269
    %s272 = sadd.s32 %s271, 1
    %p275 = scmp.eq.s32.totalorder %s27, 1
    %p276 = scmp.ne.s32.totalorder %s271, %s273
    %p277 = scmp.eq.s32.totalorder %s27, 0
    %p278 = por %p276, %p277
    %p279 = scmp.ne.s32.totalorder %s271, %s273
    %p280 = scmp.eq.s32.totalorder %s32, 1
    %p281 = por %p279, %p280
    %p282 = scmp.ne.s32.totalorder %s273, %s274
    %p283 = scmp.eq.s32.totalorder %s32, 0
    %p284 = por %p282, %p283
    %p285 = scmp.ne.s32.totalorder %s273, %s274
    %p286 = scmp.eq.s32.totalorder %s33, 1
    %p287 = por %p285, %p286
    %p289 = scmp.ne.s32.totalorder %s274, %s288
    %p290 = scmp.eq.s32.totalorder %s33, 0
    %p291 = por %p289, %p290
    %s293 = sadd.s32 %s292, 1
    %p296 = scmp.eq.s32.totalorder %s27, 1
    %p297 = scmp.ne.s32.totalorder %s292, %s294
    %p298 = scmp.eq.s32.totalorder %s27, 0
    %p299 = por %p297, %p298
    %p300 = scmp.ne.s32.totalorder %s292, %s294
    %p301 = scmp.eq.s32.totalorder %s32, 1
    %p302 = por %p300, %p301
    %p303 = scmp.ne.s32.totalorder %s294, %s295
    %p304 = scmp.eq.s32.totalorder %s32, 0
    %p305 = por %p303, %p304
    %p306 = scmp.ne.s32.totalorder %s294, %s295
    %p307 = scmp.eq.s32.totalorder %s33, 1
    %p308 = por %p306, %p307
    %p310 = scmp.ne.s32.totalorder %s295, %s309
    %p311 = scmp.eq.s32.totalorder %s33, 0
    %p312 = por %p310, %p311
    %s314 = sadd.s32 %s313, 1
    %p317 = scmp.eq.s32.totalorder %s27, 1
    %p318 = scmp.ne.s32.totalorder %s313, %s315
    %p319 = scmp.eq.s32.totalorder %s27, 0
    %p320 = por %p318, %p319
    %p321 = scmp.ne.s32.totalorder %s313, %s315
    %p322 = scmp.eq.s32.totalorder %s32, 1
    %p323 = por %p321, %p322
    %p324 = scmp.ne.s32.totalorder %s315, %s316
    %p325 = scmp.eq.s32.totalorder %s32, 0
    %p326 = por %p324, %p325
    %p327 = scmp.ne.s32.totalorder %s315, %s316
    %p328 = scmp.eq.s32.totalorder %s33, 1
    %p329 = por %p327, %p328
    %p331 = scmp.ne.s32.totalorder %s316, %s330
    %p332 = scmp.eq.s32.totalorder %s33, 0
    %p333 = por %p331, %p332
    %s335 = sadd.s32 %s334, 1
    %p338 = scmp.eq.s32.totalorder %s27, 1
    %p339 = scmp.ne.s32.totalorder %s334, %s336
    %p340 = scmp.eq.s32.totalorder %s27, 0
    %p341 = por %p339, %p340
    %p342 = scmp.ne.s32.totalorder %s334, %s336
    %p343 = scmp.eq.s32.totalorder %s32, 1
    %p344 = por %p342, %p343
    %p345 = scmp.ne.s32.totalorder %s336, %s337
    %p346 = scmp.eq.s32.totalorder %s32, 0
    %p347 = por %p345, %p346
    %p348 = scmp.ne.s32.totalorder %s336, %s337
    %p349 = scmp.eq.s32.totalorder %s33, 1
    %p350 = por %p348, %p349
    %p352 = scmp.ne.s32.totalorder %s337, %s351
    %p353 = scmp.eq.s32.totalorder %s33, 0
    %p354 = por %p352, %p353
    %s356 = sadd.s32 %s355, 1
    %p359 = scmp.eq.s32.totalorder %s27, 1
    %p360 = scmp.ne.s32.totalorder %s355, %s357
    %p361 = scmp.eq.s32.totalorder %s27, 0
    %p362 = por %p360, %p361
    %p363 = scmp.ne.s32.totalorder %s355, %s357
    %p364 = scmp.eq.s32.totalorder %s32, 1
    %p365 = por %p363, %p364
    %p366 = scmp.ne.s32.totalorder %s357, %s358
    %p367 = scmp.eq.s32.totalorder %s32, 0
    %p368 = por %p366, %p367
    %p369 = scmp.ne.s32.totalorder %s357, %s358
    %p370 = scmp.eq.s32.totalorder %s33, 1
    %p371 = por %p369, %p370
    %p373 = scmp.ne.s32.totalorder %s358, %s372
    %p374 = scmp.eq.s32.totalorder %s33, 0
    %p375 = por %p373, %p374
    %s377 = sadd.s32 %s376, 1
    %p380 = scmp.eq.s32.totalorder %s27, 1
    %p381 = scmp.ne.s32.totalorder %s376, %s378
    %p382 = scmp.eq.s32.totalorder %s27, 0
    %p383 = por %p381, %p382
    %p384 = scmp.ne.s32.totalorder %s376, %s378
    %p385 = scmp.eq.s32.totalorder %s32, 1
    %p386 = por %p384, %p385
    %p387 = scmp.ne.s32.totalorder %s378, %s379
    %p388 = scmp.eq.s32.totalorder %s32, 0
    %p389 = por %p387, %p388
    %p390 = scmp.ne.s32.totalorder %s378, %s379
    %p391 = scmp.eq.s32.totalorder %s33, 1
    %p392 = por %p390, %p391
    %p394 = scmp.ne.s32.totalorder %s379, %s393
    %p395 = scmp.eq.s32.totalorder %s33, 0
    %p396 = por %p394, %p395
    %s398 = sadd.s32 %s397, 1
    %p401 = scmp.eq.s32.totalorder %s27, 1
    %p402 = scmp.ne.s32.totalorder %s397, %s399
    %p403 = scmp.eq.s32.totalorder %s27, 0
    %p404 = por %p402, %p403
    %p405 = scmp.ne.s32.totalorder %s397, %s399
    %p406 = scmp.eq.s32.totalorder %s32, 1
    %p407 = por %p405, %p406
    %p408 = scmp.ne.s32.totalorder %s399, %s400
    %p409 = scmp.eq.s32.totalorder %s32, 0
    %p410 = por %p408, %p409
    %p411 = scmp.ne.s32.totalorder %s399, %s400
    %p412 = scmp.eq.s32.totalorder %s33, 1
    %p413 = por %p411, %p412
    %p415 = scmp.ne.s32.totalorder %s400, %s414
    %p416 = scmp.eq.s32.totalorder %s33, 0
    %p417 = por %p415, %p416
    %s419 = sadd.s32 %s418, 1
    %p422 = scmp.eq.s32.totalorder %s27, 1
    %p423 = scmp.ne.s32.totalorder %s418, %s420
    %p424 = scmp.eq.s32.totalorder %s27, 0
    %p425 = por %p423, %p424
    %p426 = scmp.ne.s32.totalorder %s418, %s420
    %p427 = scmp.eq.s32.totalorder %s32, 1
    %p428 = por %p426, %p427
    %p429 = scmp.ne.s32.totalorder %s420, %s421
    %p430 = scmp.eq.s32.totalorder %s32, 0
    %p431 = por %p429, %p430
    %p432 = scmp.ne.s32.totalorder %s420, %s421
    %p433 = scmp.eq.s32.totalorder %s33, 1
    %p434 = por %p432, %p433
    %p436 = scmp.ne.s32.totalorder %s421, %s435
    %p437 = scmp.eq.s32.totalorder %s33, 0
    %p438 = por %p436, %p437
    %s439 = ssub.s32 %s27, %s34
    %p440 = scmp.eq.s32.totalorder %s439, 0
    %s442 = sadd.s32 %s441, 1
    %s443 = scalar_select %p440, %s441, %s442
    %p446 = pneg %p440
    %p447 = scmp.eq.s32.totalorder %s27, 1
    %p448 = por %p446, %p447
    %p449 = scmp.ne.s32.totalorder %s441, %s444
    %p450 = scmp.eq.s32.totalorder %s27, 0
    %p451 = por %p449, %p450
    %p452 = scmp.ne.s32.totalorder %s441, %s444
    %p453 = scmp.eq.s32.totalorder %s32, 1
    %p454 = por %p452, %p453
    %p455 = scmp.ne.s32.totalorder %s444, %s445
    %p456 = scmp.eq.s32.totalorder %s32, 0
    %p457 = por %p455, %p456
    %p458 = scmp.ne.s32.totalorder %s444, %s445
    %p459 = scmp.eq.s32.totalorder %s33, 1
    %p460 = por %p458, %p459
    %p462 = scmp.ne.s32.totalorder %s445, %s461
    %p463 = scmp.eq.s32.totalorder %s33, 0
    %p464 = por %p462, %p463
    %p465 = scmp.le.s32.totalorder 1, %s27
    %p466 = scmp.lt.s32.totalorder %s27, 3
    %p467 = pnand %p465, %p466
    %p468 = pneg %p467
    // Predicated region
    $region9: #{tpu_custom_call.1} parent=5 // pred_check
      _
    $region10: #{tpu_custom_call.1} parent=5 // pred_check_branch
      %470 = sbr.rel (%p467) target = $region12
    $region11: #{tpu_custom_call.1} parent=5 // pred_region
      %s471 = ssub.s32 %s27, 1
      // Predicated region
      $region13: #{tpu_custom_call.1} parent=11 // pred_check
        %p472 = pneg %p74
      $region14: #{tpu_custom_call.1} parent=11 // pred_check_branch
        %474 = sbr.rel (%p472) target = $region16
      $region15: #{tpu_custom_call.1} parent=11 // pred_region
        _
      $region16: #{tpu_custom_call.1} parent=11 // pred_fallthru
        _
      // Predicated region
      $region17: #{tpu_custom_call.1} parent=11 // pred_check
        %p475 = pneg %p95
      $region18: #{tpu_custom_call.1} parent=11 // pred_check_branch
        %477 = sbr.rel (%p475) target = $region20
      $region19: #{tpu_custom_call.1} parent=11 // pred_region
        _
      $region20: #{tpu_custom_call.1} parent=11 // pred_fallthru
        _
      // Predicated region
      $region21: #{tpu_custom_call.1} parent=11 // pred_check
        %p478 = pneg %p116
      $region22: #{tpu_custom_call.1} parent=11 // pred_check_branch
        %480 = sbr.rel (%p478) target = $region24
      $region23: #{tpu_custom_call.1} parent=11 // pred_region
        _
      $region24: #{tpu_custom_call.1} parent=11 // pred_fallthru
        _
      // Predicated region
      $region25: #{tpu_custom_call.1} parent=11 // pred_check
        %p481 = pneg %p137
      $region26: #{tpu_custom_call.1} parent=11 // pred_check_branch
        %483 = sbr.rel (%p481) target = $region28
      $region27: #{tpu_custom_call.1} parent=11 // pred_region
        _
      $region28: #{tpu_custom_call.1} parent=11 // pred_fallthru
        _
      // Predicated region
      $region29: #{tpu_custom_call.1} parent=11 // pred_check
        %p484 = pneg %p158
      $region30: #{tpu_custom_call.1} parent=11 // pred_check_branch
        %486 = sbr.rel (%p484) target = $region32
      $region31: #{tpu_custom_call.1} parent=11 // pred_region
        _
      $region32: #{tpu_custom_call.1} parent=11 // pred_fallthru
        _
      // Predicated region
      $region33: #{tpu_custom_call.1} parent=11 // pred_check
        %p487 = pneg %p179
      $region34: #{tpu_custom_call.1} parent=11 // pred_check_branch
        %489 = sbr.rel (%p487) target = $region36
      $region35: #{tpu_custom_call.1} parent=11 // pred_region
        _
      $region36: #{tpu_custom_call.1} parent=11 // pred_fallthru
        _
      // Predicated region
      $region37: #{tpu_custom_call.1} parent=11 // pred_check
        %p490 = pneg %p200
      $region38: #{tpu_custom_call.1} parent=11 // pred_check_branch
        %492 = sbr.rel (%p490) target = $region40
      $region39: #{tpu_custom_call.1} parent=11 // pred_region
        _
      $region40: #{tpu_custom_call.1} parent=11 // pred_fallthru
        _
      // Predicated region
      $region41: #{tpu_custom_call.1} parent=11 // pred_check
        %p493 = pneg %p221
      $region42: #{tpu_custom_call.1} parent=11 // pred_check_branch
        %495 = sbr.rel (%p493) target = $region44
      $region43: #{tpu_custom_call.1} parent=11 // pred_region
        _
      $region44: #{tpu_custom_call.1} parent=11 // pred_fallthru
        _
      // Predicated region
      $region45: #{tpu_custom_call.1} parent=11 // pred_check
        %p496 = pneg %p242
      $region46: #{tpu_custom_call.1} parent=11 // pred_check_branch
        %498 = sbr.rel (%p496) target = $region48
      $region47: #{tpu_custom_call.1} parent=11 // pred_region
        _
      $region48: #{tpu_custom_call.1} parent=11 // pred_fallthru
        _
      // Predicated region
      $region49: #{tpu_custom_call.1} parent=11 // pred_check
        %p499 = pneg %p263
      $region50: #{tpu_custom_call.1} parent=11 // pred_check_branch
        %501 = sbr.rel (%p499) target = $region52
      $region51: #{tpu_custom_call.1} parent=11 // pred_region
        _
      $region52: #{tpu_custom_call.1} parent=11 // pred_fallthru
        _
      // Predicated region
      $region53: #{tpu_custom_call.1} parent=11 // pred_check
        %p502 = pneg %p284
      $region54: #{tpu_custom_call.1} parent=11 // pred_check_branch
        %504 = sbr.rel (%p502) target = $region56
      $region55: #{tpu_custom_call.1} parent=11 // pred_region
        _
      $region56: #{tpu_custom_call.1} parent=11 // pred_fallthru
        _
      // Predicated region
      $region57: #{tpu_custom_call.1} parent=11 // pred_check
        %p505 = pneg %p305
      $region58: #{tpu_custom_call.1} parent=11 // pred_check_branch
        %507 = sbr.rel (%p505) target = $region60
      $region59: #{tpu_custom_call.1} parent=11 // pred_region
        _
      $region60: #{tpu_custom_call.1} parent=11 // pred_fallthru
        _
      // Predicated region
      $region61: #{tpu_custom_call.1} parent=11 // pred_check
        %p508 = pneg %p326
      $region62: #{tpu_custom_call.1} parent=11 // pred_check_branch
        %510 = sbr.rel (%p508) target = $region64
      $region63: #{tpu_custom_call.1} parent=11 // pred_region
        _
      $region64: #{tpu_custom_call.1} parent=11 // pred_fallthru
        _
      // Predicated region
      $region65: #{tpu_custom_call.1} parent=11 // pred_check
        %p511 = pneg %p347
      $region66: #{tpu_custom_call.1} parent=11 // pred_check_branch
        %513 = sbr.rel (%p511) target = $region68
      $region67: #{tpu_custom_call.1} parent=11 // pred_region
        _
      $region68: #{tpu_custom_call.1} parent=11 // pred_fallthru
        _
      // Predicated region
      $region69: #{tpu_custom_call.1} parent=11 // pred_check
        %p514 = pneg %p368
      $region70: #{tpu_custom_call.1} parent=11 // pred_check_branch
        %516 = sbr.rel (%p514) target = $region72
      $region71: #{tpu_custom_call.1} parent=11 // pred_region
        _
      $region72: #{tpu_custom_call.1} parent=11 // pred_fallthru
        _
      // Predicated region
      $region73: #{tpu_custom_call.1} parent=11 // pred_check
        %p517 = pneg %p389
      $region74: #{tpu_custom_call.1} parent=11 // pred_check_branch
        %519 = sbr.rel (%p517) target = $region76
      $region75: #{tpu_custom_call.1} parent=11 // pred_region
        _
      $region76: #{tpu_custom_call.1} parent=11 // pred_fallthru
        _
      // Predicated region
      $region77: #{tpu_custom_call.1} parent=11 // pred_check
        %p520 = pneg %p410
      $region78: #{tpu_custom_call.1} parent=11 // pred_check_branch
        %522 = sbr.rel (%p520) target = $region80
      $region79: #{tpu_custom_call.1} parent=11 // pred_region
        _
      $region80: #{tpu_custom_call.1} parent=11 // pred_fallthru
        _
      // Predicated region
      $region81: #{tpu_custom_call.1} parent=11 // pred_check
        %p523 = pneg %p431
      $region82: #{tpu_custom_call.1} parent=11 // pred_check_branch
        %525 = sbr.rel (%p523) target = $region84
      $region83: #{tpu_custom_call.1} parent=11 // pred_region
        _
      $region84: #{tpu_custom_call.1} parent=11 // pred_fallthru
        _
    $region12: #{tpu_custom_call.1} parent=5 // pred_fallthru
      _
    %p526 = scmp.lt.s32.totalorder %s27, 2
    // Predicated region
    $region85: #{tpu_custom_call.1} parent=5 // pred_check
      %p527 = pneg %p526
    $region86: #{tpu_custom_call.1} parent=5 // pred_check_branch
      %529 = sbr.rel (%p527) target = $region88
    $region87: #{tpu_custom_call.1} parent=5 // pred_region
      // Predicated region
      $region89: #{tpu_custom_call.1} parent=87 // pred_check
        %p530 = pneg %p47
      $region90: #{tpu_custom_call.1} parent=87 // pred_check_branch
        %532 = sbr.rel (%p530) target = $region92
      $region91: #{tpu_custom_call.1} parent=87 // pred_region
        %p533 = scmp.lt.s32.totalorder %s27, 1
        %s534 = scalar_select %p533, %s27, 1
        %s535 = smul.addr %s534, 32
        %s536 = smul.addr %s535, 4
        %s537 = scalar_lea.vmem %s0, %s536
      $region92: #{tpu_custom_call.1} parent=87 // pred_fallthru
        _
    $region88: #{tpu_custom_call.1} parent=5 // pred_fallthru
      _
    %p538 = scmp.le.s32.totalorder 1, %s27
    %p539 = scmp.lt.s32.totalorder %s27, 3
    %p540 = pnand %p538, %p539
    %p541 = pneg %p540
    // Predicated region
    $region93: #{tpu_custom_call.1} parent=5 // pred_check
      _
    $region94: #{tpu_custom_call.1} parent=5 // pred_check_branch
      %543 = sbr.rel (%p540) target = $region96
    $region95: #{tpu_custom_call.1} parent=5 // pred_region
      %s544 = ssub.s32 %s27, 1
      %p545 = scmp.lt.s32.totalorder %s32, 1
      %s546 = scalar_select %p545, %s32, 1
      %s547 = smul.addr %s546, 32
      %s548 = smul.addr %s547, 4
      %s549 = scalar_lea.vmem %s0, %s548
      %p550 = pneg %p53
      %p551 = pneg %p50
      %p552 = pneg %p74
      %p553 = pneg %p71
      %p554 = pneg %p95
      %p555 = pneg %p92
      %p556 = pneg %p116
      %p557 = pneg %p113
      %p558 = pneg %p137
      %p559 = pneg %p134
      %p560 = pneg %p158
      %p561 = pneg %p155
      %p562 = pneg %p179
      %p563 = pneg %p176
      %p564 = pneg %p200
      %p565 = pneg %p197
      %p566 = pneg %p221
      %p567 = pneg %p218
      %p568 = pneg %p242
      %p569 = pneg %p239
      %p570 = pneg %p263
      %p571 = pneg %p260
      %p572 = pneg %p284
      %p573 = pneg %p281
      %p574 = pneg %p305
      %p575 = pneg %p302
      %p576 = pneg %p326
      %p577 = pneg %p323
      %p578 = pneg %p347
      %p579 = pneg %p344
      %p580 = pneg %p368
      %p581 = pneg %p365
      %p582 = pneg %p389
      %p583 = pneg %p386
      %p584 = pneg %p410
      %p585 = pneg %p407
      %p586 = pneg %p431
      %p587 = pneg %p428
      %p588 = pneg %p457
      %p589 = pneg %p454
      %p590 = scmp.lt.s32.totalorder %s32, 1
      %s591 = scalar_select %p590, %s32, 1
      %s592 = scalar_lea.vmem %s19, %s591
      %p593 = scmp.lt.s32.totalorder %s32, 1
      %s594 = scalar_select %p593, %s32, 1
      %s595 = smul.addr %s594, 32
      %s596 = smul.addr %s595, 4
      %s597 = scalar_lea.vmem %s0, %s596
      %p598 = scmp.lt.s32.totalorder %s32, 1
      %s599 = scalar_select %p598, %s32, 1
      %s600 = scalar_lea.vmem %s19, %s599
      %v602 = vld [vmem:[%s597] sm:$0xf]
      %v603 = vld [vmem:[%s597 + $0x4] sm:$0xf]
      %v604 = vld [vmem:[%s597 + $0x8] sm:$0xf]
      %v605 = vld [vmem:[%s597 + $0xc] sm:$0xf]
      %v606 = vld [vmem:[%s597 + $0x10] sm:$0xf]
      %v607 = vld [vmem:[%s597 + $0x14] sm:$0xf]
      %v608 = vld [vmem:[%s597 + $0x18] sm:$0xf]
      %v609 = vld [vmem:[%s597 + $0x1c] sm:$0xf]
      %v610 = vld [vmem:[%s597 + $0x20] sm:$0xf]
      %v611 = vld [vmem:[%s597 + $0x24] sm:$0xf]
      %v612 = vld [vmem:[%s597 + $0x28] sm:$0xf]
      %v613 = vld [vmem:[%s597 + $0x2c] sm:$0xf]
      %v614 = vld [vmem:[%s597 + $0x30] sm:$0xf]
      %v615 = vld [vmem:[%s597 + $0x34] sm:$0xf]
      %v616 = vld [vmem:[%s597 + $0x38] sm:$0xf]
      %v617 = vld [vmem:[%s597 + $0x3c] sm:$0xf]
      %v618 = vld [vmem:[%s597 + $0x40] sm:$0xf]
      %v619 = vld [vmem:[%s597 + $0x44] sm:$0xf]
      %v620 = vld [vmem:[%s597 + $0x48] sm:$0xf]
      %v621 = vld [vmem:[%s597 + $0x4c] sm:$0xf]
      %v622 = vld [vmem:[%s597 + $0x50] sm:$0xf]
      %v623 = vld [vmem:[%s597 + $0x54] sm:$0xf]
      %v624 = vld [vmem:[%s597 + $0x58] sm:$0xf]
      %v625 = vld [vmem:[%s597 + $0x5c] sm:$0xf]
      %v626 = vld [vmem:[%s597 + $0x60] sm:$0xf]
      %v627 = vld [vmem:[%s597 + $0x64] sm:$0xf]
      %v628 = vld [vmem:[%s597 + $0x68] sm:$0xf]
      %v629 = vld [vmem:[%s597 + $0x6c] sm:$0xf]
      %v630 = vld [vmem:[%s597 + $0x70] sm:$0xf]
      %v631 = vld [vmem:[%s597 + $0x74] sm:$0xf]
      %v632 = vld [vmem:[%s597 + $0x78] sm:$0xf]
      %v633 = vld [vmem:[%s597 + $0x7c] sm:$0xf]
      %634 = vst [vmem:[#allocation2] sm:$0xf] 0
      %635 = vst [vmem:[#allocation2 + $0x4] sm:$0xf] 0
      %636 = vst [vmem:[#allocation2 + $0x8] sm:$0xf] 0
      %637 = vst [vmem:[#allocation2 + $0xc] sm:$0xf] 0
      %vm638 = vcmask 1040384
      %vm639 = vsmask.f32 256
      %vm640 = vmand %vm638, %vm639
      %v641 = vld [vmem:[#allocation2 + $0x10] sm:$0x1]
      %v642 = vsel %vm640, 0, %v641
      %643 = vst [vmem:[#allocation2 + $0x10] sm:$0x1] %v642
      %644 = vst [vmem:[#allocation2 + $0x14] sm:$0xf] 0
      %645 = vst [vmem:[#allocation2 + $0x18] sm:$0xf] 0
      %646 = vst [vmem:[#allocation2 + $0x1c] sm:$0xf] 0
      %647 = vst [vmem:[#allocation2 + $0x20] sm:$0xf] 0
      %v648 = vld [vmem:[#allocation2 + $0x24] sm:$0x1]
      %v649 = vsel %vm640, 0, %v648
      %650 = vst [vmem:[#allocation2 + $0x24] sm:$0x1] %v649
      %651 = vst [vmem:[#allocation2 + $0x28] sm:$0xf] 0
      %652 = vst [vmem:[#allocation2 + $0x2c] sm:$0xf] 0
      %653 = vst [vmem:[#allocation2 + $0x30] sm:$0xf] 0
      %654 = vst [vmem:[#allocation2 + $0x34] sm:$0xf] 0
      %v655 = vld [vmem:[#allocation2 + $0x38] sm:$0x1]
      %v656 = vsel %vm640, 0, %v655
      %657 = vst [vmem:[#allocation2 + $0x38] sm:$0x1] %v656
      %658 = vst [vmem:[#allocation2 + $0x3c] sm:$0xf] 0
      %659 = vst [vmem:[#allocation2 + $0x40] sm:$0xf] 0
      %660 = vst [vmem:[#allocation2 + $0x44] sm:$0xf] 0
      %661 = vst [vmem:[#allocation2 + $0x48] sm:$0xf] 0
      %v662 = vld [vmem:[#allocation2 + $0x4c] sm:$0x1]
      %v663 = vsel %vm640, 0, %v662
      %664 = vst [vmem:[#allocation2 + $0x4c] sm:$0x1] %v663
      %665 = vst [vmem:[#allocation2 + $0x50] sm:$0xf] 0
      %666 = vst [vmem:[#allocation2 + $0x54] sm:$0xf] 0
      %667 = vst [vmem:[#allocation2 + $0x58] sm:$0xf] 0
      %668 = vst [vmem:[#allocation2 + $0x5c] sm:$0xf] 0
      %v669 = vld [vmem:[#allocation2 + $0x60] sm:$0x1]
      %v670 = vsel %vm640, 0, %v669
      %671 = vst [vmem:[#allocation2 + $0x60] sm:$0x1] %v670
      %672 = vst [vmem:[#allocation2 + $0x64] sm:$0xf] 0
      %673 = vst [vmem:[#allocation2 + $0x68] sm:$0xf] 0
      %674 = vst [vmem:[#allocation2 + $0x6c] sm:$0xf] 0
      %675 = vst [vmem:[#allocation2 + $0x70] sm:$0xf] 0
      %v676 = vld [vmem:[#allocation2 + $0x74] sm:$0x1]
      %v677 = vsel %vm640, 0, %v676
      %678 = vst [vmem:[#allocation2 + $0x74] sm:$0x1] %v677
      %679 = vst [vmem:[#allocation2 + $0x78] sm:$0xf] 0
      %680 = vst [vmem:[#allocation2 + $0x7c] sm:$0xf] 0
      %681 = vst [vmem:[#allocation2 + $0x80] sm:$0xf] 0
      %682 = vst [vmem:[#allocation2 + $0x84] sm:$0xf] 0
      %v683 = vld [vmem:[#allocation2 + $0x88] sm:$0x1]
      %v684 = vsel %vm640, 0, %v683
      %685 = vst [vmem:[#allocation2 + $0x88] sm:$0x1] %v684
      %686 = vst [vmem:[#allocation2 + $0x8c] sm:$0xf] 0
      %687 = vst [vmem:[#allocation2 + $0x90] sm:$0xf] 0
      %688 = vst [vmem:[#allocation2 + $0x94] sm:$0xf] 0
      %689 = vst [vmem:[#allocation2 + $0x98] sm:$0xf] 0
      %v690 = vld [vmem:[#allocation2 + $0x9c] sm:$0x1]
      %v691 = vsel %vm640, 0, %v690
      %692 = vst [vmem:[#allocation2 + $0x9c] sm:$0x1] %v691
      %693 = vst [vmem:[#allocation2 + $0xa0] sm:$0xf] 0
      %694 = vst [vmem:[#allocation2 + $0xa4] sm:$0xf] 0
      %695 = vst [vmem:[#allocation2 + $0xa8] sm:$0xf] 0
      %696 = vst [vmem:[#allocation2 + $0xac] sm:$0xf] 0
      %v697 = vld [vmem:[#allocation2 + $0xb0] sm:$0x1]
      %v698 = vsel %vm640, 0, %v697
      %699 = vst [vmem:[#allocation2 + $0xb0] sm:$0x1] %v698
      %700 = vst [vmem:[#allocation2 + $0xb4] sm:$0xf] 0
      %701 = vst [vmem:[#allocation2 + $0xb8] sm:$0xf] 0
      %702 = vst [vmem:[#allocation2 + $0xbc] sm:$0xf] 0
      %703 = vst [vmem:[#allocation2 + $0xc0] sm:$0xf] 0
      %v704 = vld [vmem:[#allocation2 + $0xc4] sm:$0x1]
      %v705 = vsel %vm640, 0, %v704
      %706 = vst [vmem:[#allocation2 + $0xc4] sm:$0x1] %v705
      %707 = vst [vmem:[#allocation2 + $0xc8] sm:$0xf] 0
      %708 = vst [vmem:[#allocation2 + $0xcc] sm:$0xf] 0
      %709 = vst [vmem:[#allocation2 + $0xd0] sm:$0xf] 0
      %710 = vst [vmem:[#allocation2 + $0xd4] sm:$0xf] 0
      %v711 = vld [vmem:[#allocation2 + $0xd8] sm:$0x1]
      %v712 = vsel %vm640, 0, %v711
      %713 = vst [vmem:[#allocation2 + $0xd8] sm:$0x1] %v712
      %714 = vst [vmem:[#allocation2 + $0xdc] sm:$0xf] 0
      %715 = vst [vmem:[#allocation2 + $0xe0] sm:$0xf] 0
      %716 = vst [vmem:[#allocation2 + $0xe4] sm:$0xf] 0
      %717 = vst [vmem:[#allocation2 + $0xe8] sm:$0xf] 0
      %v718 = vld [vmem:[#allocation2 + $0xec] sm:$0x1]
      %v719 = vsel %vm640, 0, %v718
      %720 = vst [vmem:[#allocation2 + $0xec] sm:$0x1] %v719
      %721 = vst [vmem:[#allocation2 + $0xf0] sm:$0xf] 0
      %722 = vst [vmem:[#allocation2 + $0xf4] sm:$0xf] 0
      %723 = vst [vmem:[#allocation2 + $0xf8] sm:$0xf] 0
      %724 = vst [vmem:[#allocation2 + $0xfc] sm:$0xf] 0
      %v725 = vld [vmem:[#allocation2 + $0x100] sm:$0x1]
      %v726 = vsel %vm640, 0, %v725
      %727 = vst [vmem:[#allocation2 + $0x100] sm:$0x1] %v726
      %728 = vst [vmem:[#allocation2 + $0x104] sm:$0xf] 0
      %729 = vst [vmem:[#allocation2 + $0x108] sm:$0xf] 0
      %730 = vst [vmem:[#allocation2 + $0x10c] sm:$0xf] 0
      %731 = vst [vmem:[#allocation2 + $0x110] sm:$0xf] 0
      %v732 = vld [vmem:[#allocation2 + $0x114] sm:$0x1]
      %v733 = vsel %vm640, 0, %v732
      %734 = vst [vmem:[#allocation2 + $0x114] sm:$0x1] %v733
      %735 = vst [vmem:[#allocation2 + $0x118] sm:$0xf] 0
      %736 = vst [vmem:[#allocation2 + $0x11c] sm:$0xf] 0
      %737 = vst [vmem:[#allocation2 + $0x120] sm:$0xf] 0
      %738 = vst [vmem:[#allocation2 + $0x124] sm:$0xf] 0
      %v739 = vld [vmem:[#allocation2 + $0x128] sm:$0x1]
      %v740 = vsel %vm640, 0, %v739
      %741 = vst [vmem:[#allocation2 + $0x128] sm:$0x1] %v740
      %742 = vst [vmem:[#allocation2 + $0x12c] sm:$0xf] 0
      %743 = vst [vmem:[#allocation2 + $0x130] sm:$0xf] 0
      %744 = vst [vmem:[#allocation2 + $0x134] sm:$0xf] 0
      %745 = vst [vmem:[#allocation2 + $0x138] sm:$0xf] 0
      %v746 = vld [vmem:[#allocation2 + $0x13c] sm:$0x1]
      %v747 = vsel %vm640, 0, %v746
      %748 = vst [vmem:[#allocation2 + $0x13c] sm:$0x1] %v747
      %749 = vst [vmem:[#allocation2 + $0x140] sm:$0xf] 0
      %750 = vst [vmem:[#allocation2 + $0x144] sm:$0xf] 0
      %751 = vst [vmem:[#allocation2 + $0x148] sm:$0xf] 0
      %752 = vst [vmem:[#allocation2 + $0x14c] sm:$0xf] 0
      %v753 = vld [vmem:[#allocation2 + $0x150] sm:$0x1]
      %v754 = vsel %vm640, 0, %v753
      %755 = vst [vmem:[#allocation2 + $0x150] sm:$0x1] %v754
      %756 = vst [vmem:[#allocation2 + $0x154] sm:$0xf] 0
      %757 = vst [vmem:[#allocation2 + $0x158] sm:$0xf] 0
      %758 = vst [vmem:[#allocation2 + $0x15c] sm:$0xf] 0
      %759 = vst [vmem:[#allocation2 + $0x160] sm:$0xf] 0
      %v760 = vld [vmem:[#allocation2 + $0x164] sm:$0x1]
      %v761 = vsel %vm640, 0, %v760
      %762 = vst [vmem:[#allocation2 + $0x164] sm:$0x1] %v761
      %s763 = scalar_lea.vmem [#allocation2], 20
      %vm764 = vcmask 19456
      %765 = vst.msk [vmem:[%s763 + $0x8] sm:$0xf] %vm764, %v602
      %766 = vst.msk [vmem:[%s763 + $0xc] sm:$0xf] %vm764, %v603
      %767 = vst.msk [vmem:[%s763 + $0x1c] sm:$0xf] %vm764, %v604
      %768 = vst.msk [vmem:[%s763 + $0x20] sm:$0xf] %vm764, %v605
      %769 = vst.msk [vmem:[%s763 + $0x30] sm:$0xf] %vm764, %v606
      %770 = vst.msk [vmem:[%s763 + $0x34] sm:$0xf] %vm764, %v607
      %771 = vst.msk [vmem:[%s763 + $0x44] sm:$0xf] %vm764, %v608
      %772 = vst.msk [vmem:[%s763 + $0x48] sm:$0xf] %vm764, %v609
      %773 = vst.msk [vmem:[%s763 + $0x58] sm:$0xf] %vm764, %v610
      %774 = vst.msk [vmem:[%s763 + $0x5c] sm:$0xf] %vm764, %v611
      %775 = vst.msk [vmem:[%s763 + $0x6c] sm:$0xf] %vm764, %v612
      %776 = vst.msk [vmem:[%s763 + $0x70] sm:$0xf] %vm764, %v613
      %777 = vst.msk [vmem:[%s763 + $0x80] sm:$0xf] %vm764, %v614
      %778 = vst.msk [vmem:[%s763 + $0x84] sm:$0xf] %vm764, %v615
      %779 = vst.msk [vmem:[%s763 + $0x94] sm:$0xf] %vm764, %v616
      %780 = vst.msk [vmem:[%s763 + $0x98] sm:$0xf] %vm764, %v617
      %781 = vst.msk [vmem:[%s763 + $0xa8] sm:$0xf] %vm764, %v618
      %782 = vst.msk [vmem:[%s763 + $0xac] sm:$0xf] %vm764, %v619
      %783 = vst.msk [vmem:[%s763 + $0xbc] sm:$0xf] %vm764, %v620
      %784 = vst.msk [vmem:[%s763 + $0xc0] sm:$0xf] %vm764, %v621
      %785 = vst.msk [vmem:[%s763 + $0xd0] sm:$0xf] %vm764, %v622
      %786 = vst.msk [vmem:[%s763 + $0xd4] sm:$0xf] %vm764, %v623
      %787 = vst.msk [vmem:[%s763 + $0xe4] sm:$0xf] %vm764, %v624
      %788 = vst.msk [vmem:[%s763 + $0xe8] sm:$0xf] %vm764, %v625
      %789 = vst.msk [vmem:[%s763 + $0xf8] sm:$0xf] %vm764, %v626
      %790 = vst.msk [vmem:[%s763 + $0xfc] sm:$0xf] %vm764, %v627
      %791 = vst.msk [vmem:[%s763 + $0x10c] sm:$0xf] %vm764, %v628
      %792 = vst.msk [vmem:[%s763 + $0x110] sm:$0xf] %vm764, %v629
      %793 = vst.msk [vmem:[%s763 + $0x120] sm:$0xf] %vm764, %v630
      %794 = vst.msk [vmem:[%s763 + $0x124] sm:$0xf] %vm764, %v631
      %795 = vst.msk [vmem:[%s763 + $0x134] sm:$0xf] %vm764, %v632
      %796 = vst.msk [vmem:[%s763 + $0x138] sm:$0xf] %vm764, %v633
      %v797 = vld [vmem:[#allocation2 + $0x4] sm:$0x8]
      %v798 = vld [vmem:[#allocation2 + $0x8] sm:$0xf]
      %v799 = vld [vmem:[#allocation2 + $0xc] sm:$0xf]
      %v800 = vld [vmem:[#allocation2 + $0x18] sm:$0x8]
      %v801 = vld [vmem:[#allocation2 + $0x1c] sm:$0xf]
      %v802 = vld [vmem:[#allocation2 + $0x20] sm:$0xf]
      %v803 = vld [vmem:[#allocation2 + $0x2c] sm:$0x8]
      %v804 = vld [vmem:[#allocation2 + $0x30] sm:$0xf]
      %v805 = vld [vmem:[#allocation2 + $0x34] sm:$0xf]
      %v806 = vld [vmem:[#allocation2 + $0x40] sm:$0x8]
      %v807 = vld [vmem:[#allocation2 + $0x44] sm:$0xf]
      %v808 = vld [vmem:[#allocation2 + $0x48] sm:$0xf]
      %v809 = vld [vmem:[#allocation2 + $0x54] sm:$0x8]
      %v810 = vld [vmem:[#allocation2 + $0x58] sm:$0xf]
      %v811 = vld [vmem:[#allocation2 + $0x5c] sm:$0xf]
      %v812 = vld [vmem:[#allocation2 + $0x68] sm:$0x8]
      %v813 = vld [vmem:[#allocation2 + $0x6c] sm:$0xf]
      %v814 = vld [vmem:[#allocation2 + $0x70] sm:$0xf]
      %v815 = vld [vmem:[#allocation2 + $0x7c] sm:$0x8]
      %v816 = vld [vmem:[#allocation2 + $0x80] sm:$0xf]
      %v817 = vld [vmem:[#allocation2 + $0x84] sm:$0xf]
      %v818 = vld [vmem:[#allocation2 + $0x90] sm:$0x8]
      %v819 = vld [vmem:[#allocation2 + $0x94] sm:$0xf]
      %v820 = vld [vmem:[#allocation2 + $0x98] sm:$0xf]
      %v821 = vld [vmem:[#allocation2 + $0xa4] sm:$0x8]
      %v822 = vld [vmem:[#allocation2 + $0xa8] sm:$0xf]
      %v823 = vld [vmem:[#allocation2 + $0xac] sm:$0xf]
      %v824 = vld [vmem:[#allocation2 + $0xb8] sm:$0x8]
      %v825 = vld [vmem:[#allocation2 + $0xbc] sm:$0xf]
      %v826 = vld [vmem:[#allocation2 + $0xc0] sm:$0xf]
      %v827 = vld [vmem:[#allocation2 + $0xcc] sm:$0x8]
      %v828 = vld [vmem:[#allocation2 + $0xd0] sm:$0xf]
      %v829 = vld [vmem:[#allocation2 + $0xd4] sm:$0xf]
      %v830 = vld [vmem:[#allocation2 + $0xe0] sm:$0x8]
      %v831 = vld [vmem:[#allocation2 + $0xe4] sm:$0xf]
      %v832 = vld [vmem:[#allocation2 + $0xe8] sm:$0xf]
      %v833 = vld [vmem:[#allocation2 + $0xf4] sm:$0x8]
      %v834 = vld [vmem:[#allocation2 + $0xf8] sm:$0xf]
      %v835 = vld [vmem:[#allocation2 + $0xfc] sm:$0xf]
      %v836 = vld [vmem:[#allocation2 + $0x108] sm:$0x8]
      %v837 = vld [vmem:[#allocation2 + $0x10c] sm:$0xf]
      %v838 = vld [vmem:[#allocation2 + $0x110] sm:$0xf]
      %v839 = vld [vmem:[#allocation2 + $0x11c] sm:$0x8]
      %v840 = vld [vmem:[#allocation2 + $0x120] sm:$0xf]
      %v841 = vld [vmem:[#allocation2 + $0x124] sm:$0xf]
      %v842 = vld [vmem:[#allocation2 + $0x130] sm:$0x8]
      %v843 = vld [vmem:[#allocation2 + $0x134] sm:$0xf]
      %v844 = vld [vmem:[#allocation2 + $0x138] sm:$0xf]
      %v845 = vld [vmem:[#allocation2 + $0x10] sm:$0x1]
      %v846 = vld [vmem:[#allocation2 + $0x24] sm:$0x1]
      %v847 = vld [vmem:[#allocation2 + $0x38] sm:$0x1]
      %v848 = vld [vmem:[#allocation2 + $0x4c] sm:$0x1]
      %v849 = vld [vmem:[#allocation2 + $0x60] sm:$0x1]
      %v850 = vld [vmem:[#allocation2 + $0x74] sm:$0x1]
      %v851 = vld [vmem:[#allocation2 + $0x88] sm:$0x1]
      %v852 = vld [vmem:[#allocation2 + $0x9c] sm:$0x1]
      %v853 = vld [vmem:[#allocation2 + $0xb0] sm:$0x1]
      %v854 = vld [vmem:[#allocation2 + $0xc4] sm:$0x1]
      %v855 = vld [vmem:[#allocation2 + $0xd8] sm:$0x1]
      %v856 = vld [vmem:[#allocation2 + $0xec] sm:$0x1]
      %v857 = vld [vmem:[#allocation2 + $0x100] sm:$0x1]
      %v858 = vld [vmem:[#allocation2 + $0x114] sm:$0x1]
      %v859 = vld [vmem:[#allocation2 + $0x128] sm:$0x1]
      %v860 = vld [vmem:[#allocation2 + $0x13c] sm:$0x1]
      %v861 = vld [vmem:[%s763 + $0x4] sm:$0x8]
      %v862 = vld [vmem:[%s763 + $0x8] sm:$0xf]
      %v863 = vld [vmem:[%s763 + $0xc] sm:$0xf]
      %v864 = vld [vmem:[%s763 + $0x18] sm:$0x8]
      %v865 = vld [vmem:[%s763 + $0x1c] sm:$0xf]
      %v866 = vld [vmem:[%s763 + $0x20] sm:$0xf]
      %v867 = vld [vmem:[%s763 + $0x2c] sm:$0x8]
      %v868 = vld [vmem:[%s763 + $0x30] sm:$0xf]
      %v869 = vld [vmem:[%s763 + $0x34] sm:$0xf]
      %v870 = vld [vmem:[%s763 + $0x40] sm:$0x8]
      %v871 = vld [vmem:[%s763 + $0x44] sm:$0xf]
      %v872 = vld [vmem:[%s763 + $0x48] sm:$0xf]
      %v873 = vld [vmem:[%s763 + $0x54] sm:$0x8]
      %v874 = vld [vmem:[%s763 + $0x58] sm:$0xf]
      %v875 = vld [vmem:[%s763 + $0x5c] sm:$0xf]
      %v876 = vld [vmem:[%s763 + $0x68] sm:$0x8]
      %v877 = vld [vmem:[%s763 + $0x6c] sm:$0xf]
      %v878 = vld [vmem:[%s763 + $0x70] sm:$0xf]
      %v879 = vld [vmem:[%s763 + $0x7c] sm:$0x8]
      %v880 = vld [vmem:[%s763 + $0x80] sm:$0xf]
      %v881 = vld [vmem:[%s763 + $0x84] sm:$0xf]
      %v882 = vld [vmem:[%s763 + $0x90] sm:$0x8]
      %v883 = vld [vmem:[%s763 + $0x94] sm:$0xf]
      %v884 = vld [vmem:[%s763 + $0x98] sm:$0xf]
      %v885 = vld [vmem:[%s763 + $0xa4] sm:$0x8]
      %v886 = vld [vmem:[%s763 + $0xa8] sm:$0xf]
      %v887 = vld [vmem:[%s763 + $0xac] sm:$0xf]
      %v888 = vld [vmem:[%s763 + $0xb8] sm:$0x8]
      %v889 = vld [vmem:[%s763 + $0xbc] sm:$0xf]
      %v890 = vld [vmem:[%s763 + $0xc0] sm:$0xf]
      %v891 = vld [vmem:[%s763 + $0xcc] sm:$0x8]
      %v892 = vld [vmem:[%s763 + $0xd0] sm:$0xf]
      %v893 = vld [vmem:[%s763 + $0xd4] sm:$0xf]
      %v894 = vld [vmem:[%s763 + $0xe0] sm:$0x8]
      %v895 = vld [vmem:[%s763 + $0xe4] sm:$0xf]
      %v896 = vld [vmem:[%s763 + $0xe8] sm:$0xf]
      %v897 = vld [vmem:[%s763 + $0xf4] sm:$0x8]
      %v898 = vld [vmem:[%s763 + $0xf8] sm:$0xf]
      %v899 = vld [vmem:[%s763 + $0xfc] sm:$0xf]
      %v900 = vld [vmem:[%s763 + $0x108] sm:$0x8]
      %v901 = vld [vmem:[%s763 + $0x10c] sm:$0xf]
      %v902 = vld [vmem:[%s763 + $0x110] sm:$0xf]
      %v903 = vld [vmem:[%s763 + $0x11c] sm:$0x8]
      %v904 = vld [vmem:[%s763 + $0x120] sm:$0xf]
      %v905 = vld [vmem:[%s763 + $0x124] sm:$0xf]
      %v906 = vld [vmem:[%s763 + $0x130] sm:$0x8]
      %v907 = vld [vmem:[%s763 + $0x134] sm:$0xf]
      %v908 = vld [vmem:[%s763 + $0x138] sm:$0xf]
      %v909 = vld [vmem:[%s763 + $0x10] sm:$0x1]
      %v910 = vld [vmem:[%s763 + $0x24] sm:$0x1]
      %v911 = vld [vmem:[%s763 + $0x38] sm:$0x1]
      %v912 = vld [vmem:[%s763 + $0x4c] sm:$0x1]
      %v913 = vld [vmem:[%s763 + $0x60] sm:$0x1]
      %v914 = vld [vmem:[%s763 + $0x74] sm:$0x1]
      %v915 = vld [vmem:[%s763 + $0x88] sm:$0x1]
      %v916 = vld [vmem:[%s763 + $0x9c] sm:$0x1]
      %v917 = vld [vmem:[%s763 + $0xb0] sm:$0x1]
      %v918 = vld [vmem:[%s763 + $0xc4] sm:$0x1]
      %v919 = vld [vmem:[%s763 + $0xd8] sm:$0x1]
      %v920 = vld [vmem:[%s763 + $0xec] sm:$0x1]
      %v921 = vld [vmem:[%s763 + $0x100] sm:$0x1]
      %v922 = vld [vmem:[%s763 + $0x114] sm:$0x1]
      %v923 = vld [vmem:[%s763 + $0x128] sm:$0x1]
      %v924 = vld [vmem:[%s763 + $0x13c] sm:$0x1]
      %s925 = scalar_lea.vmem [#allocation2], 40
      %v926 = vld [vmem:[%s925 + $0x4] sm:$0x8]
      %v927 = vld [vmem:[%s925 + $0x8] sm:$0xf]
      %v928 = vld [vmem:[%s925 + $0xc] sm:$0xf]
      %v929 = vld [vmem:[%s925 + $0x18] sm:$0x8]
      %v930 = vld [vmem:[%s925 + $0x1c] sm:$0xf]
      %v931 = vld [vmem:[%s925 + $0x20] sm:$0xf]
      %v932 = vld [vmem:[%s925 + $0x2c] sm:$0x8]
      %v933 = vld [vmem:[%s925 + $0x30] sm:$0xf]
      %v934 = vld [vmem:[%s925 + $0x34] sm:$0xf]
      %v935 = vld [vmem:[%s925 + $0x40] sm:$0x8]
      %v936 = vld [vmem:[%s925 + $0x44] sm:$0xf]
      %v937 = vld [vmem:[%s925 + $0x48] sm:$0xf]
      %v938 = vld [vmem:[%s925 + $0x54] sm:$0x8]
      %v939 = vld [vmem:[%s925 + $0x58] sm:$0xf]
      %v940 = vld [vmem:[%s925 + $0x5c] sm:$0xf]
      %v941 = vld [vmem:[%s925 + $0x68] sm:$0x8]
      %v942 = vld [vmem:[%s925 + $0x6c] sm:$0xf]
      %v943 = vld [vmem:[%s925 + $0x70] sm:$0xf]
      %v944 = vld [vmem:[%s925 + $0x7c] sm:$0x8]
      %v945 = vld [vmem:[%s925 + $0x80] sm:$0xf]
      %v946 = vld [vmem:[%s925 + $0x84] sm:$0xf]
      %v947 = vld [vmem:[%s925 + $0x90] sm:$0x8]
      %v948 = vld [vmem:[%s925 + $0x94] sm:$0xf]
      %v949 = vld [vmem:[%s925 + $0x98] sm:$0xf]
      %v950 = vld [vmem:[%s925 + $0xa4] sm:$0x8]
      %v951 = vld [vmem:[%s925 + $0xa8] sm:$0xf]
      %v952 = vld [vmem:[%s925 + $0xac] sm:$0xf]
      %v953 = vld [vmem:[%s925 + $0xb8] sm:$0x8]
      %v954 = vld [vmem:[%s925 + $0xbc] sm:$0xf]
      %v955 = vld [vmem:[%s925 + $0xc0] sm:$0xf]
      %v956 = vld [vmem:[%s925 + $0xcc] sm:$0x8]
      %v957 = vld [vmem:[%s925 + $0xd0] sm:$0xf]
      %v958 = vld [vmem:[%s925 + $0xd4] sm:$0xf]
      %v959 = vld [vmem:[%s925 + $0xe0] sm:$0x8]
      %v960 = vld [vmem:[%s925 + $0xe4] sm:$0xf]
      %v961 = vld [vmem:[%s925 + $0xe8] sm:$0xf]
      %v962 = vld [vmem:[%s925 + $0xf4] sm:$0x8]
      %v963 = vld [vmem:[%s925 + $0xf8] sm:$0xf]
      %v964 = vld [vmem:[%s925 + $0xfc] sm:$0xf]
      %v965 = vld [vmem:[%s925 + $0x108] sm:$0x8]
      %v966 = vld [vmem:[%s925 + $0x10c] sm:$0xf]
      %v967 = vld [vmem:[%s925 + $0x110] sm:$0xf]
      %v968 = vld [vmem:[%s925 + $0x11c] sm:$0x8]
      %v969 = vld [vmem:[%s925 + $0x120] sm:$0xf]
      %v970 = vld [vmem:[%s925 + $0x124] sm:$0xf]
      %v971 = vld [vmem:[%s925 + $0x130] sm:$0x8]
      %v972 = vld [vmem:[%s925 + $0x134] sm:$0xf]
      %v973 = vld [vmem:[%s925 + $0x138] sm:$0xf]
      %v974 = vld [vmem:[%s925 + $0x10] sm:$0x1]
      %v975 = vld [vmem:[%s925 + $0x24] sm:$0x1]
      %v976 = vld [vmem:[%s925 + $0x38] sm:$0x1]
      %v977 = vld [vmem:[%s925 + $0x4c] sm:$0x1]
      %v978 = vld [vmem:[%s925 + $0x60] sm:$0x1]
      %v979 = vld [vmem:[%s925 + $0x74] sm:$0x1]
      %v980 = vld [vmem:[%s925 + $0x88] sm:$0x1]
      %v981 = vld [vmem:[%s925 + $0x9c] sm:$0x1]
      %v982 = vld [vmem:[%s925 + $0xb0] sm:$0x1]
      %v983 = vld [vmem:[%s925 + $0xc4] sm:$0x1]
      %v984 = vld [vmem:[%s925 + $0xd8] sm:$0x1]
      %v985 = vld [vmem:[%s925 + $0xec] sm:$0x1]
      %v986 = vld [vmem:[%s925 + $0x100] sm:$0x1]
      %v987 = vld [vmem:[%s925 + $0x114] sm:$0x1]
      %v988 = vld [vmem:[%s925 + $0x128] sm:$0x1]
      %v989 = vld [vmem:[%s925 + $0x13c] sm:$0x1]
      %v1038 = vunpack.c.l.b16 %v797
      %v1039 = vunpack.c.l.b16 %v798
      %v1040 = vunpack.c.l.b16 %v799
      %v1041 = vunpack.c.l.b16 %v800
      %v1042 = vunpack.c.l.b16 %v801
      %v1043 = vunpack.c.l.b16 %v802
      %v1044 = vunpack.c.l.b16 %v803
      %v1045 = vunpack.c.l.b16 %v804
      %v1046 = vunpack.c.l.b16 %v805
      %v1047 = vunpack.c.l.b16 %v806
      %v1048 = vunpack.c.l.b16 %v807
      %v1049 = vunpack.c.l.b16 %v808
      %v1050 = vunpack.c.l.b16 %v809
      %v1051 = vunpack.c.l.b16 %v810
      %v1052 = vunpack.c.l.b16 %v811
      %v1053 = vunpack.c.l.b16 %v812
      %v1054 = vunpack.c.l.b16 %v813
      %v1055 = vunpack.c.l.b16 %v814
      %v1056 = vunpack.c.l.b16 %v815
      %v1057 = vunpack.c.l.b16 %v816
      %v1058 = vunpack.c.l.b16 %v817
      %v1059 = vunpack.c.l.b16 %v818
      %v1060 = vunpack.c.l.b16 %v819
      %v1061 = vunpack.c.l.b16 %v820
      %v1062 = vunpack.c.l.b16 %v821
      %v1063 = vunpack.c.l.b16 %v822
      %v1064 = vunpack.c.l.b16 %v823
      %v1065 = vunpack.c.l.b16 %v824
      %v1066 = vunpack.c.l.b16 %v825
      %v1067 = vunpack.c.l.b16 %v826
      %v1068 = vunpack.c.l.b16 %v827
      %v1069 = vunpack.c.l.b16 %v828
      %v1070 = vunpack.c.l.b16 %v829
      %v1071 = vunpack.c.l.b16 %v830
      %v1072 = vunpack.c.l.b16 %v831
      %v1073 = vunpack.c.l.b16 %v832
      %v1074 = vunpack.c.l.b16 %v833
      %v1075 = vunpack.c.l.b16 %v834
      %v1076 = vunpack.c.l.b16 %v835
      %v1077 = vunpack.c.l.b16 %v836
      %v1078 = vunpack.c.l.b16 %v837
      %v1079 = vunpack.c.l.b16 %v838
      %v1080 = vunpack.c.l.b16 %v839
      %v1081 = vunpack.c.l.b16 %v840
      %v1082 = vunpack.c.l.b16 %v841
      %v1083 = vunpack.c.l.b16 %v842
      %v1084 = vunpack.c.l.b16 %v843
      %v1085 = vunpack.c.l.b16 %v844
      %v1086 = vpack.c.b16 %v1039, %v1038
      %v1087 = vpack.c.b16 %v1040, %v1040
      %v1088 = vpack.c.b16 %v1042, %v1041
      %v1089 = vpack.c.b16 %v1043, %v1043
      %v1090 = vpack.c.b16 %v1045, %v1044
      %v1091 = vpack.c.b16 %v1046, %v1046
      %v1092 = vpack.c.b16 %v1048, %v1047
      %v1093 = vpack.c.b16 %v1049, %v1049
      %v1094 = vpack.c.b16 %v1051, %v1050
      %v1095 = vpack.c.b16 %v1052, %v1052
      %v1096 = vpack.c.b16 %v1054, %v1053
      %v1097 = vpack.c.b16 %v1055, %v1055
      %v1098 = vpack.c.b16 %v1057, %v1056
      %v1099 = vpack.c.b16 %v1058, %v1058
      %v1100 = vpack.c.b16 %v1060, %v1059
      %v1101 = vpack.c.b16 %v1061, %v1061
      %v1102 = vpack.c.b16 %v1063, %v1062
      %v1103 = vpack.c.b16 %v1064, %v1064
      %v1104 = vpack.c.b16 %v1066, %v1065
      %v1105 = vpack.c.b16 %v1067, %v1067
      %v1106 = vpack.c.b16 %v1069, %v1068
      %v1107 = vpack.c.b16 %v1070, %v1070
      %v1108 = vpack.c.b16 %v1072, %v1071
      %v1109 = vpack.c.b16 %v1073, %v1073
      %v1110 = vpack.c.b16 %v1075, %v1074
      %v1111 = vpack.c.b16 %v1076, %v1076
      %v1112 = vpack.c.b16 %v1078, %v1077
      %v1113 = vpack.c.b16 %v1079, %v1079
      %v1114 = vpack.c.b16 %v1081, %v1080
      %v1115 = vpack.c.b16 %v1082, %v1082
      %v1116 = vpack.c.b16 %v1084, %v1083
      %v1117 = vpack.c.b16 %v1085, %v1085
      %v1118 = vpack.c.b16 %v1040, %v1039
      %v1119 = vpack.c.b16 %v1043, %v1042
      %v1120 = vpack.c.b16 %v1046, %v1045
      %v1121 = vpack.c.b16 %v1049, %v1048
      %v1122 = vpack.c.b16 %v1052, %v1051
      %v1123 = vpack.c.b16 %v1055, %v1054
      %v1124 = vpack.c.b16 %v1058, %v1057
      %v1125 = vpack.c.b16 %v1061, %v1060
      %v1126 = vpack.c.b16 %v1064, %v1063
      %v1127 = vpack.c.b16 %v1067, %v1066
      %v1128 = vpack.c.b16 %v1070, %v1069
      %v1129 = vpack.c.b16 %v1073, %v1072
      %v1130 = vpack.c.b16 %v1076, %v1075
      %v1131 = vpack.c.b16 %v1079, %v1078
      %v1132 = vpack.c.b16 %v1082, %v1081
      %v1133 = vpack.c.b16 %v1085, %v1084
      %v1135 = vshrl.u32 %v1118, 16
      %v1137 = vrot.slane %v1135, 4
      %v1138 = vshll.u32 %v1118, 16
      %v1140 = vrot.slane %v1138, 5
      %v1141 = vor.u32 %v1137, %v1140
      %v1143 = vshrl.u32 %v1119, 16
      %v1145 = vrot.slane %v1143, 4
      %v1146 = vshll.u32 %v1119, 16
      %v1148 = vrot.slane %v1146, 5
      %v1149 = vor.u32 %v1145, %v1148
      %v1151 = vshrl.u32 %v1120, 16
      %v1153 = vrot.slane %v1151, 4
      %v1154 = vshll.u32 %v1120, 16
      %v1156 = vrot.slane %v1154, 5
      %v1157 = vor.u32 %v1153, %v1156
      %v1159 = vshrl.u32 %v1121, 16
      %v1161 = vrot.slane %v1159, 4
      %v1162 = vshll.u32 %v1121, 16
      %v1164 = vrot.slane %v1162, 5
      %v1165 = vor.u32 %v1161, %v1164
      %v1167 = vshrl.u32 %v1122, 16
      %v1169 = vrot.slane %v1167, 4
      %v1170 = vshll.u32 %v1122, 16
      %v1172 = vrot.slane %v1170, 5
      %v1173 = vor.u32 %v1169, %v1172
      %v1175 = vshrl.u32 %v1123, 16
      %v1177 = vrot.slane %v1175, 4
      %v1178 = vshll.u32 %v1123, 16
      %v1180 = vrot.slane %v1178, 5
      %v1181 = vor.u32 %v1177, %v1180
      %v1183 = vshrl.u32 %v1124, 16
      %v1185 = vrot.slane %v1183, 4
      %v1186 = vshll.u32 %v1124, 16
      %v1188 = vrot.slane %v1186, 5
      %v1189 = vor.u32 %v1185, %v1188
      %v1191 = vshrl.u32 %v1125, 16
      %v1193 = vrot.slane %v1191, 4
      %v1194 = vshll.u32 %v1125, 16
      %v1196 = vrot.slane %v1194, 5
      %v1197 = vor.u32 %v1193, %v1196
      %v1199 = vshrl.u32 %v1126, 16
      %v1201 = vrot.slane %v1199, 4
      %v1202 = vshll.u32 %v1126, 16
      %v1204 = vrot.slane %v1202, 5
      %v1205 = vor.u32 %v1201, %v1204
      %v1207 = vshrl.u32 %v1127, 16
      %v1209 = vrot.slane %v1207, 4
      %v1210 = vshll.u32 %v1127, 16
      %v1212 = vrot.slane %v1210, 5
      %v1213 = vor.u32 %v1209, %v1212
      %v1215 = vshrl.u32 %v1128, 16
      %v1217 = vrot.slane %v1215, 4
      %v1218 = vshll.u32 %v1128, 16
      %v1220 = vrot.slane %v1218, 5
      %v1221 = vor.u32 %v1217, %v1220
      %v1223 = vshrl.u32 %v1129, 16
      %v1225 = vrot.slane %v1223, 4
      %v1226 = vshll.u32 %v1129, 16
      %v1228 = vrot.slane %v1226, 5
      %v1229 = vor.u32 %v1225, %v1228
      %v1231 = vshrl.u32 %v1130, 16
      %v1233 = vrot.slane %v1231, 4
      %v1234 = vshll.u32 %v1130, 16
      %v1236 = vrot.slane %v1234, 5
      %v1237 = vor.u32 %v1233, %v1236
      %v1239 = vshrl.u32 %v1131, 16
      %v1241 = vrot.slane %v1239, 4
      %v1242 = vshll.u32 %v1131, 16
      %v1244 = vrot.slane %v1242, 5
      %v1245 = vor.u32 %v1241, %v1244
      %v1247 = vshrl.u32 %v1132, 16
      %v1249 = vrot.slane %v1247, 4
      %v1250 = vshll.u32 %v1132, 16
      %v1252 = vrot.slane %v1250, 5
      %v1253 = vor.u32 %v1249, %v1252
      %v1255 = vshrl.u32 %v1133, 16
      %v1257 = vrot.slane %v1255, 4
      %v1258 = vshll.u32 %v1133, 16
      %v1260 = vrot.slane %v1258, 5
      %v1261 = vor.u32 %v1257, %v1260
      %v1278 = vunpack.c.l.b16 %v845
      %v1279 = vunpack.c.l.b16 %v846
      %v1280 = vunpack.c.l.b16 %v847
      %v1281 = vunpack.c.l.b16 %v848
      %v1282 = vunpack.c.l.b16 %v849
      %v1283 = vunpack.c.l.b16 %v850
      %v1284 = vunpack.c.l.b16 %v851
      %v1285 = vunpack.c.l.b16 %v852
      %v1286 = vunpack.c.l.b16 %v853
      %v1287 = vunpack.c.l.b16 %v854
      %v1288 = vunpack.c.l.b16 %v855
      %v1289 = vunpack.c.l.b16 %v856
      %v1290 = vunpack.c.l.b16 %v857
      %v1291 = vunpack.c.l.b16 %v858
      %v1292 = vunpack.c.l.b16 %v859
      %v1293 = vunpack.c.l.b16 %v860
      %v1294 = vpack.c.b16 %v1278, %v1278
      %v1295 = vpack.c.b16 %v1279, %v1279
      %v1296 = vpack.c.b16 %v1280, %v1280
      %v1297 = vpack.c.b16 %v1281, %v1281
      %v1298 = vpack.c.b16 %v1282, %v1282
      %v1299 = vpack.c.b16 %v1283, %v1283
      %v1300 = vpack.c.b16 %v1284, %v1284
      %v1301 = vpack.c.b16 %v1285, %v1285
      %v1302 = vpack.c.b16 %v1286, %v1286
      %v1303 = vpack.c.b16 %v1287, %v1287
      %v1304 = vpack.c.b16 %v1288, %v1288
      %v1305 = vpack.c.b16 %v1289, %v1289
      %v1306 = vpack.c.b16 %v1290, %v1290
      %v1307 = vpack.c.b16 %v1291, %v1291
      %v1308 = vpack.c.b16 %v1292, %v1292
      %v1309 = vpack.c.b16 %v1293, %v1293
      %vm1310 = vcmask 1042432
      %v1311 = vrot.slane %v1118, 5
      %v1312 = vrot.slane %v1294, 5
      %v1313 = vsel %vm1310, %v1311, %v1312
      %v1314 = vrot.slane %v1119, 5
      %v1315 = vrot.slane %v1295, 5
      %v1316 = vsel %vm1310, %v1314, %v1315
      %v1317 = vrot.slane %v1120, 5
      %v1318 = vrot.slane %v1296, 5
      %v1319 = vsel %vm1310, %v1317, %v1318
      %v1320 = vrot.slane %v1121, 5
      %v1321 = vrot.slane %v1297, 5
      %v1322 = vsel %vm1310, %v1320, %v1321
      %v1323 = vrot.slane %v1122, 5
      %v1324 = vrot.slane %v1298, 5
      %v1325 = vsel %vm1310, %v1323, %v1324
      %v1326 = vrot.slane %v1123, 5
      %v1327 = vrot.slane %v1299, 5
      %v1328 = vsel %vm1310, %v1326, %v1327
      %v1329 = vrot.slane %v1124, 5
      %v1330 = vrot.slane %v1300, 5
      %v1331 = vsel %vm1310, %v1329, %v1330
      %v1332 = vrot.slane %v1125, 5
      %v1333 = vrot.slane %v1301, 5
      %v1334 = vsel %vm1310, %v1332, %v1333
      %v1335 = vrot.slane %v1126, 5
      %v1336 = vrot.slane %v1302, 5
      %v1337 = vsel %vm1310, %v1335, %v1336
      %v1338 = vrot.slane %v1127, 5
      %v1339 = vrot.slane %v1303, 5
      %v1340 = vsel %vm1310, %v1338, %v1339
      %v1341 = vrot.slane %v1128, 5
      %v1342 = vrot.slane %v1304, 5
      %v1343 = vsel %vm1310, %v1341, %v1342
      %v1344 = vrot.slane %v1129, 5
      %v1345 = vrot.slane %v1305, 5
      %v1346 = vsel %vm1310, %v1344, %v1345
      %v1347 = vrot.slane %v1130, 5
      %v1348 = vrot.slane %v1306, 5
      %v1349 = vsel %vm1310, %v1347, %v1348
      %v1350 = vrot.slane %v1131, 5
      %v1351 = vrot.slane %v1307, 5
      %v1352 = vsel %vm1310, %v1350, %v1351
      %v1353 = vrot.slane %v1132, 5
      %v1354 = vrot.slane %v1308, 5
      %v1355 = vsel %vm1310, %v1353, %v1354
      %v1356 = vrot.slane %v1133, 5
      %v1357 = vrot.slane %v1309, 5
      %v1358 = vsel %vm1310, %v1356, %v1357
      %v1407 = vunpack.c.l.b16 %v861
      %v1408 = vunpack.c.l.b16 %v862
      %v1409 = vunpack.c.l.b16 %v863
      %v1410 = vunpack.c.l.b16 %v864
      %v1411 = vunpack.c.l.b16 %v865
      %v1412 = vunpack.c.l.b16 %v866
      %v1413 = vunpack.c.l.b16 %v867
      %v1414 = vunpack.c.l.b16 %v868
      %v1415 = vunpack.c.l.b16 %v869
      %v1416 = vunpack.c.l.b16 %v870
      %v1417 = vunpack.c.l.b16 %v871
      %v1418 = vunpack.c.l.b16 %v872
      %v1419 = vunpack.c.l.b16 %v873
      %v1420 = vunpack.c.l.b16 %v874
      %v1421 = vunpack.c.l.b16 %v875
      %v1422 = vunpack.c.l.b16 %v876
      %v1423 = vunpack.c.l.b16 %v877
      %v1424 = vunpack.c.l.b16 %v878
      %v1425 = vunpack.c.l.b16 %v879
      %v1426 = vunpack.c.l.b16 %v880
      %v1427 = vunpack.c.l.b16 %v881
      %v1428 = vunpack.c.l.b16 %v882
      %v1429 = vunpack.c.l.b16 %v883
      %v1430 = vunpack.c.l.b16 %v884
      %v1431 = vunpack.c.l.b16 %v885
      %v1432 = vunpack.c.l.b16 %v886
      %v1433 = vunpack.c.l.b16 %v887
      %v1434 = vunpack.c.l.b16 %v888
      %v1435 = vunpack.c.l.b16 %v889
      %v1436 = vunpack.c.l.b16 %v890
      %v1437 = vunpack.c.l.b16 %v891
      %v1438 = vunpack.c.l.b16 %v892
      %v1439 = vunpack.c.l.b16 %v893
      %v1440 = vunpack.c.l.b16 %v894
      %v1441 = vunpack.c.l.b16 %v895
      %v1442 = vunpack.c.l.b16 %v896
      %v1443 = vunpack.c.l.b16 %v897
      %v1444 = vunpack.c.l.b16 %v898
      %v1445 = vunpack.c.l.b16 %v899
      %v1446 = vunpack.c.l.b16 %v900
      %v1447 = vunpack.c.l.b16 %v901
      %v1448 = vunpack.c.l.b16 %v902
      %v1449 = vunpack.c.l.b16 %v903
      %v1450 = vunpack.c.l.b16 %v904
      %v1451 = vunpack.c.l.b16 %v905
      %v1452 = vunpack.c.l.b16 %v906
      %v1453 = vunpack.c.l.b16 %v907
      %v1454 = vunpack.c.l.b16 %v908
      %v1455 = vpack.c.b16 %v1408, %v1407
      %v1456 = vpack.c.b16 %v1409, %v1409
      %v1457 = vpack.c.b16 %v1411, %v1410
      %v1458 = vpack.c.b16 %v1412, %v1412
      %v1459 = vpack.c.b16 %v1414, %v1413
      %v1460 = vpack.c.b16 %v1415, %v1415
      %v1461 = vpack.c.b16 %v1417, %v1416
      %v1462 = vpack.c.b16 %v1418, %v1418
      %v1463 = vpack.c.b16 %v1420, %v1419
      %v1464 = vpack.c.b16 %v1421, %v1421
      %v1465 = vpack.c.b16 %v1423, %v1422
      %v1466 = vpack.c.b16 %v1424, %v1424
      %v1467 = vpack.c.b16 %v1426, %v1425
      %v1468 = vpack.c.b16 %v1427, %v1427
      %v1469 = vpack.c.b16 %v1429, %v1428
      %v1470 = vpack.c.b16 %v1430, %v1430
      %v1471 = vpack.c.b16 %v1432, %v1431
      %v1472 = vpack.c.b16 %v1433, %v1433
      %v1473 = vpack.c.b16 %v1435, %v1434
      %v1474 = vpack.c.b16 %v1436, %v1436
      %v1475 = vpack.c.b16 %v1438, %v1437
      %v1476 = vpack.c.b16 %v1439, %v1439
      %v1477 = vpack.c.b16 %v1441, %v1440
      %v1478 = vpack.c.b16 %v1442, %v1442
      %v1479 = vpack.c.b16 %v1444, %v1443
      %v1480 = vpack.c.b16 %v1445, %v1445
      %v1481 = vpack.c.b16 %v1447, %v1446
      %v1482 = vpack.c.b16 %v1448, %v1448
      %v1483 = vpack.c.b16 %v1450, %v1449
      %v1484 = vpack.c.b16 %v1451, %v1451
      %v1485 = vpack.c.b16 %v1453, %v1452
      %v1486 = vpack.c.b16 %v1454, %v1454
      %v1487 = vpack.c.b16 %v1409, %v1408
      %v1488 = vpack.c.b16 %v1412, %v1411
      %v1489 = vpack.c.b16 %v1415, %v1414
      %v1490 = vpack.c.b16 %v1418, %v1417
      %v1491 = vpack.c.b16 %v1421, %v1420
      %v1492 = vpack.c.b16 %v1424, %v1423
      %v1493 = vpack.c.b16 %v1427, %v1426
      %v1494 = vpack.c.b16 %v1430, %v1429
      %v1495 = vpack.c.b16 %v1433, %v1432
      %v1496 = vpack.c.b16 %v1436, %v1435
      %v1497 = vpack.c.b16 %v1439, %v1438
      %v1498 = vpack.c.b16 %v1442, %v1441
      %v1499 = vpack.c.b16 %v1445, %v1444
      %v1500 = vpack.c.b16 %v1448, %v1447
      %v1501 = vpack.c.b16 %v1451, %v1450
      %v1502 = vpack.c.b16 %v1454, %v1453
      %v1504 = vshrl.u32 %v1487, 16
      %v1506 = vrot.slane %v1504, 4
      %v1507 = vshll.u32 %v1487, 16
      %v1509 = vrot.slane %v1507, 5
      %v1510 = vor.u32 %v1506, %v1509
      %v1512 = vshrl.u32 %v1488, 16
      %v1514 = vrot.slane %v1512, 4
      %v1515 = vshll.u32 %v1488, 16
      %v1517 = vrot.slane %v1515, 5
      %v1518 = vor.u32 %v1514, %v1517
      %v1520 = vshrl.u32 %v1489, 16
      %v1522 = vrot.slane %v1520, 4
      %v1523 = vshll.u32 %v1489, 16
      %v1525 = vrot.slane %v1523, 5
      %v1526 = vor.u32 %v1522, %v1525
      %v1528 = vshrl.u32 %v1490, 16
      %v1530 = vrot.slane %v1528, 4
      %v1531 = vshll.u32 %v1490, 16
      %v1533 = vrot.slane %v1531, 5
      %v1534 = vor.u32 %v1530, %v1533
      %v1536 = vshrl.u32 %v1491, 16
      %v1538 = vrot.slane %v1536, 4
      %v1539 = vshll.u32 %v1491, 16
      %v1541 = vrot.slane %v1539, 5
      %v1542 = vor.u32 %v1538, %v1541
      %v1544 = vshrl.u32 %v1492, 16
      %v1546 = vrot.slane %v1544, 4
      %v1547 = vshll.u32 %v1492, 16
      %v1549 = vrot.slane %v1547, 5
      %v1550 = vor.u32 %v1546, %v1549
      %v1552 = vshrl.u32 %v1493, 16
      %v1554 = vrot.slane %v1552, 4
      %v1555 = vshll.u32 %v1493, 16
      %v1557 = vrot.slane %v1555, 5
      %v1558 = vor.u32 %v1554, %v1557
      %v1560 = vshrl.u32 %v1494, 16
      %v1562 = vrot.slane %v1560, 4
      %v1563 = vshll.u32 %v1494, 16
      %v1565 = vrot.slane %v1563, 5
      %v1566 = vor.u32 %v1562, %v1565
      %v1568 = vshrl.u32 %v1495, 16
      %v1570 = vrot.slane %v1568, 4
      %v1571 = vshll.u32 %v1495, 16
      %v1573 = vrot.slane %v1571, 5
      %v1574 = vor.u32 %v1570, %v1573
      %v1576 = vshrl.u32 %v1496, 16
      %v1578 = vrot.slane %v1576, 4
      %v1579 = vshll.u32 %v1496, 16
      %v1581 = vrot.slane %v1579, 5
      %v1582 = vor.u32 %v1578, %v1581
      %v1584 = vshrl.u32 %v1497, 16
      %v1586 = vrot.slane %v1584, 4
      %v1587 = vshll.u32 %v1497, 16
      %v1589 = vrot.slane %v1587, 5
      %v1590 = vor.u32 %v1586, %v1589
      %v1592 = vshrl.u32 %v1498, 16
      %v1594 = vrot.slane %v1592, 4
      %v1595 = vshll.u32 %v1498, 16
      %v1597 = vrot.slane %v1595, 5
      %v1598 = vor.u32 %v1594, %v1597
      %v1600 = vshrl.u32 %v1499, 16
      %v1602 = vrot.slane %v1600, 4
      %v1603 = vshll.u32 %v1499, 16
      %v1605 = vrot.slane %v1603, 5
      %v1606 = vor.u32 %v1602, %v1605
      %v1608 = vshrl.u32 %v1500, 16
      %v1610 = vrot.slane %v1608, 4
      %v1611 = vshll.u32 %v1500, 16
      %v1613 = vrot.slane %v1611, 5
      %v1614 = vor.u32 %v1610, %v1613
      %v1616 = vshrl.u32 %v1501, 16
      %v1618 = vrot.slane %v1616, 4
      %v1619 = vshll.u32 %v1501, 16
      %v1621 = vrot.slane %v1619, 5
      %v1622 = vor.u32 %v1618, %v1621
      %v1624 = vshrl.u32 %v1502, 16
      %v1626 = vrot.slane %v1624, 4
      %v1627 = vshll.u32 %v1502, 16
      %v1629 = vrot.slane %v1627, 5
      %v1630 = vor.u32 %v1626, %v1629
      %v1647 = vunpack.c.l.b16 %v909
      %v1648 = vunpack.c.l.b16 %v910
      %v1649 = vunpack.c.l.b16 %v911
      %v1650 = vunpack.c.l.b16 %v912
      %v1651 = vunpack.c.l.b16 %v913
      %v1652 = vunpack.c.l.b16 %v914
      %v1653 = vunpack.c.l.b16 %v915
      %v1654 = vunpack.c.l.b16 %v916
      %v1655 = vunpack.c.l.b16 %v917
      %v1656 = vunpack.c.l.b16 %v918
      %v1657 = vunpack.c.l.b16 %v919
      %v1658 = vunpack.c.l.b16 %v920
      %v1659 = vunpack.c.l.b16 %v921
      %v1660 = vunpack.c.l.b16 %v922
      %v1661 = vunpack.c.l.b16 %v923
      %v1662 = vunpack.c.l.b16 %v924
      %v1663 = vpack.c.b16 %v1647, %v1647
      %v1664 = vpack.c.b16 %v1648, %v1648
      %v1665 = vpack.c.b16 %v1649, %v1649
      %v1666 = vpack.c.b16 %v1650, %v1650
      %v1667 = vpack.c.b16 %v1651, %v1651
      %v1668 = vpack.c.b16 %v1652, %v1652
      %v1669 = vpack.c.b16 %v1653, %v1653
      %v1670 = vpack.c.b16 %v1654, %v1654
      %v1671 = vpack.c.b16 %v1655, %v1655
      %v1672 = vpack.c.b16 %v1656, %v1656
      %v1673 = vpack.c.b16 %v1657, %v1657
      %v1674 = vpack.c.b16 %v1658, %v1658
      %v1675 = vpack.c.b16 %v1659, %v1659
      %v1676 = vpack.c.b16 %v1660, %v1660
      %v1677 = vpack.c.b16 %v1661, %v1661
      %v1678 = vpack.c.b16 %v1662, %v1662
      %v1679 = vrot.slane %v1487, 5
      %v1680 = vrot.slane %v1663, 5
      %v1681 = vsel %vm1310, %v1679, %v1680
      %v1682 = vrot.slane %v1488, 5
      %v1683 = vrot.slane %v1664, 5
      %v1684 = vsel %vm1310, %v1682, %v1683
      %v1685 = vrot.slane %v1489, 5
      %v1686 = vrot.slane %v1665, 5
      %v1687 = vsel %vm1310, %v1685, %v1686
      %v1688 = vrot.slane %v1490, 5
      %v1689 = vrot.slane %v1666, 5
      %v1690 = vsel %vm1310, %v1688, %v1689
      %v1691 = vrot.slane %v1491, 5
      %v1692 = vrot.slane %v1667, 5
      %v1693 = vsel %vm1310, %v1691, %v1692
      %v1694 = vrot.slane %v1492, 5
      %v1695 = vrot.slane %v1668, 5
      %v1696 = vsel %vm1310, %v1694, %v1695
      %v1697 = vrot.slane %v1493, 5
      %v1698 = vrot.slane %v1669, 5
      %v1699 = vsel %vm1310, %v1697, %v1698
      %v1700 = vrot.slane %v1494, 5
      %v1701 = vrot.slane %v1670, 5
      %v1702 = vsel %vm1310, %v1700, %v1701
      %v1703 = vrot.slane %v1495, 5
      %v1704 = vrot.slane %v1671, 5
      %v1705 = vsel %vm1310, %v1703, %v1704
      %v1706 = vrot.slane %v1496, 5
      %v1707 = vrot.slane %v1672, 5
      %v1708 = vsel %vm1310, %v1706, %v1707
      %v1709 = vrot.slane %v1497, 5
      %v1710 = vrot.slane %v1673, 5
      %v1711 = vsel %vm1310, %v1709, %v1710
      %v1712 = vrot.slane %v1498, 5
      %v1713 = vrot.slane %v1674, 5
      %v1714 = vsel %vm1310, %v1712, %v1713
      %v1715 = vrot.slane %v1499, 5
      %v1716 = vrot.slane %v1675, 5
      %v1717 = vsel %vm1310, %v1715, %v1716
      %v1718 = vrot.slane %v1500, 5
      %v1719 = vrot.slane %v1676, 5
      %v1720 = vsel %vm1310, %v1718, %v1719
      %v1721 = vrot.slane %v1501, 5
      %v1722 = vrot.slane %v1677, 5
      %v1723 = vsel %vm1310, %v1721, %v1722
      %v1724 = vrot.slane %v1502, 5
      %v1725 = vrot.slane %v1678, 5
      %v1726 = vsel %vm1310, %v1724, %v1725
      %v1775 = vunpack.c.l.b16 %v926
      %v1776 = vunpack.c.l.b16 %v927
      %v1777 = vunpack.c.l.b16 %v928
      %v1778 = vunpack.c.l.b16 %v929
      %v1779 = vunpack.c.l.b16 %v930
      %v1780 = vunpack.c.l.b16 %v931
      %v1781 = vunpack.c.l.b16 %v932
      %v1782 = vunpack.c.l.b16 %v933
      %v1783 = vunpack.c.l.b16 %v934
      %v1784 = vunpack.c.l.b16 %v935
      %v1785 = vunpack.c.l.b16 %v936
      %v1786 = vunpack.c.l.b16 %v937
      %v1787 = vunpack.c.l.b16 %v938
      %v1788 = vunpack.c.l.b16 %v939
      %v1789 = vunpack.c.l.b16 %v940
      %v1790 = vunpack.c.l.b16 %v941
      %v1791 = vunpack.c.l.b16 %v942
      %v1792 = vunpack.c.l.b16 %v943
      %v1793 = vunpack.c.l.b16 %v944
      %v1794 = vunpack.c.l.b16 %v945
      %v1795 = vunpack.c.l.b16 %v946
      %v1796 = vunpack.c.l.b16 %v947
      %v1797 = vunpack.c.l.b16 %v948
      %v1798 = vunpack.c.l.b16 %v949
      %v1799 = vunpack.c.l.b16 %v950
      %v1800 = vunpack.c.l.b16 %v951
      %v1801 = vunpack.c.l.b16 %v952
      %v1802 = vunpack.c.l.b16 %v953
      %v1803 = vunpack.c.l.b16 %v954
      %v1804 = vunpack.c.l.b16 %v955
      %v1805 = vunpack.c.l.b16 %v956
      %v1806 = vunpack.c.l.b16 %v957
      %v1807 = vunpack.c.l.b16 %v958
      %v1808 = vunpack.c.l.b16 %v959
      %v1809 = vunpack.c.l.b16 %v960
      %v1810 = vunpack.c.l.b16 %v961
      %v1811 = vunpack.c.l.b16 %v962
      %v1812 = vunpack.c.l.b16 %v963
      %v1813 = vunpack.c.l.b16 %v964
      %v1814 = vunpack.c.l.b16 %v965
      %v1815 = vunpack.c.l.b16 %v966
      %v1816 = vunpack.c.l.b16 %v967
      %v1817 = vunpack.c.l.b16 %v968
      %v1818 = vunpack.c.l.b16 %v969
      %v1819 = vunpack.c.l.b16 %v970
      %v1820 = vunpack.c.l.b16 %v971
      %v1821 = vunpack.c.l.b16 %v972
      %v1822 = vunpack.c.l.b16 %v973
      %v1823 = vpack.c.b16 %v1776, %v1775
      %v1824 = vpack.c.b16 %v1777, %v1777
      %v1825 = vpack.c.b16 %v1779, %v1778
      %v1826 = vpack.c.b16 %v1780, %v1780
      %v1827 = vpack.c.b16 %v1782, %v1781
      %v1828 = vpack.c.b16 %v1783, %v1783
      %v1829 = vpack.c.b16 %v1785, %v1784
      %v1830 = vpack.c.b16 %v1786, %v1786
      %v1831 = vpack.c.b16 %v1788, %v1787
      %v1832 = vpack.c.b16 %v1789, %v1789
      %v1833 = vpack.c.b16 %v1791, %v1790
      %v1834 = vpack.c.b16 %v1792, %v1792
      %v1835 = vpack.c.b16 %v1794, %v1793
      %v1836 = vpack.c.b16 %v1795, %v1795
      %v1837 = vpack.c.b16 %v1797, %v1796
      %v1838 = vpack.c.b16 %v1798, %v1798
      %v1839 = vpack.c.b16 %v1800, %v1799
      %v1840 = vpack.c.b16 %v1801, %v1801
      %v1841 = vpack.c.b16 %v1803, %v1802
      %v1842 = vpack.c.b16 %v1804, %v1804
      %v1843 = vpack.c.b16 %v1806, %v1805
      %v1844 = vpack.c.b16 %v1807, %v1807
      %v1845 = vpack.c.b16 %v1809, %v1808
      %v1846 = vpack.c.b16 %v1810, %v1810
      %v1847 = vpack.c.b16 %v1812, %v1811
      %v1848 = vpack.c.b16 %v1813, %v1813
      %v1849 = vpack.c.b16 %v1815, %v1814
      %v1850 = vpack.c.b16 %v1816, %v1816
      %v1851 = vpack.c.b16 %v1818, %v1817
      %v1852 = vpack.c.b16 %v1819, %v1819
      %v1853 = vpack.c.b16 %v1821, %v1820
      %v1854 = vpack.c.b16 %v1822, %v1822
      %v1855 = vpack.c.b16 %v1777, %v1776
      %v1856 = vpack.c.b16 %v1780, %v1779
      %v1857 = vpack.c.b16 %v1783, %v1782
      %v1858 = vpack.c.b16 %v1786, %v1785
      %v1859 = vpack.c.b16 %v1789, %v1788
      %v1860 = vpack.c.b16 %v1792, %v1791
      %v1861 = vpack.c.b16 %v1795, %v1794
      %v1862 = vpack.c.b16 %v1798, %v1797
      %v1863 = vpack.c.b16 %v1801, %v1800
      %v1864 = vpack.c.b16 %v1804, %v1803
      %v1865 = vpack.c.b16 %v1807, %v1806
      %v1866 = vpack.c.b16 %v1810, %v1809
      %v1867 = vpack.c.b16 %v1813, %v1812
      %v1868 = vpack.c.b16 %v1816, %v1815
      %v1869 = vpack.c.b16 %v1819, %v1818
      %v1870 = vpack.c.b16 %v1822, %v1821
      %v1872 = vshrl.u32 %v1855, 16
      %v1874 = vrot.slane %v1872, 4
      %v1875 = vshll.u32 %v1855, 16
      %v1877 = vrot.slane %v1875, 5
      %v1878 = vor.u32 %v1874, %v1877
      %v1880 = vshrl.u32 %v1856, 16
      %v1882 = vrot.slane %v1880, 4
      %v1883 = vshll.u32 %v1856, 16
      %v1885 = vrot.slane %v1883, 5
      %v1886 = vor.u32 %v1882, %v1885
      %v1888 = vshrl.u32 %v1857, 16
      %v1890 = vrot.slane %v1888, 4
      %v1891 = vshll.u32 %v1857, 16
      %v1893 = vrot.slane %v1891, 5
      %v1894 = vor.u32 %v1890, %v1893
      %v1896 = vshrl.u32 %v1858, 16
      %v1898 = vrot.slane %v1896, 4
      %v1899 = vshll.u32 %v1858, 16
      %v1901 = vrot.slane %v1899, 5
      %v1902 = vor.u32 %v1898, %v1901
      %v1904 = vshrl.u32 %v1859, 16
      %v1906 = vrot.slane %v1904, 4
      %v1907 = vshll.u32 %v1859, 16
      %v1909 = vrot.slane %v1907, 5
      %v1910 = vor.u32 %v1906, %v1909
      %v1912 = vshrl.u32 %v1860, 16
      %v1914 = vrot.slane %v1912, 4
      %v1915 = vshll.u32 %v1860, 16
      %v1917 = vrot.slane %v1915, 5
      %v1918 = vor.u32 %v1914, %v1917
      %v1920 = vshrl.u32 %v1861, 16
      %v1922 = vrot.slane %v1920, 4
      %v1923 = vshll.u32 %v1861, 16
      %v1925 = vrot.slane %v1923, 5
      %v1926 = vor.u32 %v1922, %v1925
      %v1928 = vshrl.u32 %v1862, 16
      %v1930 = vrot.slane %v1928, 4
      %v1931 = vshll.u32 %v1862, 16
      %v1933 = vrot.slane %v1931, 5
      %v1934 = vor.u32 %v1930, %v1933
      %v1936 = vshrl.u32 %v1863, 16
      %v1938 = vrot.slane %v1936, 4
      %v1939 = vshll.u32 %v1863, 16
      %v1941 = vrot.slane %v1939, 5
      %v1942 = vor.u32 %v1938, %v1941
      %v1944 = vshrl.u32 %v1864, 16
      %v1946 = vrot.slane %v1944, 4
      %v1947 = vshll.u32 %v1864, 16
      %v1949 = vrot.slane %v1947, 5
      %v1950 = vor.u32 %v1946, %v1949
      %v1952 = vshrl.u32 %v1865, 16
      %v1954 = vrot.slane %v1952, 4
      %v1955 = vshll.u32 %v1865, 16
      %v1957 = vrot.slane %v1955, 5
      %v1958 = vor.u32 %v1954, %v1957
      %v1960 = vshrl.u32 %v1866, 16
      %v1962 = vrot.slane %v1960, 4
      %v1963 = vshll.u32 %v1866, 16
      %v1965 = vrot.slane %v1963, 5
      %v1966 = vor.u32 %v1962, %v1965
      %v1968 = vshrl.u32 %v1867, 16
      %v1970 = vrot.slane %v1968, 4
      %v1971 = vshll.u32 %v1867, 16
      %v1973 = vrot.slane %v1971, 5
      %v1974 = vor.u32 %v1970, %v1973
      %v1976 = vshrl.u32 %v1868, 16
      %v1978 = vrot.slane %v1976, 4
      %v1979 = vshll.u32 %v1868, 16
      %v1981 = vrot.slane %v1979, 5
      %v1982 = vor.u32 %v1978, %v1981
      %v1984 = vshrl.u32 %v1869, 16
      %v1986 = vrot.slane %v1984, 4
      %v1987 = vshll.u32 %v1869, 16
      %v1989 = vrot.slane %v1987, 5
      %v1990 = vor.u32 %v1986, %v1989
      %v1992 = vshrl.u32 %v1870, 16
      %v1994 = vrot.slane %v1992, 4
      %v1995 = vshll.u32 %v1870, 16
      %v1997 = vrot.slane %v1995, 5
      %v1998 = vor.u32 %v1994, %v1997
      %v2015 = vunpack.c.l.b16 %v974
      %v2016 = vunpack.c.l.b16 %v975
      %v2017 = vunpack.c.l.b16 %v976
      %v2018 = vunpack.c.l.b16 %v977
      %v2019 = vunpack.c.l.b16 %v978
      %v2020 = vunpack.c.l.b16 %v979
      %v2021 = vunpack.c.l.b16 %v980
      %v2022 = vunpack.c.l.b16 %v981
      %v2023 = vunpack.c.l.b16 %v982
      %v2024 = vunpack.c.l.b16 %v983
      %v2025 = vunpack.c.l.b16 %v984
      %v2026 = vunpack.c.l.b16 %v985
      %v2027 = vunpack.c.l.b16 %v986
      %v2028 = vunpack.c.l.b16 %v987
      %v2029 = vunpack.c.l.b16 %v988
      %v2030 = vunpack.c.l.b16 %v989
      %v2031 = vpack.c.b16 %v2015, %v2015
      %v2032 = vpack.c.b16 %v2016, %v2016
      %v2033 = vpack.c.b16 %v2017, %v2017
      %v2034 = vpack.c.b16 %v2018, %v2018
      %v2035 = vpack.c.b16 %v2019, %v2019
      %v2036 = vpack.c.b16 %v2020, %v2020
      %v2037 = vpack.c.b16 %v2021, %v2021
      %v2038 = vpack.c.b16 %v2022, %v2022
      %v2039 = vpack.c.b16 %v2023, %v2023
      %v2040 = vpack.c.b16 %v2024, %v2024
      %v2041 = vpack.c.b16 %v2025, %v2025
      %v2042 = vpack.c.b16 %v2026, %v2026
      %v2043 = vpack.c.b16 %v2027, %v2027
      %v2044 = vpack.c.b16 %v2028, %v2028
      %v2045 = vpack.c.b16 %v2029, %v2029
      %v2046 = vpack.c.b16 %v2030, %v2030
      %v2047 = vrot.slane %v1855, 5
      %v2048 = vrot.slane %v2031, 5
      %v2049 = vsel %vm1310, %v2047, %v2048
      %v2050 = vrot.slane %v1856, 5
      %v2051 = vrot.slane %v2032, 5
      %v2052 = vsel %vm1310, %v2050, %v2051
      %v2053 = vrot.slane %v1857, 5
      %v2054 = vrot.slane %v2033, 5
      %v2055 = vsel %vm1310, %v2053, %v2054
      %v2056 = vrot.slane %v1858, 5
      %v2057 = vrot.slane %v2034, 5
      %v2058 = vsel %vm1310, %v2056, %v2057
      %v2059 = vrot.slane %v1859, 5
      %v2060 = vrot.slane %v2035, 5
      %v2061 = vsel %vm1310, %v2059, %v2060
      %v2062 = vrot.slane %v1860, 5
      %v2063 = vrot.slane %v2036, 5
      %v2064 = vsel %vm1310, %v2062, %v2063
      %v2065 = vrot.slane %v1861, 5
      %v2066 = vrot.slane %v2037, 5
      %v2067 = vsel %vm1310, %v2065, %v2066
      %v2068 = vrot.slane %v1862, 5
      %v2069 = vrot.slane %v2038, 5
      %v2070 = vsel %vm1310, %v2068, %v2069
      %v2071 = vrot.slane %v1863, 5
      %v2072 = vrot.slane %v2039, 5
      %v2073 = vsel %vm1310, %v2071, %v2072
      %v2074 = vrot.slane %v1864, 5
      %v2075 = vrot.slane %v2040, 5
      %v2076 = vsel %vm1310, %v2074, %v2075
      %v2077 = vrot.slane %v1865, 5
      %v2078 = vrot.slane %v2041, 5
      %v2079 = vsel %vm1310, %v2077, %v2078
      %v2080 = vrot.slane %v1866, 5
      %v2081 = vrot.slane %v2042, 5
      %v2082 = vsel %vm1310, %v2080, %v2081
      %v2083 = vrot.slane %v1867, 5
      %v2084 = vrot.slane %v2043, 5
      %v2085 = vsel %vm1310, %v2083, %v2084
      %v2086 = vrot.slane %v1868, 5
      %v2087 = vrot.slane %v2044, 5
      %v2088 = vsel %vm1310, %v2086, %v2087
      %v2089 = vrot.slane %v1869, 5
      %v2090 = vrot.slane %v2045, 5
      %v2091 = vsel %vm1310, %v2089, %v2090
      %v2092 = vrot.slane %v1870, 5
      %v2093 = vrot.slane %v2046, 5
      %v2094 = vsel %vm1310, %v2092, %v2093
      %vm2095 = vsmask.f32 4352
      %v2097 = vshrl.u32 %v1086, 16
      %v2099 = vrot.slane %v2097, 3
      %v2100 = vshll.u32 %v1086, 16
      %v2102 = vrot.slane %v2100, 4
      %v2103 = vor.u32 %v2099, %v2102
      %v2105 = vshrl.u32 %v1087, 16
      %v2107 = vrot.slane %v2105, 3
      %v2108 = vshll.u32 %v1087, 16
      %v2110 = vrot.slane %v2108, 4
      %v2111 = vor.u32 %v2107, %v2110
      %v2112 = vsel %vm2095, %v2103, %v2111
      %v2114 = vshrl.u32 %v1141, 16
      %v2116 = vrot.slane %v2114, 3
      %v2117 = vshll.u32 %v1141, 16
      %v2119 = vrot.slane %v2117, 4
      %v2120 = vor.u32 %v2116, %v2119
      %v2121 = vsel %vm2095, %v2120, %v2120
      %v2123 = vshrl.u32 %v1311, 16
      %v2125 = vrot.slane %v2123, 3
      %v2126 = vshll.u32 %v1311, 16
      %v2128 = vrot.slane %v2126, 4
      %v2129 = vor.u32 %v2125, %v2128
      %v2131 = vshrl.u32 %v1313, 16
      %v2133 = vrot.slane %v2131, 3
      %v2134 = vshll.u32 %v1313, 16
      %v2136 = vrot.slane %v2134, 4
      %v2137 = vor.u32 %v2133, %v2136
      %v2138 = vsel %vm2095, %v2129, %v2137
      %v2140 = vshrl.u32 %v1455, 16
      %v2142 = vrot.slane %v2140, 3
      %v2143 = vshll.u32 %v1455, 16
      %v2145 = vrot.slane %v2143, 4
      %v2146 = vor.u32 %v2142, %v2145
      %v2148 = vshrl.u32 %v1456, 16
      %v2150 = vrot.slane %v2148, 3
      %v2151 = vshll.u32 %v1456, 16
      %v2153 = vrot.slane %v2151, 4
      %v2154 = vor.u32 %v2150, %v2153
      %v2155 = vsel %vm2095, %v2146, %v2154
      %v2157 = vshrl.u32 %v1510, 16
      %v2159 = vrot.slane %v2157, 3
      %v2160 = vshll.u32 %v1510, 16
      %v2162 = vrot.slane %v2160, 4
      %v2163 = vor.u32 %v2159, %v2162
      %v2164 = vsel %vm2095, %v2163, %v2163
      %v2166 = vshrl.u32 %v1679, 16
      %v2168 = vrot.slane %v2166, 3
      %v2169 = vshll.u32 %v1679, 16
      %v2171 = vrot.slane %v2169, 4
      %v2172 = vor.u32 %v2168, %v2171
      %v2174 = vshrl.u32 %v1681, 16
      %v2176 = vrot.slane %v2174, 3
      %v2177 = vshll.u32 %v1681, 16
      %v2179 = vrot.slane %v2177, 4
      %v2180 = vor.u32 %v2176, %v2179
      %v2181 = vsel %vm2095, %v2172, %v2180
      %v2183 = vshrl.u32 %v1823, 16
      %v2185 = vrot.slane %v2183, 3
      %v2186 = vshll.u32 %v1823, 16
      %v2188 = vrot.slane %v2186, 4
      %v2189 = vor.u32 %v2185, %v2188
      %v2191 = vshrl.u32 %v1824, 16
      %v2193 = vrot.slane %v2191, 3
      %v2194 = vshll.u32 %v1824, 16
      %v2196 = vrot.slane %v2194, 4
      %v2197 = vor.u32 %v2193, %v2196
      %v2198 = vsel %vm2095, %v2189, %v2197
      %v2200 = vshrl.u32 %v1878, 16
      %v2202 = vrot.slane %v2200, 3
      %v2203 = vshll.u32 %v1878, 16
      %v2205 = vrot.slane %v2203, 4
      %v2206 = vor.u32 %v2202, %v2205
      %v2207 = vsel %vm2095, %v2206, %v2206
      %v2209 = vshrl.u32 %v2047, 16
      %v2211 = vrot.slane %v2209, 3
      %v2212 = vshll.u32 %v2047, 16
      %v2214 = vrot.slane %v2212, 4
      %v2215 = vor.u32 %v2211, %v2214
      %v2217 = vshrl.u32 %v2049, 16
      %v2219 = vrot.slane %v2217, 3
      %v2220 = vshll.u32 %v2049, 16
      %v2222 = vrot.slane %v2220, 4
      %v2223 = vor.u32 %v2219, %v2222
      %v2224 = vsel %vm2095, %v2215, %v2223
      %v2226 = vshrl.u32 %v1088, 16
      %v2228 = vrot.slane %v2226, 3
      %v2229 = vshll.u32 %v1088, 16
      %v2231 = vrot.slane %v2229, 4
      %v2232 = vor.u32 %v2228, %v2231
      %v2234 = vshrl.u32 %v1089, 16
      %v2236 = vrot.slane %v2234, 3
      %v2237 = vshll.u32 %v1089, 16
      %v2239 = vrot.slane %v2237, 4
      %v2240 = vor.u32 %v2236, %v2239
      %v2241 = vsel %vm2095, %v2232, %v2240
      %v2243 = vshrl.u32 %v1149, 16
      %v2245 = vrot.slane %v2243, 3
      %v2246 = vshll.u32 %v1149, 16
      %v2248 = vrot.slane %v2246, 4
      %v2249 = vor.u32 %v2245, %v2248
      %v2250 = vsel %vm2095, %v2249, %v2249
      %v2252 = vshrl.u32 %v1314, 16
      %v2254 = vrot.slane %v2252, 3
      %v2255 = vshll.u32 %v1314, 16
      %v2257 = vrot.slane %v2255, 4
      %v2258 = vor.u32 %v2254, %v2257
      %v2260 = vshrl.u32 %v1316, 16
      %v2262 = vrot.slane %v2260, 3
      %v2263 = vshll.u32 %v1316, 16
      %v2265 = vrot.slane %v2263, 4
      %v2266 = vor.u32 %v2262, %v2265
      %v2267 = vsel %vm2095, %v2258, %v2266
      %v2269 = vshrl.u32 %v1457, 16
      %v2271 = vrot.slane %v2269, 3
      %v2272 = vshll.u32 %v1457, 16
      %v2274 = vrot.slane %v2272, 4
      %v2275 = vor.u32 %v2271, %v2274
      %v2277 = vshrl.u32 %v1458, 16
      %v2279 = vrot.slane %v2277, 3
      %v2280 = vshll.u32 %v1458, 16
      %v2282 = vrot.slane %v2280, 4
      %v2283 = vor.u32 %v2279, %v2282
      %v2284 = vsel %vm2095, %v2275, %v2283
      %v2286 = vshrl.u32 %v1518, 16
      %v2288 = vrot.slane %v2286, 3
      %v2289 = vshll.u32 %v1518, 16
      %v2291 = vrot.slane %v2289, 4
      %v2292 = vor.u32 %v2288, %v2291
      %v2293 = vsel %vm2095, %v2292, %v2292
      %v2295 = vshrl.u32 %v1682, 16
      %v2297 = vrot.slane %v2295, 3
      %v2298 = vshll.u32 %v1682, 16
      %v2300 = vrot.slane %v2298, 4
      %v2301 = vor.u32 %v2297, %v2300
      %v2303 = vshrl.u32 %v1684, 16
      %v2305 = vrot.slane %v2303, 3
      %v2306 = vshll.u32 %v1684, 16
      %v2308 = vrot.slane %v2306, 4
      %v2309 = vor.u32 %v2305, %v2308
      %v2310 = vsel %vm2095, %v2301, %v2309
      %v2312 = vshrl.u32 %v1825, 16
      %v2314 = vrot.slane %v2312, 3
      %v2315 = vshll.u32 %v1825, 16
      %v2317 = vrot.slane %v2315, 4
      %v2318 = vor.u32 %v2314, %v2317
      %v2320 = vshrl.u32 %v1826, 16
      %v2322 = vrot.slane %v2320, 3
      %v2323 = vshll.u32 %v1826, 16
      %v2325 = vrot.slane %v2323, 4
      %v2326 = vor.u32 %v2322, %v2325
      %v2327 = vsel %vm2095, %v2318, %v2326
      %v2329 = vshrl.u32 %v1886, 16
      %v2331 = vrot.slane %v2329, 3
      %v2332 = vshll.u32 %v1886, 16
      %v2334 = vrot.slane %v2332, 4
      %v2335 = vor.u32 %v2331, %v2334
      %v2336 = vsel %vm2095, %v2335, %v2335
      %v2338 = vshrl.u32 %v2050, 16
      %v2340 = vrot.slane %v2338, 3
      %v2341 = vshll.u32 %v2050, 16
      %v2343 = vrot.slane %v2341, 4
      %v2344 = vor.u32 %v2340, %v2343
      %v2346 = vshrl.u32 %v2052, 16
      %v2348 = vrot.slane %v2346, 3
      %v2349 = vshll.u32 %v2052, 16
      %v2351 = vrot.slane %v2349, 4
      %v2352 = vor.u32 %v2348, %v2351
      %v2353 = vsel %vm2095, %v2344, %v2352
      %v2355 = vshrl.u32 %v1090, 16
      %v2357 = vrot.slane %v2355, 3
      %v2358 = vshll.u32 %v1090, 16
      %v2360 = vrot.slane %v2358, 4
      %v2361 = vor.u32 %v2357, %v2360
      %v2363 = vshrl.u32 %v1091, 16
      %v2365 = vrot.slane %v2363, 3
      %v2366 = vshll.u32 %v1091, 16
      %v2368 = vrot.slane %v2366, 4
      %v2369 = vor.u32 %v2365, %v2368
      %v2370 = vsel %vm2095, %v2361, %v2369
      %v2372 = vshrl.u32 %v1157, 16
      %v2374 = vrot.slane %v2372, 3
      %v2375 = vshll.u32 %v1157, 16
      %v2377 = vrot.slane %v2375, 4
      %v2378 = vor.u32 %v2374, %v2377
      %v2379 = vsel %vm2095, %v2378, %v2378
      %v2381 = vshrl.u32 %v1317, 16
      %v2383 = vrot.slane %v2381, 3
      %v2384 = vshll.u32 %v1317, 16
      %v2386 = vrot.slane %v2384, 4
      %v2387 = vor.u32 %v2383, %v2386
      %v2389 = vshrl.u32 %v1319, 16
      %v2391 = vrot.slane %v2389, 3
      %v2392 = vshll.u32 %v1319, 16
      %v2394 = vrot.slane %v2392, 4
      %v2395 = vor.u32 %v2391, %v2394
      %v2396 = vsel %vm2095, %v2387, %v2395
      %v2398 = vshrl.u32 %v1459, 16
      %v2400 = vrot.slane %v2398, 3
      %v2401 = vshll.u32 %v1459, 16
      %v2403 = vrot.slane %v2401, 4
      %v2404 = vor.u32 %v2400, %v2403
      %v2406 = vshrl.u32 %v1460, 16
      %v2408 = vrot.slane %v2406, 3
      %v2409 = vshll.u32 %v1460, 16
      %v2411 = vrot.slane %v2409, 4
      %v2412 = vor.u32 %v2408, %v2411
      %v2413 = vsel %vm2095, %v2404, %v2412
      %v2415 = vshrl.u32 %v1526, 16
      %v2417 = vrot.slane %v2415, 3
      %v2418 = vshll.u32 %v1526, 16
      %v2420 = vrot.slane %v2418, 4
      %v2421 = vor.u32 %v2417, %v2420
      %v2422 = vsel %vm2095, %v2421, %v2421
      %v2424 = vshrl.u32 %v1685, 16
      %v2426 = vrot.slane %v2424, 3
      %v2427 = vshll.u32 %v1685, 16
      %v2429 = vrot.slane %v2427, 4
      %v2430 = vor.u32 %v2426, %v2429
      %v2432 = vshrl.u32 %v1687, 16
      %v2434 = vrot.slane %v2432, 3
      %v2435 = vshll.u32 %v1687, 16
      %v2437 = vrot.slane %v2435, 4
      %v2438 = vor.u32 %v2434, %v2437
      %v2439 = vsel %vm2095, %v2430, %v2438
      %v2441 = vshrl.u32 %v1827, 16
      %v2443 = vrot.slane %v2441, 3
      %v2444 = vshll.u32 %v1827, 16
      %v2446 = vrot.slane %v2444, 4
      %v2447 = vor.u32 %v2443, %v2446
      %v2449 = vshrl.u32 %v1828, 16
      %v2451 = vrot.slane %v2449, 3
      %v2452 = vshll.u32 %v1828, 16
      %v2454 = vrot.slane %v2452, 4
      %v2455 = vor.u32 %v2451, %v2454
      %v2456 = vsel %vm2095, %v2447, %v2455
      %v2458 = vshrl.u32 %v1894, 16
      %v2460 = vrot.slane %v2458, 3
      %v2461 = vshll.u32 %v1894, 16
      %v2463 = vrot.slane %v2461, 4
      %v2464 = vor.u32 %v2460, %v2463
      %v2465 = vsel %vm2095, %v2464, %v2464
      %v2467 = vshrl.u32 %v2053, 16
      %v2469 = vrot.slane %v2467, 3
      %v2470 = vshll.u32 %v2053, 16
      %v2472 = vrot.slane %v2470, 4
      %v2473 = vor.u32 %v2469, %v2472
      %v2475 = vshrl.u32 %v2055, 16
      %v2477 = vrot.slane %v2475, 3
      %v2478 = vshll.u32 %v2055, 16
      %v2480 = vrot.slane %v2478, 4
      %v2481 = vor.u32 %v2477, %v2480
      %v2482 = vsel %vm2095, %v2473, %v2481
      %v2484 = vshrl.u32 %v1092, 16
      %v2486 = vrot.slane %v2484, 3
      %v2487 = vshll.u32 %v1092, 16
      %v2489 = vrot.slane %v2487, 4
      %v2490 = vor.u32 %v2486, %v2489
      %v2492 = vshrl.u32 %v1093, 16
      %v2494 = vrot.slane %v2492, 3
      %v2495 = vshll.u32 %v1093, 16
      %v2497 = vrot.slane %v2495, 4
      %v2498 = vor.u32 %v2494, %v2497
      %v2499 = vsel %vm2095, %v2490, %v2498
      %v2501 = vshrl.u32 %v1165, 16
      %v2503 = vrot.slane %v2501, 3
      %v2504 = vshll.u32 %v1165, 16
      %v2506 = vrot.slane %v2504, 4
      %v2507 = vor.u32 %v2503, %v2506
      %v2508 = vsel %vm2095, %v2507, %v2507
      %v2510 = vshrl.u32 %v1320, 16
      %v2512 = vrot.slane %v2510, 3
      %v2513 = vshll.u32 %v1320, 16
      %v2515 = vrot.slane %v2513, 4
      %v2516 = vor.u32 %v2512, %v2515
      %v2518 = vshrl.u32 %v1322, 16
      %v2520 = vrot.slane %v2518, 3
      %v2521 = vshll.u32 %v1322, 16
      %v2523 = vrot.slane %v2521, 4
      %v2524 = vor.u32 %v2520, %v2523
      %v2525 = vsel %vm2095, %v2516, %v2524
      %v2527 = vshrl.u32 %v1461, 16
      %v2529 = vrot.slane %v2527, 3
      %v2530 = vshll.u32 %v1461, 16
      %v2532 = vrot.slane %v2530, 4
      %v2533 = vor.u32 %v2529, %v2532
      %v2535 = vshrl.u32 %v1462, 16
      %v2537 = vrot.slane %v2535, 3
      %v2538 = vshll.u32 %v1462, 16
      %v2540 = vrot.slane %v2538, 4
      %v2541 = vor.u32 %v2537, %v2540
      %v2542 = vsel %vm2095, %v2533, %v2541
      %v2544 = vshrl.u32 %v1534, 16
      %v2546 = vrot.slane %v2544, 3
      %v2547 = vshll.u32 %v1534, 16
      %v2549 = vrot.slane %v2547, 4
      %v2550 = vor.u32 %v2546, %v2549
      %v2551 = vsel %vm2095, %v2550, %v2550
      %v2553 = vshrl.u32 %v1688, 16
      %v2555 = vrot.slane %v2553, 3
      %v2556 = vshll.u32 %v1688, 16
      %v2558 = vrot.slane %v2556, 4
      %v2559 = vor.u32 %v2555, %v2558
      %v2561 = vshrl.u32 %v1690, 16
      %v2563 = vrot.slane %v2561, 3
      %v2564 = vshll.u32 %v1690, 16
      %v2566 = vrot.slane %v2564, 4
      %v2567 = vor.u32 %v2563, %v2566
      %v2568 = vsel %vm2095, %v2559, %v2567
      %v2570 = vshrl.u32 %v1829, 16
      %v2572 = vrot.slane %v2570, 3
      %v2573 = vshll.u32 %v1829, 16
      %v2575 = vrot.slane %v2573, 4
      %v2576 = vor.u32 %v2572, %v2575
      %v2578 = vshrl.u32 %v1830, 16
      %v2580 = vrot.slane %v2578, 3
      %v2581 = vshll.u32 %v1830, 16
      %v2583 = vrot.slane %v2581, 4
      %v2584 = vor.u32 %v2580, %v2583
      %v2585 = vsel %vm2095, %v2576, %v2584
      %v2587 = vshrl.u32 %v1902, 16
      %v2589 = vrot.slane %v2587, 3
      %v2590 = vshll.u32 %v1902, 16
      %v2592 = vrot.slane %v2590, 4
      %v2593 = vor.u32 %v2589, %v2592
      %v2594 = vsel %vm2095, %v2593, %v2593
      %v2596 = vshrl.u32 %v2056, 16
      %v2598 = vrot.slane %v2596, 3
      %v2599 = vshll.u32 %v2056, 16
      %v2601 = vrot.slane %v2599, 4
      %v2602 = vor.u32 %v2598, %v2601
      %v2604 = vshrl.u32 %v2058, 16
      %v2606 = vrot.slane %v2604, 3
      %v2607 = vshll.u32 %v2058, 16
      %v2609 = vrot.slane %v2607, 4
      %v2610 = vor.u32 %v2606, %v2609
      %v2611 = vsel %vm2095, %v2602, %v2610
      %v2613 = vshrl.u32 %v1094, 16
      %v2615 = vrot.slane %v2613, 3
      %v2616 = vshll.u32 %v1094, 16
      %v2618 = vrot.slane %v2616, 4
      %v2619 = vor.u32 %v2615, %v2618
      %v2621 = vshrl.u32 %v1095, 16
      %v2623 = vrot.slane %v2621, 3
      %v2624 = vshll.u32 %v1095, 16
      %v2626 = vrot.slane %v2624, 4
      %v2627 = vor.u32 %v2623, %v2626
      %v2628 = vsel %vm2095, %v2619, %v2627
      %v2630 = vshrl.u32 %v1173, 16
      %v2632 = vrot.slane %v2630, 3
      %v2633 = vshll.u32 %v1173, 16
      %v2635 = vrot.slane %v2633, 4
      %v2636 = vor.u32 %v2632, %v2635
      %v2637 = vsel %vm2095, %v2636, %v2636
      %v2639 = vshrl.u32 %v1323, 16
      %v2641 = vrot.slane %v2639, 3
      %v2642 = vshll.u32 %v1323, 16
      %v2644 = vrot.slane %v2642, 4
      %v2645 = vor.u32 %v2641, %v2644
      %v2647 = vshrl.u32 %v1325, 16
      %v2649 = vrot.slane %v2647, 3
      %v2650 = vshll.u32 %v1325, 16
      %v2652 = vrot.slane %v2650, 4
      %v2653 = vor.u32 %v2649, %v2652
      %v2654 = vsel %vm2095, %v2645, %v2653
      %v2656 = vshrl.u32 %v1463, 16
      %v2658 = vrot.slane %v2656, 3
      %v2659 = vshll.u32 %v1463, 16
      %v2661 = vrot.slane %v2659, 4
      %v2662 = vor.u32 %v2658, %v2661
      %v2664 = vshrl.u32 %v1464, 16
      %v2666 = vrot.slane %v2664, 3
      %v2667 = vshll.u32 %v1464, 16
      %v2669 = vrot.slane %v2667, 4
      %v2670 = vor.u32 %v2666, %v2669
      %v2671 = vsel %vm2095, %v2662, %v2670
      %v2673 = vshrl.u32 %v1542, 16
      %v2675 = vrot.slane %v2673, 3
      %v2676 = vshll.u32 %v1542, 16
      %v2678 = vrot.slane %v2676, 4
      %v2679 = vor.u32 %v2675, %v2678
      %v2680 = vsel %vm2095, %v2679, %v2679
      %v2682 = vshrl.u32 %v1691, 16
      %v2684 = vrot.slane %v2682, 3
      %v2685 = vshll.u32 %v1691, 16
      %v2687 = vrot.slane %v2685, 4
      %v2688 = vor.u32 %v2684, %v2687
      %v2690 = vshrl.u32 %v1693, 16
      %v2692 = vrot.slane %v2690, 3
      %v2693 = vshll.u32 %v1693, 16
      %v2695 = vrot.slane %v2693, 4
      %v2696 = vor.u32 %v2692, %v2695
      %v2697 = vsel %vm2095, %v2688, %v2696
      %v2699 = vshrl.u32 %v1831, 16
      %v2701 = vrot.slane %v2699, 3
      %v2702 = vshll.u32 %v1831, 16
      %v2704 = vrot.slane %v2702, 4
      %v2705 = vor.u32 %v2701, %v2704
      %v2707 = vshrl.u32 %v1832, 16
      %v2709 = vrot.slane %v2707, 3
      %v2710 = vshll.u32 %v1832, 16
      %v2712 = vrot.slane %v2710, 4
      %v2713 = vor.u32 %v2709, %v2712
      %v2714 = vsel %vm2095, %v2705, %v2713
      %v2716 = vshrl.u32 %v1910, 16
      %v2718 = vrot.slane %v2716, 3
      %v2719 = vshll.u32 %v1910, 16
      %v2721 = vrot.slane %v2719, 4
      %v2722 = vor.u32 %v2718, %v2721
      %v2723 = vsel %vm2095, %v2722, %v2722
      %v2725 = vshrl.u32 %v2059, 16
      %v2727 = vrot.slane %v2725, 3
      %v2728 = vshll.u32 %v2059, 16
      %v2730 = vrot.slane %v2728, 4
      %v2731 = vor.u32 %v2727, %v2730
      %v2733 = vshrl.u32 %v2061, 16
      %v2735 = vrot.slane %v2733, 3
      %v2736 = vshll.u32 %v2061, 16
      %v2738 = vrot.slane %v2736, 4
      %v2739 = vor.u32 %v2735, %v2738
      %v2740 = vsel %vm2095, %v2731, %v2739
      %v2742 = vshrl.u32 %v1096, 16
      %v2744 = vrot.slane %v2742, 3
      %v2745 = vshll.u32 %v1096, 16
      %v2747 = vrot.slane %v2745, 4
      %v2748 = vor.u32 %v2744, %v2747
      %v2750 = vshrl.u32 %v1097, 16
      %v2752 = vrot.slane %v2750, 3
      %v2753 = vshll.u32 %v1097, 16
      %v2755 = vrot.slane %v2753, 4
      %v2756 = vor.u32 %v2752, %v2755
      %v2757 = vsel %vm2095, %v2748, %v2756
      %v2759 = vshrl.u32 %v1181, 16
      %v2761 = vrot.slane %v2759, 3
      %v2762 = vshll.u32 %v1181, 16
      %v2764 = vrot.slane %v2762, 4
      %v2765 = vor.u32 %v2761, %v2764
      %v2766 = vsel %vm2095, %v2765, %v2765
      %v2768 = vshrl.u32 %v1326, 16
      %v2770 = vrot.slane %v2768, 3
      %v2771 = vshll.u32 %v1326, 16
      %v2773 = vrot.slane %v2771, 4
      %v2774 = vor.u32 %v2770, %v2773
      %v2776 = vshrl.u32 %v1328, 16
      %v2778 = vrot.slane %v2776, 3
      %v2779 = vshll.u32 %v1328, 16
      %v2781 = vrot.slane %v2779, 4
      %v2782 = vor.u32 %v2778, %v2781
      %v2783 = vsel %vm2095, %v2774, %v2782
      %v2785 = vshrl.u32 %v1465, 16
      %v2787 = vrot.slane %v2785, 3
      %v2788 = vshll.u32 %v1465, 16
      %v2790 = vrot.slane %v2788, 4
      %v2791 = vor.u32 %v2787, %v2790
      %v2793 = vshrl.u32 %v1466, 16
      %v2795 = vrot.slane %v2793, 3
      %v2796 = vshll.u32 %v1466, 16
      %v2798 = vrot.slane %v2796, 4
      %v2799 = vor.u32 %v2795, %v2798
      %v2800 = vsel %vm2095, %v2791, %v2799
      %v2802 = vshrl.u32 %v1550, 16
      %v2804 = vrot.slane %v2802, 3
      %v2805 = vshll.u32 %v1550, 16
      %v2807 = vrot.slane %v2805, 4
      %v2808 = vor.u32 %v2804, %v2807
      %v2809 = vsel %vm2095, %v2808, %v2808
      %v2811 = vshrl.u32 %v1694, 16
      %v2813 = vrot.slane %v2811, 3
      %v2814 = vshll.u32 %v1694, 16
      %v2816 = vrot.slane %v2814, 4
      %v2817 = vor.u32 %v2813, %v2816
      %v2819 = vshrl.u32 %v1696, 16
      %v2821 = vrot.slane %v2819, 3
      %v2822 = vshll.u32 %v1696, 16
      %v2824 = vrot.slane %v2822, 4
      %v2825 = vor.u32 %v2821, %v2824
      %v2826 = vsel %vm2095, %v2817, %v2825
      %v2828 = vshrl.u32 %v1833, 16
      %v2830 = vrot.slane %v2828, 3
      %v2831 = vshll.u32 %v1833, 16
      %v2833 = vrot.slane %v2831, 4
      %v2834 = vor.u32 %v2830, %v2833
      %v2836 = vshrl.u32 %v1834, 16
      %v2838 = vrot.slane %v2836, 3
      %v2839 = vshll.u32 %v1834, 16
      %v2841 = vrot.slane %v2839, 4
      %v2842 = vor.u32 %v2838, %v2841
      %v2843 = vsel %vm2095, %v2834, %v2842
      %v2845 = vshrl.u32 %v1918, 16
      %v2847 = vrot.slane %v2845, 3
      %v2848 = vshll.u32 %v1918, 16
      %v2850 = vrot.slane %v2848, 4
      %v2851 = vor.u32 %v2847, %v2850
      %v2852 = vsel %vm2095, %v2851, %v2851
      %v2854 = vshrl.u32 %v2062, 16
      %v2856 = vrot.slane %v2854, 3
      %v2857 = vshll.u32 %v2062, 16
      %v2859 = vrot.slane %v2857, 4
      %v2860 = vor.u32 %v2856, %v2859
      %v2862 = vshrl.u32 %v2064, 16
      %v2864 = vrot.slane %v2862, 3
      %v2865 = vshll.u32 %v2064, 16
      %v2867 = vrot.slane %v2865, 4
      %v2868 = vor.u32 %v2864, %v2867
      %v2869 = vsel %vm2095, %v2860, %v2868
      %v2871 = vshrl.u32 %v1098, 16
      %v2873 = vrot.slane %v2871, 3
      %v2874 = vshll.u32 %v1098, 16
      %v2876 = vrot.slane %v2874, 4
      %v2877 = vor.u32 %v2873, %v2876
      %v2879 = vshrl.u32 %v1099, 16
      %v2881 = vrot.slane %v2879, 3
      %v2882 = vshll.u32 %v1099, 16
      %v2884 = vrot.slane %v2882, 4
      %v2885 = vor.u32 %v2881, %v2884
      %v2886 = vsel %vm2095, %v2877, %v2885
      %v2888 = vshrl.u32 %v1189, 16
      %v2890 = vrot.slane %v2888, 3
      %v2891 = vshll.u32 %v1189, 16
      %v2893 = vrot.slane %v2891, 4
      %v2894 = vor.u32 %v2890, %v2893
      %v2895 = vsel %vm2095, %v2894, %v2894
      %v2897 = vshrl.u32 %v1329, 16
      %v2899 = vrot.slane %v2897, 3
      %v2900 = vshll.u32 %v1329, 16
      %v2902 = vrot.slane %v2900, 4
      %v2903 = vor.u32 %v2899, %v2902
      %v2905 = vshrl.u32 %v1331, 16
      %v2907 = vrot.slane %v2905, 3
      %v2908 = vshll.u32 %v1331, 16
      %v2910 = vrot.slane %v2908, 4
      %v2911 = vor.u32 %v2907, %v2910
      %v2912 = vsel %vm2095, %v2903, %v2911
      %v2914 = vshrl.u32 %v1467, 16
      %v2916 = vrot.slane %v2914, 3
      %v2917 = vshll.u32 %v1467, 16
      %v2919 = vrot.slane %v2917, 4
      %v2920 = vor.u32 %v2916, %v2919
      %v2922 = vshrl.u32 %v1468, 16
      %v2924 = vrot.slane %v2922, 3
      %v2925 = vshll.u32 %v1468, 16
      %v2927 = vrot.slane %v2925, 4
      %v2928 = vor.u32 %v2924, %v2927
      %v2929 = vsel %vm2095, %v2920, %v2928
      %v2931 = vshrl.u32 %v1558, 16
      %v2933 = vrot.slane %v2931, 3
      %v2934 = vshll.u32 %v1558, 16
      %v2936 = vrot.slane %v2934, 4
      %v2937 = vor.u32 %v2933, %v2936
      %v2938 = vsel %vm2095, %v2937, %v2937
      %v2940 = vshrl.u32 %v1697, 16
      %v2942 = vrot.slane %v2940, 3
      %v2943 = vshll.u32 %v1697, 16
      %v2945 = vrot.slane %v2943, 4
      %v2946 = vor.u32 %v2942, %v2945
      %v2948 = vshrl.u32 %v1699, 16
      %v2950 = vrot.slane %v2948, 3
      %v2951 = vshll.u32 %v1699, 16
      %v2953 = vrot.slane %v2951, 4
      %v2954 = vor.u32 %v2950, %v2953
      %v2955 = vsel %vm2095, %v2946, %v2954
      %v2957 = vshrl.u32 %v1835, 16
      %v2959 = vrot.slane %v2957, 3
      %v2960 = vshll.u32 %v1835, 16
      %v2962 = vrot.slane %v2960, 4
      %v2963 = vor.u32 %v2959, %v2962
      %v2965 = vshrl.u32 %v1836, 16
      %v2967 = vrot.slane %v2965, 3
      %v2968 = vshll.u32 %v1836, 16
      %v2970 = vrot.slane %v2968, 4
      %v2971 = vor.u32 %v2967, %v2970
      %v2972 = vsel %vm2095, %v2963, %v2971
      %v2974 = vshrl.u32 %v1926, 16
      %v2976 = vrot.slane %v2974, 3
      %v2977 = vshll.u32 %v1926, 16
      %v2979 = vrot.slane %v2977, 4
      %v2980 = vor.u32 %v2976, %v2979
      %v2981 = vsel %vm2095, %v2980, %v2980
      %v2983 = vshrl.u32 %v2065, 16
      %v2985 = vrot.slane %v2983, 3
      %v2986 = vshll.u32 %v2065, 16
      %v2988 = vrot.slane %v2986, 4
      %v2989 = vor.u32 %v2985, %v2988
      %v2991 = vshrl.u32 %v2067, 16
      %v2993 = vrot.slane %v2991, 3
      %v2994 = vshll.u32 %v2067, 16
      %v2996 = vrot.slane %v2994, 4
      %v2997 = vor.u32 %v2993, %v2996
      %v2998 = vsel %vm2095, %v2989, %v2997
      %v3000 = vshrl.u32 %v1100, 16
      %v3002 = vrot.slane %v3000, 3
      %v3003 = vshll.u32 %v1100, 16
      %v3005 = vrot.slane %v3003, 4
      %v3006 = vor.u32 %v3002, %v3005
      %v3008 = vshrl.u32 %v1101, 16
      %v3010 = vrot.slane %v3008, 3
      %v3011 = vshll.u32 %v1101, 16
      %v3013 = vrot.slane %v3011, 4
      %v3014 = vor.u32 %v3010, %v3013
      %v3015 = vsel %vm2095, %v3006, %v3014
      %v3017 = vshrl.u32 %v1197, 16
      %v3019 = vrot.slane %v3017, 3
      %v3020 = vshll.u32 %v1197, 16
      %v3022 = vrot.slane %v3020, 4
      %v3023 = vor.u32 %v3019, %v3022
      %v3024 = vsel %vm2095, %v3023, %v3023
      %v3026 = vshrl.u32 %v1332, 16
      %v3028 = vrot.slane %v3026, 3
      %v3029 = vshll.u32 %v1332, 16
      %v3031 = vrot.slane %v3029, 4
      %v3032 = vor.u32 %v3028, %v3031
      %v3034 = vshrl.u32 %v1334, 16
      %v3036 = vrot.slane %v3034, 3
      %v3037 = vshll.u32 %v1334, 16
      %v3039 = vrot.slane %v3037, 4
      %v3040 = vor.u32 %v3036, %v3039
      %v3041 = vsel %vm2095, %v3032, %v3040
      %v3043 = vshrl.u32 %v1469, 16
      %v3045 = vrot.slane %v3043, 3
      %v3046 = vshll.u32 %v1469, 16
      %v3048 = vrot.slane %v3046, 4
      %v3049 = vor.u32 %v3045, %v3048
      %v3051 = vshrl.u32 %v1470, 16
      %v3053 = vrot.slane %v3051, 3
      %v3054 = vshll.u32 %v1470, 16
      %v3056 = vrot.slane %v3054, 4
      %v3057 = vor.u32 %v3053, %v3056
      %v3058 = vsel %vm2095, %v3049, %v3057
      %v3060 = vshrl.u32 %v1566, 16
      %v3062 = vrot.slane %v3060, 3
      %v3063 = vshll.u32 %v1566, 16
      %v3065 = vrot.slane %v3063, 4
      %v3066 = vor.u32 %v3062, %v3065
      %v3067 = vsel %vm2095, %v3066, %v3066
      %v3069 = vshrl.u32 %v1700, 16
      %v3071 = vrot.slane %v3069, 3
      %v3072 = vshll.u32 %v1700, 16
      %v3074 = vrot.slane %v3072, 4
      %v3075 = vor.u32 %v3071, %v3074
      %v3077 = vshrl.u32 %v1702, 16
      %v3079 = vrot.slane %v3077, 3
      %v3080 = vshll.u32 %v1702, 16
      %v3082 = vrot.slane %v3080, 4
      %v3083 = vor.u32 %v3079, %v3082
      %v3084 = vsel %vm2095, %v3075, %v3083
      %v3086 = vshrl.u32 %v1837, 16
      %v3088 = vrot.slane %v3086, 3
      %v3089 = vshll.u32 %v1837, 16
      %v3091 = vrot.slane %v3089, 4
      %v3092 = vor.u32 %v3088, %v3091
      %v3094 = vshrl.u32 %v1838, 16
      %v3096 = vrot.slane %v3094, 3
      %v3097 = vshll.u32 %v1838, 16
      %v3099 = vrot.slane %v3097, 4
      %v3100 = vor.u32 %v3096, %v3099
      %v3101 = vsel %vm2095, %v3092, %v3100
      %v3103 = vshrl.u32 %v1934, 16
      %v3105 = vrot.slane %v3103, 3
      %v3106 = vshll.u32 %v1934, 16
      %v3108 = vrot.slane %v3106, 4
      %v3109 = vor.u32 %v3105, %v3108
      %v3110 = vsel %vm2095, %v3109, %v3109
      %v3112 = vshrl.u32 %v2068, 16
      %v3114 = vrot.slane %v3112, 3
      %v3115 = vshll.u32 %v2068, 16
      %v3117 = vrot.slane %v3115, 4
      %v3118 = vor.u32 %v3114, %v3117
      %v3120 = vshrl.u32 %v2070, 16
      %v3122 = vrot.slane %v3120, 3
      %v3123 = vshll.u32 %v2070, 16
      %v3125 = vrot.slane %v3123, 4
      %v3126 = vor.u32 %v3122, %v3125
      %v3127 = vsel %vm2095, %v3118, %v3126
      %v3129 = vshrl.u32 %v1102, 16
      %v3131 = vrot.slane %v3129, 3
      %v3132 = vshll.u32 %v1102, 16
      %v3134 = vrot.slane %v3132, 4
      %v3135 = vor.u32 %v3131, %v3134
      %v3137 = vshrl.u32 %v1103, 16
      %v3139 = vrot.slane %v3137, 3
      %v3140 = vshll.u32 %v1103, 16
      %v3142 = vrot.slane %v3140, 4
      %v3143 = vor.u32 %v3139, %v3142
      %v3144 = vsel %vm2095, %v3135, %v3143
      %v3146 = vshrl.u32 %v1205, 16
      %v3148 = vrot.slane %v3146, 3
      %v3149 = vshll.u32 %v1205, 16
      %v3151 = vrot.slane %v3149, 4
      %v3152 = vor.u32 %v3148, %v3151
      %v3153 = vsel %vm2095, %v3152, %v3152
      %v3155 = vshrl.u32 %v1335, 16
      %v3157 = vrot.slane %v3155, 3
      %v3158 = vshll.u32 %v1335, 16
      %v3160 = vrot.slane %v3158, 4
      %v3161 = vor.u32 %v3157, %v3160
      %v3163 = vshrl.u32 %v1337, 16
      %v3165 = vrot.slane %v3163, 3
      %v3166 = vshll.u32 %v1337, 16
      %v3168 = vrot.slane %v3166, 4
      %v3169 = vor.u32 %v3165, %v3168
      %v3170 = vsel %vm2095, %v3161, %v3169
      %v3172 = vshrl.u32 %v1471, 16
      %v3174 = vrot.slane %v3172, 3
      %v3175 = vshll.u32 %v1471, 16
      %v3177 = vrot.slane %v3175, 4
      %v3178 = vor.u32 %v3174, %v3177
      %v3180 = vshrl.u32 %v1472, 16
      %v3182 = vrot.slane %v3180, 3
      %v3183 = vshll.u32 %v1472, 16
      %v3185 = vrot.slane %v3183, 4
      %v3186 = vor.u32 %v3182, %v3185
      %v3187 = vsel %vm2095, %v3178, %v3186
      %v3189 = vshrl.u32 %v1574, 16
      %v3191 = vrot.slane %v3189, 3
      %v3192 = vshll.u32 %v1574, 16
      %v3194 = vrot.slane %v3192, 4
      %v3195 = vor.u32 %v3191, %v3194
      %v3196 = vsel %vm2095, %v3195, %v3195
      %v3198 = vshrl.u32 %v1703, 16
      %v3200 = vrot.slane %v3198, 3
      %v3201 = vshll.u32 %v1703, 16
      %v3203 = vrot.slane %v3201, 4
      %v3204 = vor.u32 %v3200, %v3203
      %v3206 = vshrl.u32 %v1705, 16
      %v3208 = vrot.slane %v3206, 3
      %v3209 = vshll.u32 %v1705, 16
      %v3211 = vrot.slane %v3209, 4
      %v3212 = vor.u32 %v3208, %v3211
      %v3213 = vsel %vm2095, %v3204, %v3212
      %v3215 = vshrl.u32 %v1839, 16
      %v3217 = vrot.slane %v3215, 3
      %v3218 = vshll.u32 %v1839, 16
      %v3220 = vrot.slane %v3218, 4
      %v3221 = vor.u32 %v3217, %v3220
      %v3223 = vshrl.u32 %v1840, 16
      %v3225 = vrot.slane %v3223, 3
      %v3226 = vshll.u32 %v1840, 16
      %v3228 = vrot.slane %v3226, 4
      %v3229 = vor.u32 %v3225, %v3228
      %v3230 = vsel %vm2095, %v3221, %v3229
      %v3232 = vshrl.u32 %v1942, 16
      %v3234 = vrot.slane %v3232, 3
      %v3235 = vshll.u32 %v1942, 16
      %v3237 = vrot.slane %v3235, 4
      %v3238 = vor.u32 %v3234, %v3237
      %v3239 = vsel %vm2095, %v3238, %v3238
      %v3241 = vshrl.u32 %v2071, 16
      %v3243 = vrot.slane %v3241, 3
      %v3244 = vshll.u32 %v2071, 16
      %v3246 = vrot.slane %v3244, 4
      %v3247 = vor.u32 %v3243, %v3246
      %v3249 = vshrl.u32 %v2073, 16
      %v3251 = vrot.slane %v3249, 3
      %v3252 = vshll.u32 %v2073, 16
      %v3254 = vrot.slane %v3252, 4
      %v3255 = vor.u32 %v3251, %v3254
      %v3256 = vsel %vm2095, %v3247, %v3255
      %v3258 = vshrl.u32 %v1104, 16
      %v3260 = vrot.slane %v3258, 3
      %v3261 = vshll.u32 %v1104, 16
      %v3263 = vrot.slane %v3261, 4
      %v3264 = vor.u32 %v3260, %v3263
      %v3266 = vshrl.u32 %v1105, 16
      %v3268 = vrot.slane %v3266, 3
      %v3269 = vshll.u32 %v1105, 16
      %v3271 = vrot.slane %v3269, 4
      %v3272 = vor.u32 %v3268, %v3271
      %v3273 = vsel %vm2095, %v3264, %v3272
      %v3275 = vshrl.u32 %v1213, 16
      %v3277 = vrot.slane %v3275, 3
      %v3278 = vshll.u32 %v1213, 16
      %v3280 = vrot.slane %v3278, 4
      %v3281 = vor.u32 %v3277, %v3280
      %v3282 = vsel %vm2095, %v3281, %v3281
      %v3284 = vshrl.u32 %v1338, 16
      %v3286 = vrot.slane %v3284, 3
      %v3287 = vshll.u32 %v1338, 16
      %v3289 = vrot.slane %v3287, 4
      %v3290 = vor.u32 %v3286, %v3289
      %v3292 = vshrl.u32 %v1340, 16
      %v3294 = vrot.slane %v3292, 3
      %v3295 = vshll.u32 %v1340, 16
      %v3297 = vrot.slane %v3295, 4
      %v3298 = vor.u32 %v3294, %v3297
      %v3299 = vsel %vm2095, %v3290, %v3298
      %v3301 = vshrl.u32 %v1473, 16
      %v3303 = vrot.slane %v3301, 3
      %v3304 = vshll.u32 %v1473, 16
      %v3306 = vrot.slane %v3304, 4
      %v3307 = vor.u32 %v3303, %v3306
      %v3309 = vshrl.u32 %v1474, 16
      %v3311 = vrot.slane %v3309, 3
      %v3312 = vshll.u32 %v1474, 16
      %v3314 = vrot.slane %v3312, 4
      %v3315 = vor.u32 %v3311, %v3314
      %v3316 = vsel %vm2095, %v3307, %v3315
      %v3318 = vshrl.u32 %v1582, 16
      %v3320 = vrot.slane %v3318, 3
      %v3321 = vshll.u32 %v1582, 16
      %v3323 = vrot.slane %v3321, 4
      %v3324 = vor.u32 %v3320, %v3323
      %v3325 = vsel %vm2095, %v3324, %v3324
      %v3327 = vshrl.u32 %v1706, 16
      %v3329 = vrot.slane %v3327, 3
      %v3330 = vshll.u32 %v1706, 16
      %v3332 = vrot.slane %v3330, 4
      %v3333 = vor.u32 %v3329, %v3332
      %v3335 = vshrl.u32 %v1708, 16
      %v3337 = vrot.slane %v3335, 3
      %v3338 = vshll.u32 %v1708, 16
      %v3340 = vrot.slane %v3338, 4
      %v3341 = vor.u32 %v3337, %v3340
      %v3342 = vsel %vm2095, %v3333, %v3341
      %v3344 = vshrl.u32 %v1841, 16
      %v3346 = vrot.slane %v3344, 3
      %v3347 = vshll.u32 %v1841, 16
      %v3349 = vrot.slane %v3347, 4
      %v3350 = vor.u32 %v3346, %v3349
      %v3352 = vshrl.u32 %v1842, 16
      %v3354 = vrot.slane %v3352, 3
      %v3355 = vshll.u32 %v1842, 16
      %v3357 = vrot.slane %v3355, 4
      %v3358 = vor.u32 %v3354, %v3357
      %v3359 = vsel %vm2095, %v3350, %v3358
      %v3361 = vshrl.u32 %v1950, 16
      %v3363 = vrot.slane %v3361, 3
      %v3364 = vshll.u32 %v1950, 16
      %v3366 = vrot.slane %v3364, 4
      %v3367 = vor.u32 %v3363, %v3366
      %v3368 = vsel %vm2095, %v3367, %v3367
      %v3370 = vshrl.u32 %v2074, 16
      %v3372 = vrot.slane %v3370, 3
      %v3373 = vshll.u32 %v2074, 16
      %v3375 = vrot.slane %v3373, 4
      %v3376 = vor.u32 %v3372, %v3375
      %v3378 = vshrl.u32 %v2076, 16
      %v3380 = vrot.slane %v3378, 3
      %v3381 = vshll.u32 %v2076, 16
      %v3383 = vrot.slane %v3381, 4
      %v3384 = vor.u32 %v3380, %v3383
      %v3385 = vsel %vm2095, %v3376, %v3384
      %v3387 = vshrl.u32 %v1106, 16
      %v3389 = vrot.slane %v3387, 3
      %v3390 = vshll.u32 %v1106, 16
      %v3392 = vrot.slane %v3390, 4
      %v3393 = vor.u32 %v3389, %v3392
      %v3395 = vshrl.u32 %v1107, 16
      %v3397 = vrot.slane %v3395, 3
      %v3398 = vshll.u32 %v1107, 16
      %v3400 = vrot.slane %v3398, 4
      %v3401 = vor.u32 %v3397, %v3400
      %v3402 = vsel %vm2095, %v3393, %v3401
      %v3404 = vshrl.u32 %v1221, 16
      %v3406 = vrot.slane %v3404, 3
      %v3407 = vshll.u32 %v1221, 16
      %v3409 = vrot.slane %v3407, 4
      %v3410 = vor.u32 %v3406, %v3409
      %v3411 = vsel %vm2095, %v3410, %v3410
      %v3413 = vshrl.u32 %v1341, 16
      %v3415 = vrot.slane %v3413, 3
      %v3416 = vshll.u32 %v1341, 16
      %v3418 = vrot.slane %v3416, 4
      %v3419 = vor.u32 %v3415, %v3418
      %v3421 = vshrl.u32 %v1343, 16
      %v3423 = vrot.slane %v3421, 3
      %v3424 = vshll.u32 %v1343, 16
      %v3426 = vrot.slane %v3424, 4
      %v3427 = vor.u32 %v3423, %v3426
      %v3428 = vsel %vm2095, %v3419, %v3427
      %v3430 = vshrl.u32 %v1475, 16
      %v3432 = vrot.slane %v3430, 3
      %v3433 = vshll.u32 %v1475, 16
      %v3435 = vrot.slane %v3433, 4
      %v3436 = vor.u32 %v3432, %v3435
      %v3438 = vshrl.u32 %v1476, 16
      %v3440 = vrot.slane %v3438, 3
      %v3441 = vshll.u32 %v1476, 16
      %v3443 = vrot.slane %v3441, 4
      %v3444 = vor.u32 %v3440, %v3443
      %v3445 = vsel %vm2095, %v3436, %v3444
      %v3447 = vshrl.u32 %v1590, 16
      %v3449 = vrot.slane %v3447, 3
      %v3450 = vshll.u32 %v1590, 16
      %v3452 = vrot.slane %v3450, 4
      %v3453 = vor.u32 %v3449, %v3452
      %v3454 = vsel %vm2095, %v3453, %v3453
      %v3456 = vshrl.u32 %v1709, 16
      %v3458 = vrot.slane %v3456, 3
      %v3459 = vshll.u32 %v1709, 16
      %v3461 = vrot.slane %v3459, 4
      %v3462 = vor.u32 %v3458, %v3461
      %v3464 = vshrl.u32 %v1711, 16
      %v3466 = vrot.slane %v3464, 3
      %v3467 = vshll.u32 %v1711, 16
      %v3469 = vrot.slane %v3467, 4
      %v3470 = vor.u32 %v3466, %v3469
      %v3471 = vsel %vm2095, %v3462, %v3470
      %v3473 = vshrl.u32 %v1843, 16
      %v3475 = vrot.slane %v3473, 3
      %v3476 = vshll.u32 %v1843, 16
      %v3478 = vrot.slane %v3476, 4
      %v3479 = vor.u32 %v3475, %v3478
      %v3481 = vshrl.u32 %v1844, 16
      %v3483 = vrot.slane %v3481, 3
      %v3484 = vshll.u32 %v1844, 16
      %v3486 = vrot.slane %v3484, 4
      %v3487 = vor.u32 %v3483, %v3486
      %v3488 = vsel %vm2095, %v3479, %v3487
      %v3490 = vshrl.u32 %v1958, 16
      %v3492 = vrot.slane %v3490, 3
      %v3493 = vshll.u32 %v1958, 16
      %v3495 = vrot.slane %v3493, 4
      %v3496 = vor.u32 %v3492, %v3495
      %v3497 = vsel %vm2095, %v3496, %v3496
      %v3499 = vshrl.u32 %v2077, 16
      %v3501 = vrot.slane %v3499, 3
      %v3502 = vshll.u32 %v2077, 16
      %v3504 = vrot.slane %v3502, 4
      %v3505 = vor.u32 %v3501, %v3504
      %v3507 = vshrl.u32 %v2079, 16
      %v3509 = vrot.slane %v3507, 3
      %v3510 = vshll.u32 %v2079, 16
      %v3512 = vrot.slane %v3510, 4
      %v3513 = vor.u32 %v3509, %v3512
      %v3514 = vsel %vm2095, %v3505, %v3513
      %v3516 = vshrl.u32 %v1108, 16
      %v3518 = vrot.slane %v3516, 3
      %v3519 = vshll.u32 %v1108, 16
      %v3521 = vrot.slane %v3519, 4
      %v3522 = vor.u32 %v3518, %v3521
      %v3524 = vshrl.u32 %v1109, 16
      %v3526 = vrot.slane %v3524, 3
      %v3527 = vshll.u32 %v1109, 16
      %v3529 = vrot.slane %v3527, 4
      %v3530 = vor.u32 %v3526, %v3529
      %v3531 = vsel %vm2095, %v3522, %v3530
      %v3533 = vshrl.u32 %v1229, 16
      %v3535 = vrot.slane %v3533, 3
      %v3536 = vshll.u32 %v1229, 16
      %v3538 = vrot.slane %v3536, 4
      %v3539 = vor.u32 %v3535, %v3538
      %v3540 = vsel %vm2095, %v3539, %v3539
      %v3542 = vshrl.u32 %v1344, 16
      %v3544 = vrot.slane %v3542, 3
      %v3545 = vshll.u32 %v1344, 16
      %v3547 = vrot.slane %v3545, 4
      %v3548 = vor.u32 %v3544, %v3547
      %v3550 = vshrl.u32 %v1346, 16
      %v3552 = vrot.slane %v3550, 3
      %v3553 = vshll.u32 %v1346, 16
      %v3555 = vrot.slane %v3553, 4
      %v3556 = vor.u32 %v3552, %v3555
      %v3557 = vsel %vm2095, %v3548, %v3556
      %v3559 = vshrl.u32 %v1477, 16
      %v3561 = vrot.slane %v3559, 3
      %v3562 = vshll.u32 %v1477, 16
      %v3564 = vrot.slane %v3562, 4
      %v3565 = vor.u32 %v3561, %v3564
      %v3567 = vshrl.u32 %v1478, 16
      %v3569 = vrot.slane %v3567, 3
      %v3570 = vshll.u32 %v1478, 16
      %v3572 = vrot.slane %v3570, 4
      %v3573 = vor.u32 %v3569, %v3572
      %v3574 = vsel %vm2095, %v3565, %v3573
      %v3576 = vshrl.u32 %v1598, 16
      %v3578 = vrot.slane %v3576, 3
      %v3579 = vshll.u32 %v1598, 16
      %v3581 = vrot.slane %v3579, 4
      %v3582 = vor.u32 %v3578, %v3581
      %v3583 = vsel %vm2095, %v3582, %v3582
      %v3585 = vshrl.u32 %v1712, 16
      %v3587 = vrot.slane %v3585, 3
      %v3588 = vshll.u32 %v1712, 16
      %v3590 = vrot.slane %v3588, 4
      %v3591 = vor.u32 %v3587, %v3590
      %v3593 = vshrl.u32 %v1714, 16
      %v3595 = vrot.slane %v3593, 3
      %v3596 = vshll.u32 %v1714, 16
      %v3598 = vrot.slane %v3596, 4
      %v3599 = vor.u32 %v3595, %v3598
      %v3600 = vsel %vm2095, %v3591, %v3599
      %v3602 = vshrl.u32 %v1845, 16
      %v3604 = vrot.slane %v3602, 3
      %v3605 = vshll.u32 %v1845, 16
      %v3607 = vrot.slane %v3605, 4
      %v3608 = vor.u32 %v3604, %v3607
      %v3610 = vshrl.u32 %v1846, 16
      %v3612 = vrot.slane %v3610, 3
      %v3613 = vshll.u32 %v1846, 16
      %v3615 = vrot.slane %v3613, 4
      %v3616 = vor.u32 %v3612, %v3615
      %v3617 = vsel %vm2095, %v3608, %v3616
      %v3619 = vshrl.u32 %v1966, 16
      %v3621 = vrot.slane %v3619, 3
      %v3622 = vshll.u32 %v1966, 16
      %v3624 = vrot.slane %v3622, 4
      %v3625 = vor.u32 %v3621, %v3624
      %v3626 = vsel %vm2095, %v3625, %v3625
      %v3628 = vshrl.u32 %v2080, 16
      %v3630 = vrot.slane %v3628, 3
      %v3631 = vshll.u32 %v2080, 16
      %v3633 = vrot.slane %v3631, 4
      %v3634 = vor.u32 %v3630, %v3633
      %v3636 = vshrl.u32 %v2082, 16
      %v3638 = vrot.slane %v3636, 3
      %v3639 = vshll.u32 %v2082, 16
      %v3641 = vrot.slane %v3639, 4
      %v3642 = vor.u32 %v3638, %v3641
      %v3643 = vsel %vm2095, %v3634, %v3642
      %v3645 = vshrl.u32 %v1110, 16
      %v3647 = vrot.slane %v3645, 3
      %v3648 = vshll.u32 %v1110, 16
      %v3650 = vrot.slane %v3648, 4
      %v3651 = vor.u32 %v3647, %v3650
      %v3653 = vshrl.u32 %v1111, 16
      %v3655 = vrot.slane %v3653, 3
      %v3656 = vshll.u32 %v1111, 16
      %v3658 = vrot.slane %v3656, 4
      %v3659 = vor.u32 %v3655, %v3658
      %v3660 = vsel %vm2095, %v3651, %v3659
      %v3662 = vshrl.u32 %v1237, 16
      %v3664 = vrot.slane %v3662, 3
      %v3665 = vshll.u32 %v1237, 16
      %v3667 = vrot.slane %v3665, 4
      %v3668 = vor.u32 %v3664, %v3667
      %v3669 = vsel %vm2095, %v3668, %v3668
      %v3671 = vshrl.u32 %v1347, 16
      %v3673 = vrot.slane %v3671, 3
      %v3674 = vshll.u32 %v1347, 16
      %v3676 = vrot.slane %v3674, 4
      %v3677 = vor.u32 %v3673, %v3676
      %v3679 = vshrl.u32 %v1349, 16
      %v3681 = vrot.slane %v3679, 3
      %v3682 = vshll.u32 %v1349, 16
      %v3684 = vrot.slane %v3682, 4
      %v3685 = vor.u32 %v3681, %v3684
      %v3686 = vsel %vm2095, %v3677, %v3685
      %v3688 = vshrl.u32 %v1479, 16
      %v3690 = vrot.slane %v3688, 3
      %v3691 = vshll.u32 %v1479, 16
      %v3693 = vrot.slane %v3691, 4
      %v3694 = vor.u32 %v3690, %v3693
      %v3696 = vshrl.u32 %v1480, 16
      %v3698 = vrot.slane %v3696, 3
      %v3699 = vshll.u32 %v1480, 16
      %v3701 = vrot.slane %v3699, 4
      %v3702 = vor.u32 %v3698, %v3701
      %v3703 = vsel %vm2095, %v3694, %v3702
      %v3705 = vshrl.u32 %v1606, 16
      %v3707 = vrot.slane %v3705, 3
      %v3708 = vshll.u32 %v1606, 16
      %v3710 = vrot.slane %v3708, 4
      %v3711 = vor.u32 %v3707, %v3710
      %v3712 = vsel %vm2095, %v3711, %v3711
      %v3714 = vshrl.u32 %v1715, 16
      %v3716 = vrot.slane %v3714, 3
      %v3717 = vshll.u32 %v1715, 16
      %v3719 = vrot.slane %v3717, 4
      %v3720 = vor.u32 %v3716, %v3719
      %v3722 = vshrl.u32 %v1717, 16
      %v3724 = vrot.slane %v3722, 3
      %v3725 = vshll.u32 %v1717, 16
      %v3727 = vrot.slane %v3725, 4
      %v3728 = vor.u32 %v3724, %v3727
      %v3729 = vsel %vm2095, %v3720, %v3728
      %v3731 = vshrl.u32 %v1847, 16
      %v3733 = vrot.slane %v3731, 3
      %v3734 = vshll.u32 %v1847, 16
      %v3736 = vrot.slane %v3734, 4
      %v3737 = vor.u32 %v3733, %v3736
      %v3739 = vshrl.u32 %v1848, 16
      %v3741 = vrot.slane %v3739, 3
      %v3742 = vshll.u32 %v1848, 16
      %v3744 = vrot.slane %v3742, 4
      %v3745 = vor.u32 %v3741, %v3744
      %v3746 = vsel %vm2095, %v3737, %v3745
      %v3748 = vshrl.u32 %v1974, 16
      %v3750 = vrot.slane %v3748, 3
      %v3751 = vshll.u32 %v1974, 16
      %v3753 = vrot.slane %v3751, 4
      %v3754 = vor.u32 %v3750, %v3753
      %v3755 = vsel %vm2095, %v3754, %v3754
      %v3757 = vshrl.u32 %v2083, 16
      %v3759 = vrot.slane %v3757, 3
      %v3760 = vshll.u32 %v2083, 16
      %v3762 = vrot.slane %v3760, 4
      %v3763 = vor.u32 %v3759, %v3762
      %v3765 = vshrl.u32 %v2085, 16
      %v3767 = vrot.slane %v3765, 3
      %v3768 = vshll.u32 %v2085, 16
      %v3770 = vrot.slane %v3768, 4
      %v3771 = vor.u32 %v3767, %v3770
      %v3772 = vsel %vm2095, %v3763, %v3771
      %v3774 = vshrl.u32 %v1112, 16
      %v3776 = vrot.slane %v3774, 3
      %v3777 = vshll.u32 %v1112, 16
      %v3779 = vrot.slane %v3777, 4
      %v3780 = vor.u32 %v3776, %v3779
      %v3782 = vshrl.u32 %v1113, 16
      %v3784 = vrot.slane %v3782, 3
      %v3785 = vshll.u32 %v1113, 16
      %v3787 = vrot.slane %v3785, 4
      %v3788 = vor.u32 %v3784, %v3787
      %v3789 = vsel %vm2095, %v3780, %v3788
      %v3791 = vshrl.u32 %v1245, 16
      %v3793 = vrot.slane %v3791, 3
      %v3794 = vshll.u32 %v1245, 16
      %v3796 = vrot.slane %v3794, 4
      %v3797 = vor.u32 %v3793, %v3796
      %v3798 = vsel %vm2095, %v3797, %v3797
      %v3800 = vshrl.u32 %v1350, 16
      %v3802 = vrot.slane %v3800, 3
      %v3803 = vshll.u32 %v1350, 16
      %v3805 = vrot.slane %v3803, 4
      %v3806 = vor.u32 %v3802, %v3805
      %v3808 = vshrl.u32 %v1352, 16
      %v3810 = vrot.slane %v3808, 3
      %v3811 = vshll.u32 %v1352, 16
      %v3813 = vrot.slane %v3811, 4
      %v3814 = vor.u32 %v3810, %v3813
      %v3815 = vsel %vm2095, %v3806, %v3814
      %v3817 = vshrl.u32 %v1481, 16
      %v3819 = vrot.slane %v3817, 3
      %v3820 = vshll.u32 %v1481, 16
      %v3822 = vrot.slane %v3820, 4
      %v3823 = vor.u32 %v3819, %v3822
      %v3825 = vshrl.u32 %v1482, 16
      %v3827 = vrot.slane %v3825, 3
      %v3828 = vshll.u32 %v1482, 16
      %v3830 = vrot.slane %v3828, 4
      %v3831 = vor.u32 %v3827, %v3830
      %v3832 = vsel %vm2095, %v3823, %v3831
      %v3834 = vshrl.u32 %v1614, 16
      %v3836 = vrot.slane %v3834, 3
      %v3837 = vshll.u32 %v1614, 16
      %v3839 = vrot.slane %v3837, 4
      %v3840 = vor.u32 %v3836, %v3839
      %v3841 = vsel %vm2095, %v3840, %v3840
      %v3843 = vshrl.u32 %v1718, 16
      %v3845 = vrot.slane %v3843, 3
      %v3846 = vshll.u32 %v1718, 16
      %v3848 = vrot.slane %v3846, 4
      %v3849 = vor.u32 %v3845, %v3848
      %v3851 = vshrl.u32 %v1720, 16
      %v3853 = vrot.slane %v3851, 3
      %v3854 = vshll.u32 %v1720, 16
      %v3856 = vrot.slane %v3854, 4
      %v3857 = vor.u32 %v3853, %v3856
      %v3858 = vsel %vm2095, %v3849, %v3857
      %v3860 = vshrl.u32 %v1849, 16
      %v3862 = vrot.slane %v3860, 3
      %v3863 = vshll.u32 %v1849, 16
      %v3865 = vrot.slane %v3863, 4
      %v3866 = vor.u32 %v3862, %v3865
      %v3868 = vshrl.u32 %v1850, 16
      %v3870 = vrot.slane %v3868, 3
      %v3871 = vshll.u32 %v1850, 16
      %v3873 = vrot.slane %v3871, 4
      %v3874 = vor.u32 %v3870, %v3873
      %v3875 = vsel %vm2095, %v3866, %v3874
      %v3877 = vshrl.u32 %v1982, 16
      %v3879 = vrot.slane %v3877, 3
      %v3880 = vshll.u32 %v1982, 16
      %v3882 = vrot.slane %v3880, 4
      %v3883 = vor.u32 %v3879, %v3882
      %v3884 = vsel %vm2095, %v3883, %v3883
      %v3886 = vshrl.u32 %v2086, 16
      %v3888 = vrot.slane %v3886, 3
      %v3889 = vshll.u32 %v2086, 16
      %v3891 = vrot.slane %v3889, 4
      %v3892 = vor.u32 %v3888, %v3891
      %v3894 = vshrl.u32 %v2088, 16
      %v3896 = vrot.slane %v3894, 3
      %v3897 = vshll.u32 %v2088, 16
      %v3899 = vrot.slane %v3897, 4
      %v3900 = vor.u32 %v3896, %v3899
      %v3901 = vsel %vm2095, %v3892, %v3900
      %v3903 = vshrl.u32 %v1114, 16
      %v3905 = vrot.slane %v3903, 3
      %v3906 = vshll.u32 %v1114, 16
      %v3908 = vrot.slane %v3906, 4
      %v3909 = vor.u32 %v3905, %v3908
      %v3911 = vshrl.u32 %v1115, 16
      %v3913 = vrot.slane %v3911, 3
      %v3914 = vshll.u32 %v1115, 16
      %v3916 = vrot.slane %v3914, 4
      %v3917 = vor.u32 %v3913, %v3916
      %v3918 = vsel %vm2095, %v3909, %v3917
      %v3920 = vshrl.u32 %v1253, 16
      %v3922 = vrot.slane %v3920, 3
      %v3923 = vshll.u32 %v1253, 16
      %v3925 = vrot.slane %v3923, 4
      %v3926 = vor.u32 %v3922, %v3925
      %v3927 = vsel %vm2095, %v3926, %v3926
      %v3929 = vshrl.u32 %v1353, 16
      %v3931 = vrot.slane %v3929, 3
      %v3932 = vshll.u32 %v1353, 16
      %v3934 = vrot.slane %v3932, 4
      %v3935 = vor.u32 %v3931, %v3934
      %v3937 = vshrl.u32 %v1355, 16
      %v3939 = vrot.slane %v3937, 3
      %v3940 = vshll.u32 %v1355, 16
      %v3942 = vrot.slane %v3940, 4
      %v3943 = vor.u32 %v3939, %v3942
      %v3944 = vsel %vm2095, %v3935, %v3943
      %v3946 = vshrl.u32 %v1483, 16
      %v3948 = vrot.slane %v3946, 3
      %v3949 = vshll.u32 %v1483, 16
      %v3951 = vrot.slane %v3949, 4
      %v3952 = vor.u32 %v3948, %v3951
      %v3954 = vshrl.u32 %v1484, 16
      %v3956 = vrot.slane %v3954, 3
      %v3957 = vshll.u32 %v1484, 16
      %v3959 = vrot.slane %v3957, 4
      %v3960 = vor.u32 %v3956, %v3959
      %v3961 = vsel %vm2095, %v3952, %v3960
      %v3963 = vshrl.u32 %v1622, 16
      %v3965 = vrot.slane %v3963, 3
      %v3966 = vshll.u32 %v1622, 16
      %v3968 = vrot.slane %v3966, 4
      %v3969 = vor.u32 %v3965, %v3968
      %v3970 = vsel %vm2095, %v3969, %v3969
      %v3972 = vshrl.u32 %v1721, 16
      %v3974 = vrot.slane %v3972, 3
      %v3975 = vshll.u32 %v1721, 16
      %v3977 = vrot.slane %v3975, 4
      %v3978 = vor.u32 %v3974, %v3977
      %v3980 = vshrl.u32 %v1723, 16
      %v3982 = vrot.slane %v3980, 3
      %v3983 = vshll.u32 %v1723, 16
      %v3985 = vrot.slane %v3983, 4
      %v3986 = vor.u32 %v3982, %v3985
      %v3987 = vsel %vm2095, %v3978, %v3986
      %v3989 = vshrl.u32 %v1851, 16
      %v3991 = vrot.slane %v3989, 3
      %v3992 = vshll.u32 %v1851, 16
      %v3994 = vrot.slane %v3992, 4
      %v3995 = vor.u32 %v3991, %v3994
      %v3997 = vshrl.u32 %v1852, 16
      %v3999 = vrot.slane %v3997, 3
      %v4000 = vshll.u32 %v1852, 16
      %v4002 = vrot.slane %v4000, 4
      %v4003 = vor.u32 %v3999, %v4002
      %v4004 = vsel %vm2095, %v3995, %v4003
      %v4006 = vshrl.u32 %v1990, 16
      %v4008 = vrot.slane %v4006, 3
      %v4009 = vshll.u32 %v1990, 16
      %v4011 = vrot.slane %v4009, 4
      %v4012 = vor.u32 %v4008, %v4011
      %v4013 = vsel %vm2095, %v4012, %v4012
      %v4015 = vshrl.u32 %v2089, 16
      %v4017 = vrot.slane %v4015, 3
      %v4018 = vshll.u32 %v2089, 16
      %v4020 = vrot.slane %v4018, 4
      %v4021 = vor.u32 %v4017, %v4020
      %v4023 = vshrl.u32 %v2091, 16
      %v4025 = vrot.slane %v4023, 3
      %v4026 = vshll.u32 %v2091, 16
      %v4028 = vrot.slane %v4026, 4
      %v4029 = vor.u32 %v4025, %v4028
      %v4030 = vsel %vm2095, %v4021, %v4029
      %v4032 = vshrl.u32 %v1116, 16
      %v4034 = vrot.slane %v4032, 3
      %v4035 = vshll.u32 %v1116, 16
      %v4037 = vrot.slane %v4035, 4
      %v4038 = vor.u32 %v4034, %v4037
      %v4040 = vshrl.u32 %v1117, 16
      %v4042 = vrot.slane %v4040, 3
      %v4043 = vshll.u32 %v1117, 16
      %v4045 = vrot.slane %v4043, 4
      %v4046 = vor.u32 %v4042, %v4045
      %v4047 = vsel %vm2095, %v4038, %v4046
      %v4049 = vshrl.u32 %v1261, 16
      %v4051 = vrot.slane %v4049, 3
      %v4052 = vshll.u32 %v1261, 16
      %v4054 = vrot.slane %v4052, 4
      %v4055 = vor.u32 %v4051, %v4054
      %v4056 = vsel %vm2095, %v4055, %v4055
      %v4058 = vshrl.u32 %v1356, 16
      %v4060 = vrot.slane %v4058, 3
      %v4061 = vshll.u32 %v1356, 16
      %v4063 = vrot.slane %v4061, 4
      %v4064 = vor.u32 %v4060, %v4063
      %v4066 = vshrl.u32 %v1358, 16
      %v4068 = vrot.slane %v4066, 3
      %v4069 = vshll.u32 %v1358, 16
      %v4071 = vrot.slane %v4069, 4
      %v4072 = vor.u32 %v4068, %v4071
      %v4073 = vsel %vm2095, %v4064, %v4072
      %v4075 = vshrl.u32 %v1485, 16
      %v4077 = vrot.slane %v4075, 3
      %v4078 = vshll.u32 %v1485, 16
      %v4080 = vrot.slane %v4078, 4
      %v4081 = vor.u32 %v4077, %v4080
      %v4083 = vshrl.u32 %v1486, 16
      %v4085 = vrot.slane %v4083, 3
      %v4086 = vshll.u32 %v1486, 16
      %v4088 = vrot.slane %v4086, 4
      %v4089 = vor.u32 %v4085, %v4088
      %v4090 = vsel %vm2095, %v4081, %v4089
      %v4092 = vshrl.u32 %v1630, 16
      %v4094 = vrot.slane %v4092, 3
      %v4095 = vshll.u32 %v1630, 16
      %v4097 = vrot.slane %v4095, 4
      %v4098 = vor.u32 %v4094, %v4097
      %v4099 = vsel %vm2095, %v4098, %v4098
      %v4101 = vshrl.u32 %v1724, 16
      %v4103 = vrot.slane %v4101, 3
      %v4104 = vshll.u32 %v1724, 16
      %v4106 = vrot.slane %v4104, 4
      %v4107 = vor.u32 %v4103, %v4106
      %v4109 = vshrl.u32 %v1726, 16
      %v4111 = vrot.slane %v4109, 3
      %v4112 = vshll.u32 %v1726, 16
      %v4114 = vrot.slane %v4112, 4
      %v4115 = vor.u32 %v4111, %v4114
      %v4116 = vsel %vm2095, %v4107, %v4115
      %v4118 = vshrl.u32 %v1853, 16
      %v4120 = vrot.slane %v4118, 3
      %v4121 = vshll.u32 %v1853, 16
      %v4123 = vrot.slane %v4121, 4
      %v4124 = vor.u32 %v4120, %v4123
      %v4126 = vshrl.u32 %v1854, 16
      %v4128 = vrot.slane %v4126, 3
      %v4129 = vshll.u32 %v1854, 16
      %v4131 = vrot.slane %v4129, 4
      %v4132 = vor.u32 %v4128, %v4131
      %v4133 = vsel %vm2095, %v4124, %v4132
      %v4135 = vshrl.u32 %v1998, 16
      %v4137 = vrot.slane %v4135, 3
      %v4138 = vshll.u32 %v1998, 16
      %v4140 = vrot.slane %v4138, 4
      %v4141 = vor.u32 %v4137, %v4140
      %v4142 = vsel %vm2095, %v4141, %v4141
      %v4144 = vshrl.u32 %v2092, 16
      %v4146 = vrot.slane %v4144, 3
      %v4147 = vshll.u32 %v2092, 16
      %v4149 = vrot.slane %v4147, 4
      %v4150 = vor.u32 %v4146, %v4149
      %v4152 = vshrl.u32 %v2094, 16
      %v4154 = vrot.slane %v4152, 3
      %v4155 = vshll.u32 %v2094, 16
      %v4157 = vrot.slane %v4155, 4
      %v4158 = vor.u32 %v4154, %v4157
      %v4159 = vsel %vm2095, %v4150, %v4158
      %v4304 = vld [vmem:[%s1] sm:$0xf]
      %v4305 = vld [vmem:[%s1 + $0x4] sm:$0xf]
      %v4306 = vld [vmem:[%s1 + $0x8] sm:$0xf]
      %v4307 = vld [vmem:[%s1 + $0xc] sm:$0xf]
      %v4308 = vld [vmem:[%s1 + $0x10] sm:$0xf]
      %v4309 = vld [vmem:[%s1 + $0x14] sm:$0xf]
      %v4310 = vld [vmem:[%s1 + $0x18] sm:$0xf]
      %v4311 = vld [vmem:[%s1 + $0x1c] sm:$0xf]
      %v4312 = vld [vmem:[%s1 + $0x20] sm:$0xf]
      %v4313 = vld [vmem:[%s1 + $0x24] sm:$0xf]
      %v4314 = vld [vmem:[%s1 + $0x28] sm:$0xf]
      %v4315 = vld [vmem:[%s1 + $0x2c] sm:$0xf]
      %v4316 = vld [vmem:[%s1 + $0x30] sm:$0xf]
      %v4317 = vld [vmem:[%s1 + $0x34] sm:$0xf]
      %v4318 = vld [vmem:[%s1 + $0x38] sm:$0xf]
      %v4319 = vld [vmem:[%s1 + $0x3c] sm:$0xf]
      %v4320 = vld [vmem:[%s1 + $0x40] sm:$0xf]
      %v4321 = vld [vmem:[%s1 + $0x44] sm:$0xf]
      %v4322 = vld [vmem:[%s1 + $0x48] sm:$0xf]
      %v4323 = vld [vmem:[%s1 + $0x4c] sm:$0xf]
      %v4324 = vld [vmem:[%s1 + $0x50] sm:$0xf]
      %v4325 = vld [vmem:[%s1 + $0x54] sm:$0xf]
      %v4326 = vld [vmem:[%s1 + $0x58] sm:$0xf]
      %v4327 = vld [vmem:[%s1 + $0x5c] sm:$0xf]
      %v4328 = vld [vmem:[%s1 + $0x60] sm:$0xf]
      %v4329 = vld [vmem:[%s1 + $0x64] sm:$0xf]
      %v4330 = vld [vmem:[%s1 + $0x68] sm:$0xf]
      %v4331 = vld [vmem:[%s1 + $0x6c] sm:$0xf]
      %v4332 = vld [vmem:[%s1 + $0x70] sm:$0xf]
      %v4333 = vld [vmem:[%s1 + $0x74] sm:$0xf]
      %v4334 = vld [vmem:[%s1 + $0x78] sm:$0xf]
      %v4335 = vld [vmem:[%s1 + $0x7c] sm:$0xf]
      %v4336 = vld [vmem:[%s1 + $0x80] sm:$0xf]
      %v4337 = vld [vmem:[%s1 + $0x84] sm:$0xf]
      %v4338 = vld [vmem:[%s1 + $0x88] sm:$0xf]
      %v4339 = vld [vmem:[%s1 + $0x8c] sm:$0xf]
      %v4340 = vld [vmem:[%s1 + $0x90] sm:$0xf]
      %v4341 = vld [vmem:[%s1 + $0x94] sm:$0xf]
      %v4342 = vld [vmem:[%s1 + $0x98] sm:$0xf]
      %v4343 = vld [vmem:[%s1 + $0x9c] sm:$0xf]
      %v4344 = vld [vmem:[%s1 + $0xa0] sm:$0xf]
      %v4345 = vld [vmem:[%s1 + $0xa4] sm:$0xf]
      %v4346 = vld [vmem:[%s1 + $0xa8] sm:$0xf]
      %v4347 = vld [vmem:[%s1 + $0xac] sm:$0xf]
      %v4348 = vld [vmem:[%s1 + $0xb0] sm:$0xf]
      %v4349 = vld [vmem:[%s1 + $0xb4] sm:$0xf]
      %v4350 = vld [vmem:[%s1 + $0xb8] sm:$0xf]
      %v4351 = vld [vmem:[%s1 + $0xbc] sm:$0xf]
      %v4352 = vld [vmem:[%s1 + $0xc0] sm:$0xf]
      %v4353 = vld [vmem:[%s1 + $0xc4] sm:$0xf]
      %v4354 = vld [vmem:[%s1 + $0xc8] sm:$0xf]
      %v4355 = vld [vmem:[%s1 + $0xcc] sm:$0xf]
      %v4356 = vld [vmem:[%s1 + $0xd0] sm:$0xf]
      %v4357 = vld [vmem:[%s1 + $0xd4] sm:$0xf]
      %v4358 = vld [vmem:[%s1 + $0xd8] sm:$0xf]
      %v4359 = vld [vmem:[%s1 + $0xdc] sm:$0xf]
      %v4360 = vld [vmem:[%s1 + $0xe0] sm:$0xf]
      %v4361 = vld [vmem:[%s1 + $0xe4] sm:$0xf]
      %v4362 = vld [vmem:[%s1 + $0xe8] sm:$0xf]
      %v4363 = vld [vmem:[%s1 + $0xec] sm:$0xf]
      %v4364 = vld [vmem:[%s1 + $0xf0] sm:$0xf]
      %v4365 = vld [vmem:[%s1 + $0xf4] sm:$0xf]
      %v4366 = vld [vmem:[%s1 + $0xf8] sm:$0xf]
      %v4367 = vld [vmem:[%s1 + $0xfc] sm:$0xf]
      %v4368 = vld [vmem:[%s1 + $0x100] sm:$0xf]
      %v4369 = vld [vmem:[%s1 + $0x104] sm:$0xf]
      %v4370 = vld [vmem:[%s1 + $0x108] sm:$0xf]
      %v4371 = vld [vmem:[%s1 + $0x10c] sm:$0xf]
      %v4372 = vld [vmem:[%s1 + $0x110] sm:$0xf]
      %v4373 = vld [vmem:[%s1 + $0x114] sm:$0xf]
      %v4374 = vld [vmem:[%s1 + $0x118] sm:$0xf]
      %v4375 = vld [vmem:[%s1 + $0x11c] sm:$0xf]
      %v4376 = vld [vmem:[%s1 + $0x120] sm:$0xf]
      %v4377 = vld [vmem:[%s1 + $0x124] sm:$0xf]
      %v4378 = vld [vmem:[%s1 + $0x128] sm:$0xf]
      %v4379 = vld [vmem:[%s1 + $0x12c] sm:$0xf]
      %v4380 = vld [vmem:[%s1 + $0x130] sm:$0xf]
      %v4381 = vld [vmem:[%s1 + $0x134] sm:$0xf]
      %v4382 = vld [vmem:[%s1 + $0x138] sm:$0xf]
      %v4383 = vld [vmem:[%s1 + $0x13c] sm:$0xf]
      %v4384 = vld [vmem:[%s1 + $0x140] sm:$0xf]
      %v4385 = vld [vmem:[%s1 + $0x144] sm:$0xf]
      %v4386 = vld [vmem:[%s1 + $0x148] sm:$0xf]
      %v4387 = vld [vmem:[%s1 + $0x14c] sm:$0xf]
      %v4388 = vld [vmem:[%s1 + $0x150] sm:$0xf]
      %v4389 = vld [vmem:[%s1 + $0x154] sm:$0xf]
      %v4390 = vld [vmem:[%s1 + $0x158] sm:$0xf]
      %v4391 = vld [vmem:[%s1 + $0x15c] sm:$0xf]
      %v4392 = vld [vmem:[%s1 + $0x160] sm:$0xf]
      %v4393 = vld [vmem:[%s1 + $0x164] sm:$0xf]
      %v4394 = vld [vmem:[%s1 + $0x168] sm:$0xf]
      %v4395 = vld [vmem:[%s1 + $0x16c] sm:$0xf]
      %v4396 = vld [vmem:[%s1 + $0x170] sm:$0xf]
      %v4397 = vld [vmem:[%s1 + $0x174] sm:$0xf]
      %v4398 = vld [vmem:[%s1 + $0x178] sm:$0xf]
      %v4399 = vld [vmem:[%s1 + $0x17c] sm:$0xf]
      %v4400 = vld [vmem:[%s1 + $0x180] sm:$0xf]
      %v4401 = vld [vmem:[%s1 + $0x184] sm:$0xf]
      %v4402 = vld [vmem:[%s1 + $0x188] sm:$0xf]
      %v4403 = vld [vmem:[%s1 + $0x18c] sm:$0xf]
      %v4404 = vld [vmem:[%s1 + $0x190] sm:$0xf]
      %v4405 = vld [vmem:[%s1 + $0x194] sm:$0xf]
      %v4406 = vld [vmem:[%s1 + $0x198] sm:$0xf]
      %v4407 = vld [vmem:[%s1 + $0x19c] sm:$0xf]
      %v4408 = vld [vmem:[%s1 + $0x1a0] sm:$0xf]
      %v4409 = vld [vmem:[%s1 + $0x1a4] sm:$0xf]
      %v4410 = vld [vmem:[%s1 + $0x1a8] sm:$0xf]
      %v4411 = vld [vmem:[%s1 + $0x1ac] sm:$0xf]
      %v4412 = vld [vmem:[%s1 + $0x1b0] sm:$0xf]
      %v4413 = vld [vmem:[%s1 + $0x1b4] sm:$0xf]
      %v4414 = vld [vmem:[%s1 + $0x1b8] sm:$0xf]
      %v4415 = vld [vmem:[%s1 + $0x1bc] sm:$0xf]
      %v4416 = vld [vmem:[%s1 + $0x1c0] sm:$0xf]
      %v4417 = vld [vmem:[%s1 + $0x1c4] sm:$0xf]
      %v4418 = vld [vmem:[%s1 + $0x1c8] sm:$0xf]
      %v4419 = vld [vmem:[%s1 + $0x1cc] sm:$0xf]
      %v4420 = vld [vmem:[%s1 + $0x1d0] sm:$0xf]
      %v4421 = vld [vmem:[%s1 + $0x1d4] sm:$0xf]
      %v4422 = vld [vmem:[%s1 + $0x1d8] sm:$0xf]
      %v4423 = vld [vmem:[%s1 + $0x1dc] sm:$0xf]
      %v4424 = vld [vmem:[%s1 + $0x1e0] sm:$0xf]
      %v4425 = vld [vmem:[%s1 + $0x1e4] sm:$0xf]
      %v4426 = vld [vmem:[%s1 + $0x1e8] sm:$0xf]
      %v4427 = vld [vmem:[%s1 + $0x1ec] sm:$0xf]
      %v4428 = vld [vmem:[%s1 + $0x1f0] sm:$0xf]
      %v4429 = vld [vmem:[%s1 + $0x1f4] sm:$0xf]
      %v4430 = vld [vmem:[%s1 + $0x1f8] sm:$0xf]
      %v4431 = vld [vmem:[%s1 + $0x1fc] sm:$0xf]
      %v4432 = vld [vmem:[%s1 + $0x200] sm:$0xf]
      %v4433 = vld [vmem:[%s1 + $0x204] sm:$0xf]
      %v4434 = vld [vmem:[%s1 + $0x208] sm:$0xf]
      %v4435 = vld [vmem:[%s1 + $0x20c] sm:$0xf]
      %v4436 = vld [vmem:[%s1 + $0x210] sm:$0xf]
      %v4437 = vld [vmem:[%s1 + $0x214] sm:$0xf]
      %v4438 = vld [vmem:[%s1 + $0x218] sm:$0xf]
      %v4439 = vld [vmem:[%s1 + $0x21c] sm:$0xf]
      %v4440 = vld [vmem:[%s1 + $0x220] sm:$0xf]
      %v4441 = vld [vmem:[%s1 + $0x224] sm:$0xf]
      %v4442 = vld [vmem:[%s1 + $0x228] sm:$0xf]
      %v4443 = vld [vmem:[%s1 + $0x22c] sm:$0xf]
      %v4444 = vld [vmem:[%s1 + $0x230] sm:$0xf]
      %v4445 = vld [vmem:[%s1 + $0x234] sm:$0xf]
      %v4446 = vld [vmem:[%s1 + $0x238] sm:$0xf]
      %v4447 = vld [vmem:[%s1 + $0x23c] sm:$0xf]
      %v4592 = vunpack.c.l.b16 %v4304
      %v4593 = vunpack.c.l.b16 %v4305
      %v4594 = vunpack.c.l.b16 %v4306
      %v4595 = vunpack.c.l.b16 %v4307
      %v4596 = vunpack.c.l.b16 %v4308
      %v4597 = vunpack.c.l.b16 %v4309
      %v4598 = vunpack.c.l.b16 %v4310
      %v4599 = vunpack.c.l.b16 %v4311
      %v4600 = vunpack.c.l.b16 %v4312
      %v4601 = vunpack.c.l.b16 %v4313
      %v4602 = vunpack.c.l.b16 %v4314
      %v4603 = vunpack.c.l.b16 %v4315
      %v4604 = vunpack.c.l.b16 %v4316
      %v4605 = vunpack.c.l.b16 %v4317
      %v4606 = vunpack.c.l.b16 %v4318
      %v4607 = vunpack.c.l.b16 %v4319
      %v4608 = vunpack.c.l.b16 %v4320
      %v4609 = vunpack.c.l.b16 %v4321
      %v4610 = vunpack.c.l.b16 %v4322
      %v4611 = vunpack.c.l.b16 %v4323
      %v4612 = vunpack.c.l.b16 %v4324
      %v4613 = vunpack.c.l.b16 %v4325
      %v4614 = vunpack.c.l.b16 %v4326
      %v4615 = vunpack.c.l.b16 %v4327
      %v4616 = vunpack.c.l.b16 %v4328
      %v4617 = vunpack.c.l.b16 %v4329
      %v4618 = vunpack.c.l.b16 %v4330
      %v4619 = vunpack.c.l.b16 %v4331
      %v4620 = vunpack.c.l.b16 %v4332
      %v4621 = vunpack.c.l.b16 %v4333
      %v4622 = vunpack.c.l.b16 %v4334
      %v4623 = vunpack.c.l.b16 %v4335
      %v4624 = vunpack.c.l.b16 %v4336
      %v4625 = vunpack.c.l.b16 %v4337
      %v4626 = vunpack.c.l.b16 %v4338
      %v4627 = vunpack.c.l.b16 %v4339
      %v4628 = vunpack.c.l.b16 %v4340
      %v4629 = vunpack.c.l.b16 %v4341
      %v4630 = vunpack.c.l.b16 %v4342
      %v4631 = vunpack.c.l.b16 %v4343
      %v4632 = vunpack.c.l.b16 %v4344
      %v4633 = vunpack.c.l.b16 %v4345
      %v4634 = vunpack.c.l.b16 %v4346
      %v4635 = vunpack.c.l.b16 %v4347
      %v4636 = vunpack.c.l.b16 %v4348
      %v4637 = vunpack.c.l.b16 %v4349
      %v4638 = vunpack.c.l.b16 %v4350
      %v4639 = vunpack.c.l.b16 %v4351
      %v4640 = vunpack.c.l.b16 %v4352
      %v4641 = vunpack.c.l.b16 %v4353
      %v4642 = vunpack.c.l.b16 %v4354
      %v4643 = vunpack.c.l.b16 %v4355
      %v4644 = vunpack.c.l.b16 %v4356
      %v4645 = vunpack.c.l.b16 %v4357
      %v4646 = vunpack.c.l.b16 %v4358
      %v4647 = vunpack.c.l.b16 %v4359
      %v4648 = vunpack.c.l.b16 %v4360
      %v4649 = vunpack.c.l.b16 %v4361
      %v4650 = vunpack.c.l.b16 %v4362
      %v4651 = vunpack.c.l.b16 %v4363
      %v4652 = vunpack.c.l.b16 %v4364
      %v4653 = vunpack.c.l.b16 %v4365
      %v4654 = vunpack.c.l.b16 %v4366
      %v4655 = vunpack.c.l.b16 %v4367
      %v4656 = vunpack.c.l.b16 %v4368
      %v4657 = vunpack.c.l.b16 %v4369
      %v4658 = vunpack.c.l.b16 %v4370
      %v4659 = vunpack.c.l.b16 %v4371
      %v4660 = vunpack.c.l.b16 %v4372
      %v4661 = vunpack.c.l.b16 %v4373
      %v4662 = vunpack.c.l.b16 %v4374
      %v4663 = vunpack.c.l.b16 %v4375
      %v4664 = vunpack.c.l.b16 %v4376
      %v4665 = vunpack.c.l.b16 %v4377
      %v4666 = vunpack.c.l.b16 %v4378
      %v4667 = vunpack.c.l.b16 %v4379
      %v4668 = vunpack.c.l.b16 %v4380
      %v4669 = vunpack.c.l.b16 %v4381
      %v4670 = vunpack.c.l.b16 %v4382
      %v4671 = vunpack.c.l.b16 %v4383
      %v4672 = vunpack.c.l.b16 %v4384
      %v4673 = vunpack.c.l.b16 %v4385
      %v4674 = vunpack.c.l.b16 %v4386
      %v4675 = vunpack.c.l.b16 %v4387
      %v4676 = vunpack.c.l.b16 %v4388
      %v4677 = vunpack.c.l.b16 %v4389
      %v4678 = vunpack.c.l.b16 %v4390
      %v4679 = vunpack.c.l.b16 %v4391
      %v4680 = vunpack.c.l.b16 %v4392
      %v4681 = vunpack.c.l.b16 %v4393
      %v4682 = vunpack.c.l.b16 %v4394
      %v4683 = vunpack.c.l.b16 %v4395
      %v4684 = vunpack.c.l.b16 %v4396
      %v4685 = vunpack.c.l.b16 %v4397
      %v4686 = vunpack.c.l.b16 %v4398
      %v4687 = vunpack.c.l.b16 %v4399
      %v4688 = vunpack.c.l.b16 %v4400
      %v4689 = vunpack.c.l.b16 %v4401
      %v4690 = vunpack.c.l.b16 %v4402
      %v4691 = vunpack.c.l.b16 %v4403
      %v4692 = vunpack.c.l.b16 %v4404
      %v4693 = vunpack.c.l.b16 %v4405
      %v4694 = vunpack.c.l.b16 %v4406
      %v4695 = vunpack.c.l.b16 %v4407
      %v4696 = vunpack.c.l.b16 %v4408
      %v4697 = vunpack.c.l.b16 %v4409
      %v4698 = vunpack.c.l.b16 %v4410
      %v4699 = vunpack.c.l.b16 %v4411
      %v4700 = vunpack.c.l.b16 %v4412
      %v4701 = vunpack.c.l.b16 %v4413
      %v4702 = vunpack.c.l.b16 %v4414
      %v4703 = vunpack.c.l.b16 %v4415
      %v4704 = vunpack.c.l.b16 %v4416
      %v4705 = vunpack.c.l.b16 %v4417
      %v4706 = vunpack.c.l.b16 %v4418
      %v4707 = vunpack.c.l.b16 %v4419
      %v4708 = vunpack.c.l.b16 %v4420
      %v4709 = vunpack.c.l.b16 %v4421
      %v4710 = vunpack.c.l.b16 %v4422
      %v4711 = vunpack.c.l.b16 %v4423
      %v4712 = vunpack.c.l.b16 %v4424
      %v4713 = vunpack.c.l.b16 %v4425
      %v4714 = vunpack.c.l.b16 %v4426
      %v4715 = vunpack.c.l.b16 %v4427
      %v4716 = vunpack.c.l.b16 %v4428
      %v4717 = vunpack.c.l.b16 %v4429
      %v4718 = vunpack.c.l.b16 %v4430
      %v4719 = vunpack.c.l.b16 %v4431
      %v4720 = vunpack.c.l.b16 %v4432
      %v4721 = vunpack.c.l.b16 %v4433
      %v4722 = vunpack.c.l.b16 %v4434
      %v4723 = vunpack.c.l.b16 %v4435
      %v4724 = vunpack.c.l.b16 %v4436
      %v4725 = vunpack.c.l.b16 %v4437
      %v4726 = vunpack.c.l.b16 %v4438
      %v4727 = vunpack.c.l.b16 %v4439
      %v4728 = vunpack.c.l.b16 %v4440
      %v4729 = vunpack.c.l.b16 %v4441
      %v4730 = vunpack.c.l.b16 %v4442
      %v4731 = vunpack.c.l.b16 %v4443
      %v4732 = vunpack.c.l.b16 %v4444
      %v4733 = vunpack.c.l.b16 %v4445
      %v4734 = vunpack.c.l.b16 %v4446
      %v4735 = vunpack.c.l.b16 %v4447
      %v4736 = vpack.c.b16 %v4593, %v4592
      %v4737 = vpack.c.b16 %v4595, %v4594
      %v4738 = vpack.c.b16 %v4597, %v4596
      %v4739 = vpack.c.b16 %v4599, %v4598
      %v4740 = vpack.c.b16 %v4601, %v4600
      %v4741 = vpack.c.b16 %v4603, %v4602
      %v4742 = vpack.c.b16 %v4605, %v4604
      %v4743 = vpack.c.b16 %v4607, %v4606
      %v4744 = vpack.c.b16 %v4609, %v4608
      %v4745 = vpack.c.b16 %v4611, %v4610
      %v4746 = vpack.c.b16 %v4613, %v4612
      %v4747 = vpack.c.b16 %v4615, %v4614
      %v4748 = vpack.c.b16 %v4617, %v4616
      %v4749 = vpack.c.b16 %v4619, %v4618
      %v4750 = vpack.c.b16 %v4621, %v4620
      %v4751 = vpack.c.b16 %v4623, %v4622
      %v4752 = vpack.c.b16 %v4625, %v4624
      %v4753 = vpack.c.b16 %v4627, %v4626
      %v4754 = vpack.c.b16 %v4629, %v4628
      %v4755 = vpack.c.b16 %v4631, %v4630
      %v4756 = vpack.c.b16 %v4633, %v4632
      %v4757 = vpack.c.b16 %v4635, %v4634
      %v4758 = vpack.c.b16 %v4637, %v4636
      %v4759 = vpack.c.b16 %v4639, %v4638
      %v4760 = vpack.c.b16 %v4641, %v4640
      %v4761 = vpack.c.b16 %v4643, %v4642
      %v4762 = vpack.c.b16 %v4645, %v4644
      %v4763 = vpack.c.b16 %v4647, %v4646
      %v4764 = vpack.c.b16 %v4649, %v4648
      %v4765 = vpack.c.b16 %v4651, %v4650
      %v4766 = vpack.c.b16 %v4653, %v4652
      %v4767 = vpack.c.b16 %v4655, %v4654
      %v4768 = vpack.c.b16 %v4657, %v4656
      %v4769 = vpack.c.b16 %v4659, %v4658
      %v4770 = vpack.c.b16 %v4661, %v4660
      %v4771 = vpack.c.b16 %v4663, %v4662
      %v4772 = vpack.c.b16 %v4665, %v4664
      %v4773 = vpack.c.b16 %v4667, %v4666
      %v4774 = vpack.c.b16 %v4669, %v4668
      %v4775 = vpack.c.b16 %v4671, %v4670
      %v4776 = vpack.c.b16 %v4673, %v4672
      %v4777 = vpack.c.b16 %v4675, %v4674
      %v4778 = vpack.c.b16 %v4677, %v4676
      %v4779 = vpack.c.b16 %v4679, %v4678
      %v4780 = vpack.c.b16 %v4681, %v4680
      %v4781 = vpack.c.b16 %v4683, %v4682
      %v4782 = vpack.c.b16 %v4685, %v4684
      %v4783 = vpack.c.b16 %v4687, %v4686
      %v4784 = vpack.c.b16 %v4689, %v4688
      %v4785 = vpack.c.b16 %v4691, %v4690
      %v4786 = vpack.c.b16 %v4693, %v4692
      %v4787 = vpack.c.b16 %v4695, %v4694
      %v4788 = vpack.c.b16 %v4697, %v4696
      %v4789 = vpack.c.b16 %v4699, %v4698
      %v4790 = vpack.c.b16 %v4701, %v4700
      %v4791 = vpack.c.b16 %v4703, %v4702
      %v4792 = vpack.c.b16 %v4705, %v4704
      %v4793 = vpack.c.b16 %v4707, %v4706
      %v4794 = vpack.c.b16 %v4709, %v4708
      %v4795 = vpack.c.b16 %v4711, %v4710
      %v4796 = vpack.c.b16 %v4713, %v4712
      %v4797 = vpack.c.b16 %v4715, %v4714
      %v4798 = vpack.c.b16 %v4717, %v4716
      %v4799 = vpack.c.b16 %v4719, %v4718
      %v4800 = vpack.c.b16 %v4721, %v4720
      %v4801 = vpack.c.b16 %v4723, %v4722
      %v4802 = vpack.c.b16 %v4725, %v4724
      %v4803 = vpack.c.b16 %v4727, %v4726
      %v4804 = vpack.c.b16 %v4729, %v4728
      %v4805 = vpack.c.b16 %v4731, %v4730
      %v4806 = vpack.c.b16 %v4733, %v4732
      %v4807 = vpack.c.b16 %v4735, %v4734
      %4880 = vmatprep.subr.bf16.mxu0 0
      %4881 = vmatpush1.bf16.msra.mxu0 %v4736
      %4882 = vmatprep.subr.bf16.mxu0 0
      %4883 = vmatpush1.bf16.msra.mxu0 %v4737
      %4884 = vmatprep.subr.bf16.mxu0 0
      %4885 = vmatpush1.bf16.msra.mxu0 %v4738
      %4886 = vmatprep.subr.bf16.mxu0 0
      %4887 = vmatpush1.bf16.msra.mxu0 %v4739
      %4888 = vmatprep.subr.bf16.mxu0 0
      %4889 = vmatpush1.bf16.msra.mxu0 %v4740
      %4890 = vmatprep.subr.bf16.mxu0 0
      %4891 = vmatpush1.bf16.msra.mxu0 %v4741
      %4892 = vmatprep.subr.bf16.mxu0 0
      %4893 = vmatpush1.bf16.msra.mxu0 %v4742
      %4894 = vmatprep.subr.bf16.mxu0 0
      %4895 = vmatpush1.bf16.msra.mxu0 %v4743
      %4896 = vmatprep.subr.bf16.mxu0 0
      %4897 = vmatpush1.bf16.msra.mxu0 %v4744
      %4898 = vmatprep.subr.bf16.mxu0 0
      %4899 = vmatpush1.bf16.msra.mxu0 %v4745
      %4900 = vmatprep.subr.bf16.mxu0 0
      %4901 = vmatpush1.bf16.msra.mxu0 %v4746
      %4902 = vmatprep.subr.bf16.mxu0 0
      %4903 = vmatpush1.bf16.msra.mxu0 %v4747
      %4904 = vmatprep.subr.bf16.mxu0 0
      %4905 = vmatpush1.bf16.msra.mxu0 %v4748
      %4906 = vmatprep.subr.bf16.mxu0 0
      %4907 = vmatpush1.bf16.msra.mxu0 %v4749
      %4908 = vmatprep.subr.bf16.mxu0 0
      %4909 = vmatpush1.bf16.msra.mxu0 %v4750
      %4910 = vmatprep.subr.bf16.mxu0 0
      %4911 = vmatpush1.bf16.msra.mxu0 %v4751
      %4912 = vmatprep.mubr.bf16.mxu0 %v2121
      %4913 = vmatmul.mubr.bf16.gmra.mrb[0].mxu0 %v2112
      %v4914 = vpop.f32.mrb[0].mxu0
      %v4915 = vadd.f32 0.0, %v4914
      %v4916 = vpop.f32.mrb[0].mxu0
      %v4917 = vpop.f32.mrb[0].mxu0
      %v4918 = vadd.f32 0.0, %v4917
      %v4919 = vpop.f32.mrb[0].mxu0
      %4920 = vmatprep.mubr.bf16.mxu0 %v2250
      %4921 = vmatmul.mubr.bf16.gmra.mrb[0].mxu0 %v2241
      %v4922 = vpop.f32.mrb[0].mxu0
      %v4923 = vadd.f32 0.0, %v4922
      %v4924 = vpop.f32.mrb[0].mxu0
      %v4925 = vpop.f32.mrb[0].mxu0
      %v4926 = vadd.f32 0.0, %v4925
      %v4927 = vpop.f32.mrb[0].mxu0
      %4928 = vmatprep.mubr.bf16.mxu0 %v2379
      %4929 = vmatmul.mubr.bf16.gmra.mrb[0].mxu0 %v2370
      %v4930 = vpop.f32.mrb[0].mxu0
      %v4931 = vadd.f32 0.0, %v4930
      %v4932 = vpop.f32.mrb[0].mxu0
      %v4933 = vpop.f32.mrb[0].mxu0
      %v4934 = vadd.f32 0.0, %v4933
      %v4935 = vpop.f32.mrb[0].mxu0
      %4936 = vmatprep.mubr.bf16.mxu0 %v2508
      %4937 = vmatmul.mubr.bf16.gmra.mrb[0].mxu0 %v2499
      %v4938 = vpop.f32.mrb[0].mxu0
      %v4939 = vadd.f32 0.0, %v4938
      %v4940 = vpop.f32.mrb[0].mxu0
      %v4941 = vpop.f32.mrb[0].mxu0
      %v4942 = vadd.f32 0.0, %v4941
      %v4943 = vpop.f32.mrb[0].mxu0
      %4944 = vmatprep.mubr.bf16.mxu0 %v2637
      %4945 = vmatmul.mubr.bf16.gmra.mrb[0].mxu0 %v2628
      %v4946 = vpop.f32.mrb[0].mxu0
      %v4947 = vadd.f32 0.0, %v4946
      %v4948 = vpop.f32.mrb[0].mxu0
      %v4949 = vpop.f32.mrb[0].mxu0
      %v4950 = vadd.f32 0.0, %v4949
      %v4951 = vpop.f32.mrb[0].mxu0
      %4952 = vmatprep.mubr.bf16.mxu0 %v2766
      %4953 = vmatmul.mubr.bf16.gmra.mrb[0].mxu0 %v2757
      %v4954 = vpop.f32.mrb[0].mxu0
      %v4955 = vadd.f32 0.0, %v4954
      %v4956 = vpop.f32.mrb[0].mxu0
      %v4957 = vpop.f32.mrb[0].mxu0
      %v4958 = vadd.f32 0.0, %v4957
      %v4959 = vpop.f32.mrb[0].mxu0
      %4960 = vmatprep.mubr.bf16.mxu0 %v2895
      %4961 = vmatmul.mubr.bf16.gmra.mrb[0].mxu0 %v2886
      %v4962 = vpop.f32.mrb[0].mxu0
      %v4963 = vadd.f32 0.0, %v4962
      %v4964 = vpop.f32.mrb[0].mxu0
      %v4965 = vpop.f32.mrb[0].mxu0
      %v4966 = vadd.f32 0.0, %v4965
      %v4967 = vpop.f32.mrb[0].mxu0
      %4968 = vmatprep.mubr.bf16.mxu0 %v3024
      %4969 = vmatmul.mubr.bf16.gmra.mrb[0].mxu0 %v3015
      %v4970 = vpop.f32.mrb[0].mxu0
      %v4971 = vadd.f32 0.0, %v4970
      %v4972 = vpop.f32.mrb[0].mxu0
      %v4973 = vpop.f32.mrb[0].mxu0
      %v4974 = vadd.f32 0.0, %v4973
      %v4975 = vpop.f32.mrb[0].mxu0
      %4976 = vmatprep.mubr.bf16.mxu0 %v3153
      %4977 = vmatmul.mubr.bf16.gmra.mrb[0].mxu0 %v3144
      %v4978 = vpop.f32.mrb[0].mxu0
      %v4979 = vadd.f32 0.0, %v4978
      %v4980 = vpop.f32.mrb[0].mxu0
      %v4981 = vpop.f32.mrb[0].mxu0
      %v4982 = vadd.f32 0.0, %v4981
      %v4983 = vpop.f32.mrb[0].mxu0
      %4984 = vmatprep.mubr.bf16.mxu0 %v3282
      %4985 = vmatmul.mubr.bf16.gmra.mrb[0].mxu0 %v3273
      %v4986 = vpop.f32.mrb[0].mxu0
      %v4987 = vadd.f32 0.0, %v4986
      %v4988 = vpop.f32.mrb[0].mxu0
      %v4989 = vpop.f32.mrb[0].mxu0
      %v4990 = vadd.f32 0.0, %v4989
      %v4991 = vpop.f32.mrb[0].mxu0
      %4992 = vmatprep.mubr.bf16.mxu0 %v3411
      %4993 = vmatmul.mubr.bf16.gmra.mrb[0].mxu0 %v3402
      %v4994 = vpop.f32.mrb[0].mxu0
      %v4995 = vadd.f32 0.0, %v4994
      %v4996 = vpop.f32.mrb[0].mxu0
      %v4997 = vpop.f32.mrb[0].mxu0
      %v4998 = vadd.f32 0.0, %v4997
      %v4999 = vpop.f32.mrb[0].mxu0
      %5000 = vmatprep.mubr.bf16.mxu0 %v3540
      %5001 = vmatmul.mubr.bf16.gmra.mrb[0].mxu0 %v3531
      %v5002 = vpop.f32.mrb[0].mxu0
      %v5003 = vadd.f32 0.0, %v5002
      %v5004 = vpop.f32.mrb[0].mxu0
      %v5005 = vpop.f32.mrb[0].mxu0
      %v5006 = vadd.f32 0.0, %v5005
      %v5007 = vpop.f32.mrb[0].mxu0
      %5008 = vmatprep.mubr.bf16.mxu0 %v3669
      %5009 = vmatmul.mubr.bf16.gmra.mrb[0].mxu0 %v3660
      %v5010 = vpop.f32.mrb[0].mxu0
      %v5011 = vadd.f32 0.0, %v5010
      %v5012 = vpop.f32.mrb[0].mxu0
      %v5013 = vpop.f32.mrb[0].mxu0
      %v5014 = vadd.f32 0.0, %v5013
      %v5015 = vpop.f32.mrb[0].mxu0
      %5016 = vmatprep.mubr.bf16.mxu0 %v3798
      %5017 = vmatmul.mubr.bf16.gmra.mrb[0].mxu0 %v3789
      %v5018 = vpop.f32.mrb[0].mxu0
      %v5019 = vadd.f32 0.0, %v5018
      %v5020 = vpop.f32.mrb[0].mxu0
      %v5021 = vpop.f32.mrb[0].mxu0
      %v5022 = vadd.f32 0.0, %v5021
      %v5023 = vpop.f32.mrb[0].mxu0
      %5024 = vmatprep.mubr.bf16.mxu0 %v3927
      %5025 = vmatmul.mubr.bf16.gmra.mrb[0].mxu0 %v3918
      %v5026 = vpop.f32.mrb[0].mxu0
      %v5027 = vadd.f32 0.0, %v5026
      %v5028 = vpop.f32.mrb[0].mxu0
      %v5029 = vpop.f32.mrb[0].mxu0
      %v5030 = vadd.f32 0.0, %v5029
      %v5031 = vpop.f32.mrb[0].mxu0
      %5032 = vmatprep.mubr.bf16.mxu0 %v4056
      %5033 = vmatmul.mubr.bf16.gmra.mrb[0].mxu0 %v4047
      %v5034 = vpop.f32.mrb[0].mxu0
      %v5035 = vadd.f32 0.0, %v5034
      %v5036 = vpop.f32.mrb[0].mxu0
      %v5037 = vpop.f32.mrb[0].mxu0
      %v5038 = vadd.f32 0.0, %v5037
      %v5039 = vpop.f32.mrb[0].mxu0
      %5040 = vdwg.mxu0
      %5041 = vmatprep.subr.bf16.mxu0 0
      %5042 = vmatpush1.bf16.msra.mxu0 %v4752
      %5043 = vmatprep.subr.bf16.mxu0 0
      %5044 = vmatpush1.bf16.msra.mxu0 %v4753
      %5045 = vmatprep.subr.bf16.mxu0 0
      %5046 = vmatpush1.bf16.msra.mxu0 %v4754
      %5047 = vmatprep.subr.bf16.mxu0 0
      %5048 = vmatpush1.bf16.msra.mxu0 %v4755
      %5049 = vmatprep.subr.bf16.mxu0 0
      %5050 = vmatpush1.bf16.msra.mxu0 %v4756
      %5051 = vmatprep.subr.bf16.mxu0 0
      %5052 = vmatpush1.bf16.msra.mxu0 %v4757
      %5053 = vmatprep.subr.bf16.mxu0 0
      %5054 = vmatpush1.bf16.msra.mxu0 %v4758
      %5055 = vmatprep.subr.bf16.mxu0 0
      %5056 = vmatpush1.bf16.msra.mxu0 %v4759
      %5057 = vmatprep.subr.bf16.mxu0 0
      %5058 = vmatpush1.bf16.msra.mxu0 %v4760
      %5059 = vmatprep.subr.bf16.mxu0 0
      %5060 = vmatpush1.bf16.msra.mxu0 %v4761
      %5061 = vmatprep.subr.bf16.mxu0 0
      %5062 = vmatpush1.bf16.msra.mxu0 %v4762
      %5063 = vmatprep.subr.bf16.mxu0 0
      %5064 = vmatpush1.bf16.msra.mxu0 %v4763
      %5065 = vmatprep.subr.bf16.mxu0 0
      %5066 = vmatpush1.bf16.msra.mxu0 %v4764
      %5067 = vmatprep.subr.bf16.mxu0 0
      %5068 = vmatpush1.bf16.msra.mxu0 %v4765
      %5069 = vmatprep.subr.bf16.mxu0 0
      %5070 = vmatpush1.bf16.msra.mxu0 %v4766
      %5071 = vmatprep.subr.bf16.mxu0 0
      %5072 = vmatpush1.bf16.msra.mxu0 %v4767
      %5073 = vmatprep.mubr.bf16.mxu0 %v2155
      %5074 = vmatmul.mubr.bf16.gmra.mrb[0].mxu0 %v2138
      %v5075 = vpop.f32.mrb[0].mxu0
      %v5076 = vadd.f32 %v4915, %v5075
      %v5077 = vpop.f32.mrb[0].mxu0
      %v5078 = vpop.f32.mrb[0].mxu0
      %v5079 = vadd.f32 %v4918, %v5078
      %v5080 = vpop.f32.mrb[0].mxu0
      %5081 = vmatprep.mubr.bf16.mxu0 %v2284
      %5082 = vmatmul.mubr.bf16.gmra.mrb[0].mxu0 %v2267
      %v5083 = vpop.f32.mrb[0].mxu0
      %v5084 = vadd.f32 %v4923, %v5083
      %v5085 = vpop.f32.mrb[0].mxu0
      %v5086 = vpop.f32.mrb[0].mxu0
      %v5087 = vadd.f32 %v4926, %v5086
      %v5088 = vpop.f32.mrb[0].mxu0
      %5089 = vmatprep.mubr.bf16.mxu0 %v2413
      %5090 = vmatmul.mubr.bf16.gmra.mrb[0].mxu0 %v2396
      %v5091 = vpop.f32.mrb[0].mxu0
      %v5092 = vadd.f32 %v4931, %v5091
      %v5093 = vpop.f32.mrb[0].mxu0
      %v5094 = vpop.f32.mrb[0].mxu0
      %v5095 = vadd.f32 %v4934, %v5094
      %v5096 = vpop.f32.mrb[0].mxu0
      %5097 = vmatprep.mubr.bf16.mxu0 %v2542
      %5098 = vmatmul.mubr.bf16.gmra.mrb[0].mxu0 %v2525
      %v5099 = vpop.f32.mrb[0].mxu0
      %v5100 = vadd.f32 %v4939, %v5099
      %v5101 = vpop.f32.mrb[0].mxu0
      %v5102 = vpop.f32.mrb[0].mxu0
      %v5103 = vadd.f32 %v4942, %v5102
      %v5104 = vpop.f32.mrb[0].mxu0
      %5105 = vmatprep.mubr.bf16.mxu0 %v2671
      %5106 = vmatmul.mubr.bf16.gmra.mrb[0].mxu0 %v2654
      %v5107 = vpop.f32.mrb[0].mxu0
      %v5108 = vadd.f32 %v4947, %v5107
      %v5109 = vpop.f32.mrb[0].mxu0
      %v5110 = vpop.f32.mrb[0].mxu0
      %v5111 = vadd.f32 %v4950, %v5110
      %v5112 = vpop.f32.mrb[0].mxu0
      %5113 = vmatprep.mubr.bf16.mxu0 %v2800
      %5114 = vmatmul.mubr.bf16.gmra.mrb[0].mxu0 %v2783
      %v5115 = vpop.f32.mrb[0].mxu0
      %v5116 = vadd.f32 %v4955, %v5115
      %v5117 = vpop.f32.mrb[0].mxu0
      %v5118 = vpop.f32.mrb[0].mxu0
      %v5119 = vadd.f32 %v4958, %v5118
      %v5120 = vpop.f32.mrb[0].mxu0
      %5121 = vmatprep.mubr.bf16.mxu0 %v2929
      %5122 = vmatmul.mubr.bf16.gmra.mrb[0].mxu0 %v2912
      %v5123 = vpop.f32.mrb[0].mxu0
      %v5124 = vadd.f32 %v4963, %v5123
      %v5125 = vpop.f32.mrb[0].mxu0
      %v5126 = vpop.f32.mrb[0].mxu0
      %v5127 = vadd.f32 %v4966, %v5126
      %v5128 = vpop.f32.mrb[0].mxu0
      %5129 = vmatprep.mubr.bf16.mxu0 %v3058
      %5130 = vmatmul.mubr.bf16.gmra.mrb[0].mxu0 %v3041
      %v5131 = vpop.f32.mrb[0].mxu0
      %v5132 = vadd.f32 %v4971, %v5131
      %v5133 = vpop.f32.mrb[0].mxu0
      %v5134 = vpop.f32.mrb[0].mxu0
      %v5135 = vadd.f32 %v4974, %v5134
      %v5136 = vpop.f32.mrb[0].mxu0
      %5137 = vmatprep.mubr.bf16.mxu0 %v3187
      %5138 = vmatmul.mubr.bf16.gmra.mrb[0].mxu0 %v3170
      %v5139 = vpop.f32.mrb[0].mxu0
      %v5140 = vadd.f32 %v4979, %v5139
      %v5141 = vpop.f32.mrb[0].mxu0
      %v5142 = vpop.f32.mrb[0].mxu0
      %v5143 = vadd.f32 %v4982, %v5142
      %v5144 = vpop.f32.mrb[0].mxu0
      %5145 = vmatprep.mubr.bf16.mxu0 %v3316
      %5146 = vmatmul.mubr.bf16.gmra.mrb[0].mxu0 %v3299
      %v5147 = vpop.f32.mrb[0].mxu0
      %v5148 = vadd.f32 %v4987, %v5147
      %v5149 = vpop.f32.mrb[0].mxu0
      %v5150 = vpop.f32.mrb[0].mxu0
      %v5151 = vadd.f32 %v4990, %v5150
      %v5152 = vpop.f32.mrb[0].mxu0
      %5153 = vmatprep.mubr.bf16.mxu0 %v3445
      %5154 = vmatmul.mubr.bf16.gmra.mrb[0].mxu0 %v3428
      %v5155 = vpop.f32.mrb[0].mxu0
      %v5156 = vadd.f32 %v4995, %v5155
      %v5157 = vpop.f32.mrb[0].mxu0
      %v5158 = vpop.f32.mrb[0].mxu0
      %v5159 = vadd.f32 %v4998, %v5158
      %v5160 = vpop.f32.mrb[0].mxu0
      %5161 = vmatprep.mubr.bf16.mxu0 %v3574
      %5162 = vmatmul.mubr.bf16.gmra.mrb[0].mxu0 %v3557
      %v5163 = vpop.f32.mrb[0].mxu0
      %v5164 = vadd.f32 %v5003, %v5163
      %v5165 = vpop.f32.mrb[0].mxu0
      %v5166 = vpop.f32.mrb[0].mxu0
      %v5167 = vadd.f32 %v5006, %v5166
      %v5168 = vpop.f32.mrb[0].mxu0
      %5169 = vmatprep.mubr.bf16.mxu0 %v3703
      %5170 = vmatmul.mubr.bf16.gmra.mrb[0].mxu0 %v3686
      %v5171 = vpop.f32.mrb[0].mxu0
      %v5172 = vadd.f32 %v5011, %v5171
      %v5173 = vpop.f32.mrb[0].mxu0
      %v5174 = vpop.f32.mrb[0].mxu0
      %v5175 = vadd.f32 %v5014, %v5174
      %v5176 = vpop.f32.mrb[0].mxu0
      %5177 = vmatprep.mubr.bf16.mxu0 %v3832
      %5178 = vmatmul.mubr.bf16.gmra.mrb[0].mxu0 %v3815
      %v5179 = vpop.f32.mrb[0].mxu0
      %v5180 = vadd.f32 %v5019, %v5179
      %v5181 = vpop.f32.mrb[0].mxu0
      %v5182 = vpop.f32.mrb[0].mxu0
      %v5183 = vadd.f32 %v5022, %v5182
      %v5184 = vpop.f32.mrb[0].mxu0
      %5185 = vmatprep.mubr.bf16.mxu0 %v3961
      %5186 = vmatmul.mubr.bf16.gmra.mrb[0].mxu0 %v3944
      %v5187 = vpop.f32.mrb[0].mxu0
      %v5188 = vadd.f32 %v5027, %v5187
      %v5189 = vpop.f32.mrb[0].mxu0
      %v5190 = vpop.f32.mrb[0].mxu0
      %v5191 = vadd.f32 %v5030, %v5190
      %v5192 = vpop.f32.mrb[0].mxu0
      %5193 = vmatprep.mubr.bf16.mxu0 %v4090
      %5194 = vmatmul.mubr.bf16.gmra.mrb[0].mxu0 %v4073
      %v5195 = vpop.f32.mrb[0].mxu0
      %v5196 = vadd.f32 %v5035, %v5195
      %v5197 = vpop.f32.mrb[0].mxu0
      %v5198 = vpop.f32.mrb[0].mxu0
      %v5199 = vadd.f32 %v5038, %v5198
      %v5200 = vpop.f32.mrb[0].mxu0
      %5201 = vdwg.mxu0
      %5202 = vmatprep.subr.bf16.mxu0 0
      %5203 = vmatpush1.bf16.msra.mxu0 %v4768
      %5204 = vmatprep.subr.bf16.mxu0 0
      %5205 = vmatpush1.bf16.msra.mxu0 %v4769
      %5206 = vmatprep.subr.bf16.mxu0 0
      %5207 = vmatpush1.bf16.msra.mxu0 %v4770
      %5208 = vmatprep.subr.bf16.mxu0 0
      %5209 = vmatpush1.bf16.msra.mxu0 %v4771
      %5210 = vmatprep.subr.bf16.mxu0 0
      %5211 = vmatpush1.bf16.msra.mxu0 %v4772
      %5212 = vmatprep.subr.bf16.mxu0 0
      %5213 = vmatpush1.bf16.msra.mxu0 %v4773
      %5214 = vmatprep.subr.bf16.mxu0 0
      %5215 = vmatpush1.bf16.msra.mxu0 %v4774
      %5216 = vmatprep.subr.bf16.mxu0 0
      %5217 = vmatpush1.bf16.msra.mxu0 %v4775
      %5218 = vmatprep.subr.bf16.mxu0 0
      %5219 = vmatpush1.bf16.msra.mxu0 %v4776
      %5220 = vmatprep.subr.bf16.mxu0 0
      %5221 = vmatpush1.bf16.msra.mxu0 %v4777
      %5222 = vmatprep.subr.bf16.mxu0 0
      %5223 = vmatpush1.bf16.msra.mxu0 %v4778
      %5224 = vmatprep.subr.bf16.mxu0 0
      %5225 = vmatpush1.bf16.msra.mxu0 %v4779
      %5226 = vmatprep.subr.bf16.mxu0 0
      %5227 = vmatpush1.bf16.msra.mxu0 %v4780
      %5228 = vmatprep.subr.bf16.mxu0 0
      %5229 = vmatpush1.bf16.msra.mxu0 %v4781
      %5230 = vmatprep.subr.bf16.mxu0 0
      %5231 = vmatpush1.bf16.msra.mxu0 %v4782
      %5232 = vmatprep.subr.bf16.mxu0 0
      %5233 = vmatpush1.bf16.msra.mxu0 %v4783
      %5234 = vmatprep.mubr.bf16.mxu0 %v2181
      %5235 = vmatmul.mubr.bf16.gmra.mrb[0].mxu0 %v2164
      %v5236 = vpop.f32.mrb[0].mxu0
      %v5237 = vadd.f32 %v5076, %v5236
      %v5238 = vpop.f32.mrb[0].mxu0
      %v5239 = vpop.f32.mrb[0].mxu0
      %v5240 = vadd.f32 %v5079, %v5239
      %v5241 = vpop.f32.mrb[0].mxu0
      %5242 = vmatprep.mubr.bf16.mxu0 %v2310
      %5243 = vmatmul.mubr.bf16.gmra.mrb[0].mxu0 %v2293
      %v5244 = vpop.f32.mrb[0].mxu0
      %v5245 = vadd.f32 %v5084, %v5244
      %v5246 = vpop.f32.mrb[0].mxu0
      %v5247 = vpop.f32.mrb[0].mxu0
      %v5248 = vadd.f32 %v5087, %v5247
      %v5249 = vpop.f32.mrb[0].mxu0
      %5250 = vmatprep.mubr.bf16.mxu0 %v2439
      %5251 = vmatmul.mubr.bf16.gmra.mrb[0].mxu0 %v2422
      %v5252 = vpop.f32.mrb[0].mxu0
      %v5253 = vadd.f32 %v5092, %v5252
      %v5254 = vpop.f32.mrb[0].mxu0
      %v5255 = vpop.f32.mrb[0].mxu0
      %v5256 = vadd.f32 %v5095, %v5255
      %v5257 = vpop.f32.mrb[0].mxu0
      %5258 = vmatprep.mubr.bf16.mxu0 %v2568
      %5259 = vmatmul.mubr.bf16.gmra.mrb[0].mxu0 %v2551
      %v5260 = vpop.f32.mrb[0].mxu0
      %v5261 = vadd.f32 %v5100, %v5260
      %v5262 = vpop.f32.mrb[0].mxu0
      %v5263 = vpop.f32.mrb[0].mxu0
      %v5264 = vadd.f32 %v5103, %v5263
      %v5265 = vpop.f32.mrb[0].mxu0
      %5266 = vmatprep.mubr.bf16.mxu0 %v2697
      %5267 = vmatmul.mubr.bf16.gmra.mrb[0].mxu0 %v2680
      %v5268 = vpop.f32.mrb[0].mxu0
      %v5269 = vadd.f32 %v5108, %v5268
      %v5270 = vpop.f32.mrb[0].mxu0
      %v5271 = vpop.f32.mrb[0].mxu0
      %v5272 = vadd.f32 %v5111, %v5271
      %v5273 = vpop.f32.mrb[0].mxu0
      %5274 = vmatprep.mubr.bf16.mxu0 %v2826
      %5275 = vmatmul.mubr.bf16.gmra.mrb[0].mxu0 %v2809
      %v5276 = vpop.f32.mrb[0].mxu0
      %v5277 = vadd.f32 %v5116, %v5276
      %v5278 = vpop.f32.mrb[0].mxu0
      %v5279 = vpop.f32.mrb[0].mxu0
      %v5280 = vadd.f32 %v5119, %v5279
      %v5281 = vpop.f32.mrb[0].mxu0
      %5282 = vmatprep.mubr.bf16.mxu0 %v2955
      %5283 = vmatmul.mubr.bf16.gmra.mrb[0].mxu0 %v2938
      %v5284 = vpop.f32.mrb[0].mxu0
      %v5285 = vadd.f32 %v5124, %v5284
      %v5286 = vpop.f32.mrb[0].mxu0
      %v5287 = vpop.f32.mrb[0].mxu0
      %v5288 = vadd.f32 %v5127, %v5287
      %v5289 = vpop.f32.mrb[0].mxu0
      %5290 = vmatprep.mubr.bf16.mxu0 %v3084
      %5291 = vmatmul.mubr.bf16.gmra.mrb[0].mxu0 %v3067
      %v5292 = vpop.f32.mrb[0].mxu0
      %v5293 = vadd.f32 %v5132, %v5292
      %v5294 = vpop.f32.mrb[0].mxu0
      %v5295 = vpop.f32.mrb[0].mxu0
      %v5296 = vadd.f32 %v5135, %v5295
      %v5297 = vpop.f32.mrb[0].mxu0
      %5298 = vmatprep.mubr.bf16.mxu0 %v3213
      %5299 = vmatmul.mubr.bf16.gmra.mrb[0].mxu0 %v3196
      %v5300 = vpop.f32.mrb[0].mxu0
      %v5301 = vadd.f32 %v5140, %v5300
      %v5302 = vpop.f32.mrb[0].mxu0
      %v5303 = vpop.f32.mrb[0].mxu0
      %v5304 = vadd.f32 %v5143, %v5303
      %v5305 = vpop.f32.mrb[0].mxu0
      %5306 = vmatprep.mubr.bf16.mxu0 %v3342
      %5307 = vmatmul.mubr.bf16.gmra.mrb[0].mxu0 %v3325
      %v5308 = vpop.f32.mrb[0].mxu0
      %v5309 = vadd.f32 %v5148, %v5308
      %v5310 = vpop.f32.mrb[0].mxu0
      %v5311 = vpop.f32.mrb[0].mxu0
      %v5312 = vadd.f32 %v5151, %v5311
      %v5313 = vpop.f32.mrb[0].mxu0
      %5314 = vmatprep.mubr.bf16.mxu0 %v3471
      %5315 = vmatmul.mubr.bf16.gmra.mrb[0].mxu0 %v3454
      %v5316 = vpop.f32.mrb[0].mxu0
      %v5317 = vadd.f32 %v5156, %v5316
      %v5318 = vpop.f32.mrb[0].mxu0
      %v5319 = vpop.f32.mrb[0].mxu0
      %v5320 = vadd.f32 %v5159, %v5319
      %v5321 = vpop.f32.mrb[0].mxu0
      %5322 = vmatprep.mubr.bf16.mxu0 %v3600
      %5323 = vmatmul.mubr.bf16.gmra.mrb[0].mxu0 %v3583
      %v5324 = vpop.f32.mrb[0].mxu0
      %v5325 = vadd.f32 %v5164, %v5324
      %v5326 = vpop.f32.mrb[0].mxu0
      %v5327 = vpop.f32.mrb[0].mxu0
      %v5328 = vadd.f32 %v5167, %v5327
      %v5329 = vpop.f32.mrb[0].mxu0
      %5330 = vmatprep.mubr.bf16.mxu0 %v3729
      %5331 = vmatmul.mubr.bf16.gmra.mrb[0].mxu0 %v3712
      %v5332 = vpop.f32.mrb[0].mxu0
      %v5333 = vadd.f32 %v5172, %v5332
      %v5334 = vpop.f32.mrb[0].mxu0
      %v5335 = vpop.f32.mrb[0].mxu0
      %v5336 = vadd.f32 %v5175, %v5335
      %v5337 = vpop.f32.mrb[0].mxu0
      %5338 = vmatprep.mubr.bf16.mxu0 %v3858
      %5339 = vmatmul.mubr.bf16.gmra.mrb[0].mxu0 %v3841
      %v5340 = vpop.f32.mrb[0].mxu0
      %v5341 = vadd.f32 %v5180, %v5340
      %v5342 = vpop.f32.mrb[0].mxu0
      %v5343 = vpop.f32.mrb[0].mxu0
      %v5344 = vadd.f32 %v5183, %v5343
      %v5345 = vpop.f32.mrb[0].mxu0
      %5346 = vmatprep.mubr.bf16.mxu0 %v3987
      %5347 = vmatmul.mubr.bf16.gmra.mrb[0].mxu0 %v3970
      %v5348 = vpop.f32.mrb[0].mxu0
      %v5349 = vadd.f32 %v5188, %v5348
      %v5350 = vpop.f32.mrb[0].mxu0
      %v5351 = vpop.f32.mrb[0].mxu0
      %v5352 = vadd.f32 %v5191, %v5351
      %v5353 = vpop.f32.mrb[0].mxu0
      %5354 = vmatprep.mubr.bf16.mxu0 %v4116
      %5355 = vmatmul.mubr.bf16.gmra.mrb[0].mxu0 %v4099
      %v5356 = vpop.f32.mrb[0].mxu0
      %v5357 = vadd.f32 %v5196, %v5356
      %v5358 = vpop.f32.mrb[0].mxu0
      %v5359 = vpop.f32.mrb[0].mxu0
      %v5360 = vadd.f32 %v5199, %v5359
      %v5361 = vpop.f32.mrb[0].mxu0
      %5362 = vdwg.mxu0
      %5363 = vmatprep.subr.bf16.mxu0 0
      %5364 = vmatpush1.bf16.msra.mxu0 %v4784
      %5365 = vmatprep.subr.bf16.mxu0 0
      %5366 = vmatpush1.bf16.msra.mxu0 %v4785
      %5367 = vmatprep.subr.bf16.mxu0 0
      %5368 = vmatpush1.bf16.msra.mxu0 %v4786
      %5369 = vmatprep.subr.bf16.mxu0 0
      %5370 = vmatpush1.bf16.msra.mxu0 %v4787
      %5371 = vmatprep.subr.bf16.mxu0 0
      %5372 = vmatpush1.bf16.msra.mxu0 %v4788
      %5373 = vmatprep.subr.bf16.mxu0 0
      %5374 = vmatpush1.bf16.msra.mxu0 %v4789
      %5375 = vmatprep.subr.bf16.mxu0 0
      %5376 = vmatpush1.bf16.msra.mxu0 %v4790
      %5377 = vmatprep.subr.bf16.mxu0 0
      %5378 = vmatpush1.bf16.msra.mxu0 %v4791
      %5379 = vmatprep.subr.bf16.mxu0 0
      %5380 = vmatpush1.bf16.msra.mxu0 %v4792
      %5381 = vmatprep.subr.bf16.mxu0 0
      %5382 = vmatpush1.bf16.msra.mxu0 %v4793
      %5383 = vmatprep.subr.bf16.mxu0 0
      %5384 = vmatpush1.bf16.msra.mxu0 %v4794
      %5385 = vmatprep.subr.bf16.mxu0 0
      %5386 = vmatpush1.bf16.msra.mxu0 %v4795
      %5387 = vmatprep.subr.bf16.mxu0 0
      %5388 = vmatpush1.bf16.msra.mxu0 %v4796
      %5389 = vmatprep.subr.bf16.mxu0 0
      %5390 = vmatpush1.bf16.msra.mxu0 %v4797
      %5391 = vmatprep.subr.bf16.mxu0 0
      %5392 = vmatpush1.bf16.msra.mxu0 %v4798
      %5393 = vmatprep.subr.bf16.mxu0 0
      %5394 = vmatpush1.bf16.msra.mxu0 %v4799
      %5395 = vmatprep.mubr.bf16.mxu0 %v2207
      %5396 = vmatmul.mubr.bf16.gmra.mrb[0].mxu0 %v2198
      %v5397 = vpop.f32.mrb[0].mxu0
      %v5398 = vadd.f32 %v5237, %v5397
      %v5399 = vpop.f32.mrb[0].mxu0
      %v5400 = vpop.f32.mrb[0].mxu0
      %v5401 = vadd.f32 %v5240, %v5400
      %v5402 = vpop.f32.mrb[0].mxu0
      %5403 = vmatprep.mubr.bf16.mxu0 %v2336
      %5404 = vmatmul.mubr.bf16.gmra.mrb[0].mxu0 %v2327
      %v5405 = vpop.f32.mrb[0].mxu0
      %v5406 = vadd.f32 %v5245, %v5405
      %v5407 = vpop.f32.mrb[0].mxu0
      %v5408 = vpop.f32.mrb[0].mxu0
      %v5409 = vadd.f32 %v5248, %v5408
      %v5410 = vpop.f32.mrb[0].mxu0
      %5411 = vmatprep.mubr.bf16.mxu0 %v2465
      %5412 = vmatmul.mubr.bf16.gmra.mrb[0].mxu0 %v2456
      %v5413 = vpop.f32.mrb[0].mxu0
      %v5414 = vadd.f32 %v5253, %v5413
      %v5415 = vpop.f32.mrb[0].mxu0
      %v5416 = vpop.f32.mrb[0].mxu0
      %v5417 = vadd.f32 %v5256, %v5416
      %v5418 = vpop.f32.mrb[0].mxu0
      %5419 = vmatprep.mubr.bf16.mxu0 %v2594
      %5420 = vmatmul.mubr.bf16.gmra.mrb[0].mxu0 %v2585
      %v5421 = vpop.f32.mrb[0].mxu0
      %v5422 = vadd.f32 %v5261, %v5421
      %v5423 = vpop.f32.mrb[0].mxu0
      %v5424 = vpop.f32.mrb[0].mxu0
      %v5425 = vadd.f32 %v5264, %v5424
      %v5426 = vpop.f32.mrb[0].mxu0
      %5427 = vmatprep.mubr.bf16.mxu0 %v2723
      %5428 = vmatmul.mubr.bf16.gmra.mrb[0].mxu0 %v2714
      %v5429 = vpop.f32.mrb[0].mxu0
      %v5430 = vadd.f32 %v5269, %v5429
      %v5431 = vpop.f32.mrb[0].mxu0
      %v5432 = vpop.f32.mrb[0].mxu0
      %v5433 = vadd.f32 %v5272, %v5432
      %v5434 = vpop.f32.mrb[0].mxu0
      %5435 = vmatprep.mubr.bf16.mxu0 %v2852
      %5436 = vmatmul.mubr.bf16.gmra.mrb[0].mxu0 %v2843
      %v5437 = vpop.f32.mrb[0].mxu0
      %v5438 = vadd.f32 %v5277, %v5437
      %v5439 = vpop.f32.mrb[0].mxu0
      %v5440 = vpop.f32.mrb[0].mxu0
      %v5441 = vadd.f32 %v5280, %v5440
      %v5442 = vpop.f32.mrb[0].mxu0
      %5443 = vmatprep.mubr.bf16.mxu0 %v2981
      %5444 = vmatmul.mubr.bf16.gmra.mrb[0].mxu0 %v2972
      %v5445 = vpop.f32.mrb[0].mxu0
      %v5446 = vadd.f32 %v5285, %v5445
      %v5447 = vpop.f32.mrb[0].mxu0
      %v5448 = vpop.f32.mrb[0].mxu0
      %v5449 = vadd.f32 %v5288, %v5448
      %v5450 = vpop.f32.mrb[0].mxu0
      %5451 = vmatprep.mubr.bf16.mxu0 %v3110
      %5452 = vmatmul.mubr.bf16.gmra.mrb[0].mxu0 %v3101
      %v5453 = vpop.f32.mrb[0].mxu0
      %v5454 = vadd.f32 %v5293, %v5453
      %v5455 = vpop.f32.mrb[0].mxu0
      %v5456 = vpop.f32.mrb[0].mxu0
      %v5457 = vadd.f32 %v5296, %v5456
      %v5458 = vpop.f32.mrb[0].mxu0
      %5459 = vmatprep.mubr.bf16.mxu0 %v3239
      %5460 = vmatmul.mubr.bf16.gmra.mrb[0].mxu0 %v3230
      %v5461 = vpop.f32.mrb[0].mxu0
      %v5462 = vadd.f32 %v5301, %v5461
      %v5463 = vpop.f32.mrb[0].mxu0
      %v5464 = vpop.f32.mrb[0].mxu0
      %v5465 = vadd.f32 %v5304, %v5464
      %v5466 = vpop.f32.mrb[0].mxu0
      %5467 = vmatprep.mubr.bf16.mxu0 %v3368
      %5468 = vmatmul.mubr.bf16.gmra.mrb[0].mxu0 %v3359
      %v5469 = vpop.f32.mrb[0].mxu0
      %v5470 = vadd.f32 %v5309, %v5469
      %v5471 = vpop.f32.mrb[0].mxu0
      %v5472 = vpop.f32.mrb[0].mxu0
      %v5473 = vadd.f32 %v5312, %v5472
      %v5474 = vpop.f32.mrb[0].mxu0
      %5475 = vmatprep.mubr.bf16.mxu0 %v3497
      %5476 = vmatmul.mubr.bf16.gmra.mrb[0].mxu0 %v3488
      %v5477 = vpop.f32.mrb[0].mxu0
      %v5478 = vadd.f32 %v5317, %v5477
      %v5479 = vpop.f32.mrb[0].mxu0
      %v5480 = vpop.f32.mrb[0].mxu0
      %v5481 = vadd.f32 %v5320, %v5480
      %v5482 = vpop.f32.mrb[0].mxu0
      %5483 = vmatprep.mubr.bf16.mxu0 %v3626
      %5484 = vmatmul.mubr.bf16.gmra.mrb[0].mxu0 %v3617
      %v5485 = vpop.f32.mrb[0].mxu0
      %v5486 = vadd.f32 %v5325, %v5485
      %v5487 = vpop.f32.mrb[0].mxu0
      %v5488 = vpop.f32.mrb[0].mxu0
      %v5489 = vadd.f32 %v5328, %v5488
      %v5490 = vpop.f32.mrb[0].mxu0
      %5491 = vmatprep.mubr.bf16.mxu0 %v3755
      %5492 = vmatmul.mubr.bf16.gmra.mrb[0].mxu0 %v3746
      %v5493 = vpop.f32.mrb[0].mxu0
      %v5494 = vadd.f32 %v5333, %v5493
      %v5495 = vpop.f32.mrb[0].mxu0
      %v5496 = vpop.f32.mrb[0].mxu0
      %v5497 = vadd.f32 %v5336, %v5496
      %v5498 = vpop.f32.mrb[0].mxu0
      %5499 = vmatprep.mubr.bf16.mxu0 %v3884
      %5500 = vmatmul.mubr.bf16.gmra.mrb[0].mxu0 %v3875
      %v5501 = vpop.f32.mrb[0].mxu0
      %v5502 = vadd.f32 %v5341, %v5501
      %v5503 = vpop.f32.mrb[0].mxu0
      %v5504 = vpop.f32.mrb[0].mxu0
      %v5505 = vadd.f32 %v5344, %v5504
      %v5506 = vpop.f32.mrb[0].mxu0
      %5507 = vmatprep.mubr.bf16.mxu0 %v4013
      %5508 = vmatmul.mubr.bf16.gmra.mrb[0].mxu0 %v4004
      %v5509 = vpop.f32.mrb[0].mxu0
      %v5510 = vadd.f32 %v5349, %v5509
      %v5511 = vpop.f32.mrb[0].mxu0
      %v5512 = vpop.f32.mrb[0].mxu0
      %v5513 = vadd.f32 %v5352, %v5512
      %v5514 = vpop.f32.mrb[0].mxu0
      %5515 = vmatprep.mubr.bf16.mxu0 %v4142
      %5516 = vmatmul.mubr.bf16.gmra.mrb[0].mxu0 %v4133
      %v5517 = vpop.f32.mrb[0].mxu0
      %v5518 = vadd.f32 %v5357, %v5517
      %v5519 = vpop.f32.mrb[0].mxu0
      %v5520 = vpop.f32.mrb[0].mxu0
      %v5521 = vadd.f32 %v5360, %v5520
      %v5522 = vpop.f32.mrb[0].mxu0
      %5523 = vdwg.mxu0
      %5524 = vmatprep.subr.bf16.mxu0 0
      %5525 = vmatpush1.bf16.msra.mxu0 %v4800
      %5526 = vmatprep.subr.bf16.mxu0 0
      %5527 = vmatpush1.bf16.msra.mxu0 %v4801
      %5528 = vmatprep.subr.bf16.mxu0 0
      %5529 = vmatpush1.bf16.msra.mxu0 %v4802
      %5530 = vmatprep.subr.bf16.mxu0 0
      %5531 = vmatpush1.bf16.msra.mxu0 %v4803
      %5532 = vmatprep.subr.bf16.mxu0 0
      %5533 = vmatpush1.bf16.msra.mxu0 %v4804
      %5534 = vmatprep.subr.bf16.mxu0 0
      %5535 = vmatpush1.bf16.msra.mxu0 %v4805
      %5536 = vmatprep.subr.bf16.mxu0 0
      %5537 = vmatpush1.bf16.msra.mxu0 %v4806
      %5538 = vmatprep.subr.bf16.mxu0 0
      %5539 = vmatpush1.bf16.msra.mxu0 %v4807
      %5540 = vmatprep.subr.bf16.mxu0 0
      %5541 = vmatpush1.bf16.msra.mxu0 0
      %5542 = vmatprep.subr.bf16.mxu0 0
      %5543 = vmatpush1.bf16.msra.mxu0 0
      %5544 = vmatprep.subr.bf16.mxu0 0
      %5545 = vmatpush1.bf16.msra.mxu0 0
      %5546 = vmatprep.subr.bf16.mxu0 0
      %5547 = vmatpush1.bf16.msra.mxu0 0
      %5548 = vmatprep.subr.bf16.mxu0 0
      %5549 = vmatpush1.bf16.msra.mxu0 0
      %5550 = vmatprep.subr.bf16.mxu0 0
      %5551 = vmatpush1.bf16.msra.mxu0 0
      %5552 = vmatprep.subr.bf16.mxu0 0
      %5553 = vmatpush1.bf16.msra.mxu0 0
      %5554 = vmatprep.subr.bf16.mxu0 0
      %5555 = vmatpush1.bf16.msra.mxu0 0
      %5556 = vmatprep.mubr.bf16.mxu0 0
      %5557 = vmatmul.mubr.bf16.gmra.mrb[0].mxu0 %v2224
      %v5558 = vpop.f32.mrb[0].mxu0
      %v5559 = vadd.f32 %v5398, %v5558
      %v5560 = vpop.f32.mrb[0].mxu0
      %v5561 = vpop.f32.mrb[0].mxu0
      %v5562 = vadd.f32 %v5401, %v5561
      %v5563 = vpop.f32.mrb[0].mxu0
      %5564 = vmatprep.mubr.bf16.mxu0 0
      %5565 = vmatmul.mubr.bf16.gmra.mrb[0].mxu0 %v2353
      %v5566 = vpop.f32.mrb[0].mxu0
      %v5567 = vadd.f32 %v5406, %v5566
      %v5568 = vpop.f32.mrb[0].mxu0
      %v5569 = vpop.f32.mrb[0].mxu0
      %v5570 = vadd.f32 %v5409, %v5569
      %v5571 = vpop.f32.mrb[0].mxu0
      %5572 = vmatprep.mubr.bf16.mxu0 0
      %5573 = vmatmul.mubr.bf16.gmra.mrb[0].mxu0 %v2482
      %v5574 = vpop.f32.mrb[0].mxu0
      %v5575 = vadd.f32 %v5414, %v5574
      %v5576 = vpop.f32.mrb[0].mxu0
      %v5577 = vpop.f32.mrb[0].mxu0
      %v5578 = vadd.f32 %v5417, %v5577
      %v5579 = vpop.f32.mrb[0].mxu0
      %5580 = vmatprep.mubr.bf16.mxu0 0
      %5581 = vmatmul.mubr.bf16.gmra.mrb[0].mxu0 %v2611
      %v5582 = vpop.f32.mrb[0].mxu0
      %v5583 = vadd.f32 %v5422, %v5582
      %v5584 = vpop.f32.mrb[0].mxu0
      %v5585 = vpop.f32.mrb[0].mxu0
      %v5586 = vadd.f32 %v5425, %v5585
      %v5587 = vpop.f32.mrb[0].mxu0
      %5588 = vmatprep.mubr.bf16.mxu0 0
      %5589 = vmatmul.mubr.bf16.gmra.mrb[0].mxu0 %v2740
      %v5590 = vpop.f32.mrb[0].mxu0
      %v5591 = vadd.f32 %v5430, %v5590
      %v5592 = vpop.f32.mrb[0].mxu0
      %v5593 = vpop.f32.mrb[0].mxu0
      %v5594 = vadd.f32 %v5433, %v5593
      %v5595 = vpop.f32.mrb[0].mxu0
      %5596 = vmatprep.mubr.bf16.mxu0 0
      %5597 = vmatmul.mubr.bf16.gmra.mrb[0].mxu0 %v2869
      %v5598 = vpop.f32.mrb[0].mxu0
      %v5599 = vadd.f32 %v5438, %v5598
      %v5600 = vpop.f32.mrb[0].mxu0
      %v5601 = vpop.f32.mrb[0].mxu0
      %v5602 = vadd.f32 %v5441, %v5601
      %v5603 = vpop.f32.mrb[0].mxu0
      %5604 = vmatprep.mubr.bf16.mxu0 0
      %5605 = vmatmul.mubr.bf16.gmra.mrb[0].mxu0 %v2998
      %v5606 = vpop.f32.mrb[0].mxu0
      %v5607 = vadd.f32 %v5446, %v5606
      %v5608 = vpop.f32.mrb[0].mxu0
      %v5609 = vpop.f32.mrb[0].mxu0
      %v5610 = vadd.f32 %v5449, %v5609
      %v5611 = vpop.f32.mrb[0].mxu0
      %5612 = vmatprep.mubr.bf16.mxu0 0
      %5613 = vmatmul.mubr.bf16.gmra.mrb[0].mxu0 %v3127
      %v5614 = vpop.f32.mrb[0].mxu0
      %v5615 = vadd.f32 %v5454, %v5614
      %v5616 = vpop.f32.mrb[0].mxu0
      %v5617 = vpop.f32.mrb[0].mxu0
      %v5618 = vadd.f32 %v5457, %v5617
      %v5619 = vpop.f32.mrb[0].mxu0
      %5620 = vmatprep.mubr.bf16.mxu0 0
      %5621 = vmatmul.mubr.bf16.gmra.mrb[0].mxu0 %v3256
      %v5622 = vpop.f32.mrb[0].mxu0
      %v5623 = vadd.f32 %v5462, %v5622
      %v5624 = vpop.f32.mrb[0].mxu0
      %v5625 = vpop.f32.mrb[0].mxu0
      %v5626 = vadd.f32 %v5465, %v5625
      %v5627 = vpop.f32.mrb[0].mxu0
      %5628 = vmatprep.mubr.bf16.mxu0 0
      %5629 = vmatmul.mubr.bf16.gmra.mrb[0].mxu0 %v3385
      %v5630 = vpop.f32.mrb[0].mxu0
      %v5631 = vadd.f32 %v5470, %v5630
      %v5632 = vpop.f32.mrb[0].mxu0
      %v5633 = vpop.f32.mrb[0].mxu0
      %v5634 = vadd.f32 %v5473, %v5633
      %v5635 = vpop.f32.mrb[0].mxu0
      %5636 = vmatprep.mubr.bf16.mxu0 0
      %5637 = vmatmul.mubr.bf16.gmra.mrb[0].mxu0 %v3514
      %v5638 = vpop.f32.mrb[0].mxu0
      %v5639 = vadd.f32 %v5478, %v5638
      %v5640 = vpop.f32.mrb[0].mxu0
      %v5641 = vpop.f32.mrb[0].mxu0
      %v5642 = vadd.f32 %v5481, %v5641
      %v5643 = vpop.f32.mrb[0].mxu0
      %5644 = vmatprep.mubr.bf16.mxu0 0
      %5645 = vmatmul.mubr.bf16.gmra.mrb[0].mxu0 %v3643
      %v5646 = vpop.f32.mrb[0].mxu0
      %v5647 = vadd.f32 %v5486, %v5646
      %v5648 = vpop.f32.mrb[0].mxu0
      %v5649 = vpop.f32.mrb[0].mxu0
      %v5650 = vadd.f32 %v5489, %v5649
      %v5651 = vpop.f32.mrb[0].mxu0
      %5652 = vmatprep.mubr.bf16.mxu0 0
      %5653 = vmatmul.mubr.bf16.gmra.mrb[0].mxu0 %v3772
      %v5654 = vpop.f32.mrb[0].mxu0
      %v5655 = vadd.f32 %v5494, %v5654
      %v5656 = vpop.f32.mrb[0].mxu0
      %v5657 = vpop.f32.mrb[0].mxu0
      %v5658 = vadd.f32 %v5497, %v5657
      %v5659 = vpop.f32.mrb[0].mxu0
      %5660 = vmatprep.mubr.bf16.mxu0 0
      %5661 = vmatmul.mubr.bf16.gmra.mrb[0].mxu0 %v3901
      %v5662 = vpop.f32.mrb[0].mxu0
      %v5663 = vadd.f32 %v5502, %v5662
      %v5664 = vpop.f32.mrb[0].mxu0
      %v5665 = vpop.f32.mrb[0].mxu0
      %v5666 = vadd.f32 %v5505, %v5665
      %v5667 = vpop.f32.mrb[0].mxu0
      %5668 = vmatprep.mubr.bf16.mxu0 0
      %5669 = vmatmul.mubr.bf16.gmra.mrb[0].mxu0 %v4030
      %v5670 = vpop.f32.mrb[0].mxu0
      %v5671 = vadd.f32 %v5510, %v5670
      %v5672 = vpop.f32.mrb[0].mxu0
      %v5673 = vpop.f32.mrb[0].mxu0
      %v5674 = vadd.f32 %v5513, %v5673
      %v5675 = vpop.f32.mrb[0].mxu0
      %5676 = vmatprep.mubr.bf16.mxu0 0
      %5677 = vmatmul.mubr.bf16.gmra.mrb[0].mxu0 %v4159
      %v5678 = vpop.f32.mrb[0].mxu0
      %v5679 = vadd.f32 %v5518, %v5678
      %v5680 = vpop.f32.mrb[0].mxu0
      %v5681 = vpop.f32.mrb[0].mxu0
      %v5682 = vadd.f32 %v5521, %v5681
      %v5683 = vpop.f32.mrb[0].mxu0
      %5684 = vdwg.mxu0
      %vm5685 = vcmask 130048
      %v5686 = vsel %vm5685, %v5559, -inf
      %v5687 = vsel %vm5685, %v5567, -inf
      %v5688 = vmax.f32 %v5686, %v5687
      %v5689 = vsel %vm5685, %v5562, -inf
      %v5690 = vsel %vm5685, %v5570, -inf
      %v5691 = vmax.f32 %v5689, %v5690
      %v5692 = vsel %vm5685, %v5575, -inf
      %v5693 = vsel %vm5685, %v5583, -inf
      %v5694 = vmax.f32 %v5692, %v5693
      %v5695 = vsel %vm5685, %v5578, -inf
      %v5696 = vsel %vm5685, %v5586, -inf
      %v5697 = vmax.f32 %v5695, %v5696
      %v5698 = vsel %vm5685, %v5591, -inf
      %v5699 = vsel %vm5685, %v5599, -inf
      %v5700 = vmax.f32 %v5698, %v5699
      %v5701 = vsel %vm5685, %v5594, -inf
      %v5702 = vsel %vm5685, %v5602, -inf
      %v5703 = vmax.f32 %v5701, %v5702
      %v5704 = vsel %vm5685, %v5607, -inf
      %v5705 = vsel %vm5685, %v5615, -inf
      %v5706 = vmax.f32 %v5704, %v5705
      %v5707 = vsel %vm5685, %v5610, -inf
      %v5708 = vsel %vm5685, %v5618, -inf
      %v5709 = vmax.f32 %v5707, %v5708
      %v5710 = vsel %vm5685, %v5623, -inf
      %v5711 = vsel %vm5685, %v5631, -inf
      %v5712 = vmax.f32 %v5710, %v5711
      %v5713 = vsel %vm5685, %v5626, -inf
      %v5714 = vsel %vm5685, %v5634, -inf
      %v5715 = vmax.f32 %v5713, %v5714
      %v5716 = vsel %vm5685, %v5639, -inf
      %v5717 = vsel %vm5685, %v5647, -inf
      %v5718 = vmax.f32 %v5716, %v5717
      %v5719 = vsel %vm5685, %v5642, -inf
      %v5720 = vsel %vm5685, %v5650, -inf
      %v5721 = vmax.f32 %v5719, %v5720
      %v5722 = vsel %vm5685, %v5655, -inf
      %v5723 = vsel %vm5685, %v5663, -inf
      %v5724 = vmax.f32 %v5722, %v5723
      %v5725 = vsel %vm5685, %v5658, -inf
      %v5726 = vsel %vm5685, %v5666, -inf
      %v5727 = vmax.f32 %v5725, %v5726
      %v5728 = vsel %vm5685, %v5671, -inf
      %v5729 = vsel %vm5685, %v5679, -inf
      %v5730 = vmax.f32 %v5728, %v5729
      %v5731 = vsel %vm5685, %v5674, -inf
      %v5732 = vsel %vm5685, %v5682, -inf
      %v5733 = vmax.f32 %v5731, %v5732
      %v5750 = vcombine.high %v5688, %v5688
      %v5752 = vunpack.c.l.s4 1983009808
      %v5753 = vunpack.c.0.s8 %v5752
      %v5754 = vlaneseq
      %v5755 = vshrl.u32 %v5754, 7
      %v5756 = vsub.s32 %v5753, %v5755
      %v5757 = vrot.slane %v5688, %v5756
      %v5759 = vunpack.c.l.s4 1983009808
      %v5760 = vunpack.c.0.s8 %v5759
      %v5761 = vlaneseq
      %v5762 = vshrl.u32 %v5761, 7
      %v5763 = vsub.s32 %v5760, %v5762
      %v5764 = vrot.slane %v5750, %v5763
      %v5765 = vcombine.high %v5757, %v5757
      %v5766 = vcombine.high %v5764, %v5764
      %v5767 = vcombine.high %v5691, %v5691
      %v5769 = vunpack.c.l.s4 1983009808
      %v5770 = vunpack.c.0.s8 %v5769
      %v5771 = vlaneseq
      %v5772 = vshrl.u32 %v5771, 7
      %v5773 = vsub.s32 %v5770, %v5772
      %v5774 = vrot.slane %v5691, %v5773
      %v5776 = vunpack.c.l.s4 1983009808
      %v5777 = vunpack.c.0.s8 %v5776
      %v5778 = vlaneseq
      %v5779 = vshrl.u32 %v5778, 7
      %v5780 = vsub.s32 %v5777, %v5779
      %v5781 = vrot.slane %v5767, %v5780
      %v5782 = vcombine.high %v5774, %v5774
      %v5783 = vcombine.high %v5781, %v5781
      %v5784 = vcombine.high %v5694, %v5694
      %v5786 = vunpack.c.l.s4 1983009808
      %v5787 = vunpack.c.0.s8 %v5786
      %v5788 = vlaneseq
      %v5789 = vshrl.u32 %v5788, 7
      %v5790 = vsub.s32 %v5787, %v5789
      %v5791 = vrot.slane %v5694, %v5790
      %v5793 = vunpack.c.l.s4 1983009808
      %v5794 = vunpack.c.0.s8 %v5793
      %v5795 = vlaneseq
      %v5796 = vshrl.u32 %v5795, 7
      %v5797 = vsub.s32 %v5794, %v5796
      %v5798 = vrot.slane %v5784, %v5797
      %v5799 = vcombine.high %v5791, %v5791
      %v5800 = vcombine.high %v5798, %v5798
      %v5801 = vcombine.high %v5697, %v5697
      %v5803 = vunpack.c.l.s4 1983009808
      %v5804 = vunpack.c.0.s8 %v5803
      %v5805 = vlaneseq
      %v5806 = vshrl.u32 %v5805, 7
      %v5807 = vsub.s32 %v5804, %v5806
      %v5808 = vrot.slane %v5697, %v5807
      %v5810 = vunpack.c.l.s4 1983009808
      %v5811 = vunpack.c.0.s8 %v5810
      %v5812 = vlaneseq
      %v5813 = vshrl.u32 %v5812, 7
      %v5814 = vsub.s32 %v5811, %v5813
      %v5815 = vrot.slane %v5801, %v5814
      %v5816 = vcombine.high %v5808, %v5808
      %v5817 = vcombine.high %v5815, %v5815
      %v5818 = vcombine.high %v5700, %v5700
      %v5820 = vunpack.c.l.s4 1983009808
      %v5821 = vunpack.c.0.s8 %v5820
      %v5822 = vlaneseq
      %v5823 = vshrl.u32 %v5822, 7
      %v5824 = vsub.s32 %v5821, %v5823
      %v5825 = vrot.slane %v5700, %v5824
      %v5827 = vunpack.c.l.s4 1983009808
      %v5828 = vunpack.c.0.s8 %v5827
      %v5829 = vlaneseq
      %v5830 = vshrl.u32 %v5829, 7
      %v5831 = vsub.s32 %v5828, %v5830
      %v5832 = vrot.slane %v5818, %v5831
      %v5833 = vcombine.high %v5825, %v5825
      %v5834 = vcombine.high %v5832, %v5832
      %v5835 = vcombine.high %v5703, %v5703
      %v5837 = vunpack.c.l.s4 1983009808
      %v5838 = vunpack.c.0.s8 %v5837
      %v5839 = vlaneseq
      %v5840 = vshrl.u32 %v5839, 7
      %v5841 = vsub.s32 %v5838, %v5840
      %v5842 = vrot.slane %v5703, %v5841
      %v5844 = vunpack.c.l.s4 1983009808
      %v5845 = vunpack.c.0.s8 %v5844
      %v5846 = vlaneseq
      %v5847 = vshrl.u32 %v5846, 7
      %v5848 = vsub.s32 %v5845, %v5847
      %v5849 = vrot.slane %v5835, %v5848
      %v5850 = vcombine.high %v5842, %v5842
      %v5851 = vcombine.high %v5849, %v5849
      %v5852 = vcombine.high %v5706, %v5706
      %v5854 = vunpack.c.l.s4 1983009808
      %v5855 = vunpack.c.0.s8 %v5854
      %v5856 = vlaneseq
      %v5857 = vshrl.u32 %v5856, 7
      %v5858 = vsub.s32 %v5855, %v5857
      %v5859 = vrot.slane %v5706, %v5858
      %v5861 = vunpack.c.l.s4 1983009808
      %v5862 = vunpack.c.0.s8 %v5861
      %v5863 = vlaneseq
      %v5864 = vshrl.u32 %v5863, 7
      %v5865 = vsub.s32 %v5862, %v5864
      %v5866 = vrot.slane %v5852, %v5865
      %v5867 = vcombine.high %v5859, %v5859
      %v5868 = vcombine.high %v5866, %v5866
      %v5869 = vcombine.high %v5709, %v5709
      %v5871 = vunpack.c.l.s4 1983009808
      %v5872 = vunpack.c.0.s8 %v5871
      %v5873 = vlaneseq
      %v5874 = vshrl.u32 %v5873, 7
      %v5875 = vsub.s32 %v5872, %v5874
      %v5876 = vrot.slane %v5709, %v5875
      %v5878 = vunpack.c.l.s4 1983009808
      %v5879 = vunpack.c.0.s8 %v5878
      %v5880 = vlaneseq
      %v5881 = vshrl.u32 %v5880, 7
      %v5882 = vsub.s32 %v5879, %v5881
      %v5883 = vrot.slane %v5869, %v5882
      %v5884 = vcombine.high %v5876, %v5876
      %v5885 = vcombine.high %v5883, %v5883
      %v5886 = vcombine.high %v5712, %v5712
      %v5888 = vunpack.c.l.s4 1983009808
      %v5889 = vunpack.c.0.s8 %v5888
      %v5890 = vlaneseq
      %v5891 = vshrl.u32 %v5890, 7
      %v5892 = vsub.s32 %v5889, %v5891
      %v5893 = vrot.slane %v5712, %v5892
      %v5895 = vunpack.c.l.s4 1983009808
      %v5896 = vunpack.c.0.s8 %v5895
      %v5897 = vlaneseq
      %v5898 = vshrl.u32 %v5897, 7
      %v5899 = vsub.s32 %v5896, %v5898
      %v5900 = vrot.slane %v5886, %v5899
      %v5901 = vcombine.high %v5893, %v5893
      %v5902 = vcombine.high %v5900, %v5900
      %v5903 = vcombine.high %v5715, %v5715
      %v5905 = vunpack.c.l.s4 1983009808
      %v5906 = vunpack.c.0.s8 %v5905
      %v5907 = vlaneseq
      %v5908 = vshrl.u32 %v5907, 7
      %v5909 = vsub.s32 %v5906, %v5908
      %v5910 = vrot.slane %v5715, %v5909
      %v5912 = vunpack.c.l.s4 1983009808
      %v5913 = vunpack.c.0.s8 %v5912
      %v5914 = vlaneseq
      %v5915 = vshrl.u32 %v5914, 7
      %v5916 = vsub.s32 %v5913, %v5915
      %v5917 = vrot.slane %v5903, %v5916
      %v5918 = vcombine.high %v5910, %v5910
      %v5919 = vcombine.high %v5917, %v5917
      %v5920 = vcombine.high %v5718, %v5718
      %v5922 = vunpack.c.l.s4 1983009808
      %v5923 = vunpack.c.0.s8 %v5922
      %v5924 = vlaneseq
      %v5925 = vshrl.u32 %v5924, 7
      %v5926 = vsub.s32 %v5923, %v5925
      %v5927 = vrot.slane %v5718, %v5926
      %v5929 = vunpack.c.l.s4 1983009808
      %v5930 = vunpack.c.0.s8 %v5929
      %v5931 = vlaneseq
      %v5932 = vshrl.u32 %v5931, 7
      %v5933 = vsub.s32 %v5930, %v5932
      %v5934 = vrot.slane %v5920, %v5933
      %v5935 = vcombine.high %v5927, %v5927
      %v5936 = vcombine.high %v5934, %v5934
      %v5937 = vcombine.high %v5721, %v5721
      %v5939 = vunpack.c.l.s4 1983009808
      %v5940 = vunpack.c.0.s8 %v5939
      %v5941 = vlaneseq
      %v5942 = vshrl.u32 %v5941, 7
      %v5943 = vsub.s32 %v5940, %v5942
      %v5944 = vrot.slane %v5721, %v5943
      %v5946 = vunpack.c.l.s4 1983009808
      %v5947 = vunpack.c.0.s8 %v5946
      %v5948 = vlaneseq
      %v5949 = vshrl.u32 %v5948, 7
      %v5950 = vsub.s32 %v5947, %v5949
      %v5951 = vrot.slane %v5937, %v5950
      %v5952 = vcombine.high %v5944, %v5944
      %v5953 = vcombine.high %v5951, %v5951
      %v5954 = vcombine.high %v5724, %v5724
      %v5956 = vunpack.c.l.s4 1983009808
      %v5957 = vunpack.c.0.s8 %v5956
      %v5958 = vlaneseq
      %v5959 = vshrl.u32 %v5958, 7
      %v5960 = vsub.s32 %v5957, %v5959
      %v5961 = vrot.slane %v5724, %v5960
      %v5963 = vunpack.c.l.s4 1983009808
      %v5964 = vunpack.c.0.s8 %v5963
      %v5965 = vlaneseq
      %v5966 = vshrl.u32 %v5965, 7
      %v5967 = vsub.s32 %v5964, %v5966
      %v5968 = vrot.slane %v5954, %v5967
      %v5969 = vcombine.high %v5961, %v5961
      %v5970 = vcombine.high %v5968, %v5968
      %v5971 = vcombine.high %v5727, %v5727
      %v5973 = vunpack.c.l.s4 1983009808
      %v5974 = vunpack.c.0.s8 %v5973
      %v5975 = vlaneseq
      %v5976 = vshrl.u32 %v5975, 7
      %v5977 = vsub.s32 %v5974, %v5976
      %v5978 = vrot.slane %v5727, %v5977
      %v5980 = vunpack.c.l.s4 1983009808
      %v5981 = vunpack.c.0.s8 %v5980
      %v5982 = vlaneseq
      %v5983 = vshrl.u32 %v5982, 7
      %v5984 = vsub.s32 %v5981, %v5983
      %v5985 = vrot.slane %v5971, %v5984
      %v5986 = vcombine.high %v5978, %v5978
      %v5987 = vcombine.high %v5985, %v5985
      %v5988 = vcombine.high %v5730, %v5730
      %v5990 = vunpack.c.l.s4 1983009808
      %v5991 = vunpack.c.0.s8 %v5990
      %v5992 = vlaneseq
      %v5993 = vshrl.u32 %v5992, 7
      %v5994 = vsub.s32 %v5991, %v5993
      %v5995 = vrot.slane %v5730, %v5994
      %v5997 = vunpack.c.l.s4 1983009808
      %v5998 = vunpack.c.0.s8 %v5997
      %v5999 = vlaneseq
      %v6000 = vshrl.u32 %v5999, 7
      %v6001 = vsub.s32 %v5998, %v6000
      %v6002 = vrot.slane %v5988, %v6001
      %v6003 = vcombine.high %v5995, %v5995
      %v6004 = vcombine.high %v6002, %v6002
      %v6005 = vcombine.high %v5733, %v5733
      %v6007 = vunpack.c.l.s4 1983009808
      %v6008 = vunpack.c.0.s8 %v6007
      %v6009 = vlaneseq
      %v6010 = vshrl.u32 %v6009, 7
      %v6011 = vsub.s32 %v6008, %v6010
      %v6012 = vrot.slane %v5733, %v6011
      %v6014 = vunpack.c.l.s4 1983009808
      %v6015 = vunpack.c.0.s8 %v6014
      %v6016 = vlaneseq
      %v6017 = vshrl.u32 %v6016, 7
      %v6018 = vsub.s32 %v6015, %v6017
      %v6019 = vrot.slane %v6005, %v6018
      %v6020 = vcombine.high %v6012, %v6012
      %v6021 = vcombine.high %v6019, %v6019
      %vm6086 = vcmask 123904
      %v6087 = vsel %vm6086, %v5757, -inf
      %v6088 = vrot.slane %v6087, 4
      %v6089 = vmax.f32 %v6087, %v6088
      %v6090 = vrot.slane %v6089, 2
      %v6091 = vmax.f32 %v6089, %v6090
      %v6092 = vrot.slane %v6091, 1
      %v6093 = vmax.f32 %v6091, %v6092
      %v6094 = vsel %vm6086, %v5765, -inf
      %v6095 = vrot.slane %v6094, 4
      %v6096 = vmax.f32 %v6094, %v6095
      %v6097 = vrot.slane %v6096, 2
      %v6098 = vmax.f32 %v6096, %v6097
      %v6099 = vrot.slane %v6098, 1
      %v6100 = vmax.f32 %v6098, %v6099
      %v6101 = vsel %vm6086, %v5764, -inf
      %v6102 = vrot.slane %v6101, 4
      %v6103 = vmax.f32 %v6101, %v6102
      %v6104 = vrot.slane %v6103, 2
      %v6105 = vmax.f32 %v6103, %v6104
      %v6106 = vrot.slane %v6105, 1
      %v6107 = vmax.f32 %v6105, %v6106
      %v6108 = vsel %vm6086, %v5766, -inf
      %v6109 = vrot.slane %v6108, 4
      %v6110 = vmax.f32 %v6108, %v6109
      %v6111 = vrot.slane %v6110, 2
      %v6112 = vmax.f32 %v6110, %v6111
      %v6113 = vrot.slane %v6112, 1
      %v6114 = vmax.f32 %v6112, %v6113
      %v6115 = vsel %vm6086, %v5774, -inf
      %v6116 = vrot.slane %v6115, 4
      %v6117 = vmax.f32 %v6115, %v6116
      %v6118 = vrot.slane %v6117, 2
      %v6119 = vmax.f32 %v6117, %v6118
      %v6120 = vrot.slane %v6119, 1
      %v6121 = vmax.f32 %v6119, %v6120
      %v6122 = vsel %vm6086, %v5782, -inf
      %v6123 = vrot.slane %v6122, 4
      %v6124 = vmax.f32 %v6122, %v6123
      %v6125 = vrot.slane %v6124, 2
      %v6126 = vmax.f32 %v6124, %v6125
      %v6127 = vrot.slane %v6126, 1
      %v6128 = vmax.f32 %v6126, %v6127
      %v6129 = vsel %vm6086, %v5781, -inf
      %v6130 = vrot.slane %v6129, 4
      %v6131 = vmax.f32 %v6129, %v6130
      %v6132 = vrot.slane %v6131, 2
      %v6133 = vmax.f32 %v6131, %v6132
      %v6134 = vrot.slane %v6133, 1
      %v6135 = vmax.f32 %v6133, %v6134
      %v6136 = vsel %vm6086, %v5783, -inf
      %v6137 = vrot.slane %v6136, 4
      %v6138 = vmax.f32 %v6136, %v6137
      %v6139 = vrot.slane %v6138, 2
      %v6140 = vmax.f32 %v6138, %v6139
      %v6141 = vrot.slane %v6140, 1
      %v6142 = vmax.f32 %v6140, %v6141
      %v6143 = vsel %vm6086, %v5791, -inf
      %v6144 = vrot.slane %v6143, 4
      %v6145 = vmax.f32 %v6143, %v6144
      %v6146 = vrot.slane %v6145, 2
      %v6147 = vmax.f32 %v6145, %v6146
      %v6148 = vrot.slane %v6147, 1
      %v6149 = vmax.f32 %v6147, %v6148
      %v6150 = vsel %vm6086, %v5799, -inf
      %v6151 = vrot.slane %v6150, 4
      %v6152 = vmax.f32 %v6150, %v6151
      %v6153 = vrot.slane %v6152, 2
      %v6154 = vmax.f32 %v6152, %v6153
      %v6155 = vrot.slane %v6154, 1
      %v6156 = vmax.f32 %v6154, %v6155
      %v6157 = vsel %vm6086, %v5798, -inf
      %v6158 = vrot.slane %v6157, 4
      %v6159 = vmax.f32 %v6157, %v6158
      %v6160 = vrot.slane %v6159, 2
      %v6161 = vmax.f32 %v6159, %v6160
      %v6162 = vrot.slane %v6161, 1
      %v6163 = vmax.f32 %v6161, %v6162
      %v6164 = vsel %vm6086, %v5800, -inf
      %v6165 = vrot.slane %v6164, 4
      %v6166 = vmax.f32 %v6164, %v6165
      %v6167 = vrot.slane %v6166, 2
      %v6168 = vmax.f32 %v6166, %v6167
      %v6169 = vrot.slane %v6168, 1
      %v6170 = vmax.f32 %v6168, %v6169
      %v6171 = vsel %vm6086, %v5808, -inf
      %v6172 = vrot.slane %v6171, 4
      %v6173 = vmax.f32 %v6171, %v6172
      %v6174 = vrot.slane %v6173, 2
      %v6175 = vmax.f32 %v6173, %v6174
      %v6176 = vrot.slane %v6175, 1
      %v6177 = vmax.f32 %v6175, %v6176
      %v6178 = vsel %vm6086, %v5816, -inf
      %v6179 = vrot.slane %v6178, 4
      %v6180 = vmax.f32 %v6178, %v6179
      %v6181 = vrot.slane %v6180, 2
      %v6182 = vmax.f32 %v6180, %v6181
      %v6183 = vrot.slane %v6182, 1
      %v6184 = vmax.f32 %v6182, %v6183
      %v6185 = vsel %vm6086, %v5815, -inf
      %v6186 = vrot.slane %v6185, 4
      %v6187 = vmax.f32 %v6185, %v6186
      %v6188 = vrot.slane %v6187, 2
      %v6189 = vmax.f32 %v6187, %v6188
      %v6190 = vrot.slane %v6189, 1
      %v6191 = vmax.f32 %v6189, %v6190
      %v6192 = vsel %vm6086, %v5817, -inf
      %v6193 = vrot.slane %v6192, 4
      %v6194 = vmax.f32 %v6192, %v6193
      %v6195 = vrot.slane %v6194, 2
      %v6196 = vmax.f32 %v6194, %v6195
      %v6197 = vrot.slane %v6196, 1
      %v6198 = vmax.f32 %v6196, %v6197
      %v6199 = vsel %vm6086, %v5825, -inf
      %v6200 = vrot.slane %v6199, 4
      %v6201 = vmax.f32 %v6199, %v6200
      %v6202 = vrot.slane %v6201, 2
      %v6203 = vmax.f32 %v6201, %v6202
      %v6204 = vrot.slane %v6203, 1
      %v6205 = vmax.f32 %v6203, %v6204
      %v6206 = vsel %vm6086, %v5833, -inf
      %v6207 = vrot.slane %v6206, 4
      %v6208 = vmax.f32 %v6206, %v6207
      %v6209 = vrot.slane %v6208, 2
      %v6210 = vmax.f32 %v6208, %v6209
      %v6211 = vrot.slane %v6210, 1
      %v6212 = vmax.f32 %v6210, %v6211
      %v6213 = vsel %vm6086, %v5832, -inf
      %v6214 = vrot.slane %v6213, 4
      %v6215 = vmax.f32 %v6213, %v6214
      %v6216 = vrot.slane %v6215, 2
      %v6217 = vmax.f32 %v6215, %v6216
      %v6218 = vrot.slane %v6217, 1
      %v6219 = vmax.f32 %v6217, %v6218
      %v6220 = vsel %vm6086, %v5834, -inf
      %v6221 = vrot.slane %v6220, 4
      %v6222 = vmax.f32 %v6220, %v6221
      %v6223 = vrot.slane %v6222, 2
      %v6224 = vmax.f32 %v6222, %v6223
      %v6225 = vrot.slane %v6224, 1
      %v6226 = vmax.f32 %v6224, %v6225
      %v6227 = vsel %vm6086, %v5842, -inf
      %v6228 = vrot.slane %v6227, 4
      %v6229 = vmax.f32 %v6227, %v6228
      %v6230 = vrot.slane %v6229, 2
      %v6231 = vmax.f32 %v6229, %v6230
      %v6232 = vrot.slane %v6231, 1
      %v6233 = vmax.f32 %v6231, %v6232
      %v6234 = vsel %vm6086, %v5850, -inf
      %v6235 = vrot.slane %v6234, 4
      %v6236 = vmax.f32 %v6234, %v6235
      %v6237 = vrot.slane %v6236, 2
      %v6238 = vmax.f32 %v6236, %v6237
      %v6239 = vrot.slane %v6238, 1
      %v6240 = vmax.f32 %v6238, %v6239
      %v6241 = vsel %vm6086, %v5849, -inf
      %v6242 = vrot.slane %v6241, 4
      %v6243 = vmax.f32 %v6241, %v6242
      %v6244 = vrot.slane %v6243, 2
      %v6245 = vmax.f32 %v6243, %v6244
      %v6246 = vrot.slane %v6245, 1
      %v6247 = vmax.f32 %v6245, %v6246
      %v6248 = vsel %vm6086, %v5851, -inf
      %v6249 = vrot.slane %v6248, 4
      %v6250 = vmax.f32 %v6248, %v6249
      %v6251 = vrot.slane %v6250, 2
      %v6252 = vmax.f32 %v6250, %v6251
      %v6253 = vrot.slane %v6252, 1
      %v6254 = vmax.f32 %v6252, %v6253
      %v6255 = vsel %vm6086, %v5859, -inf
      %v6256 = vrot.slane %v6255, 4
      %v6257 = vmax.f32 %v6255, %v6256
      %v6258 = vrot.slane %v6257, 2
      %v6259 = vmax.f32 %v6257, %v6258
      %v6260 = vrot.slane %v6259, 1
      %v6261 = vmax.f32 %v6259, %v6260
      %v6262 = vsel %vm6086, %v5867, -inf
      %v6263 = vrot.slane %v6262, 4
      %v6264 = vmax.f32 %v6262, %v6263
      %v6265 = vrot.slane %v6264, 2
      %v6266 = vmax.f32 %v6264, %v6265
      %v6267 = vrot.slane %v6266, 1
      %v6268 = vmax.f32 %v6266, %v6267
      %v6269 = vsel %vm6086, %v5866, -inf
      %v6270 = vrot.slane %v6269, 4
      %v6271 = vmax.f32 %v6269, %v6270
      %v6272 = vrot.slane %v6271, 2
      %v6273 = vmax.f32 %v6271, %v6272
      %v6274 = vrot.slane %v6273, 1
      %v6275 = vmax.f32 %v6273, %v6274
      %v6276 = vsel %vm6086, %v5868, -inf
      %v6277 = vrot.slane %v6276, 4
      %v6278 = vmax.f32 %v6276, %v6277
      %v6279 = vrot.slane %v6278, 2
      %v6280 = vmax.f32 %v6278, %v6279
      %v6281 = vrot.slane %v6280, 1
      %v6282 = vmax.f32 %v6280, %v6281
      %v6283 = vsel %vm6086, %v5876, -inf
      %v6284 = vrot.slane %v6283, 4
      %v6285 = vmax.f32 %v6283, %v6284
      %v6286 = vrot.slane %v6285, 2
      %v6287 = vmax.f32 %v6285, %v6286
      %v6288 = vrot.slane %v6287, 1
      %v6289 = vmax.f32 %v6287, %v6288
      %v6290 = vsel %vm6086, %v5884, -inf
      %v6291 = vrot.slane %v6290, 4
      %v6292 = vmax.f32 %v6290, %v6291
      %v6293 = vrot.slane %v6292, 2
      %v6294 = vmax.f32 %v6292, %v6293
      %v6295 = vrot.slane %v6294, 1
      %v6296 = vmax.f32 %v6294, %v6295
      %v6297 = vsel %vm6086, %v5883, -inf
      %v6298 = vrot.slane %v6297, 4
      %v6299 = vmax.f32 %v6297, %v6298
      %v6300 = vrot.slane %v6299, 2
      %v6301 = vmax.f32 %v6299, %v6300
      %v6302 = vrot.slane %v6301, 1
      %v6303 = vmax.f32 %v6301, %v6302
      %v6304 = vsel %vm6086, %v5885, -inf
      %v6305 = vrot.slane %v6304, 4
      %v6306 = vmax.f32 %v6304, %v6305
      %v6307 = vrot.slane %v6306, 2
      %v6308 = vmax.f32 %v6306, %v6307
      %v6309 = vrot.slane %v6308, 1
      %v6310 = vmax.f32 %v6308, %v6309
      %v6311 = vsel %vm6086, %v5893, -inf
      %v6312 = vrot.slane %v6311, 4
      %v6313 = vmax.f32 %v6311, %v6312
      %v6314 = vrot.slane %v6313, 2
      %v6315 = vmax.f32 %v6313, %v6314
      %v6316 = vrot.slane %v6315, 1
      %v6317 = vmax.f32 %v6315, %v6316
      %v6318 = vsel %vm6086, %v5901, -inf
      %v6319 = vrot.slane %v6318, 4
      %v6320 = vmax.f32 %v6318, %v6319
      %v6321 = vrot.slane %v6320, 2
      %v6322 = vmax.f32 %v6320, %v6321
      %v6323 = vrot.slane %v6322, 1
      %v6324 = vmax.f32 %v6322, %v6323
      %v6325 = vsel %vm6086, %v5900, -inf
      %v6326 = vrot.slane %v6325, 4
      %v6327 = vmax.f32 %v6325, %v6326
      %v6328 = vrot.slane %v6327, 2
      %v6329 = vmax.f32 %v6327, %v6328
      %v6330 = vrot.slane %v6329, 1
      %v6331 = vmax.f32 %v6329, %v6330
      %v6332 = vsel %vm6086, %v5902, -inf
      %v6333 = vrot.slane %v6332, 4
      %v6334 = vmax.f32 %v6332, %v6333
      %v6335 = vrot.slane %v6334, 2
      %v6336 = vmax.f32 %v6334, %v6335
      %v6337 = vrot.slane %v6336, 1
      %v6338 = vmax.f32 %v6336, %v6337
      %v6339 = vsel %vm6086, %v5910, -inf
      %v6340 = vrot.slane %v6339, 4
      %v6341 = vmax.f32 %v6339, %v6340
      %v6342 = vrot.slane %v6341, 2
      %v6343 = vmax.f32 %v6341, %v6342
      %v6344 = vrot.slane %v6343, 1
      %v6345 = vmax.f32 %v6343, %v6344
      %v6346 = vsel %vm6086, %v5918, -inf
      %v6347 = vrot.slane %v6346, 4
      %v6348 = vmax.f32 %v6346, %v6347
      %v6349 = vrot.slane %v6348, 2
      %v6350 = vmax.f32 %v6348, %v6349
      %v6351 = vrot.slane %v6350, 1
      %v6352 = vmax.f32 %v6350, %v6351
      %v6353 = vsel %vm6086, %v5917, -inf
      %v6354 = vrot.slane %v6353, 4
      %v6355 = vmax.f32 %v6353, %v6354
      %v6356 = vrot.slane %v6355, 2
      %v6357 = vmax.f32 %v6355, %v6356
      %v6358 = vrot.slane %v6357, 1
      %v6359 = vmax.f32 %v6357, %v6358
      %v6360 = vsel %vm6086, %v5919, -inf
      %v6361 = vrot.slane %v6360, 4
      %v6362 = vmax.f32 %v6360, %v6361
      %v6363 = vrot.slane %v6362, 2
      %v6364 = vmax.f32 %v6362, %v6363
      %v6365 = vrot.slane %v6364, 1
      %v6366 = vmax.f32 %v6364, %v6365
      %v6367 = vsel %vm6086, %v5927, -inf
      %v6368 = vrot.slane %v6367, 4
      %v6369 = vmax.f32 %v6367, %v6368
      %v6370 = vrot.slane %v6369, 2
      %v6371 = vmax.f32 %v6369, %v6370
      %v6372 = vrot.slane %v6371, 1
      %v6373 = vmax.f32 %v6371, %v6372
      %v6374 = vsel %vm6086, %v5935, -inf
      %v6375 = vrot.slane %v6374, 4
      %v6376 = vmax.f32 %v6374, %v6375
      %v6377 = vrot.slane %v6376, 2
      %v6378 = vmax.f32 %v6376, %v6377
      %v6379 = vrot.slane %v6378, 1
      %v6380 = vmax.f32 %v6378, %v6379
      %v6381 = vsel %vm6086, %v5934, -inf
      %v6382 = vrot.slane %v6381, 4
      %v6383 = vmax.f32 %v6381, %v6382
      %v6384 = vrot.slane %v6383, 2
      %v6385 = vmax.f32 %v6383, %v6384
      %v6386 = vrot.slane %v6385, 1
      %v6387 = vmax.f32 %v6385, %v6386
      %v6388 = vsel %vm6086, %v5936, -inf
      %v6389 = vrot.slane %v6388, 4
      %v6390 = vmax.f32 %v6388, %v6389
      %v6391 = vrot.slane %v6390, 2
      %v6392 = vmax.f32 %v6390, %v6391
      %v6393 = vrot.slane %v6392, 1
      %v6394 = vmax.f32 %v6392, %v6393
      %v6395 = vsel %vm6086, %v5944, -inf
      %v6396 = vrot.slane %v6395, 4
      %v6397 = vmax.f32 %v6395, %v6396
      %v6398 = vrot.slane %v6397, 2
      %v6399 = vmax.f32 %v6397, %v6398
      %v6400 = vrot.slane %v6399, 1
      %v6401 = vmax.f32 %v6399, %v6400
      %v6402 = vsel %vm6086, %v5952, -inf
      %v6403 = vrot.slane %v6402, 4
      %v6404 = vmax.f32 %v6402, %v6403
      %v6405 = vrot.slane %v6404, 2
      %v6406 = vmax.f32 %v6404, %v6405
      %v6407 = vrot.slane %v6406, 1
      %v6408 = vmax.f32 %v6406, %v6407
      %v6409 = vsel %vm6086, %v5951, -inf
      %v6410 = vrot.slane %v6409, 4
      %v6411 = vmax.f32 %v6409, %v6410
      %v6412 = vrot.slane %v6411, 2
      %v6413 = vmax.f32 %v6411, %v6412
      %v6414 = vrot.slane %v6413, 1
      %v6415 = vmax.f32 %v6413, %v6414
      %v6416 = vsel %vm6086, %v5953, -inf
      %v6417 = vrot.slane %v6416, 4
      %v6418 = vmax.f32 %v6416, %v6417
      %v6419 = vrot.slane %v6418, 2
      %v6420 = vmax.f32 %v6418, %v6419
      %v6421 = vrot.slane %v6420, 1
      %v6422 = vmax.f32 %v6420, %v6421
      %v6423 = vsel %vm6086, %v5961, -inf
      %v6424 = vrot.slane %v6423, 4
      %v6425 = vmax.f32 %v6423, %v6424
      %v6426 = vrot.slane %v6425, 2
      %v6427 = vmax.f32 %v6425, %v6426
      %v6428 = vrot.slane %v6427, 1
      %v6429 = vmax.f32 %v6427, %v6428
      %v6430 = vsel %vm6086, %v5969, -inf
      %v6431 = vrot.slane %v6430, 4
      %v6432 = vmax.f32 %v6430, %v6431
      %v6433 = vrot.slane %v6432, 2
      %v6434 = vmax.f32 %v6432, %v6433
      %v6435 = vrot.slane %v6434, 1
      %v6436 = vmax.f32 %v6434, %v6435
      %v6437 = vsel %vm6086, %v5968, -inf
      %v6438 = vrot.slane %v6437, 4
      %v6439 = vmax.f32 %v6437, %v6438
      %v6440 = vrot.slane %v6439, 2
      %v6441 = vmax.f32 %v6439, %v6440
      %v6442 = vrot.slane %v6441, 1
      %v6443 = vmax.f32 %v6441, %v6442
      %v6444 = vsel %vm6086, %v5970, -inf
      %v6445 = vrot.slane %v6444, 4
      %v6446 = vmax.f32 %v6444, %v6445
      %v6447 = vrot.slane %v6446, 2
      %v6448 = vmax.f32 %v6446, %v6447
      %v6449 = vrot.slane %v6448, 1
      %v6450 = vmax.f32 %v6448, %v6449
      %v6451 = vsel %vm6086, %v5978, -inf
      %v6452 = vrot.slane %v6451, 4
      %v6453 = vmax.f32 %v6451, %v6452
      %v6454 = vrot.slane %v6453, 2
      %v6455 = vmax.f32 %v6453, %v6454
      %v6456 = vrot.slane %v6455, 1
      %v6457 = vmax.f32 %v6455, %v6456
      %v6458 = vsel %vm6086, %v5986, -inf
      %v6459 = vrot.slane %v6458, 4
      %v6460 = vmax.f32 %v6458, %v6459
      %v6461 = vrot.slane %v6460, 2
      %v6462 = vmax.f32 %v6460, %v6461
      %v6463 = vrot.slane %v6462, 1
      %v6464 = vmax.f32 %v6462, %v6463
      %v6465 = vsel %vm6086, %v5985, -inf
      %v6466 = vrot.slane %v6465, 4
      %v6467 = vmax.f32 %v6465, %v6466
      %v6468 = vrot.slane %v6467, 2
      %v6469 = vmax.f32 %v6467, %v6468
      %v6470 = vrot.slane %v6469, 1
      %v6471 = vmax.f32 %v6469, %v6470
      %v6472 = vsel %vm6086, %v5987, -inf
      %v6473 = vrot.slane %v6472, 4
      %v6474 = vmax.f32 %v6472, %v6473
      %v6475 = vrot.slane %v6474, 2
      %v6476 = vmax.f32 %v6474, %v6475
      %v6477 = vrot.slane %v6476, 1
      %v6478 = vmax.f32 %v6476, %v6477
      %v6479 = vsel %vm6086, %v5995, -inf
      %v6480 = vrot.slane %v6479, 4
      %v6481 = vmax.f32 %v6479, %v6480
      %v6482 = vrot.slane %v6481, 2
      %v6483 = vmax.f32 %v6481, %v6482
      %v6484 = vrot.slane %v6483, 1
      %v6485 = vmax.f32 %v6483, %v6484
      %v6486 = vsel %vm6086, %v6003, -inf
      %v6487 = vrot.slane %v6486, 4
      %v6488 = vmax.f32 %v6486, %v6487
      %v6489 = vrot.slane %v6488, 2
      %v6490 = vmax.f32 %v6488, %v6489
      %v6491 = vrot.slane %v6490, 1
      %v6492 = vmax.f32 %v6490, %v6491
      %v6493 = vsel %vm6086, %v6002, -inf
      %v6494 = vrot.slane %v6493, 4
      %v6495 = vmax.f32 %v6493, %v6494
      %v6496 = vrot.slane %v6495, 2
      %v6497 = vmax.f32 %v6495, %v6496
      %v6498 = vrot.slane %v6497, 1
      %v6499 = vmax.f32 %v6497, %v6498
      %v6500 = vsel %vm6086, %v6004, -inf
      %v6501 = vrot.slane %v6500, 4
      %v6502 = vmax.f32 %v6500, %v6501
      %v6503 = vrot.slane %v6502, 2
      %v6504 = vmax.f32 %v6502, %v6503
      %v6505 = vrot.slane %v6504, 1
      %v6506 = vmax.f32 %v6504, %v6505
      %v6507 = vsel %vm6086, %v6012, -inf
      %v6508 = vrot.slane %v6507, 4
      %v6509 = vmax.f32 %v6507, %v6508
      %v6510 = vrot.slane %v6509, 2
      %v6511 = vmax.f32 %v6509, %v6510
      %v6512 = vrot.slane %v6511, 1
      %v6513 = vmax.f32 %v6511, %v6512
      %v6514 = vsel %vm6086, %v6020, -inf
      %v6515 = vrot.slane %v6514, 4
      %v6516 = vmax.f32 %v6514, %v6515
      %v6517 = vrot.slane %v6516, 2
      %v6518 = vmax.f32 %v6516, %v6517
      %v6519 = vrot.slane %v6518, 1
      %v6520 = vmax.f32 %v6518, %v6519
      %v6521 = vsel %vm6086, %v6019, -inf
      %v6522 = vrot.slane %v6521, 4
      %v6523 = vmax.f32 %v6521, %v6522
      %v6524 = vrot.slane %v6523, 2
      %v6525 = vmax.f32 %v6523, %v6524
      %v6526 = vrot.slane %v6525, 1
      %v6527 = vmax.f32 %v6525, %v6526
      %v6528 = vsel %vm6086, %v6021, -inf
      %v6529 = vrot.slane %v6528, 4
      %v6530 = vmax.f32 %v6528, %v6529
      %v6531 = vrot.slane %v6530, 2
      %v6532 = vmax.f32 %v6530, %v6531
      %v6533 = vrot.slane %v6532, 1
      %v6534 = vmax.f32 %v6532, %v6533
      %v6535 = vld [vmem:[%s2] sm:$0x1]
      %v6537 = vlaneseq
      %v6538 = vshrl.u32 %v6537, 7
      %v6539 = vsub.s32 0, %v6538
      %v6540 = vrot.slane %v6535, %v6539
      %v6542 = vadd.f32 %v6093, %v6540
      %v6543 = vadd.f32 %v6100, %v6540
      %v6544 = vadd.f32 %v6107, %v6540
      %v6545 = vadd.f32 %v6114, %v6540
      %v6546 = vadd.f32 %v6121, %v6540
      %v6547 = vadd.f32 %v6128, %v6540
      %v6548 = vadd.f32 %v6135, %v6540
      %v6549 = vadd.f32 %v6142, %v6540
      %v6550 = vadd.f32 %v6149, %v6540
      %v6551 = vadd.f32 %v6156, %v6540
      %v6552 = vadd.f32 %v6163, %v6540
      %v6553 = vadd.f32 %v6170, %v6540
      %v6554 = vadd.f32 %v6177, %v6540
      %v6555 = vadd.f32 %v6184, %v6540
      %v6556 = vadd.f32 %v6191, %v6540
      %v6557 = vadd.f32 %v6198, %v6540
      %v6558 = vadd.f32 %v6205, %v6540
      %v6559 = vadd.f32 %v6212, %v6540
      %v6560 = vadd.f32 %v6219, %v6540
      %v6561 = vadd.f32 %v6226, %v6540
      %v6562 = vadd.f32 %v6233, %v6540
      %v6563 = vadd.f32 %v6240, %v6540
      %v6564 = vadd.f32 %v6247, %v6540
      %v6565 = vadd.f32 %v6254, %v6540
      %v6566 = vadd.f32 %v6261, %v6540
      %v6567 = vadd.f32 %v6268, %v6540
      %v6568 = vadd.f32 %v6275, %v6540
      %v6569 = vadd.f32 %v6282, %v6540
      %v6570 = vadd.f32 %v6289, %v6540
      %v6571 = vadd.f32 %v6296, %v6540
      %v6572 = vadd.f32 %v6303, %v6540
      %v6573 = vadd.f32 %v6310, %v6540
      %v6574 = vadd.f32 %v6317, %v6540
      %v6575 = vadd.f32 %v6324, %v6540
      %v6576 = vadd.f32 %v6331, %v6540
      %v6577 = vadd.f32 %v6338, %v6540
      %v6578 = vadd.f32 %v6345, %v6540
      %v6579 = vadd.f32 %v6352, %v6540
      %v6580 = vadd.f32 %v6359, %v6540
      %v6581 = vadd.f32 %v6366, %v6540
      %v6582 = vadd.f32 %v6373, %v6540
      %v6583 = vadd.f32 %v6380, %v6540
      %v6584 = vadd.f32 %v6387, %v6540
      %v6585 = vadd.f32 %v6394, %v6540
      %v6586 = vadd.f32 %v6401, %v6540
      %v6587 = vadd.f32 %v6408, %v6540
      %v6588 = vadd.f32 %v6415, %v6540
      %v6589 = vadd.f32 %v6422, %v6540
      %v6590 = vadd.f32 %v6429, %v6540
      %v6591 = vadd.f32 %v6436, %v6540
      %v6592 = vadd.f32 %v6443, %v6540
      %v6593 = vadd.f32 %v6450, %v6540
      %v6594 = vadd.f32 %v6457, %v6540
      %v6595 = vadd.f32 %v6464, %v6540
      %v6596 = vadd.f32 %v6471, %v6540
      %v6597 = vadd.f32 %v6478, %v6540
      %v6598 = vadd.f32 %v6485, %v6540
      %v6599 = vadd.f32 %v6492, %v6540
      %v6600 = vadd.f32 %v6499, %v6540
      %v6601 = vadd.f32 %v6506, %v6540
      %v6602 = vadd.f32 %v6513, %v6540
      %v6603 = vadd.f32 %v6520, %v6540
      %v6604 = vadd.f32 %v6527, %v6540
      %v6605 = vadd.f32 %v6534, %v6540
      %vm6606 = vcmp.gt.f32.partialorder %v6542, 0.0
      %vm6607 = vcmp.gt.f32.partialorder %v6543, 0.0
      %vm6608 = vcmp.gt.f32.partialorder %v6544, 0.0
      %vm6609 = vcmp.gt.f32.partialorder %v6545, 0.0
      %vm6610 = vcmp.gt.f32.partialorder %v6546, 0.0
      %vm6611 = vcmp.gt.f32.partialorder %v6547, 0.0
      %vm6612 = vcmp.gt.f32.partialorder %v6548, 0.0
      %vm6613 = vcmp.gt.f32.partialorder %v6549, 0.0
      %vm6614 = vcmp.gt.f32.partialorder %v6550, 0.0
      %vm6615 = vcmp.gt.f32.partialorder %v6551, 0.0
      %vm6616 = vcmp.gt.f32.partialorder %v6552, 0.0
      %vm6617 = vcmp.gt.f32.partialorder %v6553, 0.0
      %vm6618 = vcmp.gt.f32.partialorder %v6554, 0.0
      %vm6619 = vcmp.gt.f32.partialorder %v6555, 0.0
      %vm6620 = vcmp.gt.f32.partialorder %v6556, 0.0
      %vm6621 = vcmp.gt.f32.partialorder %v6557, 0.0
      %vm6622 = vcmp.gt.f32.partialorder %v6558, 0.0
      %vm6623 = vcmp.gt.f32.partialorder %v6559, 0.0
      %vm6624 = vcmp.gt.f32.partialorder %v6560, 0.0
      %vm6625 = vcmp.gt.f32.partialorder %v6561, 0.0
      %vm6626 = vcmp.gt.f32.partialorder %v6562, 0.0
      %vm6627 = vcmp.gt.f32.partialorder %v6563, 0.0
      %vm6628 = vcmp.gt.f32.partialorder %v6564, 0.0
      %vm6629 = vcmp.gt.f32.partialorder %v6565, 0.0
      %vm6630 = vcmp.gt.f32.partialorder %v6566, 0.0
      %vm6631 = vcmp.gt.f32.partialorder %v6567, 0.0
      %vm6632 = vcmp.gt.f32.partialorder %v6568, 0.0
      %vm6633 = vcmp.gt.f32.partialorder %v6569, 0.0
      %vm6634 = vcmp.gt.f32.partialorder %v6570, 0.0
      %vm6635 = vcmp.gt.f32.partialorder %v6571, 0.0
      %vm6636 = vcmp.gt.f32.partialorder %v6572, 0.0
      %vm6637 = vcmp.gt.f32.partialorder %v6573, 0.0
      %vm6638 = vcmp.gt.f32.partialorder %v6574, 0.0
      %vm6639 = vcmp.gt.f32.partialorder %v6575, 0.0
      %vm6640 = vcmp.gt.f32.partialorder %v6576, 0.0
      %vm6641 = vcmp.gt.f32.partialorder %v6577, 0.0
      %vm6642 = vcmp.gt.f32.partialorder %v6578, 0.0
      %vm6643 = vcmp.gt.f32.partialorder %v6579, 0.0
      %vm6644 = vcmp.gt.f32.partialorder %v6580, 0.0
      %vm6645 = vcmp.gt.f32.partialorder %v6581, 0.0
      %vm6646 = vcmp.gt.f32.partialorder %v6582, 0.0
      %vm6647 = vcmp.gt.f32.partialorder %v6583, 0.0
      %vm6648 = vcmp.gt.f32.partialorder %v6584, 0.0
      %vm6649 = vcmp.gt.f32.partialorder %v6585, 0.0
      %vm6650 = vcmp.gt.f32.partialorder %v6586, 0.0
      %vm6651 = vcmp.gt.f32.partialorder %v6587, 0.0
      %vm6652 = vcmp.gt.f32.partialorder %v6588, 0.0
      %vm6653 = vcmp.gt.f32.partialorder %v6589, 0.0
      %vm6654 = vcmp.gt.f32.partialorder %v6590, 0.0
      %vm6655 = vcmp.gt.f32.partialorder %v6591, 0.0
      %vm6656 = vcmp.gt.f32.partialorder %v6592, 0.0
      %vm6657 = vcmp.gt.f32.partialorder %v6593, 0.0
      %vm6658 = vcmp.gt.f32.partialorder %v6594, 0.0
      %vm6659 = vcmp.gt.f32.partialorder %v6595, 0.0
      %vm6660 = vcmp.gt.f32.partialorder %v6596, 0.0
      %vm6661 = vcmp.gt.f32.partialorder %v6597, 0.0
      %vm6662 = vcmp.gt.f32.partialorder %v6598, 0.0
      %vm6663 = vcmp.gt.f32.partialorder %v6599, 0.0
      %vm6664 = vcmp.gt.f32.partialorder %v6600, 0.0
      %vm6665 = vcmp.gt.f32.partialorder %v6601, 0.0
      %vm6666 = vcmp.gt.f32.partialorder %v6602, 0.0
      %vm6667 = vcmp.gt.f32.partialorder %v6603, 0.0
      %vm6668 = vcmp.gt.f32.partialorder %v6604, 0.0
      %vm6669 = vcmp.gt.f32.partialorder %v6605, 0.0
      %v6670 = vmul.f32 %v6542, 0.2
      %v6671 = vmul.f32 %v6543, 0.2
      %v6672 = vmul.f32 %v6544, 0.2
      %v6673 = vmul.f32 %v6545, 0.2
      %v6674 = vmul.f32 %v6546, 0.2
      %v6675 = vmul.f32 %v6547, 0.2
      %v6676 = vmul.f32 %v6548, 0.2
      %v6677 = vmul.f32 %v6549, 0.2
      %v6678 = vmul.f32 %v6550, 0.2
      %v6679 = vmul.f32 %v6551, 0.2
      %v6680 = vmul.f32 %v6552, 0.2
      %v6681 = vmul.f32 %v6553, 0.2
      %v6682 = vmul.f32 %v6554, 0.2
      %v6683 = vmul.f32 %v6555, 0.2
      %v6684 = vmul.f32 %v6556, 0.2
      %v6685 = vmul.f32 %v6557, 0.2
      %v6686 = vmul.f32 %v6558, 0.2
      %v6687 = vmul.f32 %v6559, 0.2
      %v6688 = vmul.f32 %v6560, 0.2
      %v6689 = vmul.f32 %v6561, 0.2
      %v6690 = vmul.f32 %v6562, 0.2
      %v6691 = vmul.f32 %v6563, 0.2
      %v6692 = vmul.f32 %v6564, 0.2
      %v6693 = vmul.f32 %v6565, 0.2
      %v6694 = vmul.f32 %v6566, 0.2
      %v6695 = vmul.f32 %v6567, 0.2
      %v6696 = vmul.f32 %v6568, 0.2
      %v6697 = vmul.f32 %v6569, 0.2
      %v6698 = vmul.f32 %v6570, 0.2
      %v6699 = vmul.f32 %v6571, 0.2
      %v6700 = vmul.f32 %v6572, 0.2
      %v6701 = vmul.f32 %v6573, 0.2
      %v6702 = vmul.f32 %v6574, 0.2
      %v6703 = vmul.f32 %v6575, 0.2
      %v6704 = vmul.f32 %v6576, 0.2
      %v6705 = vmul.f32 %v6577, 0.2
      %v6706 = vmul.f32 %v6578, 0.2
      %v6707 = vmul.f32 %v6579, 0.2
      %v6708 = vmul.f32 %v6580, 0.2
      %v6709 = vmul.f32 %v6581, 0.2
      %v6710 = vmul.f32 %v6582, 0.2
      %v6711 = vmul.f32 %v6583, 0.2
      %v6712 = vmul.f32 %v6584, 0.2
      %v6713 = vmul.f32 %v6585, 0.2
      %v6714 = vmul.f32 %v6586, 0.2
      %v6715 = vmul.f32 %v6587, 0.2
      %v6716 = vmul.f32 %v6588, 0.2
      %v6717 = vmul.f32 %v6589, 0.2
      %v6718 = vmul.f32 %v6590, 0.2
      %v6719 = vmul.f32 %v6591, 0.2
      %v6720 = vmul.f32 %v6592, 0.2
      %v6721 = vmul.f32 %v6593, 0.2
      %v6722 = vmul.f32 %v6594, 0.2
      %v6723 = vmul.f32 %v6595, 0.2
      %v6724 = vmul.f32 %v6596, 0.2
      %v6725 = vmul.f32 %v6597, 0.2
      %v6726 = vmul.f32 %v6598, 0.2
      %v6727 = vmul.f32 %v6599, 0.2
      %v6728 = vmul.f32 %v6600, 0.2
      %v6729 = vmul.f32 %v6601, 0.2
      %v6730 = vmul.f32 %v6602, 0.2
      %v6731 = vmul.f32 %v6603, 0.2
      %v6732 = vmul.f32 %v6604, 0.2
      %v6733 = vmul.f32 %v6605, 0.2
      %v6734 = vsel %vm6606, %v6542, %v6670
      %v6735 = vsel %vm6607, %v6543, %v6671
      %v6736 = vsel %vm6608, %v6544, %v6672
      %v6737 = vsel %vm6609, %v6545, %v6673
      %v6738 = vsel %vm6610, %v6546, %v6674
      %v6739 = vsel %vm6611, %v6547, %v6675
      %v6740 = vsel %vm6612, %v6548, %v6676
      %v6741 = vsel %vm6613, %v6549, %v6677
      %v6742 = vsel %vm6614, %v6550, %v6678
      %v6743 = vsel %vm6615, %v6551, %v6679
      %v6744 = vsel %vm6616, %v6552, %v6680
      %v6745 = vsel %vm6617, %v6553, %v6681
      %v6746 = vsel %vm6618, %v6554, %v6682
      %v6747 = vsel %vm6619, %v6555, %v6683
      %v6748 = vsel %vm6620, %v6556, %v6684
      %v6749 = vsel %vm6621, %v6557, %v6685
      %v6750 = vsel %vm6622, %v6558, %v6686
      %v6751 = vsel %vm6623, %v6559, %v6687
      %v6752 = vsel %vm6624, %v6560, %v6688
      %v6753 = vsel %vm6625, %v6561, %v6689
      %v6754 = vsel %vm6626, %v6562, %v6690
      %v6755 = vsel %vm6627, %v6563, %v6691
      %v6756 = vsel %vm6628, %v6564, %v6692
      %v6757 = vsel %vm6629, %v6565, %v6693
      %v6758 = vsel %vm6630, %v6566, %v6694
      %v6759 = vsel %vm6631, %v6567, %v6695
      %v6760 = vsel %vm6632, %v6568, %v6696
      %v6761 = vsel %vm6633, %v6569, %v6697
      %v6762 = vsel %vm6634, %v6570, %v6698
      %v6763 = vsel %vm6635, %v6571, %v6699
      %v6764 = vsel %vm6636, %v6572, %v6700
      %v6765 = vsel %vm6637, %v6573, %v6701
      %v6766 = vsel %vm6638, %v6574, %v6702
      %v6767 = vsel %vm6639, %v6575, %v6703
      %v6768 = vsel %vm6640, %v6576, %v6704
      %v6769 = vsel %vm6641, %v6577, %v6705
      %v6770 = vsel %vm6642, %v6578, %v6706
      %v6771 = vsel %vm6643, %v6579, %v6707
      %v6772 = vsel %vm6644, %v6580, %v6708
      %v6773 = vsel %vm6645, %v6581, %v6709
      %v6774 = vsel %vm6646, %v6582, %v6710
      %v6775 = vsel %vm6647, %v6583, %v6711
      %v6776 = vsel %vm6648, %v6584, %v6712
      %v6777 = vsel %vm6649, %v6585, %v6713
      %v6778 = vsel %vm6650, %v6586, %v6714
      %v6779 = vsel %vm6651, %v6587, %v6715
      %v6780 = vsel %vm6652, %v6588, %v6716
      %v6781 = vsel %vm6653, %v6589, %v6717
      %v6782 = vsel %vm6654, %v6590, %v6718
      %v6783 = vsel %vm6655, %v6591, %v6719
      %v6784 = vsel %vm6656, %v6592, %v6720
      %v6785 = vsel %vm6657, %v6593, %v6721
      %v6786 = vsel %vm6658, %v6594, %v6722
      %v6787 = vsel %vm6659, %v6595, %v6723
      %v6788 = vsel %vm6660, %v6596, %v6724
      %v6789 = vsel %vm6661, %v6597, %v6725
      %v6790 = vsel %vm6662, %v6598, %v6726
      %v6791 = vsel %vm6663, %v6599, %v6727
      %v6792 = vsel %vm6664, %v6600, %v6728
      %v6793 = vsel %vm6665, %v6601, %v6729
      %v6794 = vsel %vm6666, %v6602, %v6730
      %v6795 = vsel %vm6667, %v6603, %v6731
      %v6796 = vsel %vm6668, %v6604, %v6732
      %v6797 = vsel %vm6669, %v6605, %v6733
      %v6798 = vld [vmem:[%s3] sm:$0x1]
      %v6800 = vlaneseq
      %v6801 = vshrl.u32 %v6800, 7
      %v6802 = vsub.s32 0, %v6801
      %v6803 = vrot.slane %v6798, %v6802
      %v6805 = vmul.f32 %v6734, %v6803
      %v6806 = vmul.f32 %v6735, %v6803
      %v6807 = vmul.f32 %v6736, %v6803
      %v6808 = vmul.f32 %v6737, %v6803
      %v6809 = vmul.f32 %v6738, %v6803
      %v6810 = vmul.f32 %v6739, %v6803
      %v6811 = vmul.f32 %v6740, %v6803
      %v6812 = vmul.f32 %v6741, %v6803
      %v6813 = vmul.f32 %v6742, %v6803
      %v6814 = vmul.f32 %v6743, %v6803
      %v6815 = vmul.f32 %v6744, %v6803
      %v6816 = vmul.f32 %v6745, %v6803
      %v6817 = vmul.f32 %v6746, %v6803
      %v6818 = vmul.f32 %v6747, %v6803
      %v6819 = vmul.f32 %v6748, %v6803
      %v6820 = vmul.f32 %v6749, %v6803
      %v6821 = vmul.f32 %v6750, %v6803
      %v6822 = vmul.f32 %v6751, %v6803
      %v6823 = vmul.f32 %v6752, %v6803
      %v6824 = vmul.f32 %v6753, %v6803
      %v6825 = vmul.f32 %v6754, %v6803
      %v6826 = vmul.f32 %v6755, %v6803
      %v6827 = vmul.f32 %v6756, %v6803
      %v6828 = vmul.f32 %v6757, %v6803
      %v6829 = vmul.f32 %v6758, %v6803
      %v6830 = vmul.f32 %v6759, %v6803
      %v6831 = vmul.f32 %v6760, %v6803
      %v6832 = vmul.f32 %v6761, %v6803
      %v6833 = vmul.f32 %v6762, %v6803
      %v6834 = vmul.f32 %v6763, %v6803
      %v6835 = vmul.f32 %v6764, %v6803
      %v6836 = vmul.f32 %v6765, %v6803
      %v6837 = vmul.f32 %v6766, %v6803
      %v6838 = vmul.f32 %v6767, %v6803
      %v6839 = vmul.f32 %v6768, %v6803
      %v6840 = vmul.f32 %v6769, %v6803
      %v6841 = vmul.f32 %v6770, %v6803
      %v6842 = vmul.f32 %v6771, %v6803
      %v6843 = vmul.f32 %v6772, %v6803
      %v6844 = vmul.f32 %v6773, %v6803
      %v6845 = vmul.f32 %v6774, %v6803
      %v6846 = vmul.f32 %v6775, %v6803
      %v6847 = vmul.f32 %v6776, %v6803
      %v6848 = vmul.f32 %v6777, %v6803
      %v6849 = vmul.f32 %v6778, %v6803
      %v6850 = vmul.f32 %v6779, %v6803
      %v6851 = vmul.f32 %v6780, %v6803
      %v6852 = vmul.f32 %v6781, %v6803
      %v6853 = vmul.f32 %v6782, %v6803
      %v6854 = vmul.f32 %v6783, %v6803
      %v6855 = vmul.f32 %v6784, %v6803
      %v6856 = vmul.f32 %v6785, %v6803
      %v6857 = vmul.f32 %v6786, %v6803
      %v6858 = vmul.f32 %v6787, %v6803
      %v6859 = vmul.f32 %v6788, %v6803
      %v6860 = vmul.f32 %v6789, %v6803
      %v6861 = vmul.f32 %v6790, %v6803
      %v6862 = vmul.f32 %v6791, %v6803
      %v6863 = vmul.f32 %v6792, %v6803
      %v6864 = vmul.f32 %v6793, %v6803
      %v6865 = vmul.f32 %v6794, %v6803
      %v6866 = vmul.f32 %v6795, %v6803
      %v6867 = vmul.f32 %v6796, %v6803
      %v6868 = vmul.f32 %v6797, %v6803
      %v6869 = vld [vmem:[%s4] sm:$0x1]
      %v6871 = vlaneseq
      %v6872 = vshrl.u32 %v6871, 7
      %v6873 = vsub.s32 0, %v6872
      %v6874 = vrot.slane %v6869, %v6873
      %v6876 = vadd.f32 %v6805, %v6874
      %v6877 = vadd.f32 %v6806, %v6874
      %v6878 = vadd.f32 %v6807, %v6874
      %v6879 = vadd.f32 %v6808, %v6874
      %v6880 = vadd.f32 %v6809, %v6874
      %v6881 = vadd.f32 %v6810, %v6874
      %v6882 = vadd.f32 %v6811, %v6874
      %v6883 = vadd.f32 %v6812, %v6874
      %v6884 = vadd.f32 %v6813, %v6874
      %v6885 = vadd.f32 %v6814, %v6874
      %v6886 = vadd.f32 %v6815, %v6874
      %v6887 = vadd.f32 %v6816, %v6874
      %v6888 = vadd.f32 %v6817, %v6874
      %v6889 = vadd.f32 %v6818, %v6874
      %v6890 = vadd.f32 %v6819, %v6874
      %v6891 = vadd.f32 %v6820, %v6874
      %v6892 = vadd.f32 %v6821, %v6874
      %v6893 = vadd.f32 %v6822, %v6874
      %v6894 = vadd.f32 %v6823, %v6874
      %v6895 = vadd.f32 %v6824, %v6874
      %v6896 = vadd.f32 %v6825, %v6874
      %v6897 = vadd.f32 %v6826, %v6874
      %v6898 = vadd.f32 %v6827, %v6874
      %v6899 = vadd.f32 %v6828, %v6874
      %v6900 = vadd.f32 %v6829, %v6874
      %v6901 = vadd.f32 %v6830, %v6874
      %v6902 = vadd.f32 %v6831, %v6874
      %v6903 = vadd.f32 %v6832, %v6874
      %v6904 = vadd.f32 %v6833, %v6874
      %v6905 = vadd.f32 %v6834, %v6874
      %v6906 = vadd.f32 %v6835, %v6874
      %v6907 = vadd.f32 %v6836, %v6874
      %v6908 = vadd.f32 %v6837, %v6874
      %v6909 = vadd.f32 %v6838, %v6874
      %v6910 = vadd.f32 %v6839, %v6874
      %v6911 = vadd.f32 %v6840, %v6874
      %v6912 = vadd.f32 %v6841, %v6874
      %v6913 = vadd.f32 %v6842, %v6874
      %v6914 = vadd.f32 %v6843, %v6874
      %v6915 = vadd.f32 %v6844, %v6874
      %v6916 = vadd.f32 %v6845, %v6874
      %v6917 = vadd.f32 %v6846, %v6874
      %v6918 = vadd.f32 %v6847, %v6874
      %v6919 = vadd.f32 %v6848, %v6874
      %v6920 = vadd.f32 %v6849, %v6874
      %v6921 = vadd.f32 %v6850, %v6874
      %v6922 = vadd.f32 %v6851, %v6874
      %v6923 = vadd.f32 %v6852, %v6874
      %v6924 = vadd.f32 %v6853, %v6874
      %v6925 = vadd.f32 %v6854, %v6874
      %v6926 = vadd.f32 %v6855, %v6874
      %v6927 = vadd.f32 %v6856, %v6874
      %v6928 = vadd.f32 %v6857, %v6874
      %v6929 = vadd.f32 %v6858, %v6874
      %v6930 = vadd.f32 %v6859, %v6874
      %v6931 = vadd.f32 %v6860, %v6874
      %v6932 = vadd.f32 %v6861, %v6874
      %v6933 = vadd.f32 %v6862, %v6874
      %v6934 = vadd.f32 %v6863, %v6874
      %v6935 = vadd.f32 %v6864, %v6874
      %v6936 = vadd.f32 %v6865, %v6874
      %v6937 = vadd.f32 %v6866, %v6874
      %v6938 = vadd.f32 %v6867, %v6874
      %v6939 = vadd.f32 %v6868, %v6874
      %v6940 = vpack.c.bf16 %v6876, %v6876
      %v6941 = vpack.c.bf16 %v6877, %v6877
      %v6942 = vpack.c.bf16 %v6878, %v6878
      %v6943 = vpack.c.bf16 %v6879, %v6879
      %v6944 = vpack.c.bf16 %v6880, %v6880
      %v6945 = vpack.c.bf16 %v6881, %v6881
      %v6946 = vpack.c.bf16 %v6882, %v6882
      %v6947 = vpack.c.bf16 %v6883, %v6883
      %v6948 = vpack.c.bf16 %v6884, %v6884
      %v6949 = vpack.c.bf16 %v6885, %v6885
      %v6950 = vpack.c.bf16 %v6886, %v6886
      %v6951 = vpack.c.bf16 %v6887, %v6887
      %v6952 = vpack.c.bf16 %v6888, %v6888
      %v6953 = vpack.c.bf16 %v6889, %v6889
      %v6954 = vpack.c.bf16 %v6890, %v6890
      %v6955 = vpack.c.bf16 %v6891, %v6891
      %v6956 = vpack.c.bf16 %v6892, %v6892
      %v6957 = vpack.c.bf16 %v6893, %v6893
      %v6958 = vpack.c.bf16 %v6894, %v6894
      %v6959 = vpack.c.bf16 %v6895, %v6895
      %v6960 = vpack.c.bf16 %v6896, %v6896
      %v6961 = vpack.c.bf16 %v6897, %v6897
      %v6962 = vpack.c.bf16 %v6898, %v6898
      %v6963 = vpack.c.bf16 %v6899, %v6899
      %v6964 = vpack.c.bf16 %v6900, %v6900
      %v6965 = vpack.c.bf16 %v6901, %v6901
      %v6966 = vpack.c.bf16 %v6902, %v6902
      %v6967 = vpack.c.bf16 %v6903, %v6903
      %v6968 = vpack.c.bf16 %v6904, %v6904
      %v6969 = vpack.c.bf16 %v6905, %v6905
      %v6970 = vpack.c.bf16 %v6906, %v6906
      %v6971 = vpack.c.bf16 %v6907, %v6907
      %v6972 = vpack.c.bf16 %v6908, %v6908
      %v6973 = vpack.c.bf16 %v6909, %v6909
      %v6974 = vpack.c.bf16 %v6910, %v6910
      %v6975 = vpack.c.bf16 %v6911, %v6911
      %v6976 = vpack.c.bf16 %v6912, %v6912
      %v6977 = vpack.c.bf16 %v6913, %v6913
      %v6978 = vpack.c.bf16 %v6914, %v6914
      %v6979 = vpack.c.bf16 %v6915, %v6915
      %v6980 = vpack.c.bf16 %v6916, %v6916
      %v6981 = vpack.c.bf16 %v6917, %v6917
      %v6982 = vpack.c.bf16 %v6918, %v6918
      %v6983 = vpack.c.bf16 %v6919, %v6919
      %v6984 = vpack.c.bf16 %v6920, %v6920
      %v6985 = vpack.c.bf16 %v6921, %v6921
      %v6986 = vpack.c.bf16 %v6922, %v6922
      %v6987 = vpack.c.bf16 %v6923, %v6923
      %v6988 = vpack.c.bf16 %v6924, %v6924
      %v6989 = vpack.c.bf16 %v6925, %v6925
      %v6990 = vpack.c.bf16 %v6926, %v6926
      %v6991 = vpack.c.bf16 %v6927, %v6927
      %v6992 = vpack.c.bf16 %v6928, %v6928
      %v6993 = vpack.c.bf16 %v6929, %v6929
      %v6994 = vpack.c.bf16 %v6930, %v6930
      %v6995 = vpack.c.bf16 %v6931, %v6931
      %v6996 = vpack.c.bf16 %v6932, %v6932
      %v6997 = vpack.c.bf16 %v6933, %v6933
      %v6998 = vpack.c.bf16 %v6934, %v6934
      %v6999 = vpack.c.bf16 %v6935, %v6935
      %v7000 = vpack.c.bf16 %v6936, %v6936
      %v7001 = vpack.c.bf16 %v6937, %v6937
      %v7002 = vpack.c.bf16 %v6938, %v6938
      %v7003 = vpack.c.bf16 %v6939, %v6939
      %7004 = vst [vmem:[#allocation3] sm:$0xf] 0
      %7005 = vst [vmem:[#allocation3 + $0x4] sm:$0xf] 0
      %7006 = vst [vmem:[#allocation3 + $0x8] sm:$0xf] 0
      %v7007 = vld [vmem:[#allocation3 + $0xc] sm:$0x1]
      %v7008 = vsel %vm640, 0, %v7007
      %7009 = vst [vmem:[#allocation3 + $0xc] sm:$0x1] %v7008
      %7010 = vst [vmem:[#allocation3 + $0x10] sm:$0xf] 0
      %7011 = vst [vmem:[#allocation3 + $0x14] sm:$0xf] 0
      %7012 = vst [vmem:[#allocation3 + $0x18] sm:$0xf] 0
      %v7013 = vld [vmem:[#allocation3 + $0x1c] sm:$0x1]
      %v7014 = vsel %vm640, 0, %v7013
      %7015 = vst [vmem:[#allocation3 + $0x1c] sm:$0x1] %v7014
      %7016 = vst [vmem:[#allocation3 + $0x20] sm:$0xf] 0
      %7017 = vst [vmem:[#allocation3 + $0x24] sm:$0xf] 0
      %7018 = vst [vmem:[#allocation3 + $0x28] sm:$0xf] 0
      %v7019 = vld [vmem:[#allocation3 + $0x2c] sm:$0x1]
      %v7020 = vsel %vm640, 0, %v7019
      %7021 = vst [vmem:[#allocation3 + $0x2c] sm:$0x1] %v7020
      %7022 = vst [vmem:[#allocation3 + $0x30] sm:$0xf] 0
      %7023 = vst [vmem:[#allocation3 + $0x34] sm:$0xf] 0
      %7024 = vst [vmem:[#allocation3 + $0x38] sm:$0xf] 0
      %v7025 = vld [vmem:[#allocation3 + $0x3c] sm:$0x1]
      %v7026 = vsel %vm640, 0, %v7025
      %7027 = vst [vmem:[#allocation3 + $0x3c] sm:$0x1] %v7026
      %7028 = vst [vmem:[#allocation3 + $0x40] sm:$0xf] 0
      %7029 = vst [vmem:[#allocation3 + $0x44] sm:$0xf] 0
      %7030 = vst [vmem:[#allocation3 + $0x48] sm:$0xf] 0
      %v7031 = vld [vmem:[#allocation3 + $0x4c] sm:$0x1]
      %v7032 = vsel %vm640, 0, %v7031
      %7033 = vst [vmem:[#allocation3 + $0x4c] sm:$0x1] %v7032
      %7034 = vst [vmem:[#allocation3 + $0x50] sm:$0xf] 0
      %7035 = vst [vmem:[#allocation3 + $0x54] sm:$0xf] 0
      %7036 = vst [vmem:[#allocation3 + $0x58] sm:$0xf] 0
      %v7037 = vld [vmem:[#allocation3 + $0x5c] sm:$0x1]
      %v7038 = vsel %vm640, 0, %v7037
      %7039 = vst [vmem:[#allocation3 + $0x5c] sm:$0x1] %v7038
      %7040 = vst [vmem:[#allocation3 + $0x60] sm:$0xf] 0
      %7041 = vst [vmem:[#allocation3 + $0x64] sm:$0xf] 0
      %7042 = vst [vmem:[#allocation3 + $0x68] sm:$0xf] 0
      %v7043 = vld [vmem:[#allocation3 + $0x6c] sm:$0x1]
      %v7044 = vsel %vm640, 0, %v7043
      %7045 = vst [vmem:[#allocation3 + $0x6c] sm:$0x1] %v7044
      %7046 = vst [vmem:[#allocation3 + $0x70] sm:$0xf] 0
      %7047 = vst [vmem:[#allocation3 + $0x74] sm:$0xf] 0
      %7048 = vst [vmem:[#allocation3 + $0x78] sm:$0xf] 0
      %v7049 = vld [vmem:[#allocation3 + $0x7c] sm:$0x1]
      %v7050 = vsel %vm640, 0, %v7049
      %7051 = vst [vmem:[#allocation3 + $0x7c] sm:$0x1] %v7050
      %7052 = vst [vmem:[#allocation3 + $0x80] sm:$0xf] 0
      %7053 = vst [vmem:[#allocation3 + $0x84] sm:$0xf] 0
      %7054 = vst [vmem:[#allocation3 + $0x88] sm:$0xf] 0
      %v7055 = vld [vmem:[#allocation3 + $0x8c] sm:$0x1]
      %v7056 = vsel %vm640, 0, %v7055
      %7057 = vst [vmem:[#allocation3 + $0x8c] sm:$0x1] %v7056
      %7058 = vst [vmem:[#allocation3 + $0x90] sm:$0xf] 0
      %7059 = vst [vmem:[#allocation3 + $0x94] sm:$0xf] 0
      %7060 = vst [vmem:[#allocation3 + $0x98] sm:$0xf] 0
      %v7061 = vld [vmem:[#allocation3 + $0x9c] sm:$0x1]
      %v7062 = vsel %vm640, 0, %v7061
      %7063 = vst [vmem:[#allocation3 + $0x9c] sm:$0x1] %v7062
      %v7128 = vunpack.c.l.b16 %v6940
      %v7129 = vunpack.c.l.b16 %v6941
      %v7130 = vunpack.c.l.b16 %v6942
      %v7131 = vunpack.c.l.b16 %v6943
      %v7132 = vunpack.c.l.b16 %v6944
      %v7133 = vunpack.c.l.b16 %v6945
      %v7134 = vunpack.c.l.b16 %v6946
      %v7135 = vunpack.c.l.b16 %v6947
      %v7136 = vunpack.c.l.b16 %v6948
      %v7137 = vunpack.c.l.b16 %v6949
      %v7138 = vunpack.c.l.b16 %v6950
      %v7139 = vunpack.c.l.b16 %v6951
      %v7140 = vunpack.c.l.b16 %v6952
      %v7141 = vunpack.c.l.b16 %v6953
      %v7142 = vunpack.c.l.b16 %v6954
      %v7143 = vunpack.c.l.b16 %v6955
      %v7144 = vunpack.c.l.b16 %v6956
      %v7145 = vunpack.c.l.b16 %v6957
      %v7146 = vunpack.c.l.b16 %v6958
      %v7147 = vunpack.c.l.b16 %v6959
      %v7148 = vunpack.c.l.b16 %v6960
      %v7149 = vunpack.c.l.b16 %v6961
      %v7150 = vunpack.c.l.b16 %v6962
      %v7151 = vunpack.c.l.b16 %v6963
      %v7152 = vunpack.c.l.b16 %v6964
      %v7153 = vunpack.c.l.b16 %v6965
      %v7154 = vunpack.c.l.b16 %v6966
      %v7155 = vunpack.c.l.b16 %v6967
      %v7156 = vunpack.c.l.b16 %v6968
      %v7157 = vunpack.c.l.b16 %v6969
      %v7158 = vunpack.c.l.b16 %v6970
      %v7159 = vunpack.c.l.b16 %v6971
      %v7160 = vunpack.c.l.b16 %v6972
      %v7161 = vunpack.c.l.b16 %v6973
      %v7162 = vunpack.c.l.b16 %v6974
      %v7163 = vunpack.c.l.b16 %v6975
      %v7164 = vunpack.c.l.b16 %v6976
      %v7165 = vunpack.c.l.b16 %v6977
      %v7166 = vunpack.c.l.b16 %v6978
      %v7167 = vunpack.c.l.b16 %v6979
      %v7168 = vunpack.c.l.b16 %v6980
      %v7169 = vunpack.c.l.b16 %v6981
      %v7170 = vunpack.c.l.b16 %v6982
      %v7171 = vunpack.c.l.b16 %v6983
      %v7172 = vunpack.c.l.b16 %v6984
      %v7173 = vunpack.c.l.b16 %v6985
      %v7174 = vunpack.c.l.b16 %v6986
      %v7175 = vunpack.c.l.b16 %v6987
      %v7176 = vunpack.c.l.b16 %v6988
      %v7177 = vunpack.c.l.b16 %v6989
      %v7178 = vunpack.c.l.b16 %v6990
      %v7179 = vunpack.c.l.b16 %v6991
      %v7180 = vunpack.c.l.b16 %v6992
      %v7181 = vunpack.c.l.b16 %v6993
      %v7182 = vunpack.c.l.b16 %v6994
      %v7183 = vunpack.c.l.b16 %v6995
      %v7184 = vunpack.c.l.b16 %v6996
      %v7185 = vunpack.c.l.b16 %v6997
      %v7186 = vunpack.c.l.b16 %v6998
      %v7187 = vunpack.c.l.b16 %v6999
      %v7188 = vunpack.c.l.b16 %v7000
      %v7189 = vunpack.c.l.b16 %v7001
      %v7190 = vunpack.c.l.b16 %v7002
      %v7191 = vunpack.c.l.b16 %v7003
      %v7192 = vpack.c.b16 %v7128, %v7128
      %v7193 = vpack.c.b16 %v7129, %v7129
      %v7194 = vpack.c.b16 %v7130, %v7130
      %v7195 = vpack.c.b16 %v7131, %v7131
      %v7196 = vpack.c.b16 %v7132, %v7132
      %v7197 = vpack.c.b16 %v7133, %v7133
      %v7198 = vpack.c.b16 %v7134, %v7134
      %v7199 = vpack.c.b16 %v7135, %v7135
      %v7200 = vpack.c.b16 %v7136, %v7136
      %v7201 = vpack.c.b16 %v7137, %v7137
      %v7202 = vpack.c.b16 %v7138, %v7138
      %v7203 = vpack.c.b16 %v7139, %v7139
      %v7204 = vpack.c.b16 %v7140, %v7140
      %v7205 = vpack.c.b16 %v7141, %v7141
      %v7206 = vpack.c.b16 %v7142, %v7142
      %v7207 = vpack.c.b16 %v7143, %v7143
      %v7208 = vpack.c.b16 %v7144, %v7144
      %v7209 = vpack.c.b16 %v7145, %v7145
      %v7210 = vpack.c.b16 %v7146, %v7146
      %v7211 = vpack.c.b16 %v7147, %v7147
      %v7212 = vpack.c.b16 %v7148, %v7148
      %v7213 = vpack.c.b16 %v7149, %v7149
      %v7214 = vpack.c.b16 %v7150, %v7150
      %v7215 = vpack.c.b16 %v7151, %v7151
      %v7216 = vpack.c.b16 %v7152, %v7152
      %v7217 = vpack.c.b16 %v7153, %v7153
      %v7218 = vpack.c.b16 %v7154, %v7154
      %v7219 = vpack.c.b16 %v7155, %v7155
      %v7220 = vpack.c.b16 %v7156, %v7156
      %v7221 = vpack.c.b16 %v7157, %v7157
      %v7222 = vpack.c.b16 %v7158, %v7158
      %v7223 = vpack.c.b16 %v7159, %v7159
      %v7224 = vpack.c.b16 %v7160, %v7160
      %v7225 = vpack.c.b16 %v7161, %v7161
      %v7226 = vpack.c.b16 %v7162, %v7162
      %v7227 = vpack.c.b16 %v7163, %v7163
      %v7228 = vpack.c.b16 %v7164, %v7164
      %v7229 = vpack.c.b16 %v7165, %v7165
      %v7230 = vpack.c.b16 %v7166, %v7166
      %v7231 = vpack.c.b16 %v7167, %v7167
      %v7232 = vpack.c.b16 %v7168, %v7168
      %v7233 = vpack.c.b16 %v7169, %v7169
      %v7234 = vpack.c.b16 %v7170, %v7170
      %v7235 = vpack.c.b16 %v7171, %v7171
      %v7236 = vpack.c.b16 %v7172, %v7172
      %v7237 = vpack.c.b16 %v7173, %v7173
      %v7238 = vpack.c.b16 %v7174, %v7174
      %v7239 = vpack.c.b16 %v7175, %v7175
      %v7240 = vpack.c.b16 %v7176, %v7176
      %v7241 = vpack.c.b16 %v7177, %v7177
      %v7242 = vpack.c.b16 %v7178, %v7178
      %v7243 = vpack.c.b16 %v7179, %v7179
      %v7244 = vpack.c.b16 %v7180, %v7180
      %v7245 = vpack.c.b16 %v7181, %v7181
      %v7246 = vpack.c.b16 %v7182, %v7182
      %v7247 = vpack.c.b16 %v7183, %v7183
      %v7248 = vpack.c.b16 %v7184, %v7184
      %v7249 = vpack.c.b16 %v7185, %v7185
      %v7250 = vpack.c.b16 %v7186, %v7186
      %v7251 = vpack.c.b16 %v7187, %v7187
      %v7252 = vpack.c.b16 %v7188, %v7188
      %v7253 = vpack.c.b16 %v7189, %v7189
      %v7254 = vpack.c.b16 %v7190, %v7190
      %v7255 = vpack.c.b16 %v7191, %v7191
      %v7256 = vunpack.c.l.b16 %v7192
      %v7257 = vunpack.c.l.b16 %v7193
      %v7258 = vunpack.c.l.b16 %v7194
      %v7259 = vunpack.c.l.b16 %v7195
      %v7260 = vunpack.c.l.b16 %v7196
      %v7261 = vunpack.c.l.b16 %v7197
      %v7262 = vunpack.c.l.b16 %v7198
      %v7263 = vunpack.c.l.b16 %v7199
      %v7264 = vunpack.c.l.b16 %v7200
      %v7265 = vunpack.c.l.b16 %v7201
      %v7266 = vunpack.c.l.b16 %v7202
      %v7267 = vunpack.c.l.b16 %v7203
      %v7268 = vunpack.c.l.b16 %v7204
      %v7269 = vunpack.c.l.b16 %v7205
      %v7270 = vunpack.c.l.b16 %v7206
      %v7271 = vunpack.c.l.b16 %v7207
      %v7272 = vunpack.c.l.b16 %v7208
      %v7273 = vunpack.c.l.b16 %v7209
      %v7274 = vunpack.c.l.b16 %v7210
      %v7275 = vunpack.c.l.b16 %v7211
      %v7276 = vunpack.c.l.b16 %v7212
      %v7277 = vunpack.c.l.b16 %v7213
      %v7278 = vunpack.c.l.b16 %v7214
      %v7279 = vunpack.c.l.b16 %v7215
      %v7280 = vunpack.c.l.b16 %v7216
      %v7281 = vunpack.c.l.b16 %v7217
      %v7282 = vunpack.c.l.b16 %v7218
      %v7283 = vunpack.c.l.b16 %v7219
      %v7284 = vunpack.c.l.b16 %v7220
      %v7285 = vunpack.c.l.b16 %v7221
      %v7286 = vunpack.c.l.b16 %v7222
      %v7287 = vunpack.c.l.b16 %v7223
      %v7288 = vunpack.c.l.b16 %v7224
      %v7289 = vunpack.c.l.b16 %v7225
      %v7290 = vunpack.c.l.b16 %v7226
      %v7291 = vunpack.c.l.b16 %v7227
      %v7292 = vunpack.c.l.b16 %v7228
      %v7293 = vunpack.c.l.b16 %v7229
      %v7294 = vunpack.c.l.b16 %v7230
      %v7295 = vunpack.c.l.b16 %v7231
      %v7296 = vunpack.c.l.b16 %v7232
      %v7297 = vunpack.c.l.b16 %v7233
      %v7298 = vunpack.c.l.b16 %v7234
      %v7299 = vunpack.c.l.b16 %v7235
      %v7300 = vunpack.c.l.b16 %v7236
      %v7301 = vunpack.c.l.b16 %v7237
      %v7302 = vunpack.c.l.b16 %v7238
      %v7303 = vunpack.c.l.b16 %v7239
      %v7304 = vunpack.c.l.b16 %v7240
      %v7305 = vunpack.c.l.b16 %v7241
      %v7306 = vunpack.c.l.b16 %v7242
      %v7307 = vunpack.c.l.b16 %v7243
      %v7308 = vunpack.c.l.b16 %v7244
      %v7309 = vunpack.c.l.b16 %v7245
      %v7310 = vunpack.c.l.b16 %v7246
      %v7311 = vunpack.c.l.b16 %v7247
      %v7312 = vunpack.c.l.b16 %v7248
      %v7313 = vunpack.c.l.b16 %v7249
      %v7314 = vunpack.c.l.b16 %v7250
      %v7315 = vunpack.c.l.b16 %v7251
      %v7316 = vunpack.c.l.b16 %v7252
      %v7317 = vunpack.c.l.b16 %v7253
      %v7318 = vunpack.c.l.b16 %v7254
      %v7319 = vunpack.c.l.b16 %v7255
      %v7320 = vrot.slane %v7257, 7
      %vm7321 = vcmask 1041409
      %v7322 = vsel %vm7321, %v7320, %v7256
      %v7323 = vrot.slane %v7258, 6
      %vm7324 = vcmask 1042434
      %v7325 = vsel %vm7324, %v7323, %v7322
      %v7326 = vrot.slane %v7259, 5
      %vm7327 = vcmask 1043459
      %v7328 = vsel %vm7327, %v7326, %v7325
      %v7329 = vrot.slane %v7260, 4
      %vm7330 = vcmask 1044484
      %v7331 = vsel %vm7330, %v7329, %v7328
      %v7332 = vrot.slane %v7261, 3
      %vm7333 = vcmask 1045509
      %v7334 = vsel %vm7333, %v7332, %v7331
      %v7335 = vrot.slane %v7262, 2
      %vm7336 = vcmask 1046534
      %v7337 = vsel %vm7336, %v7335, %v7334
      %v7338 = vrot.slane %v7263, 1
      %vm7339 = vcmask 1047559
      %v7340 = vsel %vm7339, %v7338, %v7337
      %v7341 = vrot.slane %v7265, 7
      %v7342 = vsel %vm7321, %v7341, %v7264
      %v7343 = vrot.slane %v7266, 6
      %v7344 = vsel %vm7324, %v7343, %v7342
      %v7345 = vrot.slane %v7267, 5
      %v7346 = vsel %vm7327, %v7345, %v7344
      %v7347 = vrot.slane %v7268, 4
      %v7348 = vsel %vm7330, %v7347, %v7346
      %v7349 = vrot.slane %v7269, 3
      %v7350 = vsel %vm7333, %v7349, %v7348
      %v7351 = vrot.slane %v7270, 2
      %v7352 = vsel %vm7336, %v7351, %v7350
      %v7353 = vrot.slane %v7271, 1
      %v7354 = vsel %vm7339, %v7353, %v7352
      %v7355 = vrot.slane %v7273, 7
      %v7356 = vsel %vm7321, %v7355, %v7272
      %v7357 = vrot.slane %v7274, 6
      %v7358 = vsel %vm7324, %v7357, %v7356
      %v7359 = vrot.slane %v7275, 5
      %v7360 = vsel %vm7327, %v7359, %v7358
      %v7361 = vrot.slane %v7276, 4
      %v7362 = vsel %vm7330, %v7361, %v7360
      %v7363 = vrot.slane %v7277, 3
      %v7364 = vsel %vm7333, %v7363, %v7362
      %v7365 = vrot.slane %v7278, 2
      %v7366 = vsel %vm7336, %v7365, %v7364
      %v7367 = vrot.slane %v7279, 1
      %v7368 = vsel %vm7339, %v7367, %v7366
      %v7369 = vrot.slane %v7281, 7
      %v7370 = vsel %vm7321, %v7369, %v7280
      %v7371 = vrot.slane %v7282, 6
      %v7372 = vsel %vm7324, %v7371, %v7370
      %v7373 = vrot.slane %v7283, 5
      %v7374 = vsel %vm7327, %v7373, %v7372
      %v7375 = vrot.slane %v7284, 4
      %v7376 = vsel %vm7330, %v7375, %v7374
      %v7377 = vrot.slane %v7285, 3
      %v7378 = vsel %vm7333, %v7377, %v7376
      %v7379 = vrot.slane %v7286, 2
      %v7380 = vsel %vm7336, %v7379, %v7378
      %v7381 = vrot.slane %v7287, 1
      %v7382 = vsel %vm7339, %v7381, %v7380
      %v7383 = vrot.slane %v7289, 7
      %v7384 = vsel %vm7321, %v7383, %v7288
      %v7385 = vrot.slane %v7290, 6
      %v7386 = vsel %vm7324, %v7385, %v7384
      %v7387 = vrot.slane %v7291, 5
      %v7388 = vsel %vm7327, %v7387, %v7386
      %v7389 = vrot.slane %v7292, 4
      %v7390 = vsel %vm7330, %v7389, %v7388
      %v7391 = vrot.slane %v7293, 3
      %v7392 = vsel %vm7333, %v7391, %v7390
      %v7393 = vrot.slane %v7294, 2
      %v7394 = vsel %vm7336, %v7393, %v7392
      %v7395 = vrot.slane %v7295, 1
      %v7396 = vsel %vm7339, %v7395, %v7394
      %v7397 = vrot.slane %v7297, 7
      %v7398 = vsel %vm7321, %v7397, %v7296
      %v7399 = vrot.slane %v7298, 6
      %v7400 = vsel %vm7324, %v7399, %v7398
      %v7401 = vrot.slane %v7299, 5
      %v7402 = vsel %vm7327, %v7401, %v7400
      %v7403 = vrot.slane %v7300, 4
      %v7404 = vsel %vm7330, %v7403, %v7402
      %v7405 = vrot.slane %v7301, 3
      %v7406 = vsel %vm7333, %v7405, %v7404
      %v7407 = vrot.slane %v7302, 2
      %v7408 = vsel %vm7336, %v7407, %v7406
      %v7409 = vrot.slane %v7303, 1
      %v7410 = vsel %vm7339, %v7409, %v7408
      %v7411 = vrot.slane %v7305, 7
      %v7412 = vsel %vm7321, %v7411, %v7304
      %v7413 = vrot.slane %v7306, 6
      %v7414 = vsel %vm7324, %v7413, %v7412
      %v7415 = vrot.slane %v7307, 5
      %v7416 = vsel %vm7327, %v7415, %v7414
      %v7417 = vrot.slane %v7308, 4
      %v7418 = vsel %vm7330, %v7417, %v7416
      %v7419 = vrot.slane %v7309, 3
      %v7420 = vsel %vm7333, %v7419, %v7418
      %v7421 = vrot.slane %v7310, 2
      %v7422 = vsel %vm7336, %v7421, %v7420
      %v7423 = vrot.slane %v7311, 1
      %v7424 = vsel %vm7339, %v7423, %v7422
      %v7425 = vrot.slane %v7313, 7
      %v7426 = vsel %vm7321, %v7425, %v7312
      %v7427 = vrot.slane %v7314, 6
      %v7428 = vsel %vm7324, %v7427, %v7426
      %v7429 = vrot.slane %v7315, 5
      %v7430 = vsel %vm7327, %v7429, %v7428
      %v7431 = vrot.slane %v7316, 4
      %v7432 = vsel %vm7330, %v7431, %v7430
      %v7433 = vrot.slane %v7317, 3
      %v7434 = vsel %vm7333, %v7433, %v7432
      %v7435 = vrot.slane %v7318, 2
      %v7436 = vsel %vm7336, %v7435, %v7434
      %v7437 = vrot.slane %v7319, 1
      %v7438 = vsel %vm7339, %v7437, %v7436
      %v7439 = vpack.c.b16 %v7340, %v7340
      %v7440 = vpack.c.b16 %v7354, %v7354
      %v7441 = vpack.c.b16 %v7368, %v7368
      %v7442 = vpack.c.b16 %v7382, %v7382
      %v7443 = vpack.c.b16 %v7396, %v7396
      %v7444 = vpack.c.b16 %v7410, %v7410
      %v7445 = vpack.c.b16 %v7424, %v7424
      %v7446 = vpack.c.b16 %v7438, %v7438
      %s7455 = scalar_lea.vmem [#allocation3], 16
      %vm7456 = vcmask 125952
      %7457 = vst.msk [vmem:[%s7455 + $0x8] sm:$0xf] %vm7456, %v7439
      %7458 = vst.msk [vmem:[%s7455 + $0x18] sm:$0xf] %vm7456, %v7440
      %7459 = vst.msk [vmem:[%s7455 + $0x28] sm:$0xf] %vm7456, %v7441
      %7460 = vst.msk [vmem:[%s7455 + $0x38] sm:$0xf] %vm7456, %v7442
      %7461 = vst.msk [vmem:[%s7455 + $0x48] sm:$0xf] %vm7456, %v7443
      %7462 = vst.msk [vmem:[%s7455 + $0x58] sm:$0xf] %vm7456, %v7444
      %7463 = vst.msk [vmem:[%s7455 + $0x68] sm:$0xf] %vm7456, %v7445
      %7464 = vst.msk [vmem:[%s7455 + $0x78] sm:$0xf] %vm7456, %v7446
      %v7465 = vld [vmem:[#allocation3 + $0x4] sm:$0x8]
      %v7466 = vld [vmem:[#allocation3 + $0x8] sm:$0xf]
      %v7467 = vld [vmem:[#allocation3 + $0x14] sm:$0x8]
      %v7468 = vld [vmem:[#allocation3 + $0x18] sm:$0xf]
      %v7469 = vld [vmem:[#allocation3 + $0x24] sm:$0x8]
      %v7470 = vld [vmem:[#allocation3 + $0x28] sm:$0xf]
      %v7471 = vld [vmem:[#allocation3 + $0x34] sm:$0x8]
      %v7472 = vld [vmem:[#allocation3 + $0x38] sm:$0xf]
      %v7473 = vld [vmem:[#allocation3 + $0x44] sm:$0x8]
      %v7474 = vld [vmem:[#allocation3 + $0x48] sm:$0xf]
      %v7475 = vld [vmem:[#allocation3 + $0x54] sm:$0x8]
      %v7476 = vld [vmem:[#allocation3 + $0x58] sm:$0xf]
      %v7477 = vld [vmem:[#allocation3 + $0x64] sm:$0x8]
      %v7478 = vld [vmem:[#allocation3 + $0x68] sm:$0xf]
      %v7479 = vld [vmem:[#allocation3 + $0x74] sm:$0x8]
      %v7480 = vld [vmem:[#allocation3 + $0x78] sm:$0xf]
      %v7481 = vld [vmem:[#allocation3 + $0xc] sm:$0x1]
      %v7482 = vld [vmem:[#allocation3 + $0x1c] sm:$0x1]
      %v7483 = vld [vmem:[#allocation3 + $0x2c] sm:$0x1]
      %v7484 = vld [vmem:[#allocation3 + $0x3c] sm:$0x1]
      %v7485 = vld [vmem:[#allocation3 + $0x4c] sm:$0x1]
      %v7486 = vld [vmem:[#allocation3 + $0x5c] sm:$0x1]
      %v7487 = vld [vmem:[#allocation3 + $0x6c] sm:$0x1]
      %v7488 = vld [vmem:[#allocation3 + $0x7c] sm:$0x1]
      %v7489 = vld [vmem:[%s7455 + $0x4] sm:$0x8]
      %v7490 = vld [vmem:[%s7455 + $0x8] sm:$0xf]
      %v7491 = vld [vmem:[%s7455 + $0x14] sm:$0x8]
      %v7492 = vld [vmem:[%s7455 + $0x18] sm:$0xf]
      %v7493 = vld [vmem:[%s7455 + $0x24] sm:$0x8]
      %v7494 = vld [vmem:[%s7455 + $0x28] sm:$0xf]
      %v7495 = vld [vmem:[%s7455 + $0x34] sm:$0x8]
      %v7496 = vld [vmem:[%s7455 + $0x38] sm:$0xf]
      %v7497 = vld [vmem:[%s7455 + $0x44] sm:$0x8]
      %v7498 = vld [vmem:[%s7455 + $0x48] sm:$0xf]
      %v7499 = vld [vmem:[%s7455 + $0x54] sm:$0x8]
      %v7500 = vld [vmem:[%s7455 + $0x58] sm:$0xf]
      %v7501 = vld [vmem:[%s7455 + $0x64] sm:$0x8]
      %v7502 = vld [vmem:[%s7455 + $0x68] sm:$0xf]
      %v7503 = vld [vmem:[%s7455 + $0x74] sm:$0x8]
      %v7504 = vld [vmem:[%s7455 + $0x78] sm:$0xf]
      %v7505 = vld [vmem:[%s7455 + $0xc] sm:$0x1]
      %v7506 = vld [vmem:[%s7455 + $0x1c] sm:$0x1]
      %v7507 = vld [vmem:[%s7455 + $0x2c] sm:$0x1]
      %v7508 = vld [vmem:[%s7455 + $0x3c] sm:$0x1]
      %v7509 = vld [vmem:[%s7455 + $0x4c] sm:$0x1]
      %v7510 = vld [vmem:[%s7455 + $0x5c] sm:$0x1]
      %v7511 = vld [vmem:[%s7455 + $0x6c] sm:$0x1]
      %v7512 = vld [vmem:[%s7455 + $0x7c] sm:$0x1]
      %s7513 = scalar_lea.vmem [#allocation3], 32
      %v7514 = vld [vmem:[%s7513 + $0x4] sm:$0x8]
      %v7515 = vld [vmem:[%s7513 + $0x8] sm:$0xf]
      %v7516 = vld [vmem:[%s7513 + $0x14] sm:$0x8]
      %v7517 = vld [vmem:[%s7513 + $0x18] sm:$0xf]
      %v7518 = vld [vmem:[%s7513 + $0x24] sm:$0x8]
      %v7519 = vld [vmem:[%s7513 + $0x28] sm:$0xf]
      %v7520 = vld [vmem:[%s7513 + $0x34] sm:$0x8]
      %v7521 = vld [vmem:[%s7513 + $0x38] sm:$0xf]
      %v7522 = vld [vmem:[%s7513 + $0x44] sm:$0x8]
      %v7523 = vld [vmem:[%s7513 + $0x48] sm:$0xf]
      %v7524 = vld [vmem:[%s7513 + $0x54] sm:$0x8]
      %v7525 = vld [vmem:[%s7513 + $0x58] sm:$0xf]
      %v7526 = vld [vmem:[%s7513 + $0x64] sm:$0x8]
      %v7527 = vld [vmem:[%s7513 + $0x68] sm:$0xf]
      %v7528 = vld [vmem:[%s7513 + $0x74] sm:$0x8]
      %v7529 = vld [vmem:[%s7513 + $0x78] sm:$0xf]
      %v7530 = vld [vmem:[%s7513 + $0xc] sm:$0x1]
      %v7531 = vld [vmem:[%s7513 + $0x1c] sm:$0x1]
      %v7532 = vld [vmem:[%s7513 + $0x2c] sm:$0x1]
      %v7533 = vld [vmem:[%s7513 + $0x3c] sm:$0x1]
      %v7534 = vld [vmem:[%s7513 + $0x4c] sm:$0x1]
      %v7535 = vld [vmem:[%s7513 + $0x5c] sm:$0x1]
      %v7536 = vld [vmem:[%s7513 + $0x6c] sm:$0x1]
      %v7537 = vld [vmem:[%s7513 + $0x7c] sm:$0x1]
      %v7554 = vunpack.c.l.b16 %v7465
      %v7555 = vunpack.c.l.b16 %v7466
      %v7556 = vunpack.c.l.b16 %v7467
      %v7557 = vunpack.c.l.b16 %v7468
      %v7558 = vunpack.c.l.b16 %v7469
      %v7559 = vunpack.c.l.b16 %v7470
      %v7560 = vunpack.c.l.b16 %v7471
      %v7561 = vunpack.c.l.b16 %v7472
      %v7562 = vunpack.c.l.b16 %v7473
      %v7563 = vunpack.c.l.b16 %v7474
      %v7564 = vunpack.c.l.b16 %v7475
      %v7565 = vunpack.c.l.b16 %v7476
      %v7566 = vunpack.c.l.b16 %v7477
      %v7567 = vunpack.c.l.b16 %v7478
      %v7568 = vunpack.c.l.b16 %v7479
      %v7569 = vunpack.c.l.b16 %v7480
      %v7570 = vpack.c.b16 %v7555, %v7555
      %v7571 = vpack.c.b16 %v7557, %v7557
      %v7572 = vpack.c.b16 %v7559, %v7559
      %v7573 = vpack.c.b16 %v7561, %v7561
      %v7574 = vpack.c.b16 %v7563, %v7563
      %v7575 = vpack.c.b16 %v7565, %v7565
      %v7576 = vpack.c.b16 %v7567, %v7567
      %v7577 = vpack.c.b16 %v7569, %v7569
      %v7579 = vshrl.u32 %v7570, 16
      %v7581 = vrot.slane %v7579, 4
      %v7582 = vshll.u32 %v7570, 16
      %v7584 = vrot.slane %v7582, 5
      %v7585 = vor.u32 %v7581, %v7584
      %v7587 = vshrl.u32 %v7571, 16
      %v7589 = vrot.slane %v7587, 4
      %v7590 = vshll.u32 %v7571, 16
      %v7592 = vrot.slane %v7590, 5
      %v7593 = vor.u32 %v7589, %v7592
      %v7595 = vshrl.u32 %v7572, 16
      %v7597 = vrot.slane %v7595, 4
      %v7598 = vshll.u32 %v7572, 16
      %v7600 = vrot.slane %v7598, 5
      %v7601 = vor.u32 %v7597, %v7600
      %v7603 = vshrl.u32 %v7573, 16
      %v7605 = vrot.slane %v7603, 4
      %v7606 = vshll.u32 %v7573, 16
      %v7608 = vrot.slane %v7606, 5
      %v7609 = vor.u32 %v7605, %v7608
      %v7611 = vshrl.u32 %v7574, 16
      %v7613 = vrot.slane %v7611, 4
      %v7614 = vshll.u32 %v7574, 16
      %v7616 = vrot.slane %v7614, 5
      %v7617 = vor.u32 %v7613, %v7616
      %v7619 = vshrl.u32 %v7575, 16
      %v7621 = vrot.slane %v7619, 4
      %v7622 = vshll.u32 %v7575, 16
      %v7624 = vrot.slane %v7622, 5
      %v7625 = vor.u32 %v7621, %v7624
      %v7627 = vshrl.u32 %v7576, 16
      %v7629 = vrot.slane %v7627, 4
      %v7630 = vshll.u32 %v7576, 16
      %v7632 = vrot.slane %v7630, 5
      %v7633 = vor.u32 %v7629, %v7632
      %v7635 = vshrl.u32 %v7577, 16
      %v7637 = vrot.slane %v7635, 4
      %v7638 = vshll.u32 %v7577, 16
      %v7640 = vrot.slane %v7638, 5
      %v7641 = vor.u32 %v7637, %v7640
      %v7650 = vunpack.c.l.b16 %v7481
      %v7651 = vunpack.c.l.b16 %v7482
      %v7652 = vunpack.c.l.b16 %v7483
      %v7653 = vunpack.c.l.b16 %v7484
      %v7654 = vunpack.c.l.b16 %v7485
      %v7655 = vunpack.c.l.b16 %v7486
      %v7656 = vunpack.c.l.b16 %v7487
      %v7657 = vunpack.c.l.b16 %v7488
      %v7658 = vpack.c.b16 %v7650, %v7555
      %v7659 = vpack.c.b16 %v7651, %v7557
      %v7660 = vpack.c.b16 %v7652, %v7559
      %v7661 = vpack.c.b16 %v7653, %v7561
      %v7662 = vpack.c.b16 %v7654, %v7563
      %v7663 = vpack.c.b16 %v7655, %v7565
      %v7664 = vpack.c.b16 %v7656, %v7567
      %v7665 = vpack.c.b16 %v7657, %v7569
      %v7666 = vrot.slane %v7658, 5
      %v7667 = vrot.slane %v7659, 5
      %v7668 = vrot.slane %v7660, 5
      %v7669 = vrot.slane %v7661, 5
      %v7670 = vrot.slane %v7662, 5
      %v7671 = vrot.slane %v7663, 5
      %v7672 = vrot.slane %v7664, 5
      %v7673 = vrot.slane %v7665, 5
      %v7690 = vunpack.c.l.b16 %v7489
      %v7691 = vunpack.c.l.b16 %v7490
      %v7692 = vunpack.c.l.b16 %v7491
      %v7693 = vunpack.c.l.b16 %v7492
      %v7694 = vunpack.c.l.b16 %v7493
      %v7695 = vunpack.c.l.b16 %v7494
      %v7696 = vunpack.c.l.b16 %v7495
      %v7697 = vunpack.c.l.b16 %v7496
      %v7698 = vunpack.c.l.b16 %v7497
      %v7699 = vunpack.c.l.b16 %v7498
      %v7700 = vunpack.c.l.b16 %v7499
      %v7701 = vunpack.c.l.b16 %v7500
      %v7702 = vunpack.c.l.b16 %v7501
      %v7703 = vunpack.c.l.b16 %v7502
      %v7704 = vunpack.c.l.b16 %v7503
      %v7705 = vunpack.c.l.b16 %v7504
      %v7706 = vpack.c.b16 %v7691, %v7691
      %v7707 = vpack.c.b16 %v7693, %v7693
      %v7708 = vpack.c.b16 %v7695, %v7695
      %v7709 = vpack.c.b16 %v7697, %v7697
      %v7710 = vpack.c.b16 %v7699, %v7699
      %v7711 = vpack.c.b16 %v7701, %v7701
      %v7712 = vpack.c.b16 %v7703, %v7703
      %v7713 = vpack.c.b16 %v7705, %v7705
      %v7715 = vshrl.u32 %v7706, 16
      %v7717 = vrot.slane %v7715, 4
      %v7718 = vshll.u32 %v7706, 16
      %v7720 = vrot.slane %v7718, 5
      %v7721 = vor.u32 %v7717, %v7720
      %v7723 = vshrl.u32 %v7707, 16
      %v7725 = vrot.slane %v7723, 4
      %v7726 = vshll.u32 %v7707, 16
      %v7728 = vrot.slane %v7726, 5
      %v7729 = vor.u32 %v7725, %v7728
      %v7731 = vshrl.u32 %v7708, 16
      %v7733 = vrot.slane %v7731, 4
      %v7734 = vshll.u32 %v7708, 16
      %v7736 = vrot.slane %v7734, 5
      %v7737 = vor.u32 %v7733, %v7736
      %v7739 = vshrl.u32 %v7709, 16
      %v7741 = vrot.slane %v7739, 4
      %v7742 = vshll.u32 %v7709, 16
      %v7744 = vrot.slane %v7742, 5
      %v7745 = vor.u32 %v7741, %v7744
      %v7747 = vshrl.u32 %v7710, 16
      %v7749 = vrot.slane %v7747, 4
      %v7750 = vshll.u32 %v7710, 16
      %v7752 = vrot.slane %v7750, 5
      %v7753 = vor.u32 %v7749, %v7752
      %v7755 = vshrl.u32 %v7711, 16
      %v7757 = vrot.slane %v7755, 4
      %v7758 = vshll.u32 %v7711, 16
      %v7760 = vrot.slane %v7758, 5
      %v7761 = vor.u32 %v7757, %v7760
      %v7763 = vshrl.u32 %v7712, 16
      %v7765 = vrot.slane %v7763, 4
      %v7766 = vshll.u32 %v7712, 16
      %v7768 = vrot.slane %v7766, 5
      %v7769 = vor.u32 %v7765, %v7768
      %v7771 = vshrl.u32 %v7713, 16
      %v7773 = vrot.slane %v7771, 4
      %v7774 = vshll.u32 %v7713, 16
      %v7776 = vrot.slane %v7774, 5
      %v7777 = vor.u32 %v7773, %v7776
      %v7786 = vunpack.c.l.b16 %v7505
      %v7787 = vunpack.c.l.b16 %v7506
      %v7788 = vunpack.c.l.b16 %v7507
      %v7789 = vunpack.c.l.b16 %v7508
      %v7790 = vunpack.c.l.b16 %v7509
      %v7791 = vunpack.c.l.b16 %v7510
      %v7792 = vunpack.c.l.b16 %v7511
      %v7793 = vunpack.c.l.b16 %v7512
      %v7794 = vpack.c.b16 %v7786, %v7691
      %v7795 = vpack.c.b16 %v7787, %v7693
      %v7796 = vpack.c.b16 %v7788, %v7695
      %v7797 = vpack.c.b16 %v7789, %v7697
      %v7798 = vpack.c.b16 %v7790, %v7699
      %v7799 = vpack.c.b16 %v7791, %v7701
      %v7800 = vpack.c.b16 %v7792, %v7703
      %v7801 = vpack.c.b16 %v7793, %v7705
      %v7802 = vrot.slane %v7794, 5
      %v7803 = vrot.slane %v7795, 5
      %v7804 = vrot.slane %v7796, 5
      %v7805 = vrot.slane %v7797, 5
      %v7806 = vrot.slane %v7798, 5
      %v7807 = vrot.slane %v7799, 5
      %v7808 = vrot.slane %v7800, 5
      %v7809 = vrot.slane %v7801, 5
      %v7826 = vunpack.c.l.b16 %v7514
      %v7827 = vunpack.c.l.b16 %v7515
      %v7828 = vunpack.c.l.b16 %v7516
      %v7829 = vunpack.c.l.b16 %v7517
      %v7830 = vunpack.c.l.b16 %v7518
      %v7831 = vunpack.c.l.b16 %v7519
      %v7832 = vunpack.c.l.b16 %v7520
      %v7833 = vunpack.c.l.b16 %v7521
      %v7834 = vunpack.c.l.b16 %v7522
      %v7835 = vunpack.c.l.b16 %v7523
      %v7836 = vunpack.c.l.b16 %v7524
      %v7837 = vunpack.c.l.b16 %v7525
      %v7838 = vunpack.c.l.b16 %v7526
      %v7839 = vunpack.c.l.b16 %v7527
      %v7840 = vunpack.c.l.b16 %v7528
      %v7841 = vunpack.c.l.b16 %v7529
      %v7842 = vpack.c.b16 %v7827, %v7827
      %v7843 = vpack.c.b16 %v7829, %v7829
      %v7844 = vpack.c.b16 %v7831, %v7831
      %v7845 = vpack.c.b16 %v7833, %v7833
      %v7846 = vpack.c.b16 %v7835, %v7835
      %v7847 = vpack.c.b16 %v7837, %v7837
      %v7848 = vpack.c.b16 %v7839, %v7839
      %v7849 = vpack.c.b16 %v7841, %v7841
      %v7851 = vshrl.u32 %v7842, 16
      %v7853 = vrot.slane %v7851, 4
      %v7854 = vshll.u32 %v7842, 16
      %v7856 = vrot.slane %v7854, 5
      %v7857 = vor.u32 %v7853, %v7856
      %v7859 = vshrl.u32 %v7843, 16
      %v7861 = vrot.slane %v7859, 4
      %v7862 = vshll.u32 %v7843, 16
      %v7864 = vrot.slane %v7862, 5
      %v7865 = vor.u32 %v7861, %v7864
      %v7867 = vshrl.u32 %v7844, 16
      %v7869 = vrot.slane %v7867, 4
      %v7870 = vshll.u32 %v7844, 16
      %v7872 = vrot.slane %v7870, 5
      %v7873 = vor.u32 %v7869, %v7872
      %v7875 = vshrl.u32 %v7845, 16
      %v7877 = vrot.slane %v7875, 4
      %v7878 = vshll.u32 %v7845, 16
      %v7880 = vrot.slane %v7878, 5
      %v7881 = vor.u32 %v7877, %v7880
      %v7883 = vshrl.u32 %v7846, 16
      %v7885 = vrot.slane %v7883, 4
      %v7886 = vshll.u32 %v7846, 16
      %v7888 = vrot.slane %v7886, 5
      %v7889 = vor.u32 %v7885, %v7888
      %v7891 = vshrl.u32 %v7847, 16
      %v7893 = vrot.slane %v7891, 4
      %v7894 = vshll.u32 %v7847, 16
      %v7896 = vrot.slane %v7894, 5
      %v7897 = vor.u32 %v7893, %v7896
      %v7899 = vshrl.u32 %v7848, 16
      %v7901 = vrot.slane %v7899, 4
      %v7902 = vshll.u32 %v7848, 16
      %v7904 = vrot.slane %v7902, 5
      %v7905 = vor.u32 %v7901, %v7904
      %v7907 = vshrl.u32 %v7849, 16
      %v7909 = vrot.slane %v7907, 4
      %v7910 = vshll.u32 %v7849, 16
      %v7912 = vrot.slane %v7910, 5
      %v7913 = vor.u32 %v7909, %v7912
      %v7922 = vunpack.c.l.b16 %v7530
      %v7923 = vunpack.c.l.b16 %v7531
      %v7924 = vunpack.c.l.b16 %v7532
      %v7925 = vunpack.c.l.b16 %v7533
      %v7926 = vunpack.c.l.b16 %v7534
      %v7927 = vunpack.c.l.b16 %v7535
      %v7928 = vunpack.c.l.b16 %v7536
      %v7929 = vunpack.c.l.b16 %v7537
      %v7930 = vpack.c.b16 %v7922, %v7827
      %v7931 = vpack.c.b16 %v7923, %v7829
      %v7932 = vpack.c.b16 %v7924, %v7831
      %v7933 = vpack.c.b16 %v7925, %v7833
      %v7934 = vpack.c.b16 %v7926, %v7835
      %v7935 = vpack.c.b16 %v7927, %v7837
      %v7936 = vpack.c.b16 %v7928, %v7839
      %v7937 = vpack.c.b16 %v7929, %v7841
      %v7938 = vrot.slane %v7930, 5
      %v7939 = vrot.slane %v7931, 5
      %v7940 = vrot.slane %v7932, 5
      %v7941 = vrot.slane %v7933, 5
      %v7942 = vrot.slane %v7934, 5
      %v7943 = vrot.slane %v7935, 5
      %v7944 = vrot.slane %v7936, 5
      %v7945 = vrot.slane %v7937, 5
      %v7946 = vunpack.c.l.b16 %v7585
      %v7947 = vunpack.c.l.b16 %v7666
      %v7948 = vunpack.c.l.b16 %v7721
      %v7949 = vunpack.c.l.b16 %v7802
      %v7950 = vunpack.c.l.b16 %v7857
      %v7951 = vunpack.c.l.b16 %v7938
      %v7952 = vunpack.c.h.b16 %v7585
      %v7953 = vunpack.c.h.b16 %v7666
      %v7954 = vunpack.c.h.b16 %v7721
      %v7955 = vunpack.c.h.b16 %v7802
      %v7956 = vunpack.c.h.b16 %v7857
      %v7957 = vunpack.c.h.b16 %v7938
      %v7958 = vunpack.c.l.b16 %v7593
      %v7959 = vunpack.c.l.b16 %v7667
      %v7960 = vunpack.c.l.b16 %v7729
      %v7961 = vunpack.c.l.b16 %v7803
      %v7962 = vunpack.c.l.b16 %v7865
      %v7963 = vunpack.c.l.b16 %v7939
      %v7964 = vunpack.c.h.b16 %v7593
      %v7965 = vunpack.c.h.b16 %v7667
      %v7966 = vunpack.c.h.b16 %v7729
      %v7967 = vunpack.c.h.b16 %v7803
      %v7968 = vunpack.c.h.b16 %v7865
      %v7969 = vunpack.c.h.b16 %v7939
      %v7970 = vunpack.c.l.b16 %v7601
      %v7971 = vunpack.c.l.b16 %v7668
      %v7972 = vunpack.c.l.b16 %v7737
      %v7973 = vunpack.c.l.b16 %v7804
      %v7974 = vunpack.c.l.b16 %v7873
      %v7975 = vunpack.c.l.b16 %v7940
      %v7976 = vunpack.c.h.b16 %v7601
      %v7977 = vunpack.c.h.b16 %v7668
      %v7978 = vunpack.c.h.b16 %v7737
      %v7979 = vunpack.c.h.b16 %v7804
      %v7980 = vunpack.c.h.b16 %v7873
      %v7981 = vunpack.c.h.b16 %v7940
      %v7982 = vunpack.c.l.b16 %v7609
      %v7983 = vunpack.c.l.b16 %v7669
      %v7984 = vunpack.c.l.b16 %v7745
      %v7985 = vunpack.c.l.b16 %v7805
      %v7986 = vunpack.c.l.b16 %v7881
      %v7987 = vunpack.c.l.b16 %v7941
      %v7988 = vunpack.c.h.b16 %v7609
      %v7989 = vunpack.c.h.b16 %v7669
      %v7990 = vunpack.c.h.b16 %v7745
      %v7991 = vunpack.c.h.b16 %v7805
      %v7992 = vunpack.c.h.b16 %v7881
      %v7993 = vunpack.c.h.b16 %v7941
      %v7994 = vunpack.c.l.b16 %v7617
      %v7995 = vunpack.c.l.b16 %v7670
      %v7996 = vunpack.c.l.b16 %v7753
      %v7997 = vunpack.c.l.b16 %v7806
      %v7998 = vunpack.c.l.b16 %v7889
      %v7999 = vunpack.c.l.b16 %v7942
      %v8000 = vunpack.c.h.b16 %v7617
      %v8001 = vunpack.c.h.b16 %v7670
      %v8002 = vunpack.c.h.b16 %v7753
      %v8003 = vunpack.c.h.b16 %v7806
      %v8004 = vunpack.c.h.b16 %v7889
      %v8005 = vunpack.c.h.b16 %v7942
      %v8006 = vunpack.c.l.b16 %v7625
      %v8007 = vunpack.c.l.b16 %v7671
      %v8008 = vunpack.c.l.b16 %v7761
      %v8009 = vunpack.c.l.b16 %v7807
      %v8010 = vunpack.c.l.b16 %v7897
      %v8011 = vunpack.c.l.b16 %v7943
      %v8012 = vunpack.c.h.b16 %v7625
      %v8013 = vunpack.c.h.b16 %v7671
      %v8014 = vunpack.c.h.b16 %v7761
      %v8015 = vunpack.c.h.b16 %v7807
      %v8016 = vunpack.c.h.b16 %v7897
      %v8017 = vunpack.c.h.b16 %v7943
      %v8018 = vunpack.c.l.b16 %v7633
      %v8019 = vunpack.c.l.b16 %v7672
      %v8020 = vunpack.c.l.b16 %v7769
      %v8021 = vunpack.c.l.b16 %v7808
      %v8022 = vunpack.c.l.b16 %v7905
      %v8023 = vunpack.c.l.b16 %v7944
      %v8024 = vunpack.c.h.b16 %v7633
      %v8025 = vunpack.c.h.b16 %v7672
      %v8026 = vunpack.c.h.b16 %v7769
      %v8027 = vunpack.c.h.b16 %v7808
      %v8028 = vunpack.c.h.b16 %v7905
      %v8029 = vunpack.c.h.b16 %v7944
      %v8030 = vunpack.c.l.b16 %v7641
      %v8031 = vunpack.c.l.b16 %v7673
      %v8032 = vunpack.c.l.b16 %v7777
      %v8033 = vunpack.c.l.b16 %v7809
      %v8034 = vunpack.c.l.b16 %v7913
      %v8035 = vunpack.c.l.b16 %v7945
      %v8036 = vunpack.c.h.b16 %v7641
      %v8037 = vunpack.c.h.b16 %v7673
      %v8038 = vunpack.c.h.b16 %v7777
      %v8039 = vunpack.c.h.b16 %v7809
      %v8040 = vunpack.c.h.b16 %v7913
      %v8041 = vunpack.c.h.b16 %v7945
      %v8042 = vpack.c.b16 %v7946, %v7554
      %v8043 = vpack.c.b16 %v7690, %v7947
      %v8044 = vpack.c.b16 %v7949, %v7948
      %v8045 = vpack.c.b16 %v7950, %v7826
      %v8046 = vpack.c.b16 %v7951, %v7951
      %v8047 = vpack.c.b16 %v7952, %v7555
      %v8048 = vpack.c.b16 %v7691, %v7953
      %v8049 = vpack.c.b16 %v7955, %v7954
      %v8050 = vpack.c.b16 %v7956, %v7827
      %v8051 = vpack.c.b16 %v7957, %v7957
      %v8052 = vpack.c.b16 %v7958, %v7556
      %v8053 = vpack.c.b16 %v7692, %v7959
      %v8054 = vpack.c.b16 %v7961, %v7960
      %v8055 = vpack.c.b16 %v7962, %v7828
      %v8056 = vpack.c.b16 %v7963, %v7963
      %v8057 = vpack.c.b16 %v7964, %v7557
      %v8058 = vpack.c.b16 %v7693, %v7965
      %v8059 = vpack.c.b16 %v7967, %v7966
      %v8060 = vpack.c.b16 %v7968, %v7829
      %v8061 = vpack.c.b16 %v7969, %v7969
      %v8062 = vpack.c.b16 %v7970, %v7558
      %v8063 = vpack.c.b16 %v7694, %v7971
      %v8064 = vpack.c.b16 %v7973, %v7972
      %v8065 = vpack.c.b16 %v7974, %v7830
      %v8066 = vpack.c.b16 %v7975, %v7975
      %v8067 = vpack.c.b16 %v7976, %v7559
      %v8068 = vpack.c.b16 %v7695, %v7977
      %v8069 = vpack.c.b16 %v7979, %v7978
      %v8070 = vpack.c.b16 %v7980, %v7831
      %v8071 = vpack.c.b16 %v7981, %v7981
      %v8072 = vpack.c.b16 %v7982, %v7560
      %v8073 = vpack.c.b16 %v7696, %v7983
      %v8074 = vpack.c.b16 %v7985, %v7984
      %v8075 = vpack.c.b16 %v7986, %v7832
      %v8076 = vpack.c.b16 %v7987, %v7987
      %v8077 = vpack.c.b16 %v7988, %v7561
      %v8078 = vpack.c.b16 %v7697, %v7989
      %v8079 = vpack.c.b16 %v7991, %v7990
      %v8080 = vpack.c.b16 %v7992, %v7833
      %v8081 = vpack.c.b16 %v7993, %v7993
      %v8082 = vpack.c.b16 %v7994, %v7562
      %v8083 = vpack.c.b16 %v7698, %v7995
      %v8084 = vpack.c.b16 %v7997, %v7996
      %v8085 = vpack.c.b16 %v7998, %v7834
      %v8086 = vpack.c.b16 %v7999, %v7999
      %v8087 = vpack.c.b16 %v8000, %v7563
      %v8088 = vpack.c.b16 %v7699, %v8001
      %v8089 = vpack.c.b16 %v8003, %v8002
      %v8090 = vpack.c.b16 %v8004, %v7835
      %v8091 = vpack.c.b16 %v8005, %v8005
      %v8092 = vpack.c.b16 %v8006, %v7564
      %v8093 = vpack.c.b16 %v7700, %v8007
      %v8094 = vpack.c.b16 %v8009, %v8008
      %v8095 = vpack.c.b16 %v8010, %v7836
      %v8096 = vpack.c.b16 %v8011, %v8011
      %v8097 = vpack.c.b16 %v8012, %v7565
      %v8098 = vpack.c.b16 %v7701, %v8013
      %v8099 = vpack.c.b16 %v8015, %v8014
      %v8100 = vpack.c.b16 %v8016, %v7837
      %v8101 = vpack.c.b16 %v8017, %v8017
      %v8102 = vpack.c.b16 %v8018, %v7566
      %v8103 = vpack.c.b16 %v7702, %v8019
      %v8104 = vpack.c.b16 %v8021, %v8020
      %v8105 = vpack.c.b16 %v8022, %v7838
      %v8106 = vpack.c.b16 %v8023, %v8023
      %v8107 = vpack.c.b16 %v8024, %v7567
      %v8108 = vpack.c.b16 %v7703, %v8025
      %v8109 = vpack.c.b16 %v8027, %v8026
      %v8110 = vpack.c.b16 %v8028, %v7839
      %v8111 = vpack.c.b16 %v8029, %v8029
      %v8112 = vpack.c.b16 %v8030, %v7568
      %v8113 = vpack.c.b16 %v7704, %v8031
      %v8114 = vpack.c.b16 %v8033, %v8032
      %v8115 = vpack.c.b16 %v8034, %v7840
      %v8116 = vpack.c.b16 %v8035, %v8035
      %v8117 = vpack.c.b16 %v8036, %v7569
      %v8118 = vpack.c.b16 %v7705, %v8037
      %v8119 = vpack.c.b16 %v8039, %v8038
      %v8120 = vpack.c.b16 %v8040, %v7841
      %v8121 = vpack.c.b16 %v8041, %v8041
      %vm8122 = vsmask.f32 4368
      %vm8123 = vmor %vm639, %vm8122
      %v8125 = vshrl.u32 %v8042, 16
      %v8127 = vrot.slane %v8125, 7
      %v8128 = vrot.slane %v8127, 4
      %v8130 = vshrl.u32 %v8047, 16
      %v8132 = vrot.slane %v8130, 7
      %v8133 = vshll.u32 %v8047, 16
      %v8135 = vor.u32 %v8132, %v8133
      %v8136 = vsel %vm8123, %v8128, %v8135
      %v8138 = vshrl.u32 %v8043, 16
      %v8140 = vrot.slane %v8138, 7
      %v8141 = vrot.slane %v8140, 4
      %v8143 = vshrl.u32 %v8048, 16
      %v8145 = vrot.slane %v8143, 7
      %v8146 = vshll.u32 %v8048, 16
      %v8148 = vor.u32 %v8145, %v8146
      %v8149 = vsel %vm8123, %v8141, %v8148
      %v8151 = vshrl.u32 %v8044, 16
      %v8153 = vrot.slane %v8151, 7
      %v8154 = vrot.slane %v8153, 4
      %v8156 = vshrl.u32 %v8049, 16
      %v8158 = vrot.slane %v8156, 7
      %v8159 = vshll.u32 %v8049, 16
      %v8161 = vor.u32 %v8158, %v8159
      %v8162 = vsel %vm8123, %v8154, %v8161
      %v8164 = vshrl.u32 %v8045, 16
      %v8166 = vrot.slane %v8164, 7
      %v8167 = vrot.slane %v8166, 4
      %v8169 = vshrl.u32 %v8050, 16
      %v8171 = vrot.slane %v8169, 7
      %v8172 = vshll.u32 %v8050, 16
      %v8174 = vor.u32 %v8171, %v8172
      %v8175 = vsel %vm8123, %v8167, %v8174
      %v8177 = vshrl.u32 %v8046, 16
      %v8179 = vrot.slane %v8177, 7
      %v8180 = vrot.slane %v8179, 4
      %v8182 = vshrl.u32 %v8051, 16
      %v8184 = vrot.slane %v8182, 7
      %v8185 = vshll.u32 %v8051, 16
      %v8187 = vor.u32 %v8184, %v8185
      %v8188 = vsel %vm8123, %v8180, %v8187
      %v8190 = vshrl.u32 %v8052, 16
      %v8192 = vrot.slane %v8190, 7
      %v8193 = vrot.slane %v8192, 4
      %v8195 = vshrl.u32 %v8057, 16
      %v8197 = vrot.slane %v8195, 7
      %v8198 = vshll.u32 %v8057, 16
      %v8200 = vor.u32 %v8197, %v8198
      %v8201 = vsel %vm8123, %v8193, %v8200
      %v8203 = vshrl.u32 %v8053, 16
      %v8205 = vrot.slane %v8203, 7
      %v8206 = vrot.slane %v8205, 4
      %v8208 = vshrl.u32 %v8058, 16
      %v8210 = vrot.slane %v8208, 7
      %v8211 = vshll.u32 %v8058, 16
      %v8213 = vor.u32 %v8210, %v8211
      %v8214 = vsel %vm8123, %v8206, %v8213
      %v8216 = vshrl.u32 %v8054, 16
      %v8218 = vrot.slane %v8216, 7
      %v8219 = vrot.slane %v8218, 4
      %v8221 = vshrl.u32 %v8059, 16
      %v8223 = vrot.slane %v8221, 7
      %v8224 = vshll.u32 %v8059, 16
      %v8226 = vor.u32 %v8223, %v8224
      %v8227 = vsel %vm8123, %v8219, %v8226
      %v8229 = vshrl.u32 %v8055, 16
      %v8231 = vrot.slane %v8229, 7
      %v8232 = vrot.slane %v8231, 4
      %v8234 = vshrl.u32 %v8060, 16
      %v8236 = vrot.slane %v8234, 7
      %v8237 = vshll.u32 %v8060, 16
      %v8239 = vor.u32 %v8236, %v8237
      %v8240 = vsel %vm8123, %v8232, %v8239
      %v8242 = vshrl.u32 %v8056, 16
      %v8244 = vrot.slane %v8242, 7
      %v8245 = vrot.slane %v8244, 4
      %v8247 = vshrl.u32 %v8061, 16
      %v8249 = vrot.slane %v8247, 7
      %v8250 = vshll.u32 %v8061, 16
      %v8252 = vor.u32 %v8249, %v8250
      %v8253 = vsel %vm8123, %v8245, %v8252
      %v8255 = vshrl.u32 %v8062, 16
      %v8257 = vrot.slane %v8255, 7
      %v8258 = vrot.slane %v8257, 4
      %v8260 = vshrl.u32 %v8067, 16
      %v8262 = vrot.slane %v8260, 7
      %v8263 = vshll.u32 %v8067, 16
      %v8265 = vor.u32 %v8262, %v8263
      %v8266 = vsel %vm8123, %v8258, %v8265
      %v8268 = vshrl.u32 %v8063, 16
      %v8270 = vrot.slane %v8268, 7
      %v8271 = vrot.slane %v8270, 4
      %v8273 = vshrl.u32 %v8068, 16
      %v8275 = vrot.slane %v8273, 7
      %v8276 = vshll.u32 %v8068, 16
      %v8278 = vor.u32 %v8275, %v8276
      %v8279 = vsel %vm8123, %v8271, %v8278
      %v8281 = vshrl.u32 %v8064, 16
      %v8283 = vrot.slane %v8281, 7
      %v8284 = vrot.slane %v8283, 4
      %v8286 = vshrl.u32 %v8069, 16
      %v8288 = vrot.slane %v8286, 7
      %v8289 = vshll.u32 %v8069, 16
      %v8291 = vor.u32 %v8288, %v8289
      %v8292 = vsel %vm8123, %v8284, %v8291
      %v8294 = vshrl.u32 %v8065, 16
      %v8296 = vrot.slane %v8294, 7
      %v8297 = vrot.slane %v8296, 4
      %v8299 = vshrl.u32 %v8070, 16
      %v8301 = vrot.slane %v8299, 7
      %v8302 = vshll.u32 %v8070, 16
      %v8304 = vor.u32 %v8301, %v8302
      %v8305 = vsel %vm8123, %v8297, %v8304
      %v8307 = vshrl.u32 %v8066, 16
      %v8309 = vrot.slane %v8307, 7
      %v8310 = vrot.slane %v8309, 4
      %v8312 = vshrl.u32 %v8071, 16
      %v8314 = vrot.slane %v8312, 7
      %v8315 = vshll.u32 %v8071, 16
      %v8317 = vor.u32 %v8314, %v8315
      %v8318 = vsel %vm8123, %v8310, %v8317
      %v8320 = vshrl.u32 %v8072, 16
      %v8322 = vrot.slane %v8320, 7
      %v8323 = vrot.slane %v8322, 4
      %v8325 = vshrl.u32 %v8077, 16
      %v8327 = vrot.slane %v8325, 7
      %v8328 = vshll.u32 %v8077, 16
      %v8330 = vor.u32 %v8327, %v8328
      %v8331 = vsel %vm8123, %v8323, %v8330
      %v8333 = vshrl.u32 %v8073, 16
      %v8335 = vrot.slane %v8333, 7
      %v8336 = vrot.slane %v8335, 4
      %v8338 = vshrl.u32 %v8078, 16
      %v8340 = vrot.slane %v8338, 7
      %v8341 = vshll.u32 %v8078, 16
      %v8343 = vor.u32 %v8340, %v8341
      %v8344 = vsel %vm8123, %v8336, %v8343
      %v8346 = vshrl.u32 %v8074, 16
      %v8348 = vrot.slane %v8346, 7
      %v8349 = vrot.slane %v8348, 4
      %v8351 = vshrl.u32 %v8079, 16
      %v8353 = vrot.slane %v8351, 7
      %v8354 = vshll.u32 %v8079, 16
      %v8356 = vor.u32 %v8353, %v8354
      %v8357 = vsel %vm8123, %v8349, %v8356
      %v8359 = vshrl.u32 %v8075, 16
      %v8361 = vrot.slane %v8359, 7
      %v8362 = vrot.slane %v8361, 4
      %v8364 = vshrl.u32 %v8080, 16
      %v8366 = vrot.slane %v8364, 7
      %v8367 = vshll.u32 %v8080, 16
      %v8369 = vor.u32 %v8366, %v8367
      %v8370 = vsel %vm8123, %v8362, %v8369
      %v8372 = vshrl.u32 %v8076, 16
      %v8374 = vrot.slane %v8372, 7
      %v8375 = vrot.slane %v8374, 4
      %v8377 = vshrl.u32 %v8081, 16
      %v8379 = vrot.slane %v8377, 7
      %v8380 = vshll.u32 %v8081, 16
      %v8382 = vor.u32 %v8379, %v8380
      %v8383 = vsel %vm8123, %v8375, %v8382
      %v8385 = vshrl.u32 %v8082, 16
      %v8387 = vrot.slane %v8385, 7
      %v8388 = vrot.slane %v8387, 4
      %v8390 = vshrl.u32 %v8087, 16
      %v8392 = vrot.slane %v8390, 7
      %v8393 = vshll.u32 %v8087, 16
      %v8395 = vor.u32 %v8392, %v8393
      %v8396 = vsel %vm8123, %v8388, %v8395
      %v8398 = vshrl.u32 %v8083, 16
      %v8400 = vrot.slane %v8398, 7
      %v8401 = vrot.slane %v8400, 4
      %v8403 = vshrl.u32 %v8088, 16
      %v8405 = vrot.slane %v8403, 7
      %v8406 = vshll.u32 %v8088, 16
      %v8408 = vor.u32 %v8405, %v8406
      %v8409 = vsel %vm8123, %v8401, %v8408
      %v8411 = vshrl.u32 %v8084, 16
      %v8413 = vrot.slane %v8411, 7
      %v8414 = vrot.slane %v8413, 4
      %v8416 = vshrl.u32 %v8089, 16
      %v8418 = vrot.slane %v8416, 7
      %v8419 = vshll.u32 %v8089, 16
      %v8421 = vor.u32 %v8418, %v8419
      %v8422 = vsel %vm8123, %v8414, %v8421
      %v8424 = vshrl.u32 %v8085, 16
      %v8426 = vrot.slane %v8424, 7
      %v8427 = vrot.slane %v8426, 4
      %v8429 = vshrl.u32 %v8090, 16
      %v8431 = vrot.slane %v8429, 7
      %v8432 = vshll.u32 %v8090, 16
      %v8434 = vor.u32 %v8431, %v8432
      %v8435 = vsel %vm8123, %v8427, %v8434
      %v8437 = vshrl.u32 %v8086, 16
      %v8439 = vrot.slane %v8437, 7
      %v8440 = vrot.slane %v8439, 4
      %v8442 = vshrl.u32 %v8091, 16
      %v8444 = vrot.slane %v8442, 7
      %v8445 = vshll.u32 %v8091, 16
      %v8447 = vor.u32 %v8444, %v8445
      %v8448 = vsel %vm8123, %v8440, %v8447
      %v8450 = vshrl.u32 %v8092, 16
      %v8452 = vrot.slane %v8450, 7
      %v8453 = vrot.slane %v8452, 4
      %v8455 = vshrl.u32 %v8097, 16
      %v8457 = vrot.slane %v8455, 7
      %v8458 = vshll.u32 %v8097, 16
      %v8460 = vor.u32 %v8457, %v8458
      %v8461 = vsel %vm8123, %v8453, %v8460
      %v8463 = vshrl.u32 %v8093, 16
      %v8465 = vrot.slane %v8463, 7
      %v8466 = vrot.slane %v8465, 4
      %v8468 = vshrl.u32 %v8098, 16
      %v8470 = vrot.slane %v8468, 7
      %v8471 = vshll.u32 %v8098, 16
      %v8473 = vor.u32 %v8470, %v8471
      %v8474 = vsel %vm8123, %v8466, %v8473
      %v8476 = vshrl.u32 %v8094, 16
      %v8478 = vrot.slane %v8476, 7
      %v8479 = vrot.slane %v8478, 4
      %v8481 = vshrl.u32 %v8099, 16
      %v8483 = vrot.slane %v8481, 7
      %v8484 = vshll.u32 %v8099, 16
      %v8486 = vor.u32 %v8483, %v8484
      %v8487 = vsel %vm8123, %v8479, %v8486
      %v8489 = vshrl.u32 %v8095, 16
      %v8491 = vrot.slane %v8489, 7
      %v8492 = vrot.slane %v8491, 4
      %v8494 = vshrl.u32 %v8100, 16
      %v8496 = vrot.slane %v8494, 7
      %v8497 = vshll.u32 %v8100, 16
      %v8499 = vor.u32 %v8496, %v8497
      %v8500 = vsel %vm8123, %v8492, %v8499
      %v8502 = vshrl.u32 %v8096, 16
      %v8504 = vrot.slane %v8502, 7
      %v8505 = vrot.slane %v8504, 4
      %v8507 = vshrl.u32 %v8101, 16
      %v8509 = vrot.slane %v8507, 7
      %v8510 = vshll.u32 %v8101, 16
      %v8512 = vor.u32 %v8509, %v8510
      %v8513 = vsel %vm8123, %v8505, %v8512
      %v8515 = vshrl.u32 %v8102, 16
      %v8517 = vrot.slane %v8515, 7
      %v8518 = vrot.slane %v8517, 4
      %v8520 = vshrl.u32 %v8107, 16
      %v8522 = vrot.slane %v8520, 7
      %v8523 = vshll.u32 %v8107, 16
      %v8525 = vor.u32 %v8522, %v8523
      %v8526 = vsel %vm8123, %v8518, %v8525
      %v8528 = vshrl.u32 %v8103, 16
      %v8530 = vrot.slane %v8528, 7
      %v8531 = vrot.slane %v8530, 4
      %v8533 = vshrl.u32 %v8108, 16
      %v8535 = vrot.slane %v8533, 7
      %v8536 = vshll.u32 %v8108, 16
      %v8538 = vor.u32 %v8535, %v8536
      %v8539 = vsel %vm8123, %v8531, %v8538
      %v8541 = vshrl.u32 %v8104, 16
      %v8543 = vrot.slane %v8541, 7
      %v8544 = vrot.slane %v8543, 4
      %v8546 = vshrl.u32 %v8109, 16
      %v8548 = vrot.slane %v8546, 7
      %v8549 = vshll.u32 %v8109, 16
      %v8551 = vor.u32 %v8548, %v8549
      %v8552 = vsel %vm8123, %v8544, %v8551
      %v8554 = vshrl.u32 %v8105, 16
      %v8556 = vrot.slane %v8554, 7
      %v8557 = vrot.slane %v8556, 4
      %v8559 = vshrl.u32 %v8110, 16
      %v8561 = vrot.slane %v8559, 7
      %v8562 = vshll.u32 %v8110, 16
      %v8564 = vor.u32 %v8561, %v8562
      %v8565 = vsel %vm8123, %v8557, %v8564
      %v8567 = vshrl.u32 %v8106, 16
      %v8569 = vrot.slane %v8567, 7
      %v8570 = vrot.slane %v8569, 4
      %v8572 = vshrl.u32 %v8111, 16
      %v8574 = vrot.slane %v8572, 7
      %v8575 = vshll.u32 %v8111, 16
      %v8577 = vor.u32 %v8574, %v8575
      %v8578 = vsel %vm8123, %v8570, %v8577
      %v8580 = vshrl.u32 %v8112, 16
      %v8582 = vrot.slane %v8580, 7
      %v8583 = vrot.slane %v8582, 4
      %v8585 = vshrl.u32 %v8117, 16
      %v8587 = vrot.slane %v8585, 7
      %v8588 = vshll.u32 %v8117, 16
      %v8590 = vor.u32 %v8587, %v8588
      %v8591 = vsel %vm8123, %v8583, %v8590
      %v8593 = vshrl.u32 %v8113, 16
      %v8595 = vrot.slane %v8593, 7
      %v8596 = vrot.slane %v8595, 4
      %v8598 = vshrl.u32 %v8118, 16
      %v8600 = vrot.slane %v8598, 7
      %v8601 = vshll.u32 %v8118, 16
      %v8603 = vor.u32 %v8600, %v8601
      %v8604 = vsel %vm8123, %v8596, %v8603
      %v8606 = vshrl.u32 %v8114, 16
      %v8608 = vrot.slane %v8606, 7
      %v8609 = vrot.slane %v8608, 4
      %v8611 = vshrl.u32 %v8119, 16
      %v8613 = vrot.slane %v8611, 7
      %v8614 = vshll.u32 %v8119, 16
      %v8616 = vor.u32 %v8613, %v8614
      %v8617 = vsel %vm8123, %v8609, %v8616
      %v8619 = vshrl.u32 %v8115, 16
      %v8621 = vrot.slane %v8619, 7
      %v8622 = vrot.slane %v8621, 4
      %v8624 = vshrl.u32 %v8120, 16
      %v8626 = vrot.slane %v8624, 7
      %v8627 = vshll.u32 %v8120, 16
      %v8629 = vor.u32 %v8626, %v8627
      %v8630 = vsel %vm8123, %v8622, %v8629
      %v8632 = vshrl.u32 %v8116, 16
      %v8634 = vrot.slane %v8632, 7
      %v8635 = vrot.slane %v8634, 4
      %v8637 = vshrl.u32 %v8121, 16
      %v8639 = vrot.slane %v8637, 7
      %v8640 = vshll.u32 %v8121, 16
      %v8642 = vor.u32 %v8639, %v8640
      %v8643 = vsel %vm8123, %v8635, %v8642
      %v8644 = vld [vmem:[%s5] sm:$0xf]
      %v8645 = vld [vmem:[%s5 + $0x4] sm:$0xf]
      %v8646 = vld [vmem:[%s5 + $0x8] sm:$0xf]
      %v8647 = vld [vmem:[%s5 + $0xc] sm:$0xf]
      %v8648 = vld [vmem:[%s5 + $0x10] sm:$0xf]
      %v8649 = vld [vmem:[%s5 + $0x14] sm:$0xf]
      %v8650 = vld [vmem:[%s5 + $0x18] sm:$0xf]
      %v8651 = vld [vmem:[%s5 + $0x1c] sm:$0xf]
      %v8652 = vld [vmem:[%s5 + $0x20] sm:$0xf]
      %v8653 = vld [vmem:[%s5 + $0x24] sm:$0xf]
      %v8654 = vld [vmem:[%s5 + $0x28] sm:$0xf]
      %v8655 = vld [vmem:[%s5 + $0x2c] sm:$0xf]
      %v8656 = vld [vmem:[%s5 + $0x30] sm:$0xf]
      %v8657 = vld [vmem:[%s5 + $0x34] sm:$0xf]
      %v8658 = vld [vmem:[%s5 + $0x38] sm:$0xf]
      %v8659 = vld [vmem:[%s5 + $0x3c] sm:$0xf]
      %v8660 = vld [vmem:[%s5 + $0x40] sm:$0xf]
      %v8661 = vld [vmem:[%s5 + $0x44] sm:$0xf]
      %v8662 = vld [vmem:[%s5 + $0x48] sm:$0xf]
      %v8663 = vld [vmem:[%s5 + $0x4c] sm:$0xf]
      %v8664 = vld [vmem:[%s5 + $0x50] sm:$0xf]
      %v8665 = vld [vmem:[%s5 + $0x54] sm:$0xf]
      %v8666 = vld [vmem:[%s5 + $0x58] sm:$0xf]
      %v8667 = vld [vmem:[%s5 + $0x5c] sm:$0xf]
      %v8668 = vld [vmem:[%s5 + $0x60] sm:$0xf]
      %v8669 = vld [vmem:[%s5 + $0x64] sm:$0xf]
      %v8670 = vld [vmem:[%s5 + $0x68] sm:$0xf]
      %v8671 = vld [vmem:[%s5 + $0x6c] sm:$0xf]
      %v8672 = vld [vmem:[%s5 + $0x70] sm:$0xf]
      %v8673 = vld [vmem:[%s5 + $0x74] sm:$0xf]
      %v8674 = vld [vmem:[%s5 + $0x78] sm:$0xf]
      %v8675 = vld [vmem:[%s5 + $0x7c] sm:$0xf]
      %v8676 = vld [vmem:[%s5 + $0x80] sm:$0xf]
      %v8677 = vld [vmem:[%s5 + $0x84] sm:$0xf]
      %v8678 = vld [vmem:[%s5 + $0x88] sm:$0xf]
      %v8679 = vld [vmem:[%s5 + $0x8c] sm:$0xf]
      %v8680 = vld [vmem:[%s5 + $0x90] sm:$0xf]
      %v8681 = vld [vmem:[%s5 + $0x94] sm:$0xf]
      %v8682 = vld [vmem:[%s5 + $0x98] sm:$0xf]
      %v8683 = vld [vmem:[%s5 + $0x9c] sm:$0xf]
      %v8684 = vld [vmem:[%s5 + $0xa0] sm:$0xf]
      %v8685 = vld [vmem:[%s5 + $0xa4] sm:$0xf]
      %v8686 = vld [vmem:[%s5 + $0xa8] sm:$0xf]
      %v8687 = vld [vmem:[%s5 + $0xac] sm:$0xf]
      %v8688 = vld [vmem:[%s5 + $0xb0] sm:$0xf]
      %v8689 = vld [vmem:[%s5 + $0xb4] sm:$0xf]
      %v8690 = vld [vmem:[%s5 + $0xb8] sm:$0xf]
      %v8691 = vld [vmem:[%s5 + $0xbc] sm:$0xf]
      %v8692 = vld [vmem:[%s5 + $0xc0] sm:$0xf]
      %v8693 = vld [vmem:[%s5 + $0xc4] sm:$0xf]
      %v8694 = vld [vmem:[%s5 + $0xc8] sm:$0xf]
      %v8695 = vld [vmem:[%s5 + $0xcc] sm:$0xf]
      %v8696 = vld [vmem:[%s5 + $0xd0] sm:$0xf]
      %v8697 = vld [vmem:[%s5 + $0xd4] sm:$0xf]
      %v8698 = vld [vmem:[%s5 + $0xd8] sm:$0xf]
      %v8699 = vld [vmem:[%s5 + $0xdc] sm:$0xf]
      %v8700 = vld [vmem:[%s5 + $0xe0] sm:$0xf]
      %v8701 = vld [vmem:[%s5 + $0xe4] sm:$0xf]
      %v8702 = vld [vmem:[%s5 + $0xe8] sm:$0xf]
      %v8703 = vld [vmem:[%s5 + $0xec] sm:$0xf]
      %v8704 = vld [vmem:[%s5 + $0xf0] sm:$0xf]
      %v8705 = vld [vmem:[%s5 + $0xf4] sm:$0xf]
      %v8706 = vld [vmem:[%s5 + $0xf8] sm:$0xf]
      %v8707 = vld [vmem:[%s5 + $0xfc] sm:$0xf]
      %v8708 = vld [vmem:[%s5 + $0x100] sm:$0xf]
      %v8709 = vld [vmem:[%s5 + $0x104] sm:$0xf]
      %v8710 = vld [vmem:[%s5 + $0x108] sm:$0xf]
      %v8711 = vld [vmem:[%s5 + $0x10c] sm:$0xf]
      %v8712 = vld [vmem:[%s5 + $0x110] sm:$0xf]
      %v8713 = vld [vmem:[%s5 + $0x114] sm:$0xf]
      %v8714 = vld [vmem:[%s5 + $0x118] sm:$0xf]
      %v8715 = vld [vmem:[%s5 + $0x11c] sm:$0xf]
      %v8716 = vld [vmem:[%s5 + $0x120] sm:$0xf]
      %v8717 = vld [vmem:[%s5 + $0x124] sm:$0xf]
      %v8718 = vld [vmem:[%s5 + $0x128] sm:$0xf]
      %v8719 = vld [vmem:[%s5 + $0x12c] sm:$0xf]
      %v8720 = vld [vmem:[%s5 + $0x130] sm:$0xf]
      %v8721 = vld [vmem:[%s5 + $0x134] sm:$0xf]
      %v8722 = vld [vmem:[%s5 + $0x138] sm:$0xf]
      %v8723 = vld [vmem:[%s5 + $0x13c] sm:$0xf]
      %v8724 = vld [vmem:[%s5 + $0x140] sm:$0xf]
      %v8725 = vld [vmem:[%s5 + $0x144] sm:$0xf]
      %v8726 = vld [vmem:[%s5 + $0x148] sm:$0xf]
      %v8727 = vld [vmem:[%s5 + $0x14c] sm:$0xf]
      %v8728 = vld [vmem:[%s5 + $0x150] sm:$0xf]
      %v8729 = vld [vmem:[%s5 + $0x154] sm:$0xf]
      %v8730 = vld [vmem:[%s5 + $0x158] sm:$0xf]
      %v8731 = vld [vmem:[%s5 + $0x15c] sm:$0xf]
      %v8732 = vld [vmem:[%s5 + $0x160] sm:$0xf]
      %v8733 = vld [vmem:[%s5 + $0x164] sm:$0xf]
      %v8734 = vld [vmem:[%s5 + $0x168] sm:$0xf]
      %v8735 = vld [vmem:[%s5 + $0x16c] sm:$0xf]
      %v8736 = vld [vmem:[%s5 + $0x170] sm:$0xf]
      %v8737 = vld [vmem:[%s5 + $0x174] sm:$0xf]
      %v8738 = vld [vmem:[%s5 + $0x178] sm:$0xf]
      %v8739 = vld [vmem:[%s5 + $0x17c] sm:$0xf]
      %v8740 = vld [vmem:[%s5 + $0x180] sm:$0xf]
      %v8741 = vld [vmem:[%s5 + $0x184] sm:$0xf]
      %v8742 = vld [vmem:[%s5 + $0x188] sm:$0xf]
      %v8743 = vld [vmem:[%s5 + $0x18c] sm:$0xf]
      %v8744 = vld [vmem:[%s5 + $0x190] sm:$0xf]
      %v8745 = vld [vmem:[%s5 + $0x194] sm:$0xf]
      %v8746 = vld [vmem:[%s5 + $0x198] sm:$0xf]
      %v8747 = vld [vmem:[%s5 + $0x19c] sm:$0xf]
      %v8748 = vld [vmem:[%s5 + $0x1a0] sm:$0xf]
      %v8749 = vld [vmem:[%s5 + $0x1a4] sm:$0xf]
      %v8750 = vld [vmem:[%s5 + $0x1a8] sm:$0xf]
      %v8751 = vld [vmem:[%s5 + $0x1ac] sm:$0xf]
      %v8752 = vld [vmem:[%s5 + $0x1b0] sm:$0xf]
      %v8753 = vld [vmem:[%s5 + $0x1b4] sm:$0xf]
      %v8754 = vld [vmem:[%s5 + $0x1b8] sm:$0xf]
      %v8755 = vld [vmem:[%s5 + $0x1bc] sm:$0xf]
      %v8756 = vld [vmem:[%s5 + $0x1c0] sm:$0xf]
      %v8757 = vld [vmem:[%s5 + $0x1c4] sm:$0xf]
      %v8758 = vld [vmem:[%s5 + $0x1c8] sm:$0xf]
      %v8759 = vld [vmem:[%s5 + $0x1cc] sm:$0xf]
      %v8760 = vld [vmem:[%s5 + $0x1d0] sm:$0xf]
      %v8761 = vld [vmem:[%s5 + $0x1d4] sm:$0xf]
      %v8762 = vld [vmem:[%s5 + $0x1d8] sm:$0xf]
      %v8763 = vld [vmem:[%s5 + $0x1dc] sm:$0xf]
      %v8764 = vld [vmem:[%s5 + $0x1e0] sm:$0xf]
      %v8765 = vld [vmem:[%s5 + $0x1e4] sm:$0xf]
      %v8766 = vld [vmem:[%s5 + $0x1e8] sm:$0xf]
      %v8767 = vld [vmem:[%s5 + $0x1ec] sm:$0xf]
      %v8768 = vld [vmem:[%s5 + $0x1f0] sm:$0xf]
      %v8769 = vld [vmem:[%s5 + $0x1f4] sm:$0xf]
      %v8770 = vld [vmem:[%s5 + $0x1f8] sm:$0xf]
      %v8771 = vld [vmem:[%s5 + $0x1fc] sm:$0xf]
      %v8772 = vld [vmem:[%s5 + $0x200] sm:$0xf]
      %v8773 = vld [vmem:[%s5 + $0x204] sm:$0xf]
      %v8774 = vld [vmem:[%s5 + $0x208] sm:$0xf]
      %v8775 = vld [vmem:[%s5 + $0x20c] sm:$0xf]
      %v8776 = vld [vmem:[%s5 + $0x210] sm:$0xf]
      %v8777 = vld [vmem:[%s5 + $0x214] sm:$0xf]
      %v8778 = vld [vmem:[%s5 + $0x218] sm:$0xf]
      %v8779 = vld [vmem:[%s5 + $0x21c] sm:$0xf]
      %v8780 = vld [vmem:[%s5 + $0x220] sm:$0xf]
      %v8781 = vld [vmem:[%s5 + $0x224] sm:$0xf]
      %v8782 = vld [vmem:[%s5 + $0x228] sm:$0xf]
      %v8783 = vld [vmem:[%s5 + $0x22c] sm:$0xf]
      %v8784 = vld [vmem:[%s5 + $0x230] sm:$0xf]
      %v8785 = vld [vmem:[%s5 + $0x234] sm:$0xf]
      %v8786 = vld [vmem:[%s5 + $0x238] sm:$0xf]
      %v8787 = vld [vmem:[%s5 + $0x23c] sm:$0xf]
      %v8788 = vunpack.c.l.b16 %v8136
      %v8789 = vunpack.c.h.b16 %v8136
      %v8790 = vunpack.c.l.b16 %v8149
      %v8791 = vunpack.c.h.b16 %v8149
      %v8792 = vunpack.c.l.b16 %v8162
      %v8793 = vunpack.c.h.b16 %v8162
      %v8794 = vunpack.c.l.b16 %v8175
      %v8795 = vunpack.c.h.b16 %v8175
      %v8796 = vunpack.c.l.b16 %v8188
      %v8797 = vunpack.c.l.b16 %v8201
      %v8798 = vunpack.c.h.b16 %v8201
      %v8799 = vunpack.c.l.b16 %v8214
      %v8800 = vunpack.c.h.b16 %v8214
      %v8801 = vunpack.c.l.b16 %v8227
      %v8802 = vunpack.c.h.b16 %v8227
      %v8803 = vunpack.c.l.b16 %v8240
      %v8804 = vunpack.c.h.b16 %v8240
      %v8805 = vunpack.c.l.b16 %v8253
      %v8806 = vunpack.c.l.b16 %v8266
      %v8807 = vunpack.c.h.b16 %v8266
      %v8808 = vunpack.c.l.b16 %v8279
      %v8809 = vunpack.c.h.b16 %v8279
      %v8810 = vunpack.c.l.b16 %v8292
      %v8811 = vunpack.c.h.b16 %v8292
      %v8812 = vunpack.c.l.b16 %v8305
      %v8813 = vunpack.c.h.b16 %v8305
      %v8814 = vunpack.c.l.b16 %v8318
      %v8815 = vunpack.c.l.b16 %v8331
      %v8816 = vunpack.c.h.b16 %v8331
      %v8817 = vunpack.c.l.b16 %v8344
      %v8818 = vunpack.c.h.b16 %v8344
      %v8819 = vunpack.c.l.b16 %v8357
      %v8820 = vunpack.c.h.b16 %v8357
      %v8821 = vunpack.c.l.b16 %v8370
      %v8822 = vunpack.c.h.b16 %v8370
      %v8823 = vunpack.c.l.b16 %v8383
      %v8824 = vunpack.c.l.b16 %v8396
      %v8825 = vunpack.c.h.b16 %v8396
      %v8826 = vunpack.c.l.b16 %v8409
      %v8827 = vunpack.c.h.b16 %v8409
      %v8828 = vunpack.c.l.b16 %v8422
      %v8829 = vunpack.c.h.b16 %v8422
      %v8830 = vunpack.c.l.b16 %v8435
      %v8831 = vunpack.c.h.b16 %v8435
      %v8832 = vunpack.c.l.b16 %v8448
      %v8833 = vunpack.c.l.b16 %v8461
      %v8834 = vunpack.c.h.b16 %v8461
      %v8835 = vunpack.c.l.b16 %v8474
      %v8836 = vunpack.c.h.b16 %v8474
      %v8837 = vunpack.c.l.b16 %v8487
      %v8838 = vunpack.c.h.b16 %v8487
      %v8839 = vunpack.c.l.b16 %v8500
      %v8840 = vunpack.c.h.b16 %v8500
      %v8841 = vunpack.c.l.b16 %v8513
      %v8842 = vunpack.c.l.b16 %v8526
      %v8843 = vunpack.c.h.b16 %v8526
      %v8844 = vunpack.c.l.b16 %v8539
      %v8845 = vunpack.c.h.b16 %v8539
      %v8846 = vunpack.c.l.b16 %v8552
      %v8847 = vunpack.c.h.b16 %v8552
      %v8848 = vunpack.c.l.b16 %v8565
      %v8849 = vunpack.c.h.b16 %v8565
      %v8850 = vunpack.c.l.b16 %v8578
      %v8851 = vunpack.c.l.b16 %v8591
      %v8852 = vunpack.c.h.b16 %v8591
      %v8853 = vunpack.c.l.b16 %v8604
      %v8854 = vunpack.c.h.b16 %v8604
      %v8855 = vunpack.c.l.b16 %v8617
      %v8856 = vunpack.c.h.b16 %v8617
      %v8857 = vunpack.c.l.b16 %v8630
      %v8858 = vunpack.c.h.b16 %v8630
      %v8859 = vunpack.c.l.b16 %v8643
      %v8860 = vpack.c.b16 %v8797, %v8788
      %v8861 = vpack.c.b16 %v8798, %v8789
      %v8862 = vpack.c.b16 %v8799, %v8790
      %v8863 = vpack.c.b16 %v8800, %v8791
      %v8864 = vpack.c.b16 %v8801, %v8792
      %v8865 = vpack.c.b16 %v8802, %v8793
      %v8866 = vpack.c.b16 %v8803, %v8794
      %v8867 = vpack.c.b16 %v8804, %v8795
      %v8868 = vpack.c.b16 %v8805, %v8796
      %v8869 = vpack.c.b16 %v8815, %v8806
      %v8870 = vpack.c.b16 %v8816, %v8807
      %v8871 = vpack.c.b16 %v8817, %v8808
      %v8872 = vpack.c.b16 %v8818, %v8809
      %v8873 = vpack.c.b16 %v8819, %v8810
      %v8874 = vpack.c.b16 %v8820, %v8811
      %v8875 = vpack.c.b16 %v8821, %v8812
      %v8876 = vpack.c.b16 %v8822, %v8813
      %v8877 = vpack.c.b16 %v8823, %v8814
      %v8878 = vpack.c.b16 %v8833, %v8824
      %v8879 = vpack.c.b16 %v8834, %v8825
      %v8880 = vpack.c.b16 %v8835, %v8826
      %v8881 = vpack.c.b16 %v8836, %v8827
      %v8882 = vpack.c.b16 %v8837, %v8828
      %v8883 = vpack.c.b16 %v8838, %v8829
      %v8884 = vpack.c.b16 %v8839, %v8830
      %v8885 = vpack.c.b16 %v8840, %v8831
      %v8886 = vpack.c.b16 %v8841, %v8832
      %v8887 = vpack.c.b16 %v8851, %v8842
      %v8888 = vpack.c.b16 %v8852, %v8843
      %v8889 = vpack.c.b16 %v8853, %v8844
      %v8890 = vpack.c.b16 %v8854, %v8845
      %v8891 = vpack.c.b16 %v8855, %v8846
      %v8892 = vpack.c.b16 %v8856, %v8847
      %v8893 = vpack.c.b16 %v8857, %v8848
      %v8894 = vpack.c.b16 %v8858, %v8849
      %v8895 = vpack.c.b16 %v8859, %v8850
      %v9076 = vunpack.c.l.b16 %v8644
      %v9077 = vunpack.c.l.b16 %v8645
      %v9078 = vunpack.c.l.b16 %v8646
      %v9079 = vunpack.c.l.b16 %v8647
      %v9080 = vunpack.c.l.b16 %v8648
      %v9081 = vunpack.c.l.b16 %v8649
      %v9082 = vunpack.c.l.b16 %v8650
      %v9083 = vunpack.c.l.b16 %v8651
      %v9084 = vunpack.c.l.b16 %v8652
      %v9085 = vunpack.c.l.b16 %v8653
      %v9086 = vunpack.c.l.b16 %v8654
      %v9087 = vunpack.c.l.b16 %v8655
      %v9088 = vunpack.c.l.b16 %v8656
      %v9089 = vunpack.c.l.b16 %v8657
      %v9090 = vunpack.c.l.b16 %v8658
      %v9091 = vunpack.c.l.b16 %v8659
      %v9092 = vunpack.c.l.b16 %v8660
      %v9093 = vunpack.c.l.b16 %v8661
      %v9094 = vunpack.c.l.b16 %v8662
      %v9095 = vunpack.c.l.b16 %v8663
      %v9096 = vunpack.c.l.b16 %v8664
      %v9097 = vunpack.c.l.b16 %v8665
      %v9098 = vunpack.c.l.b16 %v8666
      %v9099 = vunpack.c.l.b16 %v8667
      %v9100 = vunpack.c.l.b16 %v8668
      %v9101 = vunpack.c.l.b16 %v8669
      %v9102 = vunpack.c.l.b16 %v8670
      %v9103 = vunpack.c.l.b16 %v8671
      %v9104 = vunpack.c.l.b16 %v8672
      %v9105 = vunpack.c.l.b16 %v8673
      %v9106 = vunpack.c.l.b16 %v8674
      %v9107 = vunpack.c.l.b16 %v8675
      %v9108 = vunpack.c.l.b16 %v8676
      %v9109 = vunpack.c.l.b16 %v8677
      %v9110 = vunpack.c.l.b16 %v8678
      %v9111 = vunpack.c.l.b16 %v8679
      %v9112 = vunpack.c.l.b16 %v8680
      %v9113 = vunpack.c.l.b16 %v8681
      %v9114 = vunpack.c.l.b16 %v8682
      %v9115 = vunpack.c.l.b16 %v8683
      %v9116 = vunpack.c.l.b16 %v8684
      %v9117 = vunpack.c.l.b16 %v8685
      %v9118 = vunpack.c.l.b16 %v8686
      %v9119 = vunpack.c.l.b16 %v8687
      %v9120 = vunpack.c.l.b16 %v8688
      %v9121 = vunpack.c.l.b16 %v8689
      %v9122 = vunpack.c.l.b16 %v8690
      %v9123 = vunpack.c.l.b16 %v8691
      %v9124 = vunpack.c.l.b16 %v8692
      %v9125 = vunpack.c.l.b16 %v8693
      %v9126 = vunpack.c.l.b16 %v8694
      %v9127 = vunpack.c.l.b16 %v8695
      %v9128 = vunpack.c.l.b16 %v8696
      %v9129 = vunpack.c.l.b16 %v8697
      %v9130 = vunpack.c.l.b16 %v8698
      %v9131 = vunpack.c.l.b16 %v8699
      %v9132 = vunpack.c.l.b16 %v8700
      %v9133 = vunpack.c.l.b16 %v8701
      %v9134 = vunpack.c.l.b16 %v8702
      %v9135 = vunpack.c.l.b16 %v8703
      %v9136 = vunpack.c.l.b16 %v8704
      %v9137 = vunpack.c.l.b16 %v8705
      %v9138 = vunpack.c.l.b16 %v8706
      %v9139 = vunpack.c.l.b16 %v8707
      %v9140 = vunpack.c.l.b16 %v8708
      %v9141 = vunpack.c.l.b16 %v8709
      %v9142 = vunpack.c.l.b16 %v8710
      %v9143 = vunpack.c.l.b16 %v8711
      %v9144 = vunpack.c.l.b16 %v8712
      %v9145 = vunpack.c.l.b16 %v8713
      %v9146 = vunpack.c.l.b16 %v8714
      %v9147 = vunpack.c.l.b16 %v8715
      %v9148 = vunpack.c.l.b16 %v8716
      %v9149 = vunpack.c.l.b16 %v8717
      %v9150 = vunpack.c.l.b16 %v8718
      %v9151 = vunpack.c.l.b16 %v8719
      %v9152 = vunpack.c.l.b16 %v8720
      %v9153 = vunpack.c.l.b16 %v8721
      %v9154 = vunpack.c.l.b16 %v8722
      %v9155 = vunpack.c.l.b16 %v8723
      %v9156 = vunpack.c.l.b16 %v8724
      %v9157 = vunpack.c.l.b16 %v8725
      %v9158 = vunpack.c.l.b16 %v8726
      %v9159 = vunpack.c.l.b16 %v8727
      %v9160 = vunpack.c.l.b16 %v8728
      %v9161 = vunpack.c.l.b16 %v8729
      %v9162 = vunpack.c.l.b16 %v8730
      %v9163 = vunpack.c.l.b16 %v8731
      %v9164 = vunpack.c.l.b16 %v8732
      %v9165 = vunpack.c.l.b16 %v8733
      %v9166 = vunpack.c.l.b16 %v8734
      %v9167 = vunpack.c.l.b16 %v8735
      %v9168 = vunpack.c.l.b16 %v8736
      %v9169 = vunpack.c.l.b16 %v8737
      %v9170 = vunpack.c.l.b16 %v8738
      %v9171 = vunpack.c.l.b16 %v8739
      %v9172 = vunpack.c.l.b16 %v8740
      %v9173 = vunpack.c.l.b16 %v8741
      %v9174 = vunpack.c.l.b16 %v8742
      %v9175 = vunpack.c.l.b16 %v8743
      %v9176 = vunpack.c.l.b16 %v8744
      %v9177 = vunpack.c.l.b16 %v8745
      %v9178 = vunpack.c.l.b16 %v8746
      %v9179 = vunpack.c.l.b16 %v8747
      %v9180 = vunpack.c.l.b16 %v8748
      %v9181 = vunpack.c.l.b16 %v8749
      %v9182 = vunpack.c.l.b16 %v8750
      %v9183 = vunpack.c.l.b16 %v8751
      %v9184 = vunpack.c.l.b16 %v8752
      %v9185 = vunpack.c.l.b16 %v8753
      %v9186 = vunpack.c.l.b16 %v8754
      %v9187 = vunpack.c.l.b16 %v8755
      %v9188 = vunpack.c.l.b16 %v8756
      %v9189 = vunpack.c.l.b16 %v8757
      %v9190 = vunpack.c.l.b16 %v8758
      %v9191 = vunpack.c.l.b16 %v8759
      %v9192 = vunpack.c.l.b16 %v8760
      %v9193 = vunpack.c.l.b16 %v8761
      %v9194 = vunpack.c.l.b16 %v8762
      %v9195 = vunpack.c.l.b16 %v8763
      %v9196 = vunpack.c.l.b16 %v8764
      %v9197 = vunpack.c.l.b16 %v8765
      %v9198 = vunpack.c.l.b16 %v8766
      %v9199 = vunpack.c.l.b16 %v8767
      %v9200 = vunpack.c.l.b16 %v8768
      %v9201 = vunpack.c.l.b16 %v8769
      %v9202 = vunpack.c.l.b16 %v8770
      %v9203 = vunpack.c.l.b16 %v8771
      %v9204 = vunpack.c.l.b16 %v8772
      %v9205 = vunpack.c.l.b16 %v8773
      %v9206 = vunpack.c.l.b16 %v8774
      %v9207 = vunpack.c.l.b16 %v8775
      %v9208 = vunpack.c.l.b16 %v8776
      %v9209 = vunpack.c.l.b16 %v8777
      %v9210 = vunpack.c.l.b16 %v8778
      %v9211 = vunpack.c.l.b16 %v8779
      %v9212 = vunpack.c.l.b16 %v8780
      %v9213 = vunpack.c.l.b16 %v8781
      %v9214 = vunpack.c.l.b16 %v8782
      %v9215 = vunpack.c.l.b16 %v8783
      %v9216 = vunpack.c.l.b16 %v8784
      %v9217 = vunpack.c.l.b16 %v8785
      %v9218 = vunpack.c.l.b16 %v8786
      %v9219 = vunpack.c.l.b16 %v8787
      %v9220 = vpack.c.b16 %v9077, %v9076
      %v9221 = vpack.c.b16 %v9079, %v9078
      %v9222 = vpack.c.b16 %v9081, %v9080
      %v9223 = vpack.c.b16 %v9083, %v9082
      %v9224 = vpack.c.b16 %v9085, %v9084
      %v9225 = vpack.c.b16 %v9087, %v9086
      %v9226 = vpack.c.b16 %v9089, %v9088
      %v9227 = vpack.c.b16 %v9091, %v9090
      %v9228 = vpack.c.b16 %v9093, %v9092
      %v9229 = vpack.c.b16 %v9095, %v9094
      %v9230 = vpack.c.b16 %v9097, %v9096
      %v9231 = vpack.c.b16 %v9099, %v9098
      %v9232 = vpack.c.b16 %v9101, %v9100
      %v9233 = vpack.c.b16 %v9103, %v9102
      %v9234 = vpack.c.b16 %v9105, %v9104
      %v9235 = vpack.c.b16 %v9107, %v9106
      %v9236 = vpack.c.b16 %v9109, %v9108
      %v9237 = vpack.c.b16 %v9111, %v9110
      %v9238 = vpack.c.b16 %v9113, %v9112
      %v9239 = vpack.c.b16 %v9115, %v9114
      %v9240 = vpack.c.b16 %v9117, %v9116
      %v9241 = vpack.c.b16 %v9119, %v9118
      %v9242 = vpack.c.b16 %v9121, %v9120
      %v9243 = vpack.c.b16 %v9123, %v9122
      %v9244 = vpack.c.b16 %v9125, %v9124
      %v9245 = vpack.c.b16 %v9127, %v9126
      %v9246 = vpack.c.b16 %v9129, %v9128
      %v9247 = vpack.c.b16 %v9131, %v9130
      %v9248 = vpack.c.b16 %v9133, %v9132
      %v9249 = vpack.c.b16 %v9135, %v9134
      %v9250 = vpack.c.b16 %v9137, %v9136
      %v9251 = vpack.c.b16 %v9139, %v9138
      %v9252 = vpack.c.b16 %v9141, %v9140
      %v9253 = vpack.c.b16 %v9143, %v9142
      %v9254 = vpack.c.b16 %v9145, %v9144
      %v9255 = vpack.c.b16 %v9147, %v9146
      %v9256 = vpack.c.b16 %v9149, %v9148
      %v9257 = vpack.c.b16 %v9151, %v9150
      %v9258 = vpack.c.b16 %v9153, %v9152
      %v9259 = vpack.c.b16 %v9155, %v9154
      %v9260 = vpack.c.b16 %v9157, %v9156
      %v9261 = vpack.c.b16 %v9159, %v9158
      %v9262 = vpack.c.b16 %v9161, %v9160
      %v9263 = vpack.c.b16 %v9163, %v9162
      %v9264 = vpack.c.b16 %v9165, %v9164
      %v9265 = vpack.c.b16 %v9167, %v9166
      %v9266 = vpack.c.b16 %v9169, %v9168
      %v9267 = vpack.c.b16 %v9171, %v9170
      %v9268 = vpack.c.b16 %v9173, %v9172
      %v9269 = vpack.c.b16 %v9175, %v9174
      %v9270 = vpack.c.b16 %v9177, %v9176
      %v9271 = vpack.c.b16 %v9179, %v9178
      %v9272 = vpack.c.b16 %v9181, %v9180
      %v9273 = vpack.c.b16 %v9183, %v9182
      %v9274 = vpack.c.b16 %v9185, %v9184
      %v9275 = vpack.c.b16 %v9187, %v9186
      %v9276 = vpack.c.b16 %v9189, %v9188
      %v9277 = vpack.c.b16 %v9191, %v9190
      %v9278 = vpack.c.b16 %v9193, %v9192
      %v9279 = vpack.c.b16 %v9195, %v9194
      %v9280 = vpack.c.b16 %v9197, %v9196
      %v9281 = vpack.c.b16 %v9199, %v9198
      %v9282 = vpack.c.b16 %v9201, %v9200
      %v9283 = vpack.c.b16 %v9203, %v9202
      %v9284 = vpack.c.b16 %v9205, %v9204
      %v9285 = vpack.c.b16 %v9207, %v9206
      %v9286 = vpack.c.b16 %v9209, %v9208
      %v9287 = vpack.c.b16 %v9211, %v9210
      %v9288 = vpack.c.b16 %v9213, %v9212
      %v9289 = vpack.c.b16 %v9215, %v9214
      %v9290 = vpack.c.b16 %v9217, %v9216
      %v9291 = vpack.c.b16 %v9219, %v9218
      %9364 = vmatprep.subr.bf16.mxu0 0
      %9365 = vmatpush1.bf16.msra.mxu0 %v9220
      %9366 = vmatprep.subr.bf16.mxu0 0
      %9367 = vmatpush1.bf16.msra.mxu0 %v9221
      %9368 = vmatprep.subr.bf16.mxu0 0
      %9369 = vmatpush1.bf16.msra.mxu0 %v9222
      %9370 = vmatprep.subr.bf16.mxu0 0
      %9371 = vmatpush1.bf16.msra.mxu0 %v9223
      %9372 = vmatprep.subr.bf16.mxu0 0
      %9373 = vmatpush1.bf16.msra.mxu0 %v9224
      %9374 = vmatprep.subr.bf16.mxu0 0
      %9375 = vmatpush1.bf16.msra.mxu0 %v9225
      %9376 = vmatprep.subr.bf16.mxu0 0
      %9377 = vmatpush1.bf16.msra.mxu0 %v9226
      %9378 = vmatprep.subr.bf16.mxu0 0
      %9379 = vmatpush1.bf16.msra.mxu0 %v9227
      %9380 = vmatprep.subr.bf16.mxu0 0
      %9381 = vmatpush1.bf16.msra.mxu0 %v9228
      %9382 = vmatprep.subr.bf16.mxu0 0
      %9383 = vmatpush1.bf16.msra.mxu0 %v9229
      %9384 = vmatprep.subr.bf16.mxu0 0
      %9385 = vmatpush1.bf16.msra.mxu0 %v9230
      %9386 = vmatprep.subr.bf16.mxu0 0
      %9387 = vmatpush1.bf16.msra.mxu0 %v9231
      %9388 = vmatprep.subr.bf16.mxu0 0
      %9389 = vmatpush1.bf16.msra.mxu0 %v9232
      %9390 = vmatprep.subr.bf16.mxu0 0
      %9391 = vmatpush1.bf16.msra.mxu0 %v9233
      %9392 = vmatprep.subr.bf16.mxu0 0
      %9393 = vmatpush1.bf16.msra.mxu0 %v9234
      %9394 = vmatprep.subr.bf16.mxu0 0
      %9395 = vmatpush1.bf16.msra.mxu0 %v9235
      %9396 = vmatprep.mubr.bf16.mxu0 %v8861
      %9397 = vmatmul.mubr.bf16.gmra.mrb[0].mxu0 %v8860
      %v9398 = vpop.f32.mrb[0].mxu0
      %v9399 = vadd.f32 0.0, %v9398
      %v9400 = vpop.f32.mrb[0].mxu0
      %v9401 = vpop.f32.mrb[0].mxu0
      %v9402 = vadd.f32 0.0, %v9401
      %v9403 = vpop.f32.mrb[0].mxu0
      %9404 = vmatprep.mubr.bf16.mxu0 %v8870
      %9405 = vmatmul.mubr.bf16.gmra.mrb[0].mxu0 %v8869
      %v9406 = vpop.f32.mrb[0].mxu0
      %v9407 = vadd.f32 0.0, %v9406
      %v9408 = vpop.f32.mrb[0].mxu0
      %v9409 = vpop.f32.mrb[0].mxu0
      %v9410 = vadd.f32 0.0, %v9409
      %v9411 = vpop.f32.mrb[0].mxu0
      %9412 = vmatprep.mubr.bf16.mxu0 %v8879
      %9413 = vmatmul.mubr.bf16.gmra.mrb[0].mxu0 %v8878
      %v9414 = vpop.f32.mrb[0].mxu0
      %v9415 = vadd.f32 0.0, %v9414
      %v9416 = vpop.f32.mrb[0].mxu0
      %v9417 = vpop.f32.mrb[0].mxu0
      %v9418 = vadd.f32 0.0, %v9417
      %v9419 = vpop.f32.mrb[0].mxu0
      %9420 = vmatprep.mubr.bf16.mxu0 %v8888
      %9421 = vmatmul.mubr.bf16.gmra.mrb[0].mxu0 %v8887
      %v9422 = vpop.f32.mrb[0].mxu0
      %v9423 = vadd.f32 0.0, %v9422
      %v9424 = vpop.f32.mrb[0].mxu0
      %v9425 = vpop.f32.mrb[0].mxu0
      %v9426 = vadd.f32 0.0, %v9425
      %v9427 = vpop.f32.mrb[0].mxu0
      %9428 = vdwg.mxu0
      %9429 = vmatprep.subr.bf16.mxu0 0
      %9430 = vmatpush1.bf16.msra.mxu0 %v9236
      %9431 = vmatprep.subr.bf16.mxu0 0
      %9432 = vmatpush1.bf16.msra.mxu0 %v9237
      %9433 = vmatprep.subr.bf16.mxu0 0
      %9434 = vmatpush1.bf16.msra.mxu0 %v9238
      %9435 = vmatprep.subr.bf16.mxu0 0
      %9436 = vmatpush1.bf16.msra.mxu0 %v9239
      %9437 = vmatprep.subr.bf16.mxu0 0
      %9438 = vmatpush1.bf16.msra.mxu0 %v9240
      %9439 = vmatprep.subr.bf16.mxu0 0
      %9440 = vmatpush1.bf16.msra.mxu0 %v9241
      %9441 = vmatprep.subr.bf16.mxu0 0
      %9442 = vmatpush1.bf16.msra.mxu0 %v9242
      %9443 = vmatprep.subr.bf16.mxu0 0
      %9444 = vmatpush1.bf16.msra.mxu0 %v9243
      %9445 = vmatprep.subr.bf16.mxu0 0
      %9446 = vmatpush1.bf16.msra.mxu0 %v9244
      %9447 = vmatprep.subr.bf16.mxu0 0
      %9448 = vmatpush1.bf16.msra.mxu0 %v9245
      %9449 = vmatprep.subr.bf16.mxu0 0
      %9450 = vmatpush1.bf16.msra.mxu0 %v9246
      %9451 = vmatprep.subr.bf16.mxu0 0
      %9452 = vmatpush1.bf16.msra.mxu0 %v9247
      %9453 = vmatprep.subr.bf16.mxu0 0
      %9454 = vmatpush1.bf16.msra.mxu0 %v9248
      %9455 = vmatprep.subr.bf16.mxu0 0
      %9456 = vmatpush1.bf16.msra.mxu0 %v9249
      %9457 = vmatprep.subr.bf16.mxu0 0
      %9458 = vmatpush1.bf16.msra.mxu0 %v9250
      %9459 = vmatprep.subr.bf16.mxu0 0
      %9460 = vmatpush1.bf16.msra.mxu0 %v9251
      %9461 = vmatprep.mubr.bf16.mxu0 %v8863
      %9462 = vmatmul.mubr.bf16.gmra.mrb[0].mxu0 %v8862
      %v9463 = vpop.f32.mrb[0].mxu0
      %v9464 = vadd.f32 %v9399, %v9463
      %v9465 = vpop.f32.mrb[0].mxu0
      %v9466 = vpop.f32.mrb[0].mxu0
      %v9467 = vadd.f32 %v9402, %v9466
      %v9468 = vpop.f32.mrb[0].mxu0
      %9469 = vmatprep.mubr.bf16.mxu0 %v8872
      %9470 = vmatmul.mubr.bf16.gmra.mrb[0].mxu0 %v8871
      %v9471 = vpop.f32.mrb[0].mxu0
      %v9472 = vadd.f32 %v9407, %v9471
      %v9473 = vpop.f32.mrb[0].mxu0
      %v9474 = vpop.f32.mrb[0].mxu0
      %v9475 = vadd.f32 %v9410, %v9474
      %v9476 = vpop.f32.mrb[0].mxu0
      %9477 = vmatprep.mubr.bf16.mxu0 %v8881
      %9478 = vmatmul.mubr.bf16.gmra.mrb[0].mxu0 %v8880
      %v9479 = vpop.f32.mrb[0].mxu0
      %v9480 = vadd.f32 %v9415, %v9479
      %v9481 = vpop.f32.mrb[0].mxu0
      %v9482 = vpop.f32.mrb[0].mxu0
      %v9483 = vadd.f32 %v9418, %v9482
      %v9484 = vpop.f32.mrb[0].mxu0
      %9485 = vmatprep.mubr.bf16.mxu0 %v8890
      %9486 = vmatmul.mubr.bf16.gmra.mrb[0].mxu0 %v8889
      %v9487 = vpop.f32.mrb[0].mxu0
      %v9488 = vadd.f32 %v9423, %v9487
      %v9489 = vpop.f32.mrb[0].mxu0
      %v9490 = vpop.f32.mrb[0].mxu0
      %v9491 = vadd.f32 %v9426, %v9490
      %v9492 = vpop.f32.mrb[0].mxu0
      %9493 = vdwg.mxu0
      %9494 = vmatprep.subr.bf16.mxu0 0
      %9495 = vmatpush1.bf16.msra.mxu0 %v9252
      %9496 = vmatprep.subr.bf16.mxu0 0
      %9497 = vmatpush1.bf16.msra.mxu0 %v9253
      %9498 = vmatprep.subr.bf16.mxu0 0
      %9499 = vmatpush1.bf16.msra.mxu0 %v9254
      %9500 = vmatprep.subr.bf16.mxu0 0
      %9501 = vmatpush1.bf16.msra.mxu0 %v9255
      %9502 = vmatprep.subr.bf16.mxu0 0
      %9503 = vmatpush1.bf16.msra.mxu0 %v9256
      %9504 = vmatprep.subr.bf16.mxu0 0
      %9505 = vmatpush1.bf16.msra.mxu0 %v9257
      %9506 = vmatprep.subr.bf16.mxu0 0
      %9507 = vmatpush1.bf16.msra.mxu0 %v9258
      %9508 = vmatprep.subr.bf16.mxu0 0
      %9509 = vmatpush1.bf16.msra.mxu0 %v9259
      %9510 = vmatprep.subr.bf16.mxu0 0
      %9511 = vmatpush1.bf16.msra.mxu0 %v9260
      %9512 = vmatprep.subr.bf16.mxu0 0
      %9513 = vmatpush1.bf16.msra.mxu0 %v9261
      %9514 = vmatprep.subr.bf16.mxu0 0
      %9515 = vmatpush1.bf16.msra.mxu0 %v9262
      %9516 = vmatprep.subr.bf16.mxu0 0
      %9517 = vmatpush1.bf16.msra.mxu0 %v9263
      %9518 = vmatprep.subr.bf16.mxu0 0
      %9519 = vmatpush1.bf16.msra.mxu0 %v9264
      %9520 = vmatprep.subr.bf16.mxu0 0
      %9521 = vmatpush1.bf16.msra.mxu0 %v9265
      %9522 = vmatprep.subr.bf16.mxu0 0
      %9523 = vmatpush1.bf16.msra.mxu0 %v9266
      %9524 = vmatprep.subr.bf16.mxu0 0
      %9525 = vmatpush1.bf16.msra.mxu0 %v9267
      %9526 = vmatprep.mubr.bf16.mxu0 %v8865
      %9527 = vmatmul.mubr.bf16.gmra.mrb[0].mxu0 %v8864
      %v9528 = vpop.f32.mrb[0].mxu0
      %v9529 = vadd.f32 %v9464, %v9528
      %v9530 = vpop.f32.mrb[0].mxu0
      %v9531 = vpop.f32.mrb[0].mxu0
      %v9532 = vadd.f32 %v9467, %v9531
      %v9533 = vpop.f32.mrb[0].mxu0
      %9534 = vmatprep.mubr.bf16.mxu0 %v8874
      %9535 = vmatmul.mubr.bf16.gmra.mrb[0].mxu0 %v8873
      %v9536 = vpop.f32.mrb[0].mxu0
      %v9537 = vadd.f32 %v9472, %v9536
      %v9538 = vpop.f32.mrb[0].mxu0
      %v9539 = vpop.f32.mrb[0].mxu0
      %v9540 = vadd.f32 %v9475, %v9539
      %v9541 = vpop.f32.mrb[0].mxu0
      %9542 = vmatprep.mubr.bf16.mxu0 %v8883
      %9543 = vmatmul.mubr.bf16.gmra.mrb[0].mxu0 %v8882
      %v9544 = vpop.f32.mrb[0].mxu0
      %v9545 = vadd.f32 %v9480, %v9544
      %v9546 = vpop.f32.mrb[0].mxu0
      %v9547 = vpop.f32.mrb[0].mxu0
      %v9548 = vadd.f32 %v9483, %v9547
      %v9549 = vpop.f32.mrb[0].mxu0
      %9550 = vmatprep.mubr.bf16.mxu0 %v8892
      %9551 = vmatmul.mubr.bf16.gmra.mrb[0].mxu0 %v8891
      %v9552 = vpop.f32.mrb[0].mxu0
      %v9553 = vadd.f32 %v9488, %v9552
      %v9554 = vpop.f32.mrb[0].mxu0
      %v9555 = vpop.f32.mrb[0].mxu0
      %v9556 = vadd.f32 %v9491, %v9555
      %v9557 = vpop.f32.mrb[0].mxu0
      %9558 = vdwg.mxu0
      %9559 = vmatprep.subr.bf16.mxu0 0
      %9560 = vmatpush1.bf16.msra.mxu0 %v9268
      %9561 = vmatprep.subr.bf16.mxu0 0
      %9562 = vmatpush1.bf16.msra.mxu0 %v9269
      %9563 = vmatprep.subr.bf16.mxu0 0
      %9564 = vmatpush1.bf16.msra.mxu0 %v9270
      %9565 = vmatprep.subr.bf16.mxu0 0
      %9566 = vmatpush1.bf16.msra.mxu0 %v9271
      %9567 = vmatprep.subr.bf16.mxu0 0
      %9568 = vmatpush1.bf16.msra.mxu0 %v9272
      %9569 = vmatprep.subr.bf16.mxu0 0
      %9570 = vmatpush1.bf16.msra.mxu0 %v9273
      %9571 = vmatprep.subr.bf16.mxu0 0
      %9572 = vmatpush1.bf16.msra.mxu0 %v9274
      %9573 = vmatprep.subr.bf16.mxu0 0
      %9574 = vmatpush1.bf16.msra.mxu0 %v9275
      %9575 = vmatprep.subr.bf16.mxu0 0
      %9576 = vmatpush1.bf16.msra.mxu0 %v9276
      %9577 = vmatprep.subr.bf16.mxu0 0
      %9578 = vmatpush1.bf16.msra.mxu0 %v9277
      %9579 = vmatprep.subr.bf16.mxu0 0
      %9580 = vmatpush1.bf16.msra.mxu0 %v9278
      %9581 = vmatprep.subr.bf16.mxu0 0
      %9582 = vmatpush1.bf16.msra.mxu0 %v9279
      %9583 = vmatprep.subr.bf16.mxu0 0
      %9584 = vmatpush1.bf16.msra.mxu0 %v9280
      %9585 = vmatprep.subr.bf16.mxu0 0
      %9586 = vmatpush1.bf16.msra.mxu0 %v9281
      %9587 = vmatprep.subr.bf16.mxu0 0
      %9588 = vmatpush1.bf16.msra.mxu0 %v9282
      %9589 = vmatprep.subr.bf16.mxu0 0
      %9590 = vmatpush1.bf16.msra.mxu0 %v9283
      %9591 = vmatprep.mubr.bf16.mxu0 %v8867
      %9592 = vmatmul.mubr.bf16.gmra.mrb[0].mxu0 %v8866
      %v9593 = vpop.f32.mrb[0].mxu0
      %v9594 = vadd.f32 %v9529, %v9593
      %v9595 = vpop.f32.mrb[0].mxu0
      %v9596 = vpop.f32.mrb[0].mxu0
      %v9597 = vadd.f32 %v9532, %v9596
      %v9598 = vpop.f32.mrb[0].mxu0
      %9599 = vmatprep.mubr.bf16.mxu0 %v8876
      %9600 = vmatmul.mubr.bf16.gmra.mrb[0].mxu0 %v8875
      %v9601 = vpop.f32.mrb[0].mxu0
      %v9602 = vadd.f32 %v9537, %v9601
      %v9603 = vpop.f32.mrb[0].mxu0
      %v9604 = vpop.f32.mrb[0].mxu0
      %v9605 = vadd.f32 %v9540, %v9604
      %v9606 = vpop.f32.mrb[0].mxu0
      %9607 = vmatprep.mubr.bf16.mxu0 %v8885
      %9608 = vmatmul.mubr.bf16.gmra.mrb[0].mxu0 %v8884
      %v9609 = vpop.f32.mrb[0].mxu0
      %v9610 = vadd.f32 %v9545, %v9609
      %v9611 = vpop.f32.mrb[0].mxu0
      %v9612 = vpop.f32.mrb[0].mxu0
      %v9613 = vadd.f32 %v9548, %v9612
      %v9614 = vpop.f32.mrb[0].mxu0
      %9615 = vmatprep.mubr.bf16.mxu0 %v8894
      %9616 = vmatmul.mubr.bf16.gmra.mrb[0].mxu0 %v8893
      %v9617 = vpop.f32.mrb[0].mxu0
      %v9618 = vadd.f32 %v9553, %v9617
      %v9619 = vpop.f32.mrb[0].mxu0
      %v9620 = vpop.f32.mrb[0].mxu0
      %v9621 = vadd.f32 %v9556, %v9620
      %v9622 = vpop.f32.mrb[0].mxu0
      %9623 = vdwg.mxu0
      %9624 = vmatprep.subr.bf16.mxu0 0
      %9625 = vmatpush1.bf16.msra.mxu0 %v9284
      %9626 = vmatprep.subr.bf16.mxu0 0
      %9627 = vmatpush1.bf16.msra.mxu0 %v9285
      %9628 = vmatprep.subr.bf16.mxu0 0
      %9629 = vmatpush1.bf16.msra.mxu0 %v9286
      %9630 = vmatprep.subr.bf16.mxu0 0
      %9631 = vmatpush1.bf16.msra.mxu0 %v9287
      %9632 = vmatprep.subr.bf16.mxu0 0
      %9633 = vmatpush1.bf16.msra.mxu0 %v9288
      %9634 = vmatprep.subr.bf16.mxu0 0
      %9635 = vmatpush1.bf16.msra.mxu0 %v9289
      %9636 = vmatprep.subr.bf16.mxu0 0
      %9637 = vmatpush1.bf16.msra.mxu0 %v9290
      %9638 = vmatprep.subr.bf16.mxu0 0
      %9639 = vmatpush1.bf16.msra.mxu0 %v9291
      %9640 = vmatprep.subr.bf16.mxu0 0
      %9641 = vmatpush1.bf16.msra.mxu0 0
      %9642 = vmatprep.subr.bf16.mxu0 0
      %9643 = vmatpush1.bf16.msra.mxu0 0
      %9644 = vmatprep.subr.bf16.mxu0 0
      %9645 = vmatpush1.bf16.msra.mxu0 0
      %9646 = vmatprep.subr.bf16.mxu0 0
      %9647 = vmatpush1.bf16.msra.mxu0 0
      %9648 = vmatprep.subr.bf16.mxu0 0
      %9649 = vmatpush1.bf16.msra.mxu0 0
      %9650 = vmatprep.subr.bf16.mxu0 0
      %9651 = vmatpush1.bf16.msra.mxu0 0
      %9652 = vmatprep.subr.bf16.mxu0 0
      %9653 = vmatpush1.bf16.msra.mxu0 0
      %9654 = vmatprep.subr.bf16.mxu0 0
      %9655 = vmatpush1.bf16.msra.mxu0 0
      %9656 = vmatprep.mubr.bf16.mxu0 0
      %9657 = vmatmul.mubr.bf16.gmra.mrb[0].mxu0 %v8868
      %v9658 = vpop.f32.mrb[0].mxu0
      %v9659 = vadd.f32 %v9594, %v9658
      %v9660 = vpop.f32.mrb[0].mxu0
      %v9661 = vpop.f32.mrb[0].mxu0
      %v9662 = vadd.f32 %v9597, %v9661
      %v9663 = vpop.f32.mrb[0].mxu0
      %9664 = vmatprep.mubr.bf16.mxu0 0
      %9665 = vmatmul.mubr.bf16.gmra.mrb[0].mxu0 %v8877
      %v9666 = vpop.f32.mrb[0].mxu0
      %v9667 = vadd.f32 %v9602, %v9666
      %v9668 = vpop.f32.mrb[0].mxu0
      %v9669 = vpop.f32.mrb[0].mxu0
      %v9670 = vadd.f32 %v9605, %v9669
      %v9671 = vpop.f32.mrb[0].mxu0
      %9672 = vmatprep.mubr.bf16.mxu0 0
      %9673 = vmatmul.mubr.bf16.gmra.mrb[0].mxu0 %v8886
      %v9674 = vpop.f32.mrb[0].mxu0
      %v9675 = vadd.f32 %v9610, %v9674
      %v9676 = vpop.f32.mrb[0].mxu0
      %v9677 = vpop.f32.mrb[0].mxu0
      %v9678 = vadd.f32 %v9613, %v9677
      %v9679 = vpop.f32.mrb[0].mxu0
      %9680 = vmatprep.mubr.bf16.mxu0 0
      %9681 = vmatmul.mubr.bf16.gmra.mrb[0].mxu0 %v8895
      %v9682 = vpop.f32.mrb[0].mxu0
      %v9683 = vadd.f32 %v9618, %v9682
      %v9684 = vpop.f32.mrb[0].mxu0
      %v9685 = vpop.f32.mrb[0].mxu0
      %v9686 = vadd.f32 %v9621, %v9685
      %v9687 = vpop.f32.mrb[0].mxu0
      %9688 = vdwg.mxu0
      %vm9689 = vcmask 261120
      %v9690 = vsel %vm9689, %v9659, -inf
      %v9691 = vsel %vm9689, %v9662, -inf
      %v9692 = vmax.f32 %v9690, %v9691
      %v9693 = vsel %vm9689, %v9667, -inf
      %v9694 = vsel %vm9689, %v9670, -inf
      %v9695 = vmax.f32 %v9693, %v9694
      %v9696 = vsel %vm9689, %v9675, -inf
      %v9697 = vsel %vm9689, %v9678, -inf
      %v9698 = vmax.f32 %v9696, %v9697
      %v9699 = vsel %vm9689, %v9683, -inf
      %v9700 = vsel %vm9689, %v9686, -inf
      %v9701 = vmax.f32 %v9699, %v9700
      %v9706 = vcombine.high %v9692, %v9692
      %v9708 = vunpack.c.l.s4 1983009808
      %v9709 = vunpack.c.0.s8 %v9708
      %v9710 = vlaneseq
      %v9711 = vshrl.u32 %v9710, 7
      %v9712 = vsub.s32 %v9709, %v9711
      %v9713 = vrot.slane %v9692, %v9712
      %v9715 = vunpack.c.l.s4 1983009808
      %v9716 = vunpack.c.0.s8 %v9715
      %v9717 = vlaneseq
      %v9718 = vshrl.u32 %v9717, 7
      %v9719 = vsub.s32 %v9716, %v9718
      %v9720 = vrot.slane %v9706, %v9719
      %v9721 = vcombine.high %v9713, %v9713
      %v9722 = vcombine.high %v9720, %v9720
      %v9723 = vcombine.high %v9695, %v9695
      %v9725 = vunpack.c.l.s4 1983009808
      %v9726 = vunpack.c.0.s8 %v9725
      %v9727 = vlaneseq
      %v9728 = vshrl.u32 %v9727, 7
      %v9729 = vsub.s32 %v9726, %v9728
      %v9730 = vrot.slane %v9695, %v9729
      %v9732 = vunpack.c.l.s4 1983009808
      %v9733 = vunpack.c.0.s8 %v9732
      %v9734 = vlaneseq
      %v9735 = vshrl.u32 %v9734, 7
      %v9736 = vsub.s32 %v9733, %v9735
      %v9737 = vrot.slane %v9723, %v9736
      %v9738 = vcombine.high %v9730, %v9730
      %v9739 = vcombine.high %v9737, %v9737
      %v9740 = vcombine.high %v9698, %v9698
      %v9742 = vunpack.c.l.s4 1983009808
      %v9743 = vunpack.c.0.s8 %v9742
      %v9744 = vlaneseq
      %v9745 = vshrl.u32 %v9744, 7
      %v9746 = vsub.s32 %v9743, %v9745
      %v9747 = vrot.slane %v9698, %v9746
      %v9749 = vunpack.c.l.s4 1983009808
      %v9750 = vunpack.c.0.s8 %v9749
      %v9751 = vlaneseq
      %v9752 = vshrl.u32 %v9751, 7
      %v9753 = vsub.s32 %v9750, %v9752
      %v9754 = vrot.slane %v9740, %v9753
      %v9755 = vcombine.high %v9747, %v9747
      %v9756 = vcombine.high %v9754, %v9754
      %v9757 = vcombine.high %v9701, %v9701
      %v9759 = vunpack.c.l.s4 1983009808
      %v9760 = vunpack.c.0.s8 %v9759
      %v9761 = vlaneseq
      %v9762 = vshrl.u32 %v9761, 7
      %v9763 = vsub.s32 %v9760, %v9762
      %v9764 = vrot.slane %v9701, %v9763
      %v9766 = vunpack.c.l.s4 1983009808
      %v9767 = vunpack.c.0.s8 %v9766
      %v9768 = vlaneseq
      %v9769 = vshrl.u32 %v9768, 7
      %v9770 = vsub.s32 %v9767, %v9769
      %v9771 = vrot.slane %v9757, %v9770
      %v9772 = vcombine.high %v9764, %v9764
      %v9773 = vcombine.high %v9771, %v9771
      %vm9790 = vcmask 254976
      %v9791 = vsel %vm9790, %v9713, -inf
      %v9792 = vrot.slane %v9791, 4
      %v9793 = vmax.f32 %v9791, %v9792
      %v9794 = vrot.slane %v9793, 2
      %v9795 = vmax.f32 %v9793, %v9794
      %v9796 = vrot.slane %v9795, 1
      %v9797 = vmax.f32 %v9795, %v9796
      %v9798 = vsel %vm9790, %v9721, -inf
      %v9799 = vrot.slane %v9798, 4
      %v9800 = vmax.f32 %v9798, %v9799
      %v9801 = vrot.slane %v9800, 2
      %v9802 = vmax.f32 %v9800, %v9801
      %v9803 = vrot.slane %v9802, 1
      %v9804 = vmax.f32 %v9802, %v9803
      %v9805 = vsel %vm9790, %v9720, -inf
      %v9806 = vrot.slane %v9805, 4
      %v9807 = vmax.f32 %v9805, %v9806
      %v9808 = vrot.slane %v9807, 2
      %v9809 = vmax.f32 %v9807, %v9808
      %v9810 = vrot.slane %v9809, 1
      %v9811 = vmax.f32 %v9809, %v9810
      %v9812 = vsel %vm9790, %v9722, -inf
      %v9813 = vrot.slane %v9812, 4
      %v9814 = vmax.f32 %v9812, %v9813
      %v9815 = vrot.slane %v9814, 2
      %v9816 = vmax.f32 %v9814, %v9815
      %v9817 = vrot.slane %v9816, 1
      %v9818 = vmax.f32 %v9816, %v9817
      %v9819 = vsel %vm9790, %v9730, -inf
      %v9820 = vrot.slane %v9819, 4
      %v9821 = vmax.f32 %v9819, %v9820
      %v9822 = vrot.slane %v9821, 2
      %v9823 = vmax.f32 %v9821, %v9822
      %v9824 = vrot.slane %v9823, 1
      %v9825 = vmax.f32 %v9823, %v9824
      %v9826 = vsel %vm9790, %v9738, -inf
      %v9827 = vrot.slane %v9826, 4
      %v9828 = vmax.f32 %v9826, %v9827
      %v9829 = vrot.slane %v9828, 2
      %v9830 = vmax.f32 %v9828, %v9829
      %v9831 = vrot.slane %v9830, 1
      %v9832 = vmax.f32 %v9830, %v9831
      %v9833 = vsel %vm9790, %v9737, -inf
      %v9834 = vrot.slane %v9833, 4
      %v9835 = vmax.f32 %v9833, %v9834
      %v9836 = vrot.slane %v9835, 2
      %v9837 = vmax.f32 %v9835, %v9836
      %v9838 = vrot.slane %v9837, 1
      %v9839 = vmax.f32 %v9837, %v9838
      %v9840 = vsel %vm9790, %v9739, -inf
      %v9841 = vrot.slane %v9840, 4
      %v9842 = vmax.f32 %v9840, %v9841
      %v9843 = vrot.slane %v9842, 2
      %v9844 = vmax.f32 %v9842, %v9843
      %v9845 = vrot.slane %v9844, 1
      %v9846 = vmax.f32 %v9844, %v9845
      %v9847 = vsel %vm9790, %v9747, -inf
      %v9848 = vrot.slane %v9847, 4
      %v9849 = vmax.f32 %v9847, %v9848
      %v9850 = vrot.slane %v9849, 2
      %v9851 = vmax.f32 %v9849, %v9850
      %v9852 = vrot.slane %v9851, 1
      %v9853 = vmax.f32 %v9851, %v9852
      %v9854 = vsel %vm9790, %v9755, -inf
      %v9855 = vrot.slane %v9854, 4
      %v9856 = vmax.f32 %v9854, %v9855
      %v9857 = vrot.slane %v9856, 2
      %v9858 = vmax.f32 %v9856, %v9857
      %v9859 = vrot.slane %v9858, 1
      %v9860 = vmax.f32 %v9858, %v9859
      %v9861 = vsel %vm9790, %v9754, -inf
      %v9862 = vrot.slane %v9861, 4
      %v9863 = vmax.f32 %v9861, %v9862
      %v9864 = vrot.slane %v9863, 2
      %v9865 = vmax.f32 %v9863, %v9864
      %v9866 = vrot.slane %v9865, 1
      %v9867 = vmax.f32 %v9865, %v9866
      %v9868 = vsel %vm9790, %v9756, -inf
      %v9869 = vrot.slane %v9868, 4
      %v9870 = vmax.f32 %v9868, %v9869
      %v9871 = vrot.slane %v9870, 2
      %v9872 = vmax.f32 %v9870, %v9871
      %v9873 = vrot.slane %v9872, 1
      %v9874 = vmax.f32 %v9872, %v9873
      %v9875 = vsel %vm9790, %v9764, -inf
      %v9876 = vrot.slane %v9875, 4
      %v9877 = vmax.f32 %v9875, %v9876
      %v9878 = vrot.slane %v9877, 2
      %v9879 = vmax.f32 %v9877, %v9878
      %v9880 = vrot.slane %v9879, 1
      %v9881 = vmax.f32 %v9879, %v9880
      %v9882 = vsel %vm9790, %v9772, -inf
      %v9883 = vrot.slane %v9882, 4
      %v9884 = vmax.f32 %v9882, %v9883
      %v9885 = vrot.slane %v9884, 2
      %v9886 = vmax.f32 %v9884, %v9885
      %v9887 = vrot.slane %v9886, 1
      %v9888 = vmax.f32 %v9886, %v9887
      %v9889 = vsel %vm9790, %v9771, -inf
      %v9890 = vrot.slane %v9889, 4
      %v9891 = vmax.f32 %v9889, %v9890
      %v9892 = vrot.slane %v9891, 2
      %v9893 = vmax.f32 %v9891, %v9892
      %v9894 = vrot.slane %v9893, 1
      %v9895 = vmax.f32 %v9893, %v9894
      %v9896 = vsel %vm9790, %v9773, -inf
      %v9897 = vrot.slane %v9896, 4
      %v9898 = vmax.f32 %v9896, %v9897
      %v9899 = vrot.slane %v9898, 2
      %v9900 = vmax.f32 %v9898, %v9899
      %v9901 = vrot.slane %v9900, 1
      %v9902 = vmax.f32 %v9900, %v9901
      %v9903 = vld [vmem:[%s6] sm:$0x1]
      %v9905 = vlaneseq
      %v9906 = vshrl.u32 %v9905, 7
      %v9907 = vsub.s32 0, %v9906
      %v9908 = vrot.slane %v9903, %v9907
      %v9910 = vadd.f32 %v9797, %v9908
      %v9911 = vadd.f32 %v9804, %v9908
      %v9912 = vadd.f32 %v9811, %v9908
      %v9913 = vadd.f32 %v9818, %v9908
      %v9914 = vadd.f32 %v9825, %v9908
      %v9915 = vadd.f32 %v9832, %v9908
      %v9916 = vadd.f32 %v9839, %v9908
      %v9917 = vadd.f32 %v9846, %v9908
      %v9918 = vadd.f32 %v9853, %v9908
      %v9919 = vadd.f32 %v9860, %v9908
      %v9920 = vadd.f32 %v9867, %v9908
      %v9921 = vadd.f32 %v9874, %v9908
      %v9922 = vadd.f32 %v9881, %v9908
      %v9923 = vadd.f32 %v9888, %v9908
      %v9924 = vadd.f32 %v9895, %v9908
      %v9925 = vadd.f32 %v9902, %v9908
      %vm9926 = vcmp.gt.f32.partialorder %v9910, 0.0
      %vm9927 = vcmp.gt.f32.partialorder %v9911, 0.0
      %vm9928 = vcmp.gt.f32.partialorder %v9912, 0.0
      %vm9929 = vcmp.gt.f32.partialorder %v9913, 0.0
      %vm9930 = vcmp.gt.f32.partialorder %v9914, 0.0
      %vm9931 = vcmp.gt.f32.partialorder %v9915, 0.0
      %vm9932 = vcmp.gt.f32.partialorder %v9916, 0.0
      %vm9933 = vcmp.gt.f32.partialorder %v9917, 0.0
      %vm9934 = vcmp.gt.f32.partialorder %v9918, 0.0
      %vm9935 = vcmp.gt.f32.partialorder %v9919, 0.0
      %vm9936 = vcmp.gt.f32.partialorder %v9920, 0.0
      %vm9937 = vcmp.gt.f32.partialorder %v9921, 0.0
      %vm9938 = vcmp.gt.f32.partialorder %v9922, 0.0
      %vm9939 = vcmp.gt.f32.partialorder %v9923, 0.0
      %vm9940 = vcmp.gt.f32.partialorder %v9924, 0.0
      %vm9941 = vcmp.gt.f32.partialorder %v9925, 0.0
      %v9942 = vmul.f32 %v9910, 0.2
      %v9943 = vmul.f32 %v9911, 0.2
      %v9944 = vmul.f32 %v9912, 0.2
      %v9945 = vmul.f32 %v9913, 0.2
      %v9946 = vmul.f32 %v9914, 0.2
      %v9947 = vmul.f32 %v9915, 0.2
      %v9948 = vmul.f32 %v9916, 0.2
      %v9949 = vmul.f32 %v9917, 0.2
      %v9950 = vmul.f32 %v9918, 0.2
      %v9951 = vmul.f32 %v9919, 0.2
      %v9952 = vmul.f32 %v9920, 0.2
      %v9953 = vmul.f32 %v9921, 0.2
      %v9954 = vmul.f32 %v9922, 0.2
      %v9955 = vmul.f32 %v9923, 0.2
      %v9956 = vmul.f32 %v9924, 0.2
      %v9957 = vmul.f32 %v9925, 0.2
      %v9958 = vsel %vm9926, %v9910, %v9942
      %v9959 = vsel %vm9927, %v9911, %v9943
      %v9960 = vsel %vm9928, %v9912, %v9944
      %v9961 = vsel %vm9929, %v9913, %v9945
      %v9962 = vsel %vm9930, %v9914, %v9946
      %v9963 = vsel %vm9931, %v9915, %v9947
      %v9964 = vsel %vm9932, %v9916, %v9948
      %v9965 = vsel %vm9933, %v9917, %v9949
      %v9966 = vsel %vm9934, %v9918, %v9950
      %v9967 = vsel %vm9935, %v9919, %v9951
      %v9968 = vsel %vm9936, %v9920, %v9952
      %v9969 = vsel %vm9937, %v9921, %v9953
      %v9970 = vsel %vm9938, %v9922, %v9954
      %v9971 = vsel %vm9939, %v9923, %v9955
      %v9972 = vsel %vm9940, %v9924, %v9956
      %v9973 = vsel %vm9941, %v9925, %v9957
      %v9974 = vld [vmem:[%s7] sm:$0x1]
      %v9976 = vlaneseq
      %v9977 = vshrl.u32 %v9976, 7
      %v9978 = vsub.s32 0, %v9977
      %v9979 = vrot.slane %v9974, %v9978
      %v9981 = vmul.f32 %v9958, %v9979
      %v9982 = vmul.f32 %v9959, %v9979
      %v9983 = vmul.f32 %v9960, %v9979
      %v9984 = vmul.f32 %v9961, %v9979
      %v9985 = vmul.f32 %v9962, %v9979
      %v9986 = vmul.f32 %v9963, %v9979
      %v9987 = vmul.f32 %v9964, %v9979
      %v9988 = vmul.f32 %v9965, %v9979
      %v9989 = vmul.f32 %v9966, %v9979
      %v9990 = vmul.f32 %v9967, %v9979
      %v9991 = vmul.f32 %v9968, %v9979
      %v9992 = vmul.f32 %v9969, %v9979
      %v9993 = vmul.f32 %v9970, %v9979
      %v9994 = vmul.f32 %v9971, %v9979
      %v9995 = vmul.f32 %v9972, %v9979
      %v9996 = vmul.f32 %v9973, %v9979
      %v9997 = vld [vmem:[%s8] sm:$0x1]
      %v9999 = vlaneseq
      %v10000 = vshrl.u32 %v9999, 7
      %v10001 = vsub.s32 0, %v10000
      %v10002 = vrot.slane %v9997, %v10001
      %v10004 = vadd.f32 %v9981, %v10002
      %v10005 = vadd.f32 %v9982, %v10002
      %v10006 = vadd.f32 %v9983, %v10002
      %v10007 = vadd.f32 %v9984, %v10002
      %v10008 = vadd.f32 %v9985, %v10002
      %v10009 = vadd.f32 %v9986, %v10002
      %v10010 = vadd.f32 %v9987, %v10002
      %v10011 = vadd.f32 %v9988, %v10002
      %v10012 = vadd.f32 %v9989, %v10002
      %v10013 = vadd.f32 %v9990, %v10002
      %v10014 = vadd.f32 %v9991, %v10002
      %v10015 = vadd.f32 %v9992, %v10002
      %v10016 = vadd.f32 %v9993, %v10002
      %v10017 = vadd.f32 %v9994, %v10002
      %v10018 = vadd.f32 %v9995, %v10002
      %v10019 = vadd.f32 %v9996, %v10002
      %v10020 = vpack.c.bf16 %v10004, %v10004
      %v10021 = vpack.c.bf16 %v10005, %v10005
      %v10022 = vpack.c.bf16 %v10006, %v10006
      %v10023 = vpack.c.bf16 %v10007, %v10007
      %v10024 = vpack.c.bf16 %v10008, %v10008
      %v10025 = vpack.c.bf16 %v10009, %v10009
      %v10026 = vpack.c.bf16 %v10010, %v10010
      %v10027 = vpack.c.bf16 %v10011, %v10011
      %v10028 = vpack.c.bf16 %v10012, %v10012
      %v10029 = vpack.c.bf16 %v10013, %v10013
      %v10030 = vpack.c.bf16 %v10014, %v10014
      %v10031 = vpack.c.bf16 %v10015, %v10015
      %v10032 = vpack.c.bf16 %v10016, %v10016
      %v10033 = vpack.c.bf16 %v10017, %v10017
      %v10034 = vpack.c.bf16 %v10018, %v10018
      %v10035 = vpack.c.bf16 %v10019, %v10019
      %10036 = vst [vmem:[#allocation4] sm:$0xf] 0
      %10037 = vst [vmem:[#allocation4 + $0x4] sm:$0xf] 0
      %vm10038 = vsmask.f32 2304
      %vm10039 = vmand %vm1310, %vm10038
      %v10040 = vld [vmem:[#allocation4 + $0x8] sm:$0x7]
      %v10041 = vsel %vm10039, 0, %v10040
      %10042 = vst [vmem:[#allocation4 + $0x8] sm:$0x7] %v10041
      %10043 = vst [vmem:[#allocation4 + $0xc] sm:$0xf] 0
      %10044 = vst [vmem:[#allocation4 + $0x10] sm:$0xf] 0
      %v10045 = vld [vmem:[#allocation4 + $0x14] sm:$0x7]
      %v10046 = vsel %vm10039, 0, %v10045
      %10047 = vst [vmem:[#allocation4 + $0x14] sm:$0x7] %v10046
      %10048 = vst [vmem:[#allocation4 + $0x18] sm:$0xf] 0
      %10049 = vst [vmem:[#allocation4 + $0x1c] sm:$0xf] 0
      %v10050 = vld [vmem:[#allocation4 + $0x20] sm:$0x7]
      %v10051 = vsel %vm10039, 0, %v10050
      %10052 = vst [vmem:[#allocation4 + $0x20] sm:$0x7] %v10051
      %10053 = vst [vmem:[#allocation4 + $0x24] sm:$0xf] 0
      %10054 = vst [vmem:[#allocation4 + $0x28] sm:$0xf] 0
      %v10055 = vld [vmem:[#allocation4 + $0x2c] sm:$0x7]
      %v10056 = vsel %vm10039, 0, %v10055
      %10057 = vst [vmem:[#allocation4 + $0x2c] sm:$0x7] %v10056
      %10058 = vst [vmem:[#allocation4 + $0x30] sm:$0xf] 0
      %10059 = vst [vmem:[#allocation4 + $0x34] sm:$0xf] 0
      %v10060 = vld [vmem:[#allocation4 + $0x38] sm:$0x7]
      %v10061 = vsel %vm10039, 0, %v10060
      %10062 = vst [vmem:[#allocation4 + $0x38] sm:$0x7] %v10061
      %10063 = vst [vmem:[#allocation4 + $0x3c] sm:$0xf] 0
      %10064 = vst [vmem:[#allocation4 + $0x40] sm:$0xf] 0
      %v10065 = vld [vmem:[#allocation4 + $0x44] sm:$0x7]
      %v10066 = vsel %vm10039, 0, %v10065
      %10067 = vst [vmem:[#allocation4 + $0x44] sm:$0x7] %v10066
      %v10084 = vunpack.c.l.b16 %v10020
      %v10085 = vunpack.c.l.b16 %v10021
      %v10086 = vunpack.c.l.b16 %v10022
      %v10087 = vunpack.c.l.b16 %v10023
      %v10088 = vunpack.c.l.b16 %v10024
      %v10089 = vunpack.c.l.b16 %v10025
      %v10090 = vunpack.c.l.b16 %v10026
      %v10091 = vunpack.c.l.b16 %v10027
      %v10092 = vunpack.c.l.b16 %v10028
      %v10093 = vunpack.c.l.b16 %v10029
      %v10094 = vunpack.c.l.b16 %v10030
      %v10095 = vunpack.c.l.b16 %v10031
      %v10096 = vunpack.c.l.b16 %v10032
      %v10097 = vunpack.c.l.b16 %v10033
      %v10098 = vunpack.c.l.b16 %v10034
      %v10099 = vunpack.c.l.b16 %v10035
      %v10100 = vpack.c.b16 %v10084, %v10084
      %v10101 = vpack.c.b16 %v10085, %v10085
      %v10102 = vpack.c.b16 %v10086, %v10086
      %v10103 = vpack.c.b16 %v10087, %v10087
      %v10104 = vpack.c.b16 %v10088, %v10088
      %v10105 = vpack.c.b16 %v10089, %v10089
      %v10106 = vpack.c.b16 %v10090, %v10090
      %v10107 = vpack.c.b16 %v10091, %v10091
      %v10108 = vpack.c.b16 %v10092, %v10092
      %v10109 = vpack.c.b16 %v10093, %v10093
      %v10110 = vpack.c.b16 %v10094, %v10094
      %v10111 = vpack.c.b16 %v10095, %v10095
      %v10112 = vpack.c.b16 %v10096, %v10096
      %v10113 = vpack.c.b16 %v10097, %v10097
      %v10114 = vpack.c.b16 %v10098, %v10098
      %v10115 = vpack.c.b16 %v10099, %v10099
      %v10116 = vunpack.c.l.b16 %v10100
      %v10117 = vunpack.c.l.b16 %v10101
      %v10118 = vunpack.c.l.b16 %v10102
      %v10119 = vunpack.c.l.b16 %v10103
      %v10120 = vunpack.c.l.b16 %v10104
      %v10121 = vunpack.c.l.b16 %v10105
      %v10122 = vunpack.c.l.b16 %v10106
      %v10123 = vunpack.c.l.b16 %v10107
      %v10124 = vunpack.c.l.b16 %v10108
      %v10125 = vunpack.c.l.b16 %v10109
      %v10126 = vunpack.c.l.b16 %v10110
      %v10127 = vunpack.c.l.b16 %v10111
      %v10128 = vunpack.c.l.b16 %v10112
      %v10129 = vunpack.c.l.b16 %v10113
      %v10130 = vunpack.c.l.b16 %v10114
      %v10131 = vunpack.c.l.b16 %v10115
      %v10132 = vrot.slane %v10117, 7
      %v10133 = vsel %vm7321, %v10132, %v10116
      %v10134 = vrot.slane %v10118, 6
      %v10135 = vsel %vm7324, %v10134, %v10133
      %v10136 = vrot.slane %v10119, 5
      %v10137 = vsel %vm7327, %v10136, %v10135
      %v10138 = vrot.slane %v10121, 7
      %v10139 = vsel %vm7321, %v10138, %v10120
      %v10140 = vrot.slane %v10122, 6
      %v10141 = vsel %vm7324, %v10140, %v10139
      %v10142 = vrot.slane %v10123, 5
      %v10143 = vsel %vm7327, %v10142, %v10141
      %v10144 = vrot.slane %v10125, 7
      %v10145 = vsel %vm7321, %v10144, %v10124
      %v10146 = vrot.slane %v10126, 6
      %v10147 = vsel %vm7324, %v10146, %v10145
      %v10148 = vrot.slane %v10127, 5
      %v10149 = vsel %vm7327, %v10148, %v10147
      %v10150 = vrot.slane %v10129, 7
      %v10151 = vsel %vm7321, %v10150, %v10128
      %v10152 = vrot.slane %v10130, 6
      %v10153 = vsel %vm7324, %v10152, %v10151
      %v10154 = vrot.slane %v10131, 5
      %v10155 = vsel %vm7327, %v10154, %v10153
      %v10156 = vpack.c.b16 %v10137, %v10137
      %v10157 = vpack.c.b16 %v10143, %v10143
      %v10158 = vpack.c.b16 %v10149, %v10149
      %v10159 = vpack.c.b16 %v10155, %v10155
      %s10164 = scalar_lea.vmem [#allocation4], 12
      %10165 = vst.msk [vmem:[%s10164 + $0x8] sm:$0x3] %vm9790, %v10156
      %10166 = vst.msk [vmem:[%s10164 + $0x14] sm:$0x3] %vm9790, %v10157
      %10167 = vst.msk [vmem:[%s10164 + $0x20] sm:$0x3] %vm9790, %v10158
      %10168 = vst.msk [vmem:[%s10164 + $0x2c] sm:$0x3] %vm9790, %v10159
      %v10169 = vld [vmem:[#allocation4 + $0x4] sm:$0x8]
      %v10170 = vld [vmem:[#allocation4 + $0x8] sm:$0x3]
      %v10171 = vld [vmem:[#allocation4 + $0x10] sm:$0x8]
      %v10172 = vld [vmem:[#allocation4 + $0x14] sm:$0x3]
      %v10173 = vld [vmem:[#allocation4 + $0x1c] sm:$0x8]
      %v10174 = vld [vmem:[#allocation4 + $0x20] sm:$0x3]
      %v10175 = vld [vmem:[#allocation4 + $0x28] sm:$0x8]
      %v10176 = vld [vmem:[#allocation4 + $0x2c] sm:$0x3]
      %v10177 = vld [vmem:[#allocation4 + $0x8] sm:$0x7]
      %v10178 = vld [vmem:[#allocation4 + $0x14] sm:$0x7]
      %v10179 = vld [vmem:[#allocation4 + $0x20] sm:$0x7]
      %v10180 = vld [vmem:[#allocation4 + $0x2c] sm:$0x7]
      %v10181 = vld [vmem:[%s10164 + $0x4] sm:$0x8]
      %v10182 = vld [vmem:[%s10164 + $0x8] sm:$0x3]
      %v10183 = vld [vmem:[%s10164 + $0x10] sm:$0x8]
      %v10184 = vld [vmem:[%s10164 + $0x14] sm:$0x3]
      %v10185 = vld [vmem:[%s10164 + $0x1c] sm:$0x8]
      %v10186 = vld [vmem:[%s10164 + $0x20] sm:$0x3]
      %v10187 = vld [vmem:[%s10164 + $0x28] sm:$0x8]
      %v10188 = vld [vmem:[%s10164 + $0x2c] sm:$0x3]
      %v10189 = vld [vmem:[%s10164 + $0x8] sm:$0x7]
      %v10190 = vld [vmem:[%s10164 + $0x14] sm:$0x7]
      %v10191 = vld [vmem:[%s10164 + $0x20] sm:$0x7]
      %v10192 = vld [vmem:[%s10164 + $0x2c] sm:$0x7]
      %s10193 = scalar_lea.vmem [#allocation4], 24
      %v10194 = vld [vmem:[%s10193 + $0x4] sm:$0x8]
      %v10195 = vld [vmem:[%s10193 + $0x8] sm:$0x3]
      %v10196 = vld [vmem:[%s10193 + $0x10] sm:$0x8]
      %v10197 = vld [vmem:[%s10193 + $0x14] sm:$0x3]
      %v10198 = vld [vmem:[%s10193 + $0x1c] sm:$0x8]
      %v10199 = vld [vmem:[%s10193 + $0x20] sm:$0x3]
      %v10200 = vld [vmem:[%s10193 + $0x28] sm:$0x8]
      %v10201 = vld [vmem:[%s10193 + $0x2c] sm:$0x3]
      %v10202 = vld [vmem:[%s10193 + $0x8] sm:$0x7]
      %v10203 = vld [vmem:[%s10193 + $0x14] sm:$0x7]
      %v10204 = vld [vmem:[%s10193 + $0x20] sm:$0x7]
      %v10205 = vld [vmem:[%s10193 + $0x2c] sm:$0x7]
      %v10214 = vunpack.c.l.b16 %v10169
      %v10215 = vunpack.c.l.b16 %v10170
      %v10216 = vunpack.c.l.b16 %v10171
      %v10217 = vunpack.c.l.b16 %v10172
      %v10218 = vunpack.c.l.b16 %v10173
      %v10219 = vunpack.c.l.b16 %v10174
      %v10220 = vunpack.c.l.b16 %v10175
      %v10221 = vunpack.c.l.b16 %v10176
      %v10222 = vpack.c.b16 %v10215, %v10214
      %v10223 = vpack.c.b16 %v10217, %v10216
      %v10224 = vpack.c.b16 %v10219, %v10218
      %v10225 = vpack.c.b16 %v10221, %v10220
      %v10226 = vpack.c.b16 %v10215, %v10215
      %v10227 = vpack.c.b16 %v10217, %v10217
      %v10228 = vpack.c.b16 %v10219, %v10219
      %v10229 = vpack.c.b16 %v10221, %v10221
      %v10231 = vshrl.u32 %v10226, 16
      %v10233 = vrot.slane %v10231, 4
      %v10234 = vshll.u32 %v10226, 16
      %v10236 = vrot.slane %v10234, 5
      %v10237 = vor.u32 %v10233, %v10236
      %v10239 = vshrl.u32 %v10227, 16
      %v10241 = vrot.slane %v10239, 4
      %v10242 = vshll.u32 %v10227, 16
      %v10244 = vrot.slane %v10242, 5
      %v10245 = vor.u32 %v10241, %v10244
      %v10247 = vshrl.u32 %v10228, 16
      %v10249 = vrot.slane %v10247, 4
      %v10250 = vshll.u32 %v10228, 16
      %v10252 = vrot.slane %v10250, 5
      %v10253 = vor.u32 %v10249, %v10252
      %v10255 = vshrl.u32 %v10229, 16
      %v10257 = vrot.slane %v10255, 4
      %v10258 = vshll.u32 %v10229, 16
      %v10260 = vrot.slane %v10258, 5
      %v10261 = vor.u32 %v10257, %v10260
      %v10266 = vunpack.c.l.b16 %v10177
      %v10267 = vunpack.c.l.b16 %v10178
      %v10268 = vunpack.c.l.b16 %v10179
      %v10269 = vunpack.c.l.b16 %v10180
      %v10270 = vpack.c.b16 %v10266, %v10266
      %v10271 = vpack.c.b16 %v10267, %v10267
      %v10272 = vpack.c.b16 %v10268, %v10268
      %v10273 = vpack.c.b16 %v10269, %v10269
      %v10274 = vrot.slane %v10270, 5
      %v10275 = vrot.slane %v10271, 5
      %v10276 = vrot.slane %v10272, 5
      %v10277 = vrot.slane %v10273, 5
      %v10286 = vunpack.c.l.b16 %v10181
      %v10287 = vunpack.c.l.b16 %v10182
      %v10288 = vunpack.c.l.b16 %v10183
      %v10289 = vunpack.c.l.b16 %v10184
      %v10290 = vunpack.c.l.b16 %v10185
      %v10291 = vunpack.c.l.b16 %v10186
      %v10292 = vunpack.c.l.b16 %v10187
      %v10293 = vunpack.c.l.b16 %v10188
      %v10294 = vpack.c.b16 %v10287, %v10286
      %v10295 = vpack.c.b16 %v10289, %v10288
      %v10296 = vpack.c.b16 %v10291, %v10290
      %v10297 = vpack.c.b16 %v10293, %v10292
      %v10298 = vpack.c.b16 %v10287, %v10287
      %v10299 = vpack.c.b16 %v10289, %v10289
      %v10300 = vpack.c.b16 %v10291, %v10291
      %v10301 = vpack.c.b16 %v10293, %v10293
      %v10303 = vshrl.u32 %v10298, 16
      %v10305 = vrot.slane %v10303, 4
      %v10306 = vshll.u32 %v10298, 16
      %v10308 = vrot.slane %v10306, 5
      %v10309 = vor.u32 %v10305, %v10308
      %v10311 = vshrl.u32 %v10299, 16
      %v10313 = vrot.slane %v10311, 4
      %v10314 = vshll.u32 %v10299, 16
      %v10316 = vrot.slane %v10314, 5
      %v10317 = vor.u32 %v10313, %v10316
      %v10319 = vshrl.u32 %v10300, 16
      %v10321 = vrot.slane %v10319, 4
      %v10322 = vshll.u32 %v10300, 16
      %v10324 = vrot.slane %v10322, 5
      %v10325 = vor.u32 %v10321, %v10324
      %v10327 = vshrl.u32 %v10301, 16
      %v10329 = vrot.slane %v10327, 4
      %v10330 = vshll.u32 %v10301, 16
      %v10332 = vrot.slane %v10330, 5
      %v10333 = vor.u32 %v10329, %v10332
      %v10338 = vunpack.c.l.b16 %v10189
      %v10339 = vunpack.c.l.b16 %v10190
      %v10340 = vunpack.c.l.b16 %v10191
      %v10341 = vunpack.c.l.b16 %v10192
      %v10342 = vpack.c.b16 %v10338, %v10338
      %v10343 = vpack.c.b16 %v10339, %v10339
      %v10344 = vpack.c.b16 %v10340, %v10340
      %v10345 = vpack.c.b16 %v10341, %v10341
      %v10346 = vrot.slane %v10342, 5
      %v10347 = vrot.slane %v10343, 5
      %v10348 = vrot.slane %v10344, 5
      %v10349 = vrot.slane %v10345, 5
      %v10358 = vunpack.c.l.b16 %v10194
      %v10359 = vunpack.c.l.b16 %v10195
      %v10360 = vunpack.c.l.b16 %v10196
      %v10361 = vunpack.c.l.b16 %v10197
      %v10362 = vunpack.c.l.b16 %v10198
      %v10363 = vunpack.c.l.b16 %v10199
      %v10364 = vunpack.c.l.b16 %v10200
      %v10365 = vunpack.c.l.b16 %v10201
      %v10366 = vpack.c.b16 %v10359, %v10358
      %v10367 = vpack.c.b16 %v10361, %v10360
      %v10368 = vpack.c.b16 %v10363, %v10362
      %v10369 = vpack.c.b16 %v10365, %v10364
      %v10370 = vpack.c.b16 %v10359, %v10359
      %v10371 = vpack.c.b16 %v10361, %v10361
      %v10372 = vpack.c.b16 %v10363, %v10363
      %v10373 = vpack.c.b16 %v10365, %v10365
      %v10375 = vshrl.u32 %v10370, 16
      %v10377 = vrot.slane %v10375, 4
      %v10378 = vshll.u32 %v10370, 16
      %v10380 = vrot.slane %v10378, 5
      %v10381 = vor.u32 %v10377, %v10380
      %v10383 = vshrl.u32 %v10371, 16
      %v10385 = vrot.slane %v10383, 4
      %v10386 = vshll.u32 %v10371, 16
      %v10388 = vrot.slane %v10386, 5
      %v10389 = vor.u32 %v10385, %v10388
      %v10391 = vshrl.u32 %v10372, 16
      %v10393 = vrot.slane %v10391, 4
      %v10394 = vshll.u32 %v10372, 16
      %v10396 = vrot.slane %v10394, 5
      %v10397 = vor.u32 %v10393, %v10396
      %v10399 = vshrl.u32 %v10373, 16
      %v10401 = vrot.slane %v10399, 4
      %v10402 = vshll.u32 %v10373, 16
      %v10404 = vrot.slane %v10402, 5
      %v10405 = vor.u32 %v10401, %v10404
      %v10410 = vunpack.c.l.b16 %v10202
      %v10411 = vunpack.c.l.b16 %v10203
      %v10412 = vunpack.c.l.b16 %v10204
      %v10413 = vunpack.c.l.b16 %v10205
      %v10414 = vpack.c.b16 %v10410, %v10410
      %v10415 = vpack.c.b16 %v10411, %v10411
      %v10416 = vpack.c.b16 %v10412, %v10412
      %v10417 = vpack.c.b16 %v10413, %v10413
      %v10418 = vrot.slane %v10414, 5
      %v10419 = vrot.slane %v10415, 5
      %v10420 = vrot.slane %v10416, 5
      %v10421 = vrot.slane %v10417, 5
      %v10422 = vcombine.low %v10222, %v10237
      %v10423 = vcombine.high %v10222, %v10237
      %v10424 = vcombine.low %v10274, %v10294
      %v10425 = vcombine.high %v10274, %v10294
      %v10427 = vunpack.c.l.s4 1983009808
      %v10428 = vunpack.c.0.s8 %v10427
      %v10429 = vlaneseq
      %v10430 = vshrl.u32 %v10429, 7
      %v10431 = vsub.s32 %v10428, %v10430
      %v10432 = vrot.slane %v10422, %v10431
      %v10434 = vunpack.c.l.s4 1983009808
      %v10435 = vunpack.c.0.s8 %v10434
      %v10436 = vlaneseq
      %v10437 = vshrl.u32 %v10436, 7
      %v10438 = vsub.s32 %v10435, %v10437
      %v10439 = vrot.slane %v10423, %v10438
      %v10441 = vunpack.c.l.s4 1983009808
      %v10442 = vunpack.c.0.s8 %v10441
      %v10443 = vlaneseq
      %v10444 = vshrl.u32 %v10443, 7
      %v10445 = vsub.s32 %v10442, %v10444
      %v10446 = vrot.slane %v10424, %v10445
      %v10448 = vunpack.c.l.s4 1983009808
      %v10449 = vunpack.c.0.s8 %v10448
      %v10450 = vlaneseq
      %v10451 = vshrl.u32 %v10450, 7
      %v10452 = vsub.s32 %v10449, %v10451
      %v10453 = vrot.slane %v10425, %v10452
      %v10454 = vcombine.high %v10432, %v10446
      %v10455 = vcombine.low %v10439, %v10453
      %v10456 = vcombine.low %v10309, %v10346
      %v10457 = vcombine.high %v10309, %v10346
      %v10458 = vcombine.low %v10366, %v10381
      %v10459 = vcombine.high %v10366, %v10381
      %v10461 = vunpack.c.l.s4 1983009808
      %v10462 = vunpack.c.0.s8 %v10461
      %v10463 = vlaneseq
      %v10464 = vshrl.u32 %v10463, 7
      %v10465 = vsub.s32 %v10462, %v10464
      %v10466 = vrot.slane %v10456, %v10465
      %v10468 = vunpack.c.l.s4 1983009808
      %v10469 = vunpack.c.0.s8 %v10468
      %v10470 = vlaneseq
      %v10471 = vshrl.u32 %v10470, 7
      %v10472 = vsub.s32 %v10469, %v10471
      %v10473 = vrot.slane %v10457, %v10472
      %v10475 = vunpack.c.l.s4 1983009808
      %v10476 = vunpack.c.0.s8 %v10475
      %v10477 = vlaneseq
      %v10478 = vshrl.u32 %v10477, 7
      %v10479 = vsub.s32 %v10476, %v10478
      %v10480 = vrot.slane %v10458, %v10479
      %v10482 = vunpack.c.l.s4 1983009808
      %v10483 = vunpack.c.0.s8 %v10482
      %v10484 = vlaneseq
      %v10485 = vshrl.u32 %v10484, 7
      %v10486 = vsub.s32 %v10483, %v10485
      %v10487 = vrot.slane %v10459, %v10486
      %v10488 = vcombine.high %v10466, %v10480
      %v10489 = vcombine.low %v10473, %v10487
      %v10490 = vcombine.high %v10418, %v10418
      %v10492 = vunpack.c.l.s4 1983009808
      %v10493 = vunpack.c.0.s8 %v10492
      %v10494 = vlaneseq
      %v10495 = vshrl.u32 %v10494, 7
      %v10496 = vsub.s32 %v10493, %v10495
      %v10497 = vrot.slane %v10418, %v10496
      %v10499 = vunpack.c.l.s4 1983009808
      %v10500 = vunpack.c.0.s8 %v10499
      %v10501 = vlaneseq
      %v10502 = vshrl.u32 %v10501, 7
      %v10503 = vsub.s32 %v10500, %v10502
      %v10504 = vrot.slane %v10490, %v10503
      %v10505 = vcombine.high %v10497, %v10497
      %v10506 = vcombine.low %v10223, %v10245
      %v10507 = vcombine.high %v10223, %v10245
      %v10508 = vcombine.low %v10275, %v10295
      %v10509 = vcombine.high %v10275, %v10295
      %v10511 = vunpack.c.l.s4 1983009808
      %v10512 = vunpack.c.0.s8 %v10511
      %v10513 = vlaneseq
      %v10514 = vshrl.u32 %v10513, 7
      %v10515 = vsub.s32 %v10512, %v10514
      %v10516 = vrot.slane %v10506, %v10515
      %v10518 = vunpack.c.l.s4 1983009808
      %v10519 = vunpack.c.0.s8 %v10518
      %v10520 = vlaneseq
      %v10521 = vshrl.u32 %v10520, 7
      %v10522 = vsub.s32 %v10519, %v10521
      %v10523 = vrot.slane %v10507, %v10522
      %v10525 = vunpack.c.l.s4 1983009808
      %v10526 = vunpack.c.0.s8 %v10525
      %v10527 = vlaneseq
      %v10528 = vshrl.u32 %v10527, 7
      %v10529 = vsub.s32 %v10526, %v10528
      %v10530 = vrot.slane %v10508, %v10529
      %v10532 = vunpack.c.l.s4 1983009808
      %v10533 = vunpack.c.0.s8 %v10532
      %v10534 = vlaneseq
      %v10535 = vshrl.u32 %v10534, 7
      %v10536 = vsub.s32 %v10533, %v10535
      %v10537 = vrot.slane %v10509, %v10536
      %v10538 = vcombine.high %v10516, %v10530
      %v10539 = vcombine.low %v10523, %v10537
      %v10540 = vcombine.low %v10317, %v10347
      %v10541 = vcombine.high %v10317, %v10347
      %v10542 = vcombine.low %v10367, %v10389
      %v10543 = vcombine.high %v10367, %v10389
      %v10545 = vunpack.c.l.s4 1983009808
      %v10546 = vunpack.c.0.s8 %v10545
      %v10547 = vlaneseq
      %v10548 = vshrl.u32 %v10547, 7
      %v10549 = vsub.s32 %v10546, %v10548
      %v10550 = vrot.slane %v10540, %v10549
      %v10552 = vunpack.c.l.s4 1983009808
      %v10553 = vunpack.c.0.s8 %v10552
      %v10554 = vlaneseq
      %v10555 = vshrl.u32 %v10554, 7
      %v10556 = vsub.s32 %v10553, %v10555
      %v10557 = vrot.slane %v10541, %v10556
      %v10559 = vunpack.c.l.s4 1983009808
      %v10560 = vunpack.c.0.s8 %v10559
      %v10561 = vlaneseq
      %v10562 = vshrl.u32 %v10561, 7
      %v10563 = vsub.s32 %v10560, %v10562
      %v10564 = vrot.slane %v10542, %v10563
      %v10566 = vunpack.c.l.s4 1983009808
      %v10567 = vunpack.c.0.s8 %v10566
      %v10568 = vlaneseq
      %v10569 = vshrl.u32 %v10568, 7
      %v10570 = vsub.s32 %v10567, %v10569
      %v10571 = vrot.slane %v10543, %v10570
      %v10572 = vcombine.high %v10550, %v10564
      %v10573 = vcombine.low %v10557, %v10571
      %v10574 = vcombine.high %v10419, %v10419
      %v10576 = vunpack.c.l.s4 1983009808
      %v10577 = vunpack.c.0.s8 %v10576
      %v10578 = vlaneseq
      %v10579 = vshrl.u32 %v10578, 7
      %v10580 = vsub.s32 %v10577, %v10579
      %v10581 = vrot.slane %v10419, %v10580
      %v10583 = vunpack.c.l.s4 1983009808
      %v10584 = vunpack.c.0.s8 %v10583
      %v10585 = vlaneseq
      %v10586 = vshrl.u32 %v10585, 7
      %v10587 = vsub.s32 %v10584, %v10586
      %v10588 = vrot.slane %v10574, %v10587
      %v10589 = vcombine.high %v10581, %v10581
      %v10590 = vcombine.low %v10224, %v10253
      %v10591 = vcombine.high %v10224, %v10253
      %v10592 = vcombine.low %v10276, %v10296
      %v10593 = vcombine.high %v10276, %v10296
      %v10595 = vunpack.c.l.s4 1983009808
      %v10596 = vunpack.c.0.s8 %v10595
      %v10597 = vlaneseq
      %v10598 = vshrl.u32 %v10597, 7
      %v10599 = vsub.s32 %v10596, %v10598
      %v10600 = vrot.slane %v10590, %v10599
      %v10602 = vunpack.c.l.s4 1983009808
      %v10603 = vunpack.c.0.s8 %v10602
      %v10604 = vlaneseq
      %v10605 = vshrl.u32 %v10604, 7
      %v10606 = vsub.s32 %v10603, %v10605
      %v10607 = vrot.slane %v10591, %v10606
      %v10609 = vunpack.c.l.s4 1983009808
      %v10610 = vunpack.c.0.s8 %v10609
      %v10611 = vlaneseq
      %v10612 = vshrl.u32 %v10611, 7
      %v10613 = vsub.s32 %v10610, %v10612
      %v10614 = vrot.slane %v10592, %v10613
      %v10616 = vunpack.c.l.s4 1983009808
      %v10617 = vunpack.c.0.s8 %v10616
      %v10618 = vlaneseq
      %v10619 = vshrl.u32 %v10618, 7
      %v10620 = vsub.s32 %v10617, %v10619
      %v10621 = vrot.slane %v10593, %v10620
      %v10622 = vcombine.high %v10600, %v10614
      %v10623 = vcombine.low %v10607, %v10621
      %v10624 = vcombine.low %v10325, %v10348
      %v10625 = vcombine.high %v10325, %v10348
      %v10626 = vcombine.low %v10368, %v10397
      %v10627 = vcombine.high %v10368, %v10397
      %v10629 = vunpack.c.l.s4 1983009808
      %v10630 = vunpack.c.0.s8 %v10629
      %v10631 = vlaneseq
      %v10632 = vshrl.u32 %v10631, 7
      %v10633 = vsub.s32 %v10630, %v10632
      %v10634 = vrot.slane %v10624, %v10633
      %v10636 = vunpack.c.l.s4 1983009808
      %v10637 = vunpack.c.0.s8 %v10636
      %v10638 = vlaneseq
      %v10639 = vshrl.u32 %v10638, 7
      %v10640 = vsub.s32 %v10637, %v10639
      %v10641 = vrot.slane %v10625, %v10640
      %v10643 = vunpack.c.l.s4 1983009808
      %v10644 = vunpack.c.0.s8 %v10643
      %v10645 = vlaneseq
      %v10646 = vshrl.u32 %v10645, 7
      %v10647 = vsub.s32 %v10644, %v10646
      %v10648 = vrot.slane %v10626, %v10647
      %v10650 = vunpack.c.l.s4 1983009808
      %v10651 = vunpack.c.0.s8 %v10650
      %v10652 = vlaneseq
      %v10653 = vshrl.u32 %v10652, 7
      %v10654 = vsub.s32 %v10651, %v10653
      %v10655 = vrot.slane %v10627, %v10654
      %v10656 = vcombine.high %v10634, %v10648
      %v10657 = vcombine.low %v10641, %v10655
      %v10658 = vcombine.high %v10420, %v10420
      %v10660 = vunpack.c.l.s4 1983009808
      %v10661 = vunpack.c.0.s8 %v10660
      %v10662 = vlaneseq
      %v10663 = vshrl.u32 %v10662, 7
      %v10664 = vsub.s32 %v10661, %v10663
      %v10665 = vrot.slane %v10420, %v10664
      %v10667 = vunpack.c.l.s4 1983009808
      %v10668 = vunpack.c.0.s8 %v10667
      %v10669 = vlaneseq
      %v10670 = vshrl.u32 %v10669, 7
      %v10671 = vsub.s32 %v10668, %v10670
      %v10672 = vrot.slane %v10658, %v10671
      %v10673 = vcombine.high %v10665, %v10665
      %v10674 = vcombine.low %v10225, %v10261
      %v10675 = vcombine.high %v10225, %v10261
      %v10676 = vcombine.low %v10277, %v10297
      %v10677 = vcombine.high %v10277, %v10297
      %v10679 = vunpack.c.l.s4 1983009808
      %v10680 = vunpack.c.0.s8 %v10679
      %v10681 = vlaneseq
      %v10682 = vshrl.u32 %v10681, 7
      %v10683 = vsub.s32 %v10680, %v10682
      %v10684 = vrot.slane %v10674, %v10683
      %v10686 = vunpack.c.l.s4 1983009808
      %v10687 = vunpack.c.0.s8 %v10686
      %v10688 = vlaneseq
      %v10689 = vshrl.u32 %v10688, 7
      %v10690 = vsub.s32 %v10687, %v10689
      %v10691 = vrot.slane %v10675, %v10690
      %v10693 = vunpack.c.l.s4 1983009808
      %v10694 = vunpack.c.0.s8 %v10693
      %v10695 = vlaneseq
      %v10696 = vshrl.u32 %v10695, 7
      %v10697 = vsub.s32 %v10694, %v10696
      %v10698 = vrot.slane %v10676, %v10697
      %v10700 = vunpack.c.l.s4 1983009808
      %v10701 = vunpack.c.0.s8 %v10700
      %v10702 = vlaneseq
      %v10703 = vshrl.u32 %v10702, 7
      %v10704 = vsub.s32 %v10701, %v10703
      %v10705 = vrot.slane %v10677, %v10704
      %v10706 = vcombine.high %v10684, %v10698
      %v10707 = vcombine.low %v10691, %v10705
      %v10708 = vcombine.low %v10333, %v10349
      %v10709 = vcombine.high %v10333, %v10349
      %v10710 = vcombine.low %v10369, %v10405
      %v10711 = vcombine.high %v10369, %v10405
      %v10713 = vunpack.c.l.s4 1983009808
      %v10714 = vunpack.c.0.s8 %v10713
      %v10715 = vlaneseq
      %v10716 = vshrl.u32 %v10715, 7
      %v10717 = vsub.s32 %v10714, %v10716
      %v10718 = vrot.slane %v10708, %v10717
      %v10720 = vunpack.c.l.s4 1983009808
      %v10721 = vunpack.c.0.s8 %v10720
      %v10722 = vlaneseq
      %v10723 = vshrl.u32 %v10722, 7
      %v10724 = vsub.s32 %v10721, %v10723
      %v10725 = vrot.slane %v10709, %v10724
      %v10727 = vunpack.c.l.s4 1983009808
      %v10728 = vunpack.c.0.s8 %v10727
      %v10729 = vlaneseq
      %v10730 = vshrl.u32 %v10729, 7
      %v10731 = vsub.s32 %v10728, %v10730
      %v10732 = vrot.slane %v10710, %v10731
      %v10734 = vunpack.c.l.s4 1983009808
      %v10735 = vunpack.c.0.s8 %v10734
      %v10736 = vlaneseq
      %v10737 = vshrl.u32 %v10736, 7
      %v10738 = vsub.s32 %v10735, %v10737
      %v10739 = vrot.slane %v10711, %v10738
      %v10740 = vcombine.high %v10718, %v10732
      %v10741 = vcombine.low %v10725, %v10739
      %v10742 = vcombine.high %v10421, %v10421
      %v10744 = vunpack.c.l.s4 1983009808
      %v10745 = vunpack.c.0.s8 %v10744
      %v10746 = vlaneseq
      %v10747 = vshrl.u32 %v10746, 7
      %v10748 = vsub.s32 %v10745, %v10747
      %v10749 = vrot.slane %v10421, %v10748
      %v10751 = vunpack.c.l.s4 1983009808
      %v10752 = vunpack.c.0.s8 %v10751
      %v10753 = vlaneseq
      %v10754 = vshrl.u32 %v10753, 7
      %v10755 = vsub.s32 %v10752, %v10754
      %v10756 = vrot.slane %v10742, %v10755
      %v10757 = vcombine.high %v10749, %v10749
      %vm10758 = vsmask.f32 2312
      %vm10759 = vmor %vm639, %vm10758
      %vm10760 = vmor %vm10759, %vm8122
      %vm10761 = vsmask.f32 6424
      %vm10762 = vmor %vm10760, %vm10761
      %v10764 = vshrl.u32 %v10454, 16
      %v10766 = vrot.slane %v10764, 7
      %v10767 = vrot.slane %v10766, 2
      %v10769 = vshrl.u32 %v10455, 16
      %v10771 = vrot.slane %v10769, 7
      %v10772 = vshll.u32 %v10455, 16
      %v10774 = vor.u32 %v10771, %v10772
      %v10775 = vsel %vm10762, %v10767, %v10774
      %v10777 = vshrl.u32 %v10488, 16
      %v10779 = vrot.slane %v10777, 7
      %v10780 = vrot.slane %v10779, 2
      %v10782 = vshrl.u32 %v10489, 16
      %v10784 = vrot.slane %v10782, 7
      %v10785 = vshll.u32 %v10489, 16
      %v10787 = vor.u32 %v10784, %v10785
      %v10788 = vsel %vm10762, %v10780, %v10787
      %v10790 = vshrl.u32 %v10505, 16
      %v10792 = vrot.slane %v10790, 7
      %v10793 = vrot.slane %v10792, 2
      %v10795 = vshrl.u32 %v10504, 16
      %v10797 = vrot.slane %v10795, 7
      %v10798 = vshll.u32 %v10504, 16
      %v10800 = vor.u32 %v10797, %v10798
      %v10801 = vsel %vm10762, %v10793, %v10800
      %v10803 = vshrl.u32 %v10538, 16
      %v10805 = vrot.slane %v10803, 7
      %v10806 = vrot.slane %v10805, 2
      %v10808 = vshrl.u32 %v10539, 16
      %v10810 = vrot.slane %v10808, 7
      %v10811 = vshll.u32 %v10539, 16
      %v10813 = vor.u32 %v10810, %v10811
      %v10814 = vsel %vm10762, %v10806, %v10813
      %v10816 = vshrl.u32 %v10572, 16
      %v10818 = vrot.slane %v10816, 7
      %v10819 = vrot.slane %v10818, 2
      %v10821 = vshrl.u32 %v10573, 16
      %v10823 = vrot.slane %v10821, 7
      %v10824 = vshll.u32 %v10573, 16
      %v10826 = vor.u32 %v10823, %v10824
      %v10827 = vsel %vm10762, %v10819, %v10826
      %v10829 = vshrl.u32 %v10589, 16
      %v10831 = vrot.slane %v10829, 7
      %v10832 = vrot.slane %v10831, 2
      %v10834 = vshrl.u32 %v10588, 16
      %v10836 = vrot.slane %v10834, 7
      %v10837 = vshll.u32 %v10588, 16
      %v10839 = vor.u32 %v10836, %v10837
      %v10840 = vsel %vm10762, %v10832, %v10839
      %v10842 = vshrl.u32 %v10622, 16
      %v10844 = vrot.slane %v10842, 7
      %v10845 = vrot.slane %v10844, 2
      %v10847 = vshrl.u32 %v10623, 16
      %v10849 = vrot.slane %v10847, 7
      %v10850 = vshll.u32 %v10623, 16
      %v10852 = vor.u32 %v10849, %v10850
      %v10853 = vsel %vm10762, %v10845, %v10852
      %v10855 = vshrl.u32 %v10656, 16
      %v10857 = vrot.slane %v10855, 7
      %v10858 = vrot.slane %v10857, 2
      %v10860 = vshrl.u32 %v10657, 16
      %v10862 = vrot.slane %v10860, 7
      %v10863 = vshll.u32 %v10657, 16
      %v10865 = vor.u32 %v10862, %v10863
      %v10866 = vsel %vm10762, %v10858, %v10865
      %v10868 = vshrl.u32 %v10673, 16
      %v10870 = vrot.slane %v10868, 7
      %v10871 = vrot.slane %v10870, 2
      %v10873 = vshrl.u32 %v10672, 16
      %v10875 = vrot.slane %v10873, 7
      %v10876 = vshll.u32 %v10672, 16
      %v10878 = vor.u32 %v10875, %v10876
      %v10879 = vsel %vm10762, %v10871, %v10878
      %v10881 = vshrl.u32 %v10706, 16
      %v10883 = vrot.slane %v10881, 7
      %v10884 = vrot.slane %v10883, 2
      %v10886 = vshrl.u32 %v10707, 16
      %v10888 = vrot.slane %v10886, 7
      %v10889 = vshll.u32 %v10707, 16
      %v10891 = vor.u32 %v10888, %v10889
      %v10892 = vsel %vm10762, %v10884, %v10891
      %v10894 = vshrl.u32 %v10740, 16
      %v10896 = vrot.slane %v10894, 7
      %v10897 = vrot.slane %v10896, 2
      %v10899 = vshrl.u32 %v10741, 16
      %v10901 = vrot.slane %v10899, 7
      %v10902 = vshll.u32 %v10741, 16
      %v10904 = vor.u32 %v10901, %v10902
      %v10905 = vsel %vm10762, %v10897, %v10904
      %v10907 = vshrl.u32 %v10757, 16
      %v10909 = vrot.slane %v10907, 7
      %v10910 = vrot.slane %v10909, 2
      %v10912 = vshrl.u32 %v10756, 16
      %v10914 = vrot.slane %v10912, 7
      %v10915 = vshll.u32 %v10756, 16
      %v10917 = vor.u32 %v10914, %v10915
      %v10918 = vsel %vm10762, %v10910, %v10917
      %v10919 = vld [vmem:[%s9] sm:$0xf]
      %v10920 = vld [vmem:[%s9 + $0x4] sm:$0xf]
      %v10921 = vld [vmem:[%s9 + $0x8] sm:$0xf]
      %v10922 = vld [vmem:[%s9 + $0xc] sm:$0xf]
      %v10923 = vld [vmem:[%s9 + $0x10] sm:$0xf]
      %v10924 = vld [vmem:[%s9 + $0x14] sm:$0xf]
      %v10925 = vld [vmem:[%s9 + $0x18] sm:$0xf]
      %v10926 = vld [vmem:[%s9 + $0x1c] sm:$0xf]
      %v10927 = vld [vmem:[%s9 + $0x20] sm:$0xf]
      %v10928 = vld [vmem:[%s9 + $0x24] sm:$0xf]
      %v10929 = vld [vmem:[%s9 + $0x28] sm:$0xf]
      %v10930 = vld [vmem:[%s9 + $0x2c] sm:$0xf]
      %v10931 = vld [vmem:[%s9 + $0x30] sm:$0xf]
      %v10932 = vld [vmem:[%s9 + $0x34] sm:$0xf]
      %v10933 = vld [vmem:[%s9 + $0x38] sm:$0xf]
      %v10934 = vld [vmem:[%s9 + $0x3c] sm:$0xf]
      %v10935 = vld [vmem:[%s9 + $0x40] sm:$0xf]
      %v10936 = vld [vmem:[%s9 + $0x44] sm:$0xf]
      %v10937 = vld [vmem:[%s9 + $0x48] sm:$0xf]
      %v10938 = vld [vmem:[%s9 + $0x4c] sm:$0xf]
      %v10939 = vld [vmem:[%s9 + $0x50] sm:$0xf]
      %v10940 = vld [vmem:[%s9 + $0x54] sm:$0xf]
      %v10941 = vld [vmem:[%s9 + $0x58] sm:$0xf]
      %v10942 = vld [vmem:[%s9 + $0x5c] sm:$0xf]
      %v10943 = vld [vmem:[%s9 + $0x60] sm:$0xf]
      %v10944 = vld [vmem:[%s9 + $0x64] sm:$0xf]
      %v10945 = vld [vmem:[%s9 + $0x68] sm:$0xf]
      %v10946 = vld [vmem:[%s9 + $0x6c] sm:$0xf]
      %v10947 = vld [vmem:[%s9 + $0x70] sm:$0xf]
      %v10948 = vld [vmem:[%s9 + $0x74] sm:$0xf]
      %v10949 = vld [vmem:[%s9 + $0x78] sm:$0xf]
      %v10950 = vld [vmem:[%s9 + $0x7c] sm:$0xf]
      %v10951 = vld [vmem:[%s9 + $0x80] sm:$0xf]
      %v10952 = vld [vmem:[%s9 + $0x84] sm:$0xf]
      %v10953 = vld [vmem:[%s9 + $0x88] sm:$0xf]
      %v10954 = vld [vmem:[%s9 + $0x8c] sm:$0xf]
      %v10955 = vld [vmem:[%s9 + $0x90] sm:$0xf]
      %v10956 = vld [vmem:[%s9 + $0x94] sm:$0xf]
      %v10957 = vld [vmem:[%s9 + $0x98] sm:$0xf]
      %v10958 = vld [vmem:[%s9 + $0x9c] sm:$0xf]
      %v10959 = vld [vmem:[%s9 + $0xa0] sm:$0xf]
      %v10960 = vld [vmem:[%s9 + $0xa4] sm:$0xf]
      %v10961 = vld [vmem:[%s9 + $0xa8] sm:$0xf]
      %v10962 = vld [vmem:[%s9 + $0xac] sm:$0xf]
      %v10963 = vld [vmem:[%s9 + $0xb0] sm:$0xf]
      %v10964 = vld [vmem:[%s9 + $0xb4] sm:$0xf]
      %v10965 = vld [vmem:[%s9 + $0xb8] sm:$0xf]
      %v10966 = vld [vmem:[%s9 + $0xbc] sm:$0xf]
      %v10967 = vld [vmem:[%s9 + $0xc0] sm:$0xf]
      %v10968 = vld [vmem:[%s9 + $0xc4] sm:$0xf]
      %v10969 = vld [vmem:[%s9 + $0xc8] sm:$0xf]
      %v10970 = vld [vmem:[%s9 + $0xcc] sm:$0xf]
      %v10971 = vld [vmem:[%s9 + $0xd0] sm:$0xf]
      %v10972 = vld [vmem:[%s9 + $0xd4] sm:$0xf]
      %v10973 = vld [vmem:[%s9 + $0xd8] sm:$0xf]
      %v10974 = vld [vmem:[%s9 + $0xdc] sm:$0xf]
      %v10975 = vld [vmem:[%s9 + $0xe0] sm:$0xf]
      %v10976 = vld [vmem:[%s9 + $0xe4] sm:$0xf]
      %v10977 = vld [vmem:[%s9 + $0xe8] sm:$0xf]
      %v10978 = vld [vmem:[%s9 + $0xec] sm:$0xf]
      %v10979 = vld [vmem:[%s9 + $0xf0] sm:$0xf]
      %v10980 = vld [vmem:[%s9 + $0xf4] sm:$0xf]
      %v10981 = vld [vmem:[%s9 + $0xf8] sm:$0xf]
      %v10982 = vld [vmem:[%s9 + $0xfc] sm:$0xf]
      %v10983 = vld [vmem:[%s9 + $0x100] sm:$0xf]
      %v10984 = vld [vmem:[%s9 + $0x104] sm:$0xf]
      %v10985 = vld [vmem:[%s9 + $0x108] sm:$0xf]
      %v10986 = vld [vmem:[%s9 + $0x10c] sm:$0xf]
      %v10987 = vld [vmem:[%s9 + $0x110] sm:$0xf]
      %v10988 = vld [vmem:[%s9 + $0x114] sm:$0xf]
      %v10989 = vld [vmem:[%s9 + $0x118] sm:$0xf]
      %v10990 = vld [vmem:[%s9 + $0x11c] sm:$0xf]
      %v10991 = vld [vmem:[%s9 + $0x120] sm:$0xf]
      %v10992 = vld [vmem:[%s9 + $0x124] sm:$0xf]
      %v10993 = vld [vmem:[%s9 + $0x128] sm:$0xf]
      %v10994 = vld [vmem:[%s9 + $0x12c] sm:$0xf]
      %v10995 = vld [vmem:[%s9 + $0x130] sm:$0xf]
      %v10996 = vld [vmem:[%s9 + $0x134] sm:$0xf]
      %v10997 = vld [vmem:[%s9 + $0x138] sm:$0xf]
      %v10998 = vld [vmem:[%s9 + $0x13c] sm:$0xf]
      %v10999 = vld [vmem:[%s9 + $0x140] sm:$0xf]
      %v11000 = vld [vmem:[%s9 + $0x144] sm:$0xf]
      %v11001 = vld [vmem:[%s9 + $0x148] sm:$0xf]
      %v11002 = vld [vmem:[%s9 + $0x14c] sm:$0xf]
      %v11003 = vld [vmem:[%s9 + $0x150] sm:$0xf]
      %v11004 = vld [vmem:[%s9 + $0x154] sm:$0xf]
      %v11005 = vld [vmem:[%s9 + $0x158] sm:$0xf]
      %v11006 = vld [vmem:[%s9 + $0x15c] sm:$0xf]
      %v11007 = vld [vmem:[%s9 + $0x160] sm:$0xf]
      %v11008 = vld [vmem:[%s9 + $0x164] sm:$0xf]
      %v11009 = vld [vmem:[%s9 + $0x168] sm:$0xf]
      %v11010 = vld [vmem:[%s9 + $0x16c] sm:$0xf]
      %v11011 = vld [vmem:[%s9 + $0x170] sm:$0xf]
      %v11012 = vld [vmem:[%s9 + $0x174] sm:$0xf]
      %v11013 = vld [vmem:[%s9 + $0x178] sm:$0xf]
      %v11014 = vld [vmem:[%s9 + $0x17c] sm:$0xf]
      %v11015 = vld [vmem:[%s9 + $0x180] sm:$0xf]
      %v11016 = vld [vmem:[%s9 + $0x184] sm:$0xf]
      %v11017 = vld [vmem:[%s9 + $0x188] sm:$0xf]
      %v11018 = vld [vmem:[%s9 + $0x18c] sm:$0xf]
      %v11019 = vld [vmem:[%s9 + $0x190] sm:$0xf]
      %v11020 = vld [vmem:[%s9 + $0x194] sm:$0xf]
      %v11021 = vld [vmem:[%s9 + $0x198] sm:$0xf]
      %v11022 = vld [vmem:[%s9 + $0x19c] sm:$0xf]
      %v11023 = vld [vmem:[%s9 + $0x1a0] sm:$0xf]
      %v11024 = vld [vmem:[%s9 + $0x1a4] sm:$0xf]
      %v11025 = vld [vmem:[%s9 + $0x1a8] sm:$0xf]
      %v11026 = vld [vmem:[%s9 + $0x1ac] sm:$0xf]
      %v11027 = vld [vmem:[%s9 + $0x1b0] sm:$0xf]
      %v11028 = vld [vmem:[%s9 + $0x1b4] sm:$0xf]
      %v11029 = vld [vmem:[%s9 + $0x1b8] sm:$0xf]
      %v11030 = vld [vmem:[%s9 + $0x1bc] sm:$0xf]
      %v11031 = vld [vmem:[%s9 + $0x1c0] sm:$0xf]
      %v11032 = vld [vmem:[%s9 + $0x1c4] sm:$0xf]
      %v11033 = vld [vmem:[%s9 + $0x1c8] sm:$0xf]
      %v11034 = vld [vmem:[%s9 + $0x1cc] sm:$0xf]
      %v11035 = vld [vmem:[%s9 + $0x1d0] sm:$0xf]
      %v11036 = vld [vmem:[%s9 + $0x1d4] sm:$0xf]
      %v11037 = vld [vmem:[%s9 + $0x1d8] sm:$0xf]
      %v11038 = vld [vmem:[%s9 + $0x1dc] sm:$0xf]
      %v11039 = vld [vmem:[%s9 + $0x1e0] sm:$0xf]
      %v11040 = vld [vmem:[%s9 + $0x1e4] sm:$0xf]
      %v11041 = vld [vmem:[%s9 + $0x1e8] sm:$0xf]
      %v11042 = vld [vmem:[%s9 + $0x1ec] sm:$0xf]
      %v11043 = vld [vmem:[%s9 + $0x1f0] sm:$0xf]
      %v11044 = vld [vmem:[%s9 + $0x1f4] sm:$0xf]
      %v11045 = vld [vmem:[%s9 + $0x1f8] sm:$0xf]
      %v11046 = vld [vmem:[%s9 + $0x1fc] sm:$0xf]
      %v11047 = vld [vmem:[%s9 + $0x200] sm:$0xf]
      %v11048 = vld [vmem:[%s9 + $0x204] sm:$0xf]
      %v11049 = vld [vmem:[%s9 + $0x208] sm:$0xf]
      %v11050 = vld [vmem:[%s9 + $0x20c] sm:$0xf]
      %v11051 = vld [vmem:[%s9 + $0x210] sm:$0xf]
      %v11052 = vld [vmem:[%s9 + $0x214] sm:$0xf]
      %v11053 = vld [vmem:[%s9 + $0x218] sm:$0xf]
      %v11054 = vld [vmem:[%s9 + $0x21c] sm:$0xf]
      %v11055 = vld [vmem:[%s9 + $0x220] sm:$0xf]
      %v11056 = vld [vmem:[%s9 + $0x224] sm:$0xf]
      %v11057 = vld [vmem:[%s9 + $0x228] sm:$0xf]
      %v11058 = vld [vmem:[%s9 + $0x22c] sm:$0xf]
      %v11059 = vld [vmem:[%s9 + $0x230] sm:$0xf]
      %v11060 = vld [vmem:[%s9 + $0x234] sm:$0xf]
      %v11061 = vld [vmem:[%s9 + $0x238] sm:$0xf]
      %v11062 = vld [vmem:[%s9 + $0x23c] sm:$0xf]
      %v11063 = vcombine.low %v10775, %v10814
      %v11064 = vcombine.high %v10775, %v10814
      %v11065 = vcombine.low %v10853, %v10892
      %v11066 = vcombine.high %v10853, %v10892
      %v11068 = vunpack.c.l.s4 1983009808
      %v11069 = vunpack.c.0.s8 %v11068
      %v11070 = vlaneseq
      %v11071 = vshrl.u32 %v11070, 7
      %v11072 = vsub.s32 %v11069, %v11071
      %v11073 = vrot.slane %v11063, %v11072
      %v11075 = vunpack.c.l.s4 1983009808
      %v11076 = vunpack.c.0.s8 %v11075
      %v11077 = vlaneseq
      %v11078 = vshrl.u32 %v11077, 7
      %v11079 = vsub.s32 %v11076, %v11078
      %v11080 = vrot.slane %v11064, %v11079
      %v11082 = vunpack.c.l.s4 1983009808
      %v11083 = vunpack.c.0.s8 %v11082
      %v11084 = vlaneseq
      %v11085 = vshrl.u32 %v11084, 7
      %v11086 = vsub.s32 %v11083, %v11085
      %v11087 = vrot.slane %v11065, %v11086
      %v11089 = vunpack.c.l.s4 1983009808
      %v11090 = vunpack.c.0.s8 %v11089
      %v11091 = vlaneseq
      %v11092 = vshrl.u32 %v11091, 7
      %v11093 = vsub.s32 %v11090, %v11092
      %v11094 = vrot.slane %v11066, %v11093
      %v11095 = vcombine.low %v11073, %v11087
      %v11096 = vcombine.high %v11073, %v11087
      %v11097 = vcombine.low %v11080, %v11094
      %v11098 = vcombine.high %v11080, %v11094
      %v11099 = vcombine.low %v10788, %v10827
      %v11100 = vcombine.high %v10788, %v10827
      %v11101 = vcombine.low %v10866, %v10905
      %v11102 = vcombine.high %v10866, %v10905
      %v11104 = vunpack.c.l.s4 1983009808
      %v11105 = vunpack.c.0.s8 %v11104
      %v11106 = vlaneseq
      %v11107 = vshrl.u32 %v11106, 7
      %v11108 = vsub.s32 %v11105, %v11107
      %v11109 = vrot.slane %v11099, %v11108
      %v11111 = vunpack.c.l.s4 1983009808
      %v11112 = vunpack.c.0.s8 %v11111
      %v11113 = vlaneseq
      %v11114 = vshrl.u32 %v11113, 7
      %v11115 = vsub.s32 %v11112, %v11114
      %v11116 = vrot.slane %v11100, %v11115
      %v11118 = vunpack.c.l.s4 1983009808
      %v11119 = vunpack.c.0.s8 %v11118
      %v11120 = vlaneseq
      %v11121 = vshrl.u32 %v11120, 7
      %v11122 = vsub.s32 %v11119, %v11121
      %v11123 = vrot.slane %v11101, %v11122
      %v11125 = vunpack.c.l.s4 1983009808
      %v11126 = vunpack.c.0.s8 %v11125
      %v11127 = vlaneseq
      %v11128 = vshrl.u32 %v11127, 7
      %v11129 = vsub.s32 %v11126, %v11128
      %v11130 = vrot.slane %v11102, %v11129
      %v11131 = vcombine.low %v11109, %v11123
      %v11132 = vcombine.high %v11109, %v11123
      %v11133 = vcombine.low %v11116, %v11130
      %v11134 = vcombine.high %v11116, %v11130
      %v11135 = vcombine.low %v10801, %v10840
      %v11136 = vcombine.low %v10879, %v10918
      %v11138 = vunpack.c.l.s4 1983009808
      %v11139 = vunpack.c.0.s8 %v11138
      %v11140 = vlaneseq
      %v11141 = vshrl.u32 %v11140, 7
      %v11142 = vsub.s32 %v11139, %v11141
      %v11143 = vrot.slane %v11135, %v11142
      %v11145 = vunpack.c.l.s4 1983009808
      %v11146 = vunpack.c.0.s8 %v11145
      %v11147 = vlaneseq
      %v11148 = vshrl.u32 %v11147, 7
      %v11149 = vsub.s32 %v11146, %v11148
      %v11150 = vrot.slane %v11136, %v11149
      %v11151 = vcombine.low %v11143, %v11150
      %v11305 = vunpack.c.l.b16 %v10919
      %v11306 = vunpack.c.l.b16 %v10920
      %v11307 = vunpack.c.l.b16 %v10921
      %v11308 = vunpack.c.l.b16 %v10922
      %v11309 = vunpack.c.l.b16 %v10923
      %v11310 = vunpack.c.l.b16 %v10924
      %v11311 = vunpack.c.l.b16 %v10925
      %v11312 = vunpack.c.l.b16 %v10926
      %v11313 = vunpack.c.l.b16 %v10927
      %v11314 = vunpack.c.l.b16 %v10928
      %v11315 = vunpack.c.l.b16 %v10929
      %v11316 = vunpack.c.l.b16 %v10930
      %v11317 = vunpack.c.l.b16 %v10931
      %v11318 = vunpack.c.l.b16 %v10932
      %v11319 = vunpack.c.l.b16 %v10933
      %v11320 = vunpack.c.l.b16 %v10934
      %v11321 = vunpack.c.l.b16 %v10935
      %v11322 = vunpack.c.l.b16 %v10936
      %v11323 = vunpack.c.l.b16 %v10937
      %v11324 = vunpack.c.l.b16 %v10938
      %v11325 = vunpack.c.l.b16 %v10939
      %v11326 = vunpack.c.l.b16 %v10940
      %v11327 = vunpack.c.l.b16 %v10941
      %v11328 = vunpack.c.l.b16 %v10942
      %v11329 = vunpack.c.l.b16 %v10943
      %v11330 = vunpack.c.l.b16 %v10944
      %v11331 = vunpack.c.l.b16 %v10945
      %v11332 = vunpack.c.l.b16 %v10946
      %v11333 = vunpack.c.l.b16 %v10947
      %v11334 = vunpack.c.l.b16 %v10948
      %v11335 = vunpack.c.l.b16 %v10949
      %v11336 = vunpack.c.l.b16 %v10950
      %v11337 = vunpack.c.l.b16 %v10951
      %v11338 = vunpack.c.l.b16 %v10952
      %v11339 = vunpack.c.l.b16 %v10953
      %v11340 = vunpack.c.l.b16 %v10954
      %v11341 = vunpack.c.l.b16 %v10955
      %v11342 = vunpack.c.l.b16 %v10956
      %v11343 = vunpack.c.l.b16 %v10957
      %v11344 = vunpack.c.l.b16 %v10958
      %v11345 = vunpack.c.l.b16 %v10959
      %v11346 = vunpack.c.l.b16 %v10960
      %v11347 = vunpack.c.l.b16 %v10961
      %v11348 = vunpack.c.l.b16 %v10962
      %v11349 = vunpack.c.l.b16 %v10963
      %v11350 = vunpack.c.l.b16 %v10964
      %v11351 = vunpack.c.l.b16 %v10965
      %v11352 = vunpack.c.l.b16 %v10966
      %v11353 = vunpack.c.l.b16 %v10967
      %v11354 = vunpack.c.l.b16 %v10968
      %v11355 = vunpack.c.l.b16 %v10969
      %v11356 = vunpack.c.l.b16 %v10970
      %v11357 = vunpack.c.l.b16 %v10971
      %v11358 = vunpack.c.l.b16 %v10972
      %v11359 = vunpack.c.l.b16 %v10973
      %v11360 = vunpack.c.l.b16 %v10974
      %v11361 = vunpack.c.l.b16 %v10975
      %v11362 = vunpack.c.l.b16 %v10976
      %v11363 = vunpack.c.l.b16 %v10977
      %v11364 = vunpack.c.l.b16 %v10978
      %v11365 = vunpack.c.l.b16 %v10979
      %v11366 = vunpack.c.l.b16 %v10980
      %v11367 = vunpack.c.l.b16 %v10981
      %v11368 = vunpack.c.l.b16 %v10982
      %v11369 = vunpack.c.l.b16 %v10983
      %v11370 = vunpack.c.l.b16 %v10984
      %v11371 = vunpack.c.l.b16 %v10985
      %v11372 = vunpack.c.l.b16 %v10986
      %v11373 = vunpack.c.l.b16 %v10987
      %v11374 = vunpack.c.l.b16 %v10988
      %v11375 = vunpack.c.l.b16 %v10989
      %v11376 = vunpack.c.l.b16 %v10990
      %v11377 = vunpack.c.l.b16 %v10991
      %v11378 = vunpack.c.l.b16 %v10992
      %v11379 = vunpack.c.l.b16 %v10993
      %v11380 = vunpack.c.l.b16 %v10994
      %v11381 = vunpack.c.l.b16 %v10995
      %v11382 = vunpack.c.l.b16 %v10996
      %v11383 = vunpack.c.l.b16 %v10997
      %v11384 = vunpack.c.l.b16 %v10998
      %v11385 = vunpack.c.l.b16 %v10999
      %v11386 = vunpack.c.l.b16 %v11000
      %v11387 = vunpack.c.l.b16 %v11001
      %v11388 = vunpack.c.l.b16 %v11002
      %v11389 = vunpack.c.l.b16 %v11003
      %v11390 = vunpack.c.l.b16 %v11004
      %v11391 = vunpack.c.l.b16 %v11005
      %v11392 = vunpack.c.l.b16 %v11006
      %v11393 = vunpack.c.l.b16 %v11007
      %v11394 = vunpack.c.l.b16 %v11008
      %v11395 = vunpack.c.l.b16 %v11009
      %v11396 = vunpack.c.l.b16 %v11010
      %v11397 = vunpack.c.l.b16 %v11011
      %v11398 = vunpack.c.l.b16 %v11012
      %v11399 = vunpack.c.l.b16 %v11013
      %v11400 = vunpack.c.l.b16 %v11014
      %v11401 = vunpack.c.l.b16 %v11015
      %v11402 = vunpack.c.l.b16 %v11016
      %v11403 = vunpack.c.l.b16 %v11017
      %v11404 = vunpack.c.l.b16 %v11018
      %v11405 = vunpack.c.l.b16 %v11019
      %v11406 = vunpack.c.l.b16 %v11020
      %v11407 = vunpack.c.l.b16 %v11021
      %v11408 = vunpack.c.l.b16 %v11022
      %v11409 = vunpack.c.l.b16 %v11023
      %v11410 = vunpack.c.l.b16 %v11024
      %v11411 = vunpack.c.l.b16 %v11025
      %v11412 = vunpack.c.l.b16 %v11026
      %v11413 = vunpack.c.l.b16 %v11027
      %v11414 = vunpack.c.l.b16 %v11028
      %v11415 = vunpack.c.l.b16 %v11029
      %v11416 = vunpack.c.l.b16 %v11030
      %v11417 = vunpack.c.l.b16 %v11031
      %v11418 = vunpack.c.l.b16 %v11032
      %v11419 = vunpack.c.l.b16 %v11033
      %v11420 = vunpack.c.l.b16 %v11034
      %v11421 = vunpack.c.l.b16 %v11035
      %v11422 = vunpack.c.l.b16 %v11036
      %v11423 = vunpack.c.l.b16 %v11037
      %v11424 = vunpack.c.l.b16 %v11038
      %v11425 = vunpack.c.l.b16 %v11039
      %v11426 = vunpack.c.l.b16 %v11040
      %v11427 = vunpack.c.l.b16 %v11041
      %v11428 = vunpack.c.l.b16 %v11042
      %v11429 = vunpack.c.l.b16 %v11043
      %v11430 = vunpack.c.l.b16 %v11044
      %v11431 = vunpack.c.l.b16 %v11045
      %v11432 = vunpack.c.l.b16 %v11046
      %v11433 = vunpack.c.l.b16 %v11047
      %v11434 = vunpack.c.l.b16 %v11048
      %v11435 = vunpack.c.l.b16 %v11049
      %v11436 = vunpack.c.l.b16 %v11050
      %v11437 = vunpack.c.l.b16 %v11051
      %v11438 = vunpack.c.l.b16 %v11052
      %v11439 = vunpack.c.l.b16 %v11053
      %v11440 = vunpack.c.l.b16 %v11054
      %v11441 = vunpack.c.l.b16 %v11055
      %v11442 = vunpack.c.l.b16 %v11056
      %v11443 = vunpack.c.l.b16 %v11057
      %v11444 = vunpack.c.l.b16 %v11058
      %v11445 = vunpack.c.l.b16 %v11059
      %v11446 = vunpack.c.l.b16 %v11060
      %v11447 = vunpack.c.l.b16 %v11061
      %v11448 = vunpack.c.l.b16 %v11062
      %v11449 = vpack.c.b16 %v11306, %v11305
      %v11450 = vpack.c.b16 %v11308, %v11307
      %v11451 = vpack.c.b16 %v11310, %v11309
      %v11452 = vpack.c.b16 %v11312, %v11311
      %v11453 = vpack.c.b16 %v11314, %v11313
      %v11454 = vpack.c.b16 %v11316, %v11315
      %v11455 = vpack.c.b16 %v11318, %v11317
      %v11456 = vpack.c.b16 %v11320, %v11319
      %v11457 = vpack.c.b16 %v11322, %v11321
      %v11458 = vpack.c.b16 %v11324, %v11323
      %v11459 = vpack.c.b16 %v11326, %v11325
      %v11460 = vpack.c.b16 %v11328, %v11327
      %v11461 = vpack.c.b16 %v11330, %v11329
      %v11462 = vpack.c.b16 %v11332, %v11331
      %v11463 = vpack.c.b16 %v11334, %v11333
      %v11464 = vpack.c.b16 %v11336, %v11335
      %v11465 = vpack.c.b16 %v11338, %v11337
      %v11466 = vpack.c.b16 %v11340, %v11339
      %v11467 = vpack.c.b16 %v11342, %v11341
      %v11468 = vpack.c.b16 %v11344, %v11343
      %v11469 = vpack.c.b16 %v11346, %v11345
      %v11470 = vpack.c.b16 %v11348, %v11347
      %v11471 = vpack.c.b16 %v11350, %v11349
      %v11472 = vpack.c.b16 %v11352, %v11351
      %v11473 = vpack.c.b16 %v11354, %v11353
      %v11474 = vpack.c.b16 %v11356, %v11355
      %v11475 = vpack.c.b16 %v11358, %v11357
      %v11476 = vpack.c.b16 %v11360, %v11359
      %v11477 = vpack.c.b16 %v11362, %v11361
      %v11478 = vpack.c.b16 %v11364, %v11363
      %v11479 = vpack.c.b16 %v11366, %v11365
      %v11480 = vpack.c.b16 %v11368, %v11367
      %v11481 = vpack.c.b16 %v11370, %v11369
      %v11482 = vpack.c.b16 %v11372, %v11371
      %v11483 = vpack.c.b16 %v11374, %v11373
      %v11484 = vpack.c.b16 %v11376, %v11375
      %v11485 = vpack.c.b16 %v11378, %v11377
      %v11486 = vpack.c.b16 %v11380, %v11379
      %v11487 = vpack.c.b16 %v11382, %v11381
      %v11488 = vpack.c.b16 %v11384, %v11383
      %v11489 = vpack.c.b16 %v11386, %v11385
      %v11490 = vpack.c.b16 %v11388, %v11387
      %v11491 = vpack.c.b16 %v11390, %v11389
      %v11492 = vpack.c.b16 %v11392, %v11391
      %v11493 = vpack.c.b16 %v11394, %v11393
      %v11494 = vpack.c.b16 %v11396, %v11395
      %v11495 = vpack.c.b16 %v11398, %v11397
      %v11496 = vpack.c.b16 %v11400, %v11399
      %v11497 = vpack.c.b16 %v11402, %v11401
      %v11498 = vpack.c.b16 %v11404, %v11403
      %v11499 = vpack.c.b16 %v11406, %v11405
      %v11500 = vpack.c.b16 %v11408, %v11407
      %v11501 = vpack.c.b16 %v11410, %v11409
      %v11502 = vpack.c.b16 %v11412, %v11411
      %v11503 = vpack.c.b16 %v11414, %v11413
      %v11504 = vpack.c.b16 %v11416, %v11415
      %v11505 = vpack.c.b16 %v11418, %v11417
      %v11506 = vpack.c.b16 %v11420, %v11419
      %v11507 = vpack.c.b16 %v11422, %v11421
      %v11508 = vpack.c.b16 %v11424, %v11423
      %v11509 = vpack.c.b16 %v11426, %v11425
      %v11510 = vpack.c.b16 %v11428, %v11427
      %v11511 = vpack.c.b16 %v11430, %v11429
      %v11512 = vpack.c.b16 %v11432, %v11431
      %v11513 = vpack.c.b16 %v11434, %v11433
      %v11514 = vpack.c.b16 %v11436, %v11435
      %v11515 = vpack.c.b16 %v11438, %v11437
      %v11516 = vpack.c.b16 %v11440, %v11439
      %v11517 = vpack.c.b16 %v11442, %v11441
      %v11518 = vpack.c.b16 %v11444, %v11443
      %v11519 = vpack.c.b16 %v11446, %v11445
      %v11520 = vpack.c.b16 %v11448, %v11447
      %11593 = vmatprep.subr.bf16.mxu0 0
      %11594 = vmatpush1.bf16.msra.mxu0 %v11449
      %11595 = vmatprep.subr.bf16.mxu0 0
      %11596 = vmatpush1.bf16.msra.mxu0 %v11450
      %11597 = vmatprep.subr.bf16.mxu0 0
      %11598 = vmatpush1.bf16.msra.mxu0 %v11451
      %11599 = vmatprep.subr.bf16.mxu0 0
      %11600 = vmatpush1.bf16.msra.mxu0 %v11452
      %11601 = vmatprep.subr.bf16.mxu0 0
      %11602 = vmatpush1.bf16.msra.mxu0 %v11453
      %11603 = vmatprep.subr.bf16.mxu0 0
      %11604 = vmatpush1.bf16.msra.mxu0 %v11454
      %11605 = vmatprep.subr.bf16.mxu0 0
      %11606 = vmatpush1.bf16.msra.mxu0 %v11455
      %11607 = vmatprep.subr.bf16.mxu0 0
      %11608 = vmatpush1.bf16.msra.mxu0 %v11456
      %11609 = vmatprep.subr.bf16.mxu0 0
      %11610 = vmatpush1.bf16.msra.mxu0 %v11457
      %11611 = vmatprep.subr.bf16.mxu0 0
      %11612 = vmatpush1.bf16.msra.mxu0 %v11458
      %11613 = vmatprep.subr.bf16.mxu0 0
      %11614 = vmatpush1.bf16.msra.mxu0 %v11459
      %11615 = vmatprep.subr.bf16.mxu0 0
      %11616 = vmatpush1.bf16.msra.mxu0 %v11460
      %11617 = vmatprep.subr.bf16.mxu0 0
      %11618 = vmatpush1.bf16.msra.mxu0 %v11461
      %11619 = vmatprep.subr.bf16.mxu0 0
      %11620 = vmatpush1.bf16.msra.mxu0 %v11462
      %11621 = vmatprep.subr.bf16.mxu0 0
      %11622 = vmatpush1.bf16.msra.mxu0 %v11463
      %11623 = vmatprep.subr.bf16.mxu0 0
      %11624 = vmatpush1.bf16.msra.mxu0 %v11464
      %11625 = vmatprep.mubr.bf16.mxu0 %v11096
      %11626 = vmatmul.mubr.bf16.gmra.mrb[0].mxu0 %v11095
      %v11627 = vpop.f32.mrb[0].mxu0
      %v11628 = vadd.f32 0.0, %v11627
      %v11629 = vpop.f32.mrb[0].mxu0
      %v11630 = vpop.f32.mrb[0].mxu0
      %v11631 = vadd.f32 0.0, %v11630
      %v11632 = vpop.f32.mrb[0].mxu0
      %11633 = vdwg.mxu0
      %11634 = vmatprep.subr.bf16.mxu0 0
      %11635 = vmatpush1.bf16.msra.mxu0 %v11465
      %11636 = vmatprep.subr.bf16.mxu0 0
      %11637 = vmatpush1.bf16.msra.mxu0 %v11466
      %11638 = vmatprep.subr.bf16.mxu0 0
      %11639 = vmatpush1.bf16.msra.mxu0 %v11467
      %11640 = vmatprep.subr.bf16.mxu0 0
      %11641 = vmatpush1.bf16.msra.mxu0 %v11468
      %11642 = vmatprep.subr.bf16.mxu0 0
      %11643 = vmatpush1.bf16.msra.mxu0 %v11469
      %11644 = vmatprep.subr.bf16.mxu0 0
      %11645 = vmatpush1.bf16.msra.mxu0 %v11470
      %11646 = vmatprep.subr.bf16.mxu0 0
      %11647 = vmatpush1.bf16.msra.mxu0 %v11471
      %11648 = vmatprep.subr.bf16.mxu0 0
      %11649 = vmatpush1.bf16.msra.mxu0 %v11472
      %11650 = vmatprep.subr.bf16.mxu0 0
      %11651 = vmatpush1.bf16.msra.mxu0 %v11473
      %11652 = vmatprep.subr.bf16.mxu0 0
      %11653 = vmatpush1.bf16.msra.mxu0 %v11474
      %11654 = vmatprep.subr.bf16.mxu0 0
      %11655 = vmatpush1.bf16.msra.mxu0 %v11475
      %11656 = vmatprep.subr.bf16.mxu0 0
      %11657 = vmatpush1.bf16.msra.mxu0 %v11476
      %11658 = vmatprep.subr.bf16.mxu0 0
      %11659 = vmatpush1.bf16.msra.mxu0 %v11477
      %11660 = vmatprep.subr.bf16.mxu0 0
      %11661 = vmatpush1.bf16.msra.mxu0 %v11478
      %11662 = vmatprep.subr.bf16.mxu0 0
      %11663 = vmatpush1.bf16.msra.mxu0 %v11479
      %11664 = vmatprep.subr.bf16.mxu0 0
      %11665 = vmatpush1.bf16.msra.mxu0 %v11480
      %11666 = vmatprep.mubr.bf16.mxu0 %v11098
      %11667 = vmatmul.mubr.bf16.gmra.mrb[0].mxu0 %v11097
      %v11668 = vpop.f32.mrb[0].mxu0
      %v11669 = vadd.f32 %v11628, %v11668
      %v11670 = vpop.f32.mrb[0].mxu0
      %v11671 = vpop.f32.mrb[0].mxu0
      %v11672 = vadd.f32 %v11631, %v11671
      %v11673 = vpop.f32.mrb[0].mxu0
      %11674 = vdwg.mxu0
      %11675 = vmatprep.subr.bf16.mxu0 0
      %11676 = vmatpush1.bf16.msra.mxu0 %v11481
      %11677 = vmatprep.subr.bf16.mxu0 0
      %11678 = vmatpush1.bf16.msra.mxu0 %v11482
      %11679 = vmatprep.subr.bf16.mxu0 0
      %11680 = vmatpush1.bf16.msra.mxu0 %v11483
      %11681 = vmatprep.subr.bf16.mxu0 0
      %11682 = vmatpush1.bf16.msra.mxu0 %v11484
      %11683 = vmatprep.subr.bf16.mxu0 0
      %11684 = vmatpush1.bf16.msra.mxu0 %v11485
      %11685 = vmatprep.subr.bf16.mxu0 0
      %11686 = vmatpush1.bf16.msra.mxu0 %v11486
      %11687 = vmatprep.subr.bf16.mxu0 0
      %11688 = vmatpush1.bf16.msra.mxu0 %v11487
      %11689 = vmatprep.subr.bf16.mxu0 0
      %11690 = vmatpush1.bf16.msra.mxu0 %v11488
      %11691 = vmatprep.subr.bf16.mxu0 0
      %11692 = vmatpush1.bf16.msra.mxu0 %v11489
      %11693 = vmatprep.subr.bf16.mxu0 0
      %11694 = vmatpush1.bf16.msra.mxu0 %v11490
      %11695 = vmatprep.subr.bf16.mxu0 0
      %11696 = vmatpush1.bf16.msra.mxu0 %v11491
      %11697 = vmatprep.subr.bf16.mxu0 0
      %11698 = vmatpush1.bf16.msra.mxu0 %v11492
      %11699 = vmatprep.subr.bf16.mxu0 0
      %11700 = vmatpush1.bf16.msra.mxu0 %v11493
      %11701 = vmatprep.subr.bf16.mxu0 0
      %11702 = vmatpush1.bf16.msra.mxu0 %v11494
      %11703 = vmatprep.subr.bf16.mxu0 0
      %11704 = vmatpush1.bf16.msra.mxu0 %v11495
      %11705 = vmatprep.subr.bf16.mxu0 0
      %11706 = vmatpush1.bf16.msra.mxu0 %v11496
      %11707 = vmatprep.mubr.bf16.mxu0 %v11132
      %11708 = vmatmul.mubr.bf16.gmra.mrb[0].mxu0 %v11131
      %v11709 = vpop.f32.mrb[0].mxu0
      %v11710 = vadd.f32 %v11669, %v11709
      %v11711 = vpop.f32.mrb[0].mxu0
      %v11712 = vpop.f32.mrb[0].mxu0
      %v11713 = vadd.f32 %v11672, %v11712
      %v11714 = vpop.f32.mrb[0].mxu0
      %11715 = vdwg.mxu0
      %11716 = vmatprep.subr.bf16.mxu0 0
      %11717 = vmatpush1.bf16.msra.mxu0 %v11497
      %11718 = vmatprep.subr.bf16.mxu0 0
      %11719 = vmatpush1.bf16.msra.mxu0 %v11498
      %11720 = vmatprep.subr.bf16.mxu0 0
      %11721 = vmatpush1.bf16.msra.mxu0 %v11499
      %11722 = vmatprep.subr.bf16.mxu0 0
      %11723 = vmatpush1.bf16.msra.mxu0 %v11500
      %11724 = vmatprep.subr.bf16.mxu0 0
      %11725 = vmatpush1.bf16.msra.mxu0 %v11501
      %11726 = vmatprep.subr.bf16.mxu0 0
      %11727 = vmatpush1.bf16.msra.mxu0 %v11502
      %11728 = vmatprep.subr.bf16.mxu0 0
      %11729 = vmatpush1.bf16.msra.mxu0 %v11503
      %11730 = vmatprep.subr.bf16.mxu0 0
      %11731 = vmatpush1.bf16.msra.mxu0 %v11504
      %11732 = vmatprep.subr.bf16.mxu0 0
      %11733 = vmatpush1.bf16.msra.mxu0 %v11505
      %11734 = vmatprep.subr.bf16.mxu0 0
      %11735 = vmatpush1.bf16.msra.mxu0 %v11506
      %11736 = vmatprep.subr.bf16.mxu0 0
      %11737 = vmatpush1.bf16.msra.mxu0 %v11507
      %11738 = vmatprep.subr.bf16.mxu0 0
      %11739 = vmatpush1.bf16.msra.mxu0 %v11508
      %11740 = vmatprep.subr.bf16.mxu0 0
      %11741 = vmatpush1.bf16.msra.mxu0 %v11509
      %11742 = vmatprep.subr.bf16.mxu0 0
      %11743 = vmatpush1.bf16.msra.mxu0 %v11510
      %11744 = vmatprep.subr.bf16.mxu0 0
      %11745 = vmatpush1.bf16.msra.mxu0 %v11511
      %11746 = vmatprep.subr.bf16.mxu0 0
      %11747 = vmatpush1.bf16.msra.mxu0 %v11512
      %11748 = vmatprep.mubr.bf16.mxu0 %v11134
      %11749 = vmatmul.mubr.bf16.gmra.mrb[0].mxu0 %v11133
      %v11750 = vpop.f32.mrb[0].mxu0
      %v11751 = vadd.f32 %v11710, %v11750
      %v11752 = vpop.f32.mrb[0].mxu0
      %v11753 = vpop.f32.mrb[0].mxu0
      %v11754 = vadd.f32 %v11713, %v11753
      %v11755 = vpop.f32.mrb[0].mxu0
      %11756 = vdwg.mxu0
      %11757 = vmatprep.subr.bf16.mxu0 0
      %11758 = vmatpush1.bf16.msra.mxu0 %v11513
      %11759 = vmatprep.subr.bf16.mxu0 0
      %11760 = vmatpush1.bf16.msra.mxu0 %v11514
      %11761 = vmatprep.subr.bf16.mxu0 0
      %11762 = vmatpush1.bf16.msra.mxu0 %v11515
      %11763 = vmatprep.subr.bf16.mxu0 0
      %11764 = vmatpush1.bf16.msra.mxu0 %v11516
      %11765 = vmatprep.subr.bf16.mxu0 0
      %11766 = vmatpush1.bf16.msra.mxu0 %v11517
      %11767 = vmatprep.subr.bf16.mxu0 0
      %11768 = vmatpush1.bf16.msra.mxu0 %v11518
      %11769 = vmatprep.subr.bf16.mxu0 0
      %11770 = vmatpush1.bf16.msra.mxu0 %v11519
      %11771 = vmatprep.subr.bf16.mxu0 0
      %11772 = vmatpush1.bf16.msra.mxu0 %v11520
      %11773 = vmatprep.subr.bf16.mxu0 0
      %11774 = vmatpush1.bf16.msra.mxu0 0
      %11775 = vmatprep.subr.bf16.mxu0 0
      %11776 = vmatpush1.bf16.msra.mxu0 0
      %11777 = vmatprep.subr.bf16.mxu0 0
      %11778 = vmatpush1.bf16.msra.mxu0 0
      %11779 = vmatprep.subr.bf16.mxu0 0
      %11780 = vmatpush1.bf16.msra.mxu0 0
      %11781 = vmatprep.subr.bf16.mxu0 0
      %11782 = vmatpush1.bf16.msra.mxu0 0
      %11783 = vmatprep.subr.bf16.mxu0 0
      %11784 = vmatpush1.bf16.msra.mxu0 0
      %11785 = vmatprep.subr.bf16.mxu0 0
      %11786 = vmatpush1.bf16.msra.mxu0 0
      %11787 = vmatprep.subr.bf16.mxu0 0
      %11788 = vmatpush1.bf16.msra.mxu0 0
      %11789 = vmatprep.mubr.bf16.mxu0 0
      %11790 = vmatmul.mubr.bf16.gmra.mrb[0].mxu0 %v11151
      %v11791 = vpop.f32.mrb[0].mxu0
      %v11792 = vadd.f32 %v11751, %v11791
      %v11793 = vpop.f32.mrb[0].mxu0
      %v11794 = vpop.f32.mrb[0].mxu0
      %v11795 = vadd.f32 %v11754, %v11794
      %v11796 = vpop.f32.mrb[0].mxu0
      %11797 = vdwg.mxu0
      %v11800 = vcombine.high %v11792, %v11792
      %v11801 = vcombine.high %v11795, %v11795
      %vm11804 = vcmask 519168
      %v11805 = vsel %vm11804, %v11792, -inf
      %v11806 = vsel %vm11804, %v11800, -inf
      %v11807 = vmax.f32 %v11805, %v11806
      %v11808 = vsel %vm11804, %v11795, -inf
      %v11809 = vsel %vm11804, %v11801, -inf
      %v11810 = vmax.f32 %v11808, %v11809
      %v11814 = vunpack.c.l.s4 1983009808
      %v11815 = vunpack.c.0.s8 %v11814
      %v11816 = vlaneseq
      %v11817 = vshrl.u32 %v11816, 7
      %v11818 = vsub.s32 %v11815, %v11817
      %v11819 = vrot.slane %v11807, %v11818
      %v11820 = vcombine.high %v11819, %v11819
      %v11822 = vunpack.c.l.s4 1983009808
      %v11823 = vunpack.c.0.s8 %v11822
      %v11824 = vlaneseq
      %v11825 = vshrl.u32 %v11824, 7
      %v11826 = vsub.s32 %v11823, %v11825
      %v11827 = vrot.slane %v11810, %v11826
      %v11828 = vcombine.high %v11827, %v11827
      %vm11833 = vcmask 517120
      %v11834 = vsel %vm11833, %v11819, -inf
      %v11835 = vrot.slane %v11834, 4
      %v11836 = vmax.f32 %v11834, %v11835
      %v11837 = vrot.slane %v11836, 2
      %v11838 = vmax.f32 %v11836, %v11837
      %v11839 = vrot.slane %v11838, 1
      %v11840 = vmax.f32 %v11838, %v11839
      %v11841 = vsel %vm11833, %v11820, -inf
      %v11842 = vrot.slane %v11841, 4
      %v11843 = vmax.f32 %v11841, %v11842
      %v11844 = vrot.slane %v11843, 2
      %v11845 = vmax.f32 %v11843, %v11844
      %v11846 = vrot.slane %v11845, 1
      %v11847 = vmax.f32 %v11845, %v11846
      %v11848 = vsel %vm11833, %v11827, -inf
      %v11849 = vrot.slane %v11848, 4
      %v11850 = vmax.f32 %v11848, %v11849
      %v11851 = vrot.slane %v11850, 2
      %v11852 = vmax.f32 %v11850, %v11851
      %v11853 = vrot.slane %v11852, 1
      %v11854 = vmax.f32 %v11852, %v11853
      %v11855 = vsel %vm11833, %v11828, -inf
      %v11856 = vrot.slane %v11855, 4
      %v11857 = vmax.f32 %v11855, %v11856
      %v11858 = vrot.slane %v11857, 2
      %v11859 = vmax.f32 %v11857, %v11858
      %v11860 = vrot.slane %v11859, 1
      %v11861 = vmax.f32 %v11859, %v11860
      %v11862 = vld [vmem:[%s10] sm:$0x1]
      %v11864 = vlaneseq
      %v11865 = vshrl.u32 %v11864, 7
      %v11866 = vsub.s32 0, %v11865
      %v11867 = vrot.slane %v11862, %v11866
      %v11869 = vadd.f32 %v11840, %v11867
      %v11870 = vadd.f32 %v11847, %v11867
      %v11871 = vadd.f32 %v11854, %v11867
      %v11872 = vadd.f32 %v11861, %v11867
      %vm11873 = vcmp.gt.f32.partialorder %v11869, 0.0
      %vm11874 = vcmp.gt.f32.partialorder %v11870, 0.0
      %vm11875 = vcmp.gt.f32.partialorder %v11871, 0.0
      %vm11876 = vcmp.gt.f32.partialorder %v11872, 0.0
      %v11877 = vmul.f32 %v11869, 0.2
      %v11878 = vmul.f32 %v11870, 0.2
      %v11879 = vmul.f32 %v11871, 0.2
      %v11880 = vmul.f32 %v11872, 0.2
      %v11881 = vsel %vm11873, %v11869, %v11877
      %v11882 = vsel %vm11874, %v11870, %v11878
      %v11883 = vsel %vm11875, %v11871, %v11879
      %v11884 = vsel %vm11876, %v11872, %v11880
      %v11885 = vld [vmem:[%s11] sm:$0x1]
      %v11887 = vlaneseq
      %v11888 = vshrl.u32 %v11887, 7
      %v11889 = vsub.s32 0, %v11888
      %v11890 = vrot.slane %v11885, %v11889
      %v11892 = vmul.f32 %v11881, %v11890
      %v11893 = vmul.f32 %v11882, %v11890
      %v11894 = vmul.f32 %v11883, %v11890
      %v11895 = vmul.f32 %v11884, %v11890
      %v11896 = vld [vmem:[%s12] sm:$0x1]
      %v11898 = vlaneseq
      %v11899 = vshrl.u32 %v11898, 7
      %v11900 = vsub.s32 0, %v11899
      %v11901 = vrot.slane %v11896, %v11900
      %v11903 = vadd.f32 %v11892, %v11901
      %v11904 = vadd.f32 %v11893, %v11901
      %v11905 = vadd.f32 %v11894, %v11901
      %v11906 = vadd.f32 %v11895, %v11901
      %v11907 = vpack.c.bf16 %v11903, %v11903
      %v11908 = vpack.c.bf16 %v11904, %v11904
      %v11909 = vpack.c.bf16 %v11905, %v11905
      %v11910 = vpack.c.bf16 %v11906, %v11906
      %11911 = vst [vmem:[#allocation5] sm:$0xf] 0
      %11912 = vst [vmem:[#allocation5 + $0x4] sm:$0xf] 0
      %vm11913 = vcmask 1041408
      %vm11914 = vsmask.f32 1280
      %vm11915 = vmand %vm11913, %vm11914
      %v11916 = vld [vmem:[#allocation5 + $0x8] sm:$0x3]
      %v11917 = vsel %vm11915, 0, %v11916
      %11918 = vst [vmem:[#allocation5 + $0x8] sm:$0x3] %v11917
      %11919 = vst [vmem:[#allocation5 + $0xc] sm:$0xf] 0
      %11920 = vst [vmem:[#allocation5 + $0x10] sm:$0xf] 0
      %v11921 = vld [vmem:[#allocation5 + $0x14] sm:$0x3]
      %v11922 = vsel %vm11915, 0, %v11921
      %11923 = vst [vmem:[#allocation5 + $0x14] sm:$0x3] %v11922
      %11924 = vst [vmem:[#allocation5 + $0x18] sm:$0xf] 0
      %11925 = vst [vmem:[#allocation5 + $0x1c] sm:$0xf] 0
      %v11926 = vld [vmem:[#allocation5 + $0x20] sm:$0x3]
      %v11927 = vsel %vm11915, 0, %v11926
      %11928 = vst [vmem:[#allocation5 + $0x20] sm:$0x3] %v11927
      %11929 = vst [vmem:[#allocation5 + $0x24] sm:$0xf] 0
      %11930 = vst [vmem:[#allocation5 + $0x28] sm:$0xf] 0
      %v11931 = vld [vmem:[#allocation5 + $0x2c] sm:$0x3]
      %v11932 = vsel %vm11915, 0, %v11931
      %11933 = vst [vmem:[#allocation5 + $0x2c] sm:$0x3] %v11932
      %v11938 = vunpack.c.l.b16 %v11907
      %v11939 = vunpack.c.l.b16 %v11908
      %v11940 = vunpack.c.l.b16 %v11909
      %v11941 = vunpack.c.l.b16 %v11910
      %v11942 = vpack.c.b16 %v11938, %v11938
      %v11943 = vpack.c.b16 %v11939, %v11939
      %v11944 = vpack.c.b16 %v11940, %v11940
      %v11945 = vpack.c.b16 %v11941, %v11941
      %v11946 = vunpack.c.l.b16 %v11942
      %v11947 = vunpack.c.l.b16 %v11943
      %v11948 = vunpack.c.l.b16 %v11944
      %v11949 = vunpack.c.l.b16 %v11945
      %v11950 = vrot.slane %v11947, 7
      %v11951 = vsel %vm7321, %v11950, %v11946
      %v11952 = vrot.slane %v11949, 7
      %v11953 = vsel %vm7321, %v11952, %v11948
      %v11954 = vpack.c.b16 %v11951, %v11951
      %v11955 = vpack.c.b16 %v11953, %v11953
      %s11958 = scalar_lea.vmem [#allocation5], 12
      %vm11959 = vcmask 516096
      %11960 = vst.msk [vmem:[%s11958 + $0x8] sm:$0x1] %vm11959, %v11954
      %11961 = vst.msk [vmem:[%s11958 + $0x14] sm:$0x1] %vm11959, %v11955
      %v11962 = vld [vmem:[#allocation5 + $0x4] sm:$0x8]
      %v11963 = vld [vmem:[#allocation5 + $0x8] sm:$0x1]
      %v11964 = vld [vmem:[#allocation5 + $0x10] sm:$0x8]
      %v11965 = vld [vmem:[#allocation5 + $0x14] sm:$0x1]
      %v11966 = vld [vmem:[#allocation5 + $0x8] sm:$0x3]
      %v11967 = vld [vmem:[#allocation5 + $0x14] sm:$0x3]
      %v11968 = vld [vmem:[%s11958 + $0x4] sm:$0x8]
      %v11969 = vld [vmem:[%s11958 + $0x8] sm:$0x1]
      %v11970 = vld [vmem:[%s11958 + $0x10] sm:$0x8]
      %v11971 = vld [vmem:[%s11958 + $0x14] sm:$0x1]
      %v11972 = vld [vmem:[%s11958 + $0x8] sm:$0x3]
      %v11973 = vld [vmem:[%s11958 + $0x14] sm:$0x3]
      %s11974 = scalar_lea.vmem [#allocation5], 24
      %v11975 = vld [vmem:[%s11974 + $0x4] sm:$0x8]
      %v11976 = vld [vmem:[%s11974 + $0x8] sm:$0x1]
      %v11977 = vld [vmem:[%s11974 + $0x10] sm:$0x8]
      %v11978 = vld [vmem:[%s11974 + $0x14] sm:$0x1]
      %v11979 = vld [vmem:[%s11974 + $0x8] sm:$0x3]
      %v11980 = vld [vmem:[%s11974 + $0x14] sm:$0x3]
      %v11985 = vunpack.c.l.b16 %v11962
      %v11986 = vunpack.c.l.b16 %v11963
      %v11987 = vunpack.c.l.b16 %v11964
      %v11988 = vunpack.c.l.b16 %v11965
      %v11989 = vpack.c.b16 %v11986, %v11985
      %v11990 = vpack.c.b16 %v11988, %v11987
      %v11991 = vpack.c.b16 %v11986, %v11986
      %v11992 = vpack.c.b16 %v11988, %v11988
      %v11994 = vshrl.u32 %v11991, 16
      %v11996 = vrot.slane %v11994, 4
      %v11997 = vshll.u32 %v11991, 16
      %v11999 = vrot.slane %v11997, 5
      %v12000 = vor.u32 %v11996, %v11999
      %v12002 = vshrl.u32 %v11992, 16
      %v12004 = vrot.slane %v12002, 4
      %v12005 = vshll.u32 %v11992, 16
      %v12007 = vrot.slane %v12005, 5
      %v12008 = vor.u32 %v12004, %v12007
      %v12011 = vunpack.c.l.b16 %v11966
      %v12012 = vunpack.c.l.b16 %v11967
      %v12013 = vpack.c.b16 %v12011, %v12011
      %v12014 = vpack.c.b16 %v12012, %v12012
      %v12015 = vrot.slane %v12013, 5
      %v12016 = vrot.slane %v12014, 5
      %v12021 = vunpack.c.l.b16 %v11968
      %v12022 = vunpack.c.l.b16 %v11969
      %v12023 = vunpack.c.l.b16 %v11970
      %v12024 = vunpack.c.l.b16 %v11971
      %v12025 = vpack.c.b16 %v12022, %v12021
      %v12026 = vpack.c.b16 %v12024, %v12023
      %v12027 = vpack.c.b16 %v12022, %v12022
      %v12028 = vpack.c.b16 %v12024, %v12024
      %v12030 = vshrl.u32 %v12027, 16
      %v12032 = vrot.slane %v12030, 4
      %v12033 = vshll.u32 %v12027, 16
      %v12035 = vrot.slane %v12033, 5
      %v12036 = vor.u32 %v12032, %v12035
      %v12038 = vshrl.u32 %v12028, 16
      %v12040 = vrot.slane %v12038, 4
      %v12041 = vshll.u32 %v12028, 16
      %v12043 = vrot.slane %v12041, 5
      %v12044 = vor.u32 %v12040, %v12043
      %v12047 = vunpack.c.l.b16 %v11972
      %v12048 = vunpack.c.l.b16 %v11973
      %v12049 = vpack.c.b16 %v12047, %v12047
      %v12050 = vpack.c.b16 %v12048, %v12048
      %v12051 = vrot.slane %v12049, 5
      %v12052 = vrot.slane %v12050, 5
      %v12057 = vunpack.c.l.b16 %v11975
      %v12058 = vunpack.c.l.b16 %v11976
      %v12059 = vunpack.c.l.b16 %v11977
      %v12060 = vunpack.c.l.b16 %v11978
      %v12061 = vpack.c.b16 %v12058, %v12057
      %v12062 = vpack.c.b16 %v12060, %v12059
      %v12063 = vpack.c.b16 %v12058, %v12058
      %v12064 = vpack.c.b16 %v12060, %v12060
      %v12066 = vshrl.u32 %v12063, 16
      %v12068 = vrot.slane %v12066, 4
      %v12069 = vshll.u32 %v12063, 16
      %v12071 = vrot.slane %v12069, 5
      %v12072 = vor.u32 %v12068, %v12071
      %v12074 = vshrl.u32 %v12064, 16
      %v12076 = vrot.slane %v12074, 4
      %v12077 = vshll.u32 %v12064, 16
      %v12079 = vrot.slane %v12077, 5
      %v12080 = vor.u32 %v12076, %v12079
      %v12083 = vunpack.c.l.b16 %v11979
      %v12084 = vunpack.c.l.b16 %v11980
      %v12085 = vpack.c.b16 %v12083, %v12083
      %v12086 = vpack.c.b16 %v12084, %v12084
      %v12087 = vrot.slane %v12085, 5
      %v12088 = vrot.slane %v12086, 5
      %v12089 = vcombine.low %v11989, %v12000
      %v12090 = vcombine.high %v11989, %v12000
      %v12091 = vcombine.low %v12015, %v12025
      %v12092 = vcombine.high %v12015, %v12025
      %v12093 = vcombine.low %v12036, %v12051
      %v12094 = vcombine.high %v12036, %v12051
      %v12095 = vcombine.low %v12061, %v12072
      %v12096 = vcombine.high %v12061, %v12072
      %v12098 = vunpack.c.l.s4 1966171168
      %v12099 = vunpack.c.0.s8 %v12098
      %v12100 = vlaneseq
      %v12101 = vshrl.u32 %v12100, 7
      %v12102 = vsub.s32 %v12099, %v12101
      %v12103 = vrot.slane %v12089, %v12102
      %v12105 = vunpack.c.l.s4 1966171168
      %v12106 = vunpack.c.0.s8 %v12105
      %v12107 = vlaneseq
      %v12108 = vshrl.u32 %v12107, 7
      %v12109 = vsub.s32 %v12106, %v12108
      %v12110 = vrot.slane %v12090, %v12109
      %v12112 = vunpack.c.l.s4 1966171168
      %v12113 = vunpack.c.0.s8 %v12112
      %v12114 = vlaneseq
      %v12115 = vshrl.u32 %v12114, 7
      %v12116 = vsub.s32 %v12113, %v12115
      %v12117 = vrot.slane %v12091, %v12116
      %v12119 = vunpack.c.l.s4 1966171168
      %v12120 = vunpack.c.0.s8 %v12119
      %v12121 = vlaneseq
      %v12122 = vshrl.u32 %v12121, 7
      %v12123 = vsub.s32 %v12120, %v12122
      %v12124 = vrot.slane %v12092, %v12123
      %v12126 = vunpack.c.l.s4 1966171168
      %v12127 = vunpack.c.0.s8 %v12126
      %v12128 = vlaneseq
      %v12129 = vshrl.u32 %v12128, 7
      %v12130 = vsub.s32 %v12127, %v12129
      %v12131 = vrot.slane %v12093, %v12130
      %v12133 = vunpack.c.l.s4 1966171168
      %v12134 = vunpack.c.0.s8 %v12133
      %v12135 = vlaneseq
      %v12136 = vshrl.u32 %v12135, 7
      %v12137 = vsub.s32 %v12134, %v12136
      %v12138 = vrot.slane %v12094, %v12137
      %v12140 = vunpack.c.l.s4 1966171168
      %v12141 = vunpack.c.0.s8 %v12140
      %v12142 = vlaneseq
      %v12143 = vshrl.u32 %v12142, 7
      %v12144 = vsub.s32 %v12141, %v12143
      %v12145 = vrot.slane %v12095, %v12144
      %v12147 = vunpack.c.l.s4 1966171168
      %v12148 = vunpack.c.0.s8 %v12147
      %v12149 = vlaneseq
      %v12150 = vshrl.u32 %v12149, 7
      %v12151 = vsub.s32 %v12148, %v12150
      %v12152 = vrot.slane %v12096, %v12151
      %v12153 = vcombine.high %v12103, %v12117
      %v12154 = vcombine.low %v12110, %v12124
      %v12155 = vcombine.high %v12131, %v12145
      %v12156 = vcombine.low %v12138, %v12152
      %v12158 = vunpack.c.l.s4 1966171168
      %v12159 = vunpack.c.0.s8 %v12158
      %v12160 = vlaneseq
      %v12161 = vshrl.u32 %v12160, 7
      %v12162 = vsub.s32 %v12159, %v12161
      %v12163 = vrot.slane %v12154, %v12162
      %v12165 = vunpack.c.l.s4 1966171168
      %v12166 = vunpack.c.0.s8 %v12165
      %v12167 = vlaneseq
      %v12168 = vshrl.u32 %v12167, 7
      %v12169 = vsub.s32 %v12166, %v12168
      %v12170 = vrot.slane %v12153, %v12169
      %v12172 = vunpack.c.l.s4 1966171168
      %v12173 = vunpack.c.0.s8 %v12172
      %v12174 = vlaneseq
      %v12175 = vshrl.u32 %v12174, 7
      %v12176 = vsub.s32 %v12173, %v12175
      %v12177 = vrot.slane %v12156, %v12176
      %v12179 = vunpack.c.l.s4 1966171168
      %v12180 = vunpack.c.0.s8 %v12179
      %v12181 = vlaneseq
      %v12182 = vshrl.u32 %v12181, 7
      %v12183 = vsub.s32 %v12180, %v12182
      %v12184 = vrot.slane %v12155, %v12183
      %v12185 = vcombine.low %v12163, %v12177
      %v12186 = vcombine.high %v12170, %v12184
      %v12187 = vcombine.high %v12087, %v12087
      %v12189 = vunpack.c.l.s4 1966171168
      %v12190 = vunpack.c.0.s8 %v12189
      %v12191 = vlaneseq
      %v12192 = vshrl.u32 %v12191, 7
      %v12193 = vsub.s32 %v12190, %v12192
      %v12194 = vrot.slane %v12087, %v12193
      %v12196 = vunpack.c.l.s4 1966171168
      %v12197 = vunpack.c.0.s8 %v12196
      %v12198 = vlaneseq
      %v12199 = vshrl.u32 %v12198, 7
      %v12200 = vsub.s32 %v12197, %v12199
      %v12201 = vrot.slane %v12187, %v12200
      %v12202 = vcombine.high %v12194, %v12194
      %v12204 = vunpack.c.l.s4 1966171168
      %v12205 = vunpack.c.0.s8 %v12204
      %v12206 = vlaneseq
      %v12207 = vshrl.u32 %v12206, 7
      %v12208 = vsub.s32 %v12205, %v12207
      %v12209 = vrot.slane %v12201, %v12208
      %v12211 = vunpack.c.l.s4 1966171168
      %v12212 = vunpack.c.0.s8 %v12211
      %v12213 = vlaneseq
      %v12214 = vshrl.u32 %v12213, 7
      %v12215 = vsub.s32 %v12212, %v12214
      %v12216 = vrot.slane %v12202, %v12215
      %v12217 = vcombine.high %v12216, %v12216
      %v12218 = vcombine.low %v11990, %v12008
      %v12219 = vcombine.high %v11990, %v12008
      %v12220 = vcombine.low %v12016, %v12026
      %v12221 = vcombine.high %v12016, %v12026
      %v12222 = vcombine.low %v12044, %v12052
      %v12223 = vcombine.high %v12044, %v12052
      %v12224 = vcombine.low %v12062, %v12080
      %v12225 = vcombine.high %v12062, %v12080
      %v12227 = vunpack.c.l.s4 1966171168
      %v12228 = vunpack.c.0.s8 %v12227
      %v12229 = vlaneseq
      %v12230 = vshrl.u32 %v12229, 7
      %v12231 = vsub.s32 %v12228, %v12230
      %v12232 = vrot.slane %v12218, %v12231
      %v12234 = vunpack.c.l.s4 1966171168
      %v12235 = vunpack.c.0.s8 %v12234
      %v12236 = vlaneseq
      %v12237 = vshrl.u32 %v12236, 7
      %v12238 = vsub.s32 %v12235, %v12237
      %v12239 = vrot.slane %v12219, %v12238
      %v12241 = vunpack.c.l.s4 1966171168
      %v12242 = vunpack.c.0.s8 %v12241
      %v12243 = vlaneseq
      %v12244 = vshrl.u32 %v12243, 7
      %v12245 = vsub.s32 %v12242, %v12244
      %v12246 = vrot.slane %v12220, %v12245
      %v12248 = vunpack.c.l.s4 1966171168
      %v12249 = vunpack.c.0.s8 %v12248
      %v12250 = vlaneseq
      %v12251 = vshrl.u32 %v12250, 7
      %v12252 = vsub.s32 %v12249, %v12251
      %v12253 = vrot.slane %v12221, %v12252
      %v12255 = vunpack.c.l.s4 1966171168
      %v12256 = vunpack.c.0.s8 %v12255
      %v12257 = vlaneseq
      %v12258 = vshrl.u32 %v12257, 7
      %v12259 = vsub.s32 %v12256, %v12258
      %v12260 = vrot.slane %v12222, %v12259
      %v12262 = vunpack.c.l.s4 1966171168
      %v12263 = vunpack.c.0.s8 %v12262
      %v12264 = vlaneseq
      %v12265 = vshrl.u32 %v12264, 7
      %v12266 = vsub.s32 %v12263, %v12265
      %v12267 = vrot.slane %v12223, %v12266
      %v12269 = vunpack.c.l.s4 1966171168
      %v12270 = vunpack.c.0.s8 %v12269
      %v12271 = vlaneseq
      %v12272 = vshrl.u32 %v12271, 7
      %v12273 = vsub.s32 %v12270, %v12272
      %v12274 = vrot.slane %v12224, %v12273
      %v12276 = vunpack.c.l.s4 1966171168
      %v12277 = vunpack.c.0.s8 %v12276
      %v12278 = vlaneseq
      %v12279 = vshrl.u32 %v12278, 7
      %v12280 = vsub.s32 %v12277, %v12279
      %v12281 = vrot.slane %v12225, %v12280
      %v12282 = vcombine.high %v12232, %v12246
      %v12283 = vcombine.low %v12239, %v12253
      %v12284 = vcombine.high %v12260, %v12274
      %v12285 = vcombine.low %v12267, %v12281
      %v12287 = vunpack.c.l.s4 1966171168
      %v12288 = vunpack.c.0.s8 %v12287
      %v12289 = vlaneseq
      %v12290 = vshrl.u32 %v12289, 7
      %v12291 = vsub.s32 %v12288, %v12290
      %v12292 = vrot.slane %v12283, %v12291
      %v12294 = vunpack.c.l.s4 1966171168
      %v12295 = vunpack.c.0.s8 %v12294
      %v12296 = vlaneseq
      %v12297 = vshrl.u32 %v12296, 7
      %v12298 = vsub.s32 %v12295, %v12297
      %v12299 = vrot.slane %v12282, %v12298
      %v12301 = vunpack.c.l.s4 1966171168
      %v12302 = vunpack.c.0.s8 %v12301
      %v12303 = vlaneseq
      %v12304 = vshrl.u32 %v12303, 7
      %v12305 = vsub.s32 %v12302, %v12304
      %v12306 = vrot.slane %v12285, %v12305
      %v12308 = vunpack.c.l.s4 1966171168
      %v12309 = vunpack.c.0.s8 %v12308
      %v12310 = vlaneseq
      %v12311 = vshrl.u32 %v12310, 7
      %v12312 = vsub.s32 %v12309, %v12311
      %v12313 = vrot.slane %v12284, %v12312
      %v12314 = vcombine.low %v12292, %v12306
      %v12315 = vcombine.high %v12299, %v12313
      %v12316 = vcombine.high %v12088, %v12088
      %v12318 = vunpack.c.l.s4 1966171168
      %v12319 = vunpack.c.0.s8 %v12318
      %v12320 = vlaneseq
      %v12321 = vshrl.u32 %v12320, 7
      %v12322 = vsub.s32 %v12319, %v12321
      %v12323 = vrot.slane %v12088, %v12322
      %v12325 = vunpack.c.l.s4 1966171168
      %v12326 = vunpack.c.0.s8 %v12325
      %v12327 = vlaneseq
      %v12328 = vshrl.u32 %v12327, 7
      %v12329 = vsub.s32 %v12326, %v12328
      %v12330 = vrot.slane %v12316, %v12329
      %v12331 = vcombine.high %v12323, %v12323
      %v12333 = vunpack.c.l.s4 1966171168
      %v12334 = vunpack.c.0.s8 %v12333
      %v12335 = vlaneseq
      %v12336 = vshrl.u32 %v12335, 7
      %v12337 = vsub.s32 %v12334, %v12336
      %v12338 = vrot.slane %v12330, %v12337
      %v12340 = vunpack.c.l.s4 1966171168
      %v12341 = vunpack.c.0.s8 %v12340
      %v12342 = vlaneseq
      %v12343 = vshrl.u32 %v12342, 7
      %v12344 = vsub.s32 %v12341, %v12343
      %v12345 = vrot.slane %v12331, %v12344
      %v12346 = vcombine.high %v12345, %v12345
      %vm12347 = vsmask.f32 1284
      %vm12348 = vmor %vm639, %vm12347
      %vm12349 = vmor %vm12348, %vm10758
      %vm12350 = vsmask.f32 3340
      %vm12351 = vmor %vm12349, %vm12350
      %vm12352 = vmor %vm12351, %vm8122
      %vm12353 = vsmask.f32 5396
      %vm12354 = vmor %vm12352, %vm12353
      %vm12355 = vmor %vm12354, %vm10761
      %vm12356 = vsmask.f32 7452
      %vm12357 = vmor %vm12355, %vm12356
      %v12359 = vshrl.u32 %v12186, 16
      %v12361 = vrot.slane %v12359, 7
      %v12362 = vrot.slane %v12361, 1
      %v12364 = vshll.u32 %v12185, 16
      %v12366 = vsel %vm12357, %v12362, %v12364
      %v12368 = vshrl.u32 %v12217, 16
      %v12370 = vrot.slane %v12368, 7
      %v12371 = vrot.slane %v12370, 1
      %v12373 = vshll.u32 %v12209, 16
      %v12375 = vsel %vm12357, %v12371, %v12373
      %v12377 = vshrl.u32 %v12315, 16
      %v12379 = vrot.slane %v12377, 7
      %v12380 = vrot.slane %v12379, 1
      %v12382 = vshll.u32 %v12314, 16
      %v12384 = vsel %vm12357, %v12380, %v12382
      %v12386 = vshrl.u32 %v12346, 16
      %v12388 = vrot.slane %v12386, 7
      %v12389 = vrot.slane %v12388, 1
      %v12391 = vshll.u32 %v12338, 16
      %v12393 = vsel %vm12357, %v12389, %v12391
      %v12394 = vld [vmem:[%s13] sm:$0xf]
      %v12395 = vld [vmem:[%s13 + $0x4] sm:$0xf]
      %v12396 = vld [vmem:[%s13 + $0x8] sm:$0xf]
      %v12397 = vld [vmem:[%s13 + $0xc] sm:$0xf]
      %v12398 = vld [vmem:[%s13 + $0x10] sm:$0xf]
      %v12399 = vld [vmem:[%s13 + $0x14] sm:$0xf]
      %v12400 = vld [vmem:[%s13 + $0x18] sm:$0xf]
      %v12401 = vld [vmem:[%s13 + $0x1c] sm:$0xf]
      %v12402 = vld [vmem:[%s13 + $0x20] sm:$0xf]
      %v12403 = vld [vmem:[%s13 + $0x24] sm:$0xf]
      %v12404 = vld [vmem:[%s13 + $0x28] sm:$0xf]
      %v12405 = vld [vmem:[%s13 + $0x2c] sm:$0xf]
      %v12406 = vld [vmem:[%s13 + $0x30] sm:$0xf]
      %v12407 = vld [vmem:[%s13 + $0x34] sm:$0xf]
      %v12408 = vld [vmem:[%s13 + $0x38] sm:$0xf]
      %v12409 = vld [vmem:[%s13 + $0x3c] sm:$0xf]
      %v12410 = vld [vmem:[%s13 + $0x40] sm:$0xf]
      %v12411 = vld [vmem:[%s13 + $0x44] sm:$0xf]
      %v12412 = vld [vmem:[%s13 + $0x48] sm:$0xf]
      %v12413 = vld [vmem:[%s13 + $0x4c] sm:$0xf]
      %v12414 = vld [vmem:[%s13 + $0x50] sm:$0xf]
      %v12415 = vld [vmem:[%s13 + $0x54] sm:$0xf]
      %v12416 = vld [vmem:[%s13 + $0x58] sm:$0xf]
      %v12417 = vld [vmem:[%s13 + $0x5c] sm:$0xf]
      %v12418 = vld [vmem:[%s13 + $0x60] sm:$0xf]
      %v12419 = vld [vmem:[%s13 + $0x64] sm:$0xf]
      %v12420 = vld [vmem:[%s13 + $0x68] sm:$0xf]
      %v12421 = vld [vmem:[%s13 + $0x6c] sm:$0xf]
      %v12422 = vld [vmem:[%s13 + $0x70] sm:$0xf]
      %v12423 = vld [vmem:[%s13 + $0x74] sm:$0xf]
      %v12424 = vld [vmem:[%s13 + $0x78] sm:$0xf]
      %v12425 = vld [vmem:[%s13 + $0x7c] sm:$0xf]
      %v12426 = vld [vmem:[%s13 + $0x80] sm:$0xf]
      %v12427 = vld [vmem:[%s13 + $0x84] sm:$0xf]
      %v12428 = vld [vmem:[%s13 + $0x88] sm:$0xf]
      %v12429 = vld [vmem:[%s13 + $0x8c] sm:$0xf]
      %v12430 = vld [vmem:[%s13 + $0x90] sm:$0xf]
      %v12431 = vld [vmem:[%s13 + $0x94] sm:$0xf]
      %v12432 = vld [vmem:[%s13 + $0x98] sm:$0xf]
      %v12433 = vld [vmem:[%s13 + $0x9c] sm:$0xf]
      %v12434 = vld [vmem:[%s13 + $0xa0] sm:$0xf]
      %v12435 = vld [vmem:[%s13 + $0xa4] sm:$0xf]
      %v12436 = vld [vmem:[%s13 + $0xa8] sm:$0xf]
      %v12437 = vld [vmem:[%s13 + $0xac] sm:$0xf]
      %v12438 = vld [vmem:[%s13 + $0xb0] sm:$0xf]
      %v12439 = vld [vmem:[%s13 + $0xb4] sm:$0xf]
      %v12440 = vld [vmem:[%s13 + $0xb8] sm:$0xf]
      %v12441 = vld [vmem:[%s13 + $0xbc] sm:$0xf]
      %v12442 = vld [vmem:[%s13 + $0xc0] sm:$0xf]
      %v12443 = vld [vmem:[%s13 + $0xc4] sm:$0xf]
      %v12444 = vld [vmem:[%s13 + $0xc8] sm:$0xf]
      %v12445 = vld [vmem:[%s13 + $0xcc] sm:$0xf]
      %v12446 = vld [vmem:[%s13 + $0xd0] sm:$0xf]
      %v12447 = vld [vmem:[%s13 + $0xd4] sm:$0xf]
      %v12448 = vld [vmem:[%s13 + $0xd8] sm:$0xf]
      %v12449 = vld [vmem:[%s13 + $0xdc] sm:$0xf]
      %v12450 = vld [vmem:[%s13 + $0xe0] sm:$0xf]
      %v12451 = vld [vmem:[%s13 + $0xe4] sm:$0xf]
      %v12452 = vld [vmem:[%s13 + $0xe8] sm:$0xf]
      %v12453 = vld [vmem:[%s13 + $0xec] sm:$0xf]
      %v12454 = vld [vmem:[%s13 + $0xf0] sm:$0xf]
      %v12455 = vld [vmem:[%s13 + $0xf4] sm:$0xf]
      %v12456 = vld [vmem:[%s13 + $0xf8] sm:$0xf]
      %v12457 = vld [vmem:[%s13 + $0xfc] sm:$0xf]
      %v12458 = vld [vmem:[%s13 + $0x100] sm:$0xf]
      %v12459 = vld [vmem:[%s13 + $0x104] sm:$0xf]
      %v12460 = vld [vmem:[%s13 + $0x108] sm:$0xf]
      %v12461 = vld [vmem:[%s13 + $0x10c] sm:$0xf]
      %v12462 = vld [vmem:[%s13 + $0x110] sm:$0xf]
      %v12463 = vld [vmem:[%s13 + $0x114] sm:$0xf]
      %v12464 = vld [vmem:[%s13 + $0x118] sm:$0xf]
      %v12465 = vld [vmem:[%s13 + $0x11c] sm:$0xf]
      %v12466 = vld [vmem:[%s13 + $0x120] sm:$0xf]
      %v12467 = vld [vmem:[%s13 + $0x124] sm:$0xf]
      %v12468 = vld [vmem:[%s13 + $0x128] sm:$0xf]
      %v12469 = vld [vmem:[%s13 + $0x12c] sm:$0xf]
      %v12470 = vld [vmem:[%s13 + $0x130] sm:$0xf]
      %v12471 = vld [vmem:[%s13 + $0x134] sm:$0xf]
      %v12472 = vld [vmem:[%s13 + $0x138] sm:$0xf]
      %v12473 = vld [vmem:[%s13 + $0x13c] sm:$0xf]
      %v12474 = vld [vmem:[%s13 + $0x140] sm:$0xf]
      %v12475 = vld [vmem:[%s13 + $0x144] sm:$0xf]
      %v12476 = vld [vmem:[%s13 + $0x148] sm:$0xf]
      %v12477 = vld [vmem:[%s13 + $0x14c] sm:$0xf]
      %v12478 = vld [vmem:[%s13 + $0x150] sm:$0xf]
      %v12479 = vld [vmem:[%s13 + $0x154] sm:$0xf]
      %v12480 = vld [vmem:[%s13 + $0x158] sm:$0xf]
      %v12481 = vld [vmem:[%s13 + $0x15c] sm:$0xf]
      %v12482 = vld [vmem:[%s13 + $0x160] sm:$0xf]
      %v12483 = vld [vmem:[%s13 + $0x164] sm:$0xf]
      %v12484 = vld [vmem:[%s13 + $0x168] sm:$0xf]
      %v12485 = vld [vmem:[%s13 + $0x16c] sm:$0xf]
      %v12486 = vld [vmem:[%s13 + $0x170] sm:$0xf]
      %v12487 = vld [vmem:[%s13 + $0x174] sm:$0xf]
      %v12488 = vld [vmem:[%s13 + $0x178] sm:$0xf]
      %v12489 = vld [vmem:[%s13 + $0x17c] sm:$0xf]
      %v12490 = vld [vmem:[%s13 + $0x180] sm:$0xf]
      %v12491 = vld [vmem:[%s13 + $0x184] sm:$0xf]
      %v12492 = vld [vmem:[%s13 + $0x188] sm:$0xf]
      %v12493 = vld [vmem:[%s13 + $0x18c] sm:$0xf]
      %v12494 = vld [vmem:[%s13 + $0x190] sm:$0xf]
      %v12495 = vld [vmem:[%s13 + $0x194] sm:$0xf]
      %v12496 = vld [vmem:[%s13 + $0x198] sm:$0xf]
      %v12497 = vld [vmem:[%s13 + $0x19c] sm:$0xf]
      %v12498 = vld [vmem:[%s13 + $0x1a0] sm:$0xf]
      %v12499 = vld [vmem:[%s13 + $0x1a4] sm:$0xf]
      %v12500 = vld [vmem:[%s13 + $0x1a8] sm:$0xf]
      %v12501 = vld [vmem:[%s13 + $0x1ac] sm:$0xf]
      %v12502 = vld [vmem:[%s13 + $0x1b0] sm:$0xf]
      %v12503 = vld [vmem:[%s13 + $0x1b4] sm:$0xf]
      %v12504 = vld [vmem:[%s13 + $0x1b8] sm:$0xf]
      %v12505 = vld [vmem:[%s13 + $0x1bc] sm:$0xf]
      %v12506 = vld [vmem:[%s13 + $0x1c0] sm:$0xf]
      %v12507 = vld [vmem:[%s13 + $0x1c4] sm:$0xf]
      %v12508 = vld [vmem:[%s13 + $0x1c8] sm:$0xf]
      %v12509 = vld [vmem:[%s13 + $0x1cc] sm:$0xf]
      %v12510 = vld [vmem:[%s13 + $0x1d0] sm:$0xf]
      %v12511 = vld [vmem:[%s13 + $0x1d4] sm:$0xf]
      %v12512 = vld [vmem:[%s13 + $0x1d8] sm:$0xf]
      %v12513 = vld [vmem:[%s13 + $0x1dc] sm:$0xf]
      %v12514 = vld [vmem:[%s13 + $0x1e0] sm:$0xf]
      %v12515 = vld [vmem:[%s13 + $0x1e4] sm:$0xf]
      %v12516 = vld [vmem:[%s13 + $0x1e8] sm:$0xf]
      %v12517 = vld [vmem:[%s13 + $0x1ec] sm:$0xf]
      %v12518 = vld [vmem:[%s13 + $0x1f0] sm:$0xf]
      %v12519 = vld [vmem:[%s13 + $0x1f4] sm:$0xf]
      %v12520 = vld [vmem:[%s13 + $0x1f8] sm:$0xf]
      %v12521 = vld [vmem:[%s13 + $0x1fc] sm:$0xf]
      %v12522 = vld [vmem:[%s13 + $0x200] sm:$0xf]
      %v12523 = vld [vmem:[%s13 + $0x204] sm:$0xf]
      %v12524 = vld [vmem:[%s13 + $0x208] sm:$0xf]
      %v12525 = vld [vmem:[%s13 + $0x20c] sm:$0xf]
      %v12526 = vld [vmem:[%s13 + $0x210] sm:$0xf]
      %v12527 = vld [vmem:[%s13 + $0x214] sm:$0xf]
      %v12528 = vld [vmem:[%s13 + $0x218] sm:$0xf]
      %v12529 = vld [vmem:[%s13 + $0x21c] sm:$0xf]
      %v12530 = vld [vmem:[%s13 + $0x220] sm:$0xf]
      %v12531 = vld [vmem:[%s13 + $0x224] sm:$0xf]
      %v12532 = vld [vmem:[%s13 + $0x228] sm:$0xf]
      %v12533 = vld [vmem:[%s13 + $0x22c] sm:$0xf]
      %v12534 = vld [vmem:[%s13 + $0x230] sm:$0xf]
      %v12535 = vld [vmem:[%s13 + $0x234] sm:$0xf]
      %v12536 = vld [vmem:[%s13 + $0x238] sm:$0xf]
      %v12537 = vld [vmem:[%s13 + $0x23c] sm:$0xf]
      %v12538 = vcombine.low %v12366, %v12384
      %v12539 = vcombine.high %v12366, %v12384
      %v12541 = vunpack.c.l.s4 1966171168
      %v12542 = vunpack.c.0.s8 %v12541
      %v12543 = vlaneseq
      %v12544 = vshrl.u32 %v12543, 7
      %v12545 = vsub.s32 %v12542, %v12544
      %v12546 = vrot.slane %v12538, %v12545
      %v12548 = vunpack.c.l.s4 1966171168
      %v12549 = vunpack.c.0.s8 %v12548
      %v12550 = vlaneseq
      %v12551 = vshrl.u32 %v12550, 7
      %v12552 = vsub.s32 %v12549, %v12551
      %v12553 = vrot.slane %v12539, %v12552
      %v12554 = vcombine.high %v12546, %v12546
      %v12555 = vcombine.high %v12553, %v12553
      %v12557 = vunpack.c.l.s4 1966171168
      %v12558 = vunpack.c.0.s8 %v12557
      %v12559 = vlaneseq
      %v12560 = vshrl.u32 %v12559, 7
      %v12561 = vsub.s32 %v12558, %v12560
      %v12562 = vrot.slane %v12546, %v12561
      %v12564 = vunpack.c.l.s4 1966171168
      %v12565 = vunpack.c.0.s8 %v12564
      %v12566 = vlaneseq
      %v12567 = vshrl.u32 %v12566, 7
      %v12568 = vsub.s32 %v12565, %v12567
      %v12569 = vrot.slane %v12553, %v12568
      %v12571 = vunpack.c.l.s4 1966171168
      %v12572 = vunpack.c.0.s8 %v12571
      %v12573 = vlaneseq
      %v12574 = vshrl.u32 %v12573, 7
      %v12575 = vsub.s32 %v12572, %v12574
      %v12576 = vrot.slane %v12554, %v12575
      %v12578 = vunpack.c.l.s4 1966171168
      %v12579 = vunpack.c.0.s8 %v12578
      %v12580 = vlaneseq
      %v12581 = vshrl.u32 %v12580, 7
      %v12582 = vsub.s32 %v12579, %v12581
      %v12583 = vrot.slane %v12555, %v12582
      %v12584 = vcombine.high %v12562, %v12562
      %v12585 = vcombine.high %v12569, %v12569
      %v12586 = vcombine.high %v12576, %v12576
      %v12587 = vcombine.high %v12583, %v12583
      %v12588 = vcombine.low %v12375, %v12393
      %v12590 = vunpack.c.l.s4 1966171168
      %v12591 = vunpack.c.0.s8 %v12590
      %v12592 = vlaneseq
      %v12593 = vshrl.u32 %v12592, 7
      %v12594 = vsub.s32 %v12591, %v12593
      %v12595 = vrot.slane %v12588, %v12594
      %v12597 = vunpack.c.l.s4 1966171168
      %v12598 = vunpack.c.0.s8 %v12597
      %v12599 = vlaneseq
      %v12600 = vshrl.u32 %v12599, 7
      %v12601 = vsub.s32 %v12598, %v12600
      %v12602 = vrot.slane %v12595, %v12601
      %v12756 = vunpack.c.l.b16 %v12394
      %v12757 = vunpack.c.l.b16 %v12395
      %v12758 = vunpack.c.l.b16 %v12396
      %v12759 = vunpack.c.l.b16 %v12397
      %v12760 = vunpack.c.l.b16 %v12398
      %v12761 = vunpack.c.l.b16 %v12399
      %v12762 = vunpack.c.l.b16 %v12400
      %v12763 = vunpack.c.l.b16 %v12401
      %v12764 = vunpack.c.l.b16 %v12402
      %v12765 = vunpack.c.l.b16 %v12403
      %v12766 = vunpack.c.l.b16 %v12404
      %v12767 = vunpack.c.l.b16 %v12405
      %v12768 = vunpack.c.l.b16 %v12406
      %v12769 = vunpack.c.l.b16 %v12407
      %v12770 = vunpack.c.l.b16 %v12408
      %v12771 = vunpack.c.l.b16 %v12409
      %v12772 = vunpack.c.l.b16 %v12410
      %v12773 = vunpack.c.l.b16 %v12411
      %v12774 = vunpack.c.l.b16 %v12412
      %v12775 = vunpack.c.l.b16 %v12413
      %v12776 = vunpack.c.l.b16 %v12414
      %v12777 = vunpack.c.l.b16 %v12415
      %v12778 = vunpack.c.l.b16 %v12416
      %v12779 = vunpack.c.l.b16 %v12417
      %v12780 = vunpack.c.l.b16 %v12418
      %v12781 = vunpack.c.l.b16 %v12419
      %v12782 = vunpack.c.l.b16 %v12420
      %v12783 = vunpack.c.l.b16 %v12421
      %v12784 = vunpack.c.l.b16 %v12422
      %v12785 = vunpack.c.l.b16 %v12423
      %v12786 = vunpack.c.l.b16 %v12424
      %v12787 = vunpack.c.l.b16 %v12425
      %v12788 = vunpack.c.l.b16 %v12426
      %v12789 = vunpack.c.l.b16 %v12427
      %v12790 = vunpack.c.l.b16 %v12428
      %v12791 = vunpack.c.l.b16 %v12429
      %v12792 = vunpack.c.l.b16 %v12430
      %v12793 = vunpack.c.l.b16 %v12431
      %v12794 = vunpack.c.l.b16 %v12432
      %v12795 = vunpack.c.l.b16 %v12433
      %v12796 = vunpack.c.l.b16 %v12434
      %v12797 = vunpack.c.l.b16 %v12435
      %v12798 = vunpack.c.l.b16 %v12436
      %v12799 = vunpack.c.l.b16 %v12437
      %v12800 = vunpack.c.l.b16 %v12438
      %v12801 = vunpack.c.l.b16 %v12439
      %v12802 = vunpack.c.l.b16 %v12440
      %v12803 = vunpack.c.l.b16 %v12441
      %v12804 = vunpack.c.l.b16 %v12442
      %v12805 = vunpack.c.l.b16 %v12443
      %v12806 = vunpack.c.l.b16 %v12444
      %v12807 = vunpack.c.l.b16 %v12445
      %v12808 = vunpack.c.l.b16 %v12446
      %v12809 = vunpack.c.l.b16 %v12447
      %v12810 = vunpack.c.l.b16 %v12448
      %v12811 = vunpack.c.l.b16 %v12449
      %v12812 = vunpack.c.l.b16 %v12450
      %v12813 = vunpack.c.l.b16 %v12451
      %v12814 = vunpack.c.l.b16 %v12452
      %v12815 = vunpack.c.l.b16 %v12453
      %v12816 = vunpack.c.l.b16 %v12454
      %v12817 = vunpack.c.l.b16 %v12455
      %v12818 = vunpack.c.l.b16 %v12456
      %v12819 = vunpack.c.l.b16 %v12457
      %v12820 = vunpack.c.l.b16 %v12458
      %v12821 = vunpack.c.l.b16 %v12459
      %v12822 = vunpack.c.l.b16 %v12460
      %v12823 = vunpack.c.l.b16 %v12461
      %v12824 = vunpack.c.l.b16 %v12462
      %v12825 = vunpack.c.l.b16 %v12463
      %v12826 = vunpack.c.l.b16 %v12464
      %v12827 = vunpack.c.l.b16 %v12465
      %v12828 = vunpack.c.l.b16 %v12466
      %v12829 = vunpack.c.l.b16 %v12467
      %v12830 = vunpack.c.l.b16 %v12468
      %v12831 = vunpack.c.l.b16 %v12469
      %v12832 = vunpack.c.l.b16 %v12470
      %v12833 = vunpack.c.l.b16 %v12471
      %v12834 = vunpack.c.l.b16 %v12472
      %v12835 = vunpack.c.l.b16 %v12473
      %v12836 = vunpack.c.l.b16 %v12474
      %v12837 = vunpack.c.l.b16 %v12475
      %v12838 = vunpack.c.l.b16 %v12476
      %v12839 = vunpack.c.l.b16 %v12477
      %v12840 = vunpack.c.l.b16 %v12478
      %v12841 = vunpack.c.l.b16 %v12479
      %v12842 = vunpack.c.l.b16 %v12480
      %v12843 = vunpack.c.l.b16 %v12481
      %v12844 = vunpack.c.l.b16 %v12482
      %v12845 = vunpack.c.l.b16 %v12483
      %v12846 = vunpack.c.l.b16 %v12484
      %v12847 = vunpack.c.l.b16 %v12485
      %v12848 = vunpack.c.l.b16 %v12486
      %v12849 = vunpack.c.l.b16 %v12487
      %v12850 = vunpack.c.l.b16 %v12488
      %v12851 = vunpack.c.l.b16 %v12489
      %v12852 = vunpack.c.l.b16 %v12490
      %v12853 = vunpack.c.l.b16 %v12491
      %v12854 = vunpack.c.l.b16 %v12492
      %v12855 = vunpack.c.l.b16 %v12493
      %v12856 = vunpack.c.l.b16 %v12494
      %v12857 = vunpack.c.l.b16 %v12495
      %v12858 = vunpack.c.l.b16 %v12496
      %v12859 = vunpack.c.l.b16 %v12497
      %v12860 = vunpack.c.l.b16 %v12498
      %v12861 = vunpack.c.l.b16 %v12499
      %v12862 = vunpack.c.l.b16 %v12500
      %v12863 = vunpack.c.l.b16 %v12501
      %v12864 = vunpack.c.l.b16 %v12502
      %v12865 = vunpack.c.l.b16 %v12503
      %v12866 = vunpack.c.l.b16 %v12504
      %v12867 = vunpack.c.l.b16 %v12505
      %v12868 = vunpack.c.l.b16 %v12506
      %v12869 = vunpack.c.l.b16 %v12507
      %v12870 = vunpack.c.l.b16 %v12508
      %v12871 = vunpack.c.l.b16 %v12509
      %v12872 = vunpack.c.l.b16 %v12510
      %v12873 = vunpack.c.l.b16 %v12511
      %v12874 = vunpack.c.l.b16 %v12512
      %v12875 = vunpack.c.l.b16 %v12513
      %v12876 = vunpack.c.l.b16 %v12514
      %v12877 = vunpack.c.l.b16 %v12515
      %v12878 = vunpack.c.l.b16 %v12516
      %v12879 = vunpack.c.l.b16 %v12517
      %v12880 = vunpack.c.l.b16 %v12518
      %v12881 = vunpack.c.l.b16 %v12519
      %v12882 = vunpack.c.l.b16 %v12520
      %v12883 = vunpack.c.l.b16 %v12521
      %v12884 = vunpack.c.l.b16 %v12522
      %v12885 = vunpack.c.l.b16 %v12523
      %v12886 = vunpack.c.l.b16 %v12524
      %v12887 = vunpack.c.l.b16 %v12525
      %v12888 = vunpack.c.l.b16 %v12526
      %v12889 = vunpack.c.l.b16 %v12527
      %v12890 = vunpack.c.l.b16 %v12528
      %v12891 = vunpack.c.l.b16 %v12529
      %v12892 = vunpack.c.l.b16 %v12530
      %v12893 = vunpack.c.l.b16 %v12531
      %v12894 = vunpack.c.l.b16 %v12532
      %v12895 = vunpack.c.l.b16 %v12533
      %v12896 = vunpack.c.l.b16 %v12534
      %v12897 = vunpack.c.l.b16 %v12535
      %v12898 = vunpack.c.l.b16 %v12536
      %v12899 = vunpack.c.l.b16 %v12537
      %v12900 = vpack.c.b16 %v12757, %v12756
      %v12901 = vpack.c.b16 %v12759, %v12758
      %v12902 = vpack.c.b16 %v12761, %v12760
      %v12903 = vpack.c.b16 %v12763, %v12762
      %v12904 = vpack.c.b16 %v12765, %v12764
      %v12905 = vpack.c.b16 %v12767, %v12766
      %v12906 = vpack.c.b16 %v12769, %v12768
      %v12907 = vpack.c.b16 %v12771, %v12770
      %v12908 = vpack.c.b16 %v12773, %v12772
      %v12909 = vpack.c.b16 %v12775, %v12774
      %v12910 = vpack.c.b16 %v12777, %v12776
      %v12911 = vpack.c.b16 %v12779, %v12778
      %v12912 = vpack.c.b16 %v12781, %v12780
      %v12913 = vpack.c.b16 %v12783, %v12782
      %v12914 = vpack.c.b16 %v12785, %v12784
      %v12915 = vpack.c.b16 %v12787, %v12786
      %v12916 = vpack.c.b16 %v12789, %v12788
      %v12917 = vpack.c.b16 %v12791, %v12790
      %v12918 = vpack.c.b16 %v12793, %v12792
      %v12919 = vpack.c.b16 %v12795, %v12794
      %v12920 = vpack.c.b16 %v12797, %v12796
      %v12921 = vpack.c.b16 %v12799, %v12798
      %v12922 = vpack.c.b16 %v12801, %v12800
      %v12923 = vpack.c.b16 %v12803, %v12802
      %v12924 = vpack.c.b16 %v12805, %v12804
      %v12925 = vpack.c.b16 %v12807, %v12806
      %v12926 = vpack.c.b16 %v12809, %v12808
      %v12927 = vpack.c.b16 %v12811, %v12810
      %v12928 = vpack.c.b16 %v12813, %v12812
      %v12929 = vpack.c.b16 %v12815, %v12814
      %v12930 = vpack.c.b16 %v12817, %v12816
      %v12931 = vpack.c.b16 %v12819, %v12818
      %v12932 = vpack.c.b16 %v12821, %v12820
      %v12933 = vpack.c.b16 %v12823, %v12822
      %v12934 = vpack.c.b16 %v12825, %v12824
      %v12935 = vpack.c.b16 %v12827, %v12826
      %v12936 = vpack.c.b16 %v12829, %v12828
      %v12937 = vpack.c.b16 %v12831, %v12830
      %v12938 = vpack.c.b16 %v12833, %v12832
      %v12939 = vpack.c.b16 %v12835, %v12834
      %v12940 = vpack.c.b16 %v12837, %v12836
      %v12941 = vpack.c.b16 %v12839, %v12838
      %v12942 = vpack.c.b16 %v12841, %v12840
      %v12943 = vpack.c.b16 %v12843, %v12842
      %v12944 = vpack.c.b16 %v12845, %v12844
      %v12945 = vpack.c.b16 %v12847, %v12846
      %v12946 = vpack.c.b16 %v12849, %v12848
      %v12947 = vpack.c.b16 %v12851, %v12850
      %v12948 = vpack.c.b16 %v12853, %v12852
      %v12949 = vpack.c.b16 %v12855, %v12854
      %v12950 = vpack.c.b16 %v12857, %v12856
      %v12951 = vpack.c.b16 %v12859, %v12858
      %v12952 = vpack.c.b16 %v12861, %v12860
      %v12953 = vpack.c.b16 %v12863, %v12862
      %v12954 = vpack.c.b16 %v12865, %v12864
      %v12955 = vpack.c.b16 %v12867, %v12866
      %v12956 = vpack.c.b16 %v12869, %v12868
      %v12957 = vpack.c.b16 %v12871, %v12870
      %v12958 = vpack.c.b16 %v12873, %v12872
      %v12959 = vpack.c.b16 %v12875, %v12874
      %v12960 = vpack.c.b16 %v12877, %v12876
      %v12961 = vpack.c.b16 %v12879, %v12878
      %v12962 = vpack.c.b16 %v12881, %v12880
      %v12963 = vpack.c.b16 %v12883, %v12882
      %v12964 = vpack.c.b16 %v12885, %v12884
      %v12965 = vpack.c.b16 %v12887, %v12886
      %v12966 = vpack.c.b16 %v12889, %v12888
      %v12967 = vpack.c.b16 %v12891, %v12890
      %v12968 = vpack.c.b16 %v12893, %v12892
      %v12969 = vpack.c.b16 %v12895, %v12894
      %v12970 = vpack.c.b16 %v12897, %v12896
      %v12971 = vpack.c.b16 %v12899, %v12898
      %13044 = vmatprep.subr.bf16.mxu0 0
      %13045 = vmatpush1.bf16.msra.mxu0 %v12900
      %13046 = vmatprep.subr.bf16.mxu0 0
      %13047 = vmatpush1.bf16.msra.mxu0 %v12901
      %13048 = vmatprep.subr.bf16.mxu0 0
      %13049 = vmatpush1.bf16.msra.mxu0 %v12902
      %13050 = vmatprep.subr.bf16.mxu0 0
      %13051 = vmatpush1.bf16.msra.mxu0 %v12903
      %13052 = vmatprep.subr.bf16.mxu0 0
      %13053 = vmatpush1.bf16.msra.mxu0 %v12904
      %13054 = vmatprep.subr.bf16.mxu0 0
      %13055 = vmatpush1.bf16.msra.mxu0 %v12905
      %13056 = vmatprep.subr.bf16.mxu0 0
      %13057 = vmatpush1.bf16.msra.mxu0 %v12906
      %13058 = vmatprep.subr.bf16.mxu0 0
      %13059 = vmatpush1.bf16.msra.mxu0 %v12907
      %13060 = vmatprep.subr.bf16.mxu0 0
      %13061 = vmatpush1.bf16.msra.mxu0 %v12908
      %13062 = vmatprep.subr.bf16.mxu0 0
      %13063 = vmatpush1.bf16.msra.mxu0 %v12909
      %13064 = vmatprep.subr.bf16.mxu0 0
      %13065 = vmatpush1.bf16.msra.mxu0 %v12910
      %13066 = vmatprep.subr.bf16.mxu0 0
      %13067 = vmatpush1.bf16.msra.mxu0 %v12911
      %13068 = vmatprep.subr.bf16.mxu0 0
      %13069 = vmatpush1.bf16.msra.mxu0 %v12912
      %13070 = vmatprep.subr.bf16.mxu0 0
      %13071 = vmatpush1.bf16.msra.mxu0 %v12913
      %13072 = vmatprep.subr.bf16.mxu0 0
      %13073 = vmatpush1.bf16.msra.mxu0 %v12914
      %13074 = vmatprep.subr.bf16.mxu0 0
      %13075 = vmatpush1.bf16.msra.mxu0 %v12915
      %13076 = vmatprep.mubr.bf16.mxu0 %v12576
      %13077 = vmatmul.mubr.bf16.gmra.mrb[0].mxu0 %v12562
      %v13078 = vpop.f32.mrb[0].mxu0
      %v13079 = vadd.f32 0.0, %v13078
      %v13080 = vpop.f32.mrb[0].mxu0
      %v13081 = vpop.f32.mrb[0].mxu0
      %v13082 = vpop.f32.mrb[0].mxu0
      %13083 = vdwg.mxu0
      %13084 = vmatprep.subr.bf16.mxu0 0
      %13085 = vmatpush1.bf16.msra.mxu0 %v12916
      %13086 = vmatprep.subr.bf16.mxu0 0
      %13087 = vmatpush1.bf16.msra.mxu0 %v12917
      %13088 = vmatprep.subr.bf16.mxu0 0
      %13089 = vmatpush1.bf16.msra.mxu0 %v12918
      %13090 = vmatprep.subr.bf16.mxu0 0
      %13091 = vmatpush1.bf16.msra.mxu0 %v12919
      %13092 = vmatprep.subr.bf16.mxu0 0
      %13093 = vmatpush1.bf16.msra.mxu0 %v12920
      %13094 = vmatprep.subr.bf16.mxu0 0
      %13095 = vmatpush1.bf16.msra.mxu0 %v12921
      %13096 = vmatprep.subr.bf16.mxu0 0
      %13097 = vmatpush1.bf16.msra.mxu0 %v12922
      %13098 = vmatprep.subr.bf16.mxu0 0
      %13099 = vmatpush1.bf16.msra.mxu0 %v12923
      %13100 = vmatprep.subr.bf16.mxu0 0
      %13101 = vmatpush1.bf16.msra.mxu0 %v12924
      %13102 = vmatprep.subr.bf16.mxu0 0
      %13103 = vmatpush1.bf16.msra.mxu0 %v12925
      %13104 = vmatprep.subr.bf16.mxu0 0
      %13105 = vmatpush1.bf16.msra.mxu0 %v12926
      %13106 = vmatprep.subr.bf16.mxu0 0
      %13107 = vmatpush1.bf16.msra.mxu0 %v12927
      %13108 = vmatprep.subr.bf16.mxu0 0
      %13109 = vmatpush1.bf16.msra.mxu0 %v12928
      %13110 = vmatprep.subr.bf16.mxu0 0
      %13111 = vmatpush1.bf16.msra.mxu0 %v12929
      %13112 = vmatprep.subr.bf16.mxu0 0
      %13113 = vmatpush1.bf16.msra.mxu0 %v12930
      %13114 = vmatprep.subr.bf16.mxu0 0
      %13115 = vmatpush1.bf16.msra.mxu0 %v12931
      %13116 = vmatprep.mubr.bf16.mxu0 %v12586
      %13117 = vmatmul.mubr.bf16.gmra.mrb[0].mxu0 %v12584
      %v13118 = vpop.f32.mrb[0].mxu0
      %v13119 = vadd.f32 %v13079, %v13118
      %v13120 = vpop.f32.mrb[0].mxu0
      %v13121 = vpop.f32.mrb[0].mxu0
      %v13122 = vpop.f32.mrb[0].mxu0
      %13123 = vdwg.mxu0
      %13124 = vmatprep.subr.bf16.mxu0 0
      %13125 = vmatpush1.bf16.msra.mxu0 %v12932
      %13126 = vmatprep.subr.bf16.mxu0 0
      %13127 = vmatpush1.bf16.msra.mxu0 %v12933
      %13128 = vmatprep.subr.bf16.mxu0 0
      %13129 = vmatpush1.bf16.msra.mxu0 %v12934
      %13130 = vmatprep.subr.bf16.mxu0 0
      %13131 = vmatpush1.bf16.msra.mxu0 %v12935
      %13132 = vmatprep.subr.bf16.mxu0 0
      %13133 = vmatpush1.bf16.msra.mxu0 %v12936
      %13134 = vmatprep.subr.bf16.mxu0 0
      %13135 = vmatpush1.bf16.msra.mxu0 %v12937
      %13136 = vmatprep.subr.bf16.mxu0 0
      %13137 = vmatpush1.bf16.msra.mxu0 %v12938
      %13138 = vmatprep.subr.bf16.mxu0 0
      %13139 = vmatpush1.bf16.msra.mxu0 %v12939
      %13140 = vmatprep.subr.bf16.mxu0 0
      %13141 = vmatpush1.bf16.msra.mxu0 %v12940
      %13142 = vmatprep.subr.bf16.mxu0 0
      %13143 = vmatpush1.bf16.msra.mxu0 %v12941
      %13144 = vmatprep.subr.bf16.mxu0 0
      %13145 = vmatpush1.bf16.msra.mxu0 %v12942
      %13146 = vmatprep.subr.bf16.mxu0 0
      %13147 = vmatpush1.bf16.msra.mxu0 %v12943
      %13148 = vmatprep.subr.bf16.mxu0 0
      %13149 = vmatpush1.bf16.msra.mxu0 %v12944
      %13150 = vmatprep.subr.bf16.mxu0 0
      %13151 = vmatpush1.bf16.msra.mxu0 %v12945
      %13152 = vmatprep.subr.bf16.mxu0 0
      %13153 = vmatpush1.bf16.msra.mxu0 %v12946
      %13154 = vmatprep.subr.bf16.mxu0 0
      %13155 = vmatpush1.bf16.msra.mxu0 %v12947
      %13156 = vmatprep.mubr.bf16.mxu0 %v12583
      %13157 = vmatmul.mubr.bf16.gmra.mrb[0].mxu0 %v12569
      %v13158 = vpop.f32.mrb[0].mxu0
      %v13159 = vadd.f32 %v13119, %v13158
      %v13160 = vpop.f32.mrb[0].mxu0
      %v13161 = vpop.f32.mrb[0].mxu0
      %v13162 = vpop.f32.mrb[0].mxu0
      %13163 = vdwg.mxu0
      %13164 = vmatprep.subr.bf16.mxu0 0
      %13165 = vmatpush1.bf16.msra.mxu0 %v12948
      %13166 = vmatprep.subr.bf16.mxu0 0
      %13167 = vmatpush1.bf16.msra.mxu0 %v12949
      %13168 = vmatprep.subr.bf16.mxu0 0
      %13169 = vmatpush1.bf16.msra.mxu0 %v12950
      %13170 = vmatprep.subr.bf16.mxu0 0
      %13171 = vmatpush1.bf16.msra.mxu0 %v12951
      %13172 = vmatprep.subr.bf16.mxu0 0
      %13173 = vmatpush1.bf16.msra.mxu0 %v12952
      %13174 = vmatprep.subr.bf16.mxu0 0
      %13175 = vmatpush1.bf16.msra.mxu0 %v12953
      %13176 = vmatprep.subr.bf16.mxu0 0
      %13177 = vmatpush1.bf16.msra.mxu0 %v12954
      %13178 = vmatprep.subr.bf16.mxu0 0
      %13179 = vmatpush1.bf16.msra.mxu0 %v12955
      %13180 = vmatprep.subr.bf16.mxu0 0
      %13181 = vmatpush1.bf16.msra.mxu0 %v12956
      %13182 = vmatprep.subr.bf16.mxu0 0
      %13183 = vmatpush1.bf16.msra.mxu0 %v12957
      %13184 = vmatprep.subr.bf16.mxu0 0
      %13185 = vmatpush1.bf16.msra.mxu0 %v12958
      %13186 = vmatprep.subr.bf16.mxu0 0
      %13187 = vmatpush1.bf16.msra.mxu0 %v12959
      %13188 = vmatprep.subr.bf16.mxu0 0
      %13189 = vmatpush1.bf16.msra.mxu0 %v12960
      %13190 = vmatprep.subr.bf16.mxu0 0
      %13191 = vmatpush1.bf16.msra.mxu0 %v12961
      %13192 = vmatprep.subr.bf16.mxu0 0
      %13193 = vmatpush1.bf16.msra.mxu0 %v12962
      %13194 = vmatprep.subr.bf16.mxu0 0
      %13195 = vmatpush1.bf16.msra.mxu0 %v12963
      %13196 = vmatprep.mubr.bf16.mxu0 %v12587
      %13197 = vmatmul.mubr.bf16.gmra.mrb[0].mxu0 %v12585
      %v13198 = vpop.f32.mrb[0].mxu0
      %v13199 = vadd.f32 %v13159, %v13198
      %v13200 = vpop.f32.mrb[0].mxu0
      %v13201 = vpop.f32.mrb[0].mxu0
      %v13202 = vpop.f32.mrb[0].mxu0
      %13203 = vdwg.mxu0
      %13204 = vmatprep.subr.bf16.mxu0 0
      %13205 = vmatpush1.bf16.msra.mxu0 %v12964
      %13206 = vmatprep.subr.bf16.mxu0 0
      %13207 = vmatpush1.bf16.msra.mxu0 %v12965
      %13208 = vmatprep.subr.bf16.mxu0 0
      %13209 = vmatpush1.bf16.msra.mxu0 %v12966
      %13210 = vmatprep.subr.bf16.mxu0 0
      %13211 = vmatpush1.bf16.msra.mxu0 %v12967
      %13212 = vmatprep.subr.bf16.mxu0 0
      %13213 = vmatpush1.bf16.msra.mxu0 %v12968
      %13214 = vmatprep.subr.bf16.mxu0 0
      %13215 = vmatpush1.bf16.msra.mxu0 %v12969
      %13216 = vmatprep.subr.bf16.mxu0 0
      %13217 = vmatpush1.bf16.msra.mxu0 %v12970
      %13218 = vmatprep.subr.bf16.mxu0 0
      %13219 = vmatpush1.bf16.msra.mxu0 %v12971
      %13220 = vmatprep.subr.bf16.mxu0 0
      %13221 = vmatpush1.bf16.msra.mxu0 0
      %13222 = vmatprep.subr.bf16.mxu0 0
      %13223 = vmatpush1.bf16.msra.mxu0 0
      %13224 = vmatprep.subr.bf16.mxu0 0
      %13225 = vmatpush1.bf16.msra.mxu0 0
      %13226 = vmatprep.subr.bf16.mxu0 0
      %13227 = vmatpush1.bf16.msra.mxu0 0
      %13228 = vmatprep.subr.bf16.mxu0 0
      %13229 = vmatpush1.bf16.msra.mxu0 0
      %13230 = vmatprep.subr.bf16.mxu0 0
      %13231 = vmatpush1.bf16.msra.mxu0 0
      %13232 = vmatprep.subr.bf16.mxu0 0
      %13233 = vmatpush1.bf16.msra.mxu0 0
      %13234 = vmatprep.subr.bf16.mxu0 0
      %13235 = vmatpush1.bf16.msra.mxu0 0
      %13236 = vmatprep.mubr.bf16.mxu0 0
      %13237 = vmatmul.mubr.bf16.gmra.mrb[0].mxu0 %v12602
      %v13238 = vpop.f32.mrb[0].mxu0
      %v13239 = vadd.f32 %v13199, %v13238
      %v13240 = vpop.f32.mrb[0].mxu0
      %v13241 = vpop.f32.mrb[0].mxu0
      %v13242 = vpop.f32.mrb[0].mxu0
      %13243 = vdwg.mxu0
      %v13246 = vunpack.c.l.s4 1983009808
      %v13247 = vunpack.c.0.s8 %v13246
      %v13248 = vlaneseq
      %v13249 = vshrl.u32 %v13248, 7
      %v13250 = vsub.s32 %v13247, %v13249
      %v13251 = vrot.slane %v13239, %v13250
      %v13252 = vcombine.high %v13251, %v13251
      %vm13255 = vcmask 1041408
      %v13256 = vsel %vm13255, %v13251, -inf
      %v13257 = vsel %vm13255, %v13252, -inf
      %v13258 = vmax.f32 %v13256, %v13257
      %v13259 = vsel %vm13255, %v13258, -inf
      %v13260 = vrot.slane %v13259, 4
      %v13261 = vmax.f32 %v13259, %v13260
      %v13262 = vrot.slane %v13261, 2
      %v13263 = vmax.f32 %v13261, %v13262
      %v13264 = vrot.slane %v13263, 1
      %v13265 = vmax.f32 %v13263, %v13264
      %v13266 = vld [vmem:[%s14] sm:$0x1]
      %v13267 = vadd.f32 %v13265, %v13266
      %vm13268 = vcmp.gt.f32.partialorder %v13267, 0.0
      %v13269 = vmul.f32 %v13267, 0.2
      %v13270 = vsel %vm13268, %v13267, %v13269
      %v13271 = vld [vmem:[%s15] sm:$0x1]
      %v13272 = vmul.f32 %v13270, %v13271
      %v13273 = vld [vmem:[%s16] sm:$0x1]
      %v13274 = vadd.f32 %v13272, %v13273
      %v13275 = vld [vmem:[%s17] sm:$0x1]
      %v13276 = vmul.f32 %v13274, %v13275
      %vm13277 = vcmask 1040384
      %v13278 = vsel %vm13277, %v13276, 0.0
      %13279 = vadd.xlane.f32.xlu0 %v13278
      %v13280 = vpop.xlane.xlu0 %13279
      %v13281 = vadd.f32 %v13280, 0.0
      %v13282 = vld [vmem:[#allocation6] sm:$0x1]
      %v13283 = vadd.f32 %v13281, %v13282
      %v13284 = vxor.u32 %v13283, 2147483648
      %v13285 = vmul.f32 %v13284, 1.442695
      %v13286 = vpow.pop %v13285
      %v13287 = vadd.f32 %v13286, 1.0
      %v13288 = vrcp.pop %v13287
      %v13289 = vmul.f32 1.0, %v13288
      %vm13290 = vcmask 0
      %13291 = vst.msk [vmem:[%s600] sm:$0x1] %vm13290, %v13289
      %p13292 = scmp.lt.s32.totalorder %s32, 1
      %s13293 = scalar_select %p13292, %s32, 1
      %s13294 = scalar_lea.vmem %s19, %s13293
      // Predicated region
      $region97: #{tpu_custom_call.1} parent=95 // pred_check
        %p13295 = pneg %p454
      $region98: #{tpu_custom_call.1} parent=95 // pred_check_branch
        %13297 = sbr.rel (%p13295) target = $region100
      $region99: #{tpu_custom_call.1} parent=95 // pred_region
        _
      $region100: #{tpu_custom_call.1} parent=95 // pred_fallthru
        _
    $region96: #{tpu_custom_call.1} parent=5 // pred_fallthru
      _
    %p13298 = scmp.le.s32.totalorder 2, %s27
    // Predicated region
    $region101: #{tpu_custom_call.1} parent=5 // pred_check
      %p13299 = pneg %p13298
    $region102: #{tpu_custom_call.1} parent=5 // pred_check_branch
      %13301 = sbr.rel (%p13299) target = $region104
    $region103: #{tpu_custom_call.1} parent=5 // pred_region
      %s13302 = ssub.s32 %s27, 2
      // Predicated region
      $region105: #{tpu_custom_call.1} parent=103 // pred_check
        %p13303 = pneg %p460
      $region106: #{tpu_custom_call.1} parent=103 // pred_check_branch
        %13305 = sbr.rel (%p13303) target = $region108
      $region107: #{tpu_custom_call.1} parent=103 // pred_region
        %p13306 = scmp.lt.s32.totalorder %s33, 1
        %s13307 = scalar_select %p13306, %s33, 1
        %s13308 = scalar_lea.vmem %s19, %s13307
      $region108: #{tpu_custom_call.1} parent=103 // pred_fallthru
        _
    $region104: #{tpu_custom_call.1} parent=5 // pred_fallthru
      _
  $region6: #{tpu_custom_call.1} parent=0 // loop_footer
    %s31 = sadd.s32 1, %s27
  $region7: #{tpu_custom_call.1} parent=0 // loop_footer_branch
    %26 = sbr.rel target = $region3
  $region8: #{tpu_custom_call.1} parent=0 // loop_exit
    _

</llo_original>
